<compile_context>
chip_gen: v7x
topology: tpu7x:2x2x1
jax: 0.10.0
libtpu: 0.0.40
codegen_flags: <defaults>
</compile_context>

<pallas_src>
import functools

import jax
import jax.numpy as jnp
from jax.experimental import pallas as pl
from jax.experimental.pallas import tpu as pltpu


_VMEM_LIMIT = 32 * 1024 * 1024  # explicit cap; safe on v7x's 64 MiB physical VMEM


# --------------------------------------------------------------------------
# Pallas kernel: fused  Y = leaky_relu( X @ W + b )   (bf16 MXU, f32 epilogue)
# --------------------------------------------------------------------------
def _mm_bias_act_kernel(x_ref, w_ref, b_ref, o_ref, *, leaky):
    acc = jnp.dot(x_ref[...], w_ref[...], preferred_element_type=jnp.float32)
    acc = acc + b_ref[...]                               # (1, N) bias broadcast
    if leaky:
        acc = jnp.where(acc >= 0.0, acc, 0.2 * acc)      # LeakyReLU(0.2)
    o_ref[...] = acc.astype(o_ref.dtype)


def matmul_bias_act(x, w, b2, *, leaky, out_dtype=jnp.bfloat16, tm_max=512):
    """x: [M, K], w: [K, N] bf16 (VMEM-resident), b2: [1, N] f32 -> [M, N]."""
    M, K = x.shape
    N = w.shape[1]
    x = x.astype(jnp.bfloat16)
    tm = M if M <= tm_max else tm_max                    # tm_max is a multiple of 8
    return pl.pallas_call(
        functools.partial(_mm_bias_act_kernel, leaky=leaky),
        out_shape=jax.ShapeDtypeStruct((M, N), out_dtype),
        grid=(pl.cdiv(M, tm),),
        in_specs=[
            pl.BlockSpec((tm, K), lambda i: (i, 0)),     # activations: tiled over M
            pl.BlockSpec((K, N), lambda i: (0, 0)),      # weight: resident
            pl.BlockSpec((1, N), lambda i: (0, 0)),      # bias: resident
        ],
        out_specs=pl.BlockSpec((tm, N), lambda i: (i, 0)),
        compiler_params=pltpu.CompilerParams(
            dimension_semantics=("parallel",),           # megacore / v7x 2-TC sharding
            vmem_limit_bytes=_VMEM_LIMIT,
        ),
    )(x, w, b2)


# --------------------------------------------------------------------------
# Conv2d (PyTorch semantics) = NHWC im2col (pure reshape) + Pallas matmul
# --------------------------------------------------------------------------
def _im2col_nhwc(x, k, stride, pad):
    """x: [B, H, W, C] -> patches [B*Ho*Wo, k*k*C] ordered (kh, kw, C)."""
    B, H, W, C = x.shape
    xp = jnp.pad(x, ((0, 0), (pad, pad), (pad, pad), (0, 0)))
    Ho = (H + 2 * pad - k) // stride + 1
    Wo = (W + 2 * pad - k) // stride + 1
    cols = []
    for i in range(k):
        for j in range(k):
            cols.append(xp[:, i:i + stride * Ho:stride, j:j + stride * Wo:stride, :])
    p = jnp.stack(cols, axis=3)                          # [B, Ho, Wo, k*k, C]
    p = p.reshape(B * Ho * Wo, k * k * C)                # pure reshape, no transpose
    return p, Ho, Wo


def conv2d_pallas(x, wmat, b2, k, stride, pad, *, leaky):
    """x: [B, H, W, Cp] NHWC (channel-padded); wmat: [k*k*Cp, Op]; b2: [1, Op]."""
    B = x.shape[0]
    p, Ho, Wo = _im2col_nhwc(x, k, stride, pad)
    y = matmul_bias_act(p, wmat, b2, leaky=leaky, out_dtype=jnp.bfloat16)
    return y.reshape(B, Ho, Wo, -1)                      # stays NHWC


# --------------------------------------------------------------------------
# Fused MLP tail: z_discrimination + joint_discriminator in ONE pallas_call
# --------------------------------------------------------------------------
def _tail_kernel(hx_ref, z_ref,
                 z1w_ref, z1b_ref, z2w_ref, z2b_ref,
                 j1wx_ref, j1wz_ref, j1b_ref,
                 j2w_ref, j2b_ref,
                 j3w_ref, j3b_ref,
                 o_ref):
    f32 = jnp.float32
    bf16 = jnp.bfloat16

    def leaky(v):
        return jnp.where(v >= 0.0, v, 0.2 * v)

    # z_discrimination: Linear(latent,256) -> LReLU -> Linear(256,256) -> LReLU
    hz = jnp.dot(z_ref[...], z1w_ref[...], preferred_element_type=f32) + z1b_ref[...]
    hz = leaky(hz)
    hz = jnp.dot(hz.astype(bf16), z2w_ref[...], preferred_element_type=f32) + z2b_ref[...]
    hz = leaky(hz)

    # joint: concat([hx, hz], 1) @ W1  ==  hx @ W1[:256] + hz @ W1[256:]
    hj = (jnp.dot(hx_ref[...], j1wx_ref[...], preferred_element_type=f32)
          + jnp.dot(hz.astype(bf16), j1wz_ref[...], preferred_element_type=f32)
          + j1b_ref[...])
    hj = leaky(hj)
    hj = jnp.dot(hj.astype(bf16), j2w_ref[...], preferred_element_type=f32) + j2b_ref[...]
    hj = leaky(hj)
    out = jnp.dot(hj.astype(bf16), j3w_ref[...], preferred_element_type=f32) + j3b_ref[...]
    o_ref[...] = out.astype(o_ref.dtype)


def tail_pallas(hx, z, pp, *, tb_max=256):
    """hx: [B, 256] bf16, z: [B, latent] -> [B, output_dim] f32."""
    B = hx.shape[0]
    z = z.astype(jnp.bfloat16)
    out_dim = pp["j3_w"].shape[1]
    tb = B if B <= tb_max else tb_max                    # tb_max is a multiple of 8

    def batch_spec(n):
        return pl.BlockSpec((tb, n), lambda i: (i, 0))

    def resident(arr):
        r, c = arr.shape
        return pl.BlockSpec((r, c), lambda i: (0, 0))

    weights = (pp["z1_w"], pp["z1_b"], pp["z2_w"], pp["z2_b"],
               pp["j1_wx"], pp["j1_wz"], pp["j1_b"],
               pp["j2_w"], pp["j2_b"], pp["j3_w"], pp["j3_b"])

    return pl.pallas_call(
        _tail_kernel,
        out_shape=jax.ShapeDtypeStruct((B, out_dim), jnp.float32),
        grid=(pl.cdiv(B, tb),),
        in_specs=[batch_spec(hx.shape[1]), batch_spec(z.shape[1])]
                 + [resident(w) for w in weights],
        out_specs=batch_spec(out_dim),
        compiler_params=pltpu.CompilerParams(
            dimension_semantics=("parallel",),
            vmem_limit_bytes=_VMEM_LIMIT,
        ),
    )(hx, z, *weights)


# --------------------------------------------------------------------------
# Parameters: synthetic init in PyTorch layout, then ONE-TIME matmul-ready prep
# --------------------------------------------------------------------------
def init_params(key, latent_dim, channels=3, n_features=32, output_dim=1):
    nf = n_features
    keys = jax.random.split(key, 18)
    s = 0.05

    def cw(k_, o, c, kk):
        return jax.random.normal(k_, (o, c, kk, kk), jnp.float32) * s

    def lw(k_, o, i):
        return jax.random.normal(k_, (o, i), jnp.float32) * s

    def bb(k_, o):
        return jax.random.normal(k_, (o,), jnp.float32) * s

    return dict(
        c1_w=cw(keys[0], nf, channels, 4),      c1_b=bb(keys[1], nf),
        c2_w=cw(keys[2], nf * 2, nf, 4),        c2_b=bb(keys[3], nf * 2),
        c3_w=cw(keys[4], nf * 4, nf * 2, 4),    c3_b=bb(keys[5], nf * 4),
        c4_w=cw(keys[6], 256, nf * 4, 4),       c4_b=bb(keys[7], 256),
        z1_w=lw(keys[8], 256, latent_dim),      z1_b=bb(keys[9], 256),
        z2_w=lw(keys[10], 256, 256),            z2_b=bb(keys[11], 256),
        j1_w=lw(keys[12], 1024, 512),           j1_b=bb(keys[13], 1024),
        j2_w=lw(keys[14], 1024, 1024),          j2_b=bb(keys[15], 1024),
        j3_w=lw(keys[16], output_dim, 1024),    j3_b=bb(keys[17], output_dim),
    )


def prepare_params(p):
    """One-time conversion: pre-transposed, lane-dense zero-padded, bf16 weights."""

    def conv(w, b, c_pad, o_pad):
        o, c, k, _ = w.shape
        wt = jnp.transpose(w, (2, 3, 1, 0))              # OIHW -> HWIO (kh, kw, C, O)
        wt = jnp.pad(wt, ((0, 0), (0, 0), (0, c_pad - c), (0, o_pad - o)))
        wm = wt.reshape(k * k * c_pad, o_pad).astype(jnp.bfloat16)
        bm = jnp.pad(b, (0, o_pad - o)).reshape(1, o_pad).astype(jnp.float32)
        return wm, bm

    def lin(w, b):
        return w.T.astype(jnp.bfloat16), b.reshape(1, -1).astype(jnp.float32)

    pp = {}
    # conv1 C_in 3->8 makes K = 4*4*8 = 128; conv1/conv2 C_out -> 128 makes all
    # conv matmul outputs lane-dense.  Padded channels stay exactly zero.
    pp["c1_w"], pp["c1_b"] = conv(p["c1_w"], p["c1_b"], 8, 128)
    pp["c2_w"], pp["c2_b"] = conv(p["c2_w"], p["c2_b"], 128, 128)
    pp["c3_w"], pp["c3_b"] = conv(p["c3_w"], p["c3_b"], 128, 128)
    pp["c4_w"], pp["c4_b"] = conv(p["c4_w"], p["c4_b"], 128, 256)

    pp["z1_w"], pp["z1_b"] = lin(p["z1_w"], p["z1_b"])
    pp["z2_w"], pp["z2_b"] = lin(p["z2_w"], p["z2_b"])
    j1_w, pp["j1_b"] = lin(p["j1_w"], p["j1_b"])
    pp["j1_wx"], pp["j1_wz"] = j1_w[:256, :], j1_w[256:, :]   # fold the concat
    pp["j2_w"], pp["j2_b"] = lin(p["j2_w"], p["j2_b"])
    pp["j3_w"], pp["j3_b"] = lin(p["j3_w"], p["j3_b"])
    return pp


# --------------------------------------------------------------------------
# Forward pass (mirrors XZDiscriminator.forward)
# --------------------------------------------------------------------------
def xz_discriminator_forward(pp, x, z):
    """x: [B, C, H, W] NCHW (PyTorch convention), z: [B, latent] -> [B, out]."""
    B, C = x.shape[0], x.shape[1]
    # One-time NCHW -> NHWC relayout + channel zero-pad (C -> 8); the conv
    # stack then stays channels-last with no further transposes.
    cin_pad = pp["c1_w"].shape[0] // 16                  # k*k = 16 -> padded C_in
    h = jnp.transpose(x, (0, 2, 3, 1)).astype(jnp.bfloat16)
    h = jnp.pad(h, ((0, 0), (0, 0), (0, 0), (0, cin_pad - C)))

    # x_discrimination: 32x32 -> 16 -> 8 -> 4 -> 1
    h = conv2d_pallas(h, pp["c1_w"], pp["c1_b"], 4, 2, 1, leaky=True)
    h = conv2d_pallas(h, pp["c2_w"], pp["c2_b"], 4, 2, 1, leaky=True)
    h = conv2d_pallas(h, pp["c3_w"], pp["c3_b"], 4, 2, 1, leaky=True)
    h = conv2d_pallas(h, pp["c4_w"], pp["c4_b"], 4, 1, 0, leaky=True)
    hx = h.reshape(B, 256)                               # Flatten(start_dim=1)

    # z_discrimination + joint_discriminator: one fused Pallas kernel.
    return tail_pallas(hx, z, pp)                        # [B, output_dim]


if __name__ == "__main__":
    B = 2
    CHANNELS = 3
    SPATIAL = 32          # required by the conv stack (32 -> 16 -> 8 -> 4 -> 1)
    LATENT_DIM = 16
    OUTPUT_DIM = 1

    key = jax.random.PRNGKey(0)
    kp, kx, kz = jax.random.split(key, 3)

    params = init_params(kp, LATENT_DIM, channels=CHANNELS,
                         n_features=32, output_dim=OUTPUT_DIM)
    prepared = prepare_params(params)                    # pre-transpose/pad/bf16, once

    x = jax.random.normal(kx, (B, CHANNELS, SPATIAL, SPATIAL), jnp.float32)
    z = jax.random.normal(kz, (B, LATENT_DIM), jnp.float32)

    fwd = jax.jit(xz_discriminator_forward)
    out = fwd(prepared, x, z)
    jax.block_until_ready(out)
    assert out.shape == (B, OUTPUT_DIM), out.shape
    print("KERNEL_OK")
</pallas_src>

<mosaic_0001>
module attributes {stable_mosaic.version = 11 : i64} {
  func.func @_mm_bias_act_kernel(%arg0: i32, %arg1: memref<512x128xbf16, #tpu.memory_space<vmem>>, %arg2: memref<128x128xbf16, #tpu.memory_space<vmem>>, %arg3: memref<1x128xf32, #tpu.memory_space<vmem>>, %arg4: memref<512x128xbf16, #tpu.memory_space<vmem>>) attributes {dimension_semantics = [#tpu.dimension_semantics<parallel>], iteration_bounds = array<i64: 1>, scalar_prefetch = 0 : i64, scratch_operands = 0 : i64, tpu.core_type = #tpu.core_type<tc>, window_params = [{transform_indices = @transform_0, window_bounds = array<i64: 512, 128>}, {pipeline_mode = #tpu.pipeline_mode<synchronous>, transform_indices = @transform_1, window_bounds = array<i64: 128, 128>}, {pipeline_mode = #tpu.pipeline_mode<synchronous>, transform_indices = @transform_2, window_bounds = array<i64: 1, 128>}, {transform_indices = @transform_3, window_bounds = array<i64: 512, 128>}]} {
    %c0 = arith.constant 0 : index
    %c0_0 = arith.constant 0 : index
    %0 = vector.load %arg1[%c0, %c0_0] : memref<512x128xbf16, #tpu.memory_space<vmem>>, vector<512x128xbf16>
    %c0_1 = arith.constant 0 : index
    %c0_2 = arith.constant 0 : index
    %1 = vector.load %arg2[%c0_1, %c0_2] : memref<128x128xbf16, #tpu.memory_space<vmem>>, vector<128x128xbf16>
    %cst = arith.constant dense<0.000000e+00> : vector<512x128xf32>
    %2 = tpu.matmul %0, %1, %cst {dimension_numbers = #tpu.dot_dimension_numbers<[1], [0], [0], [1], [0, 0, 1, 1], [], []>} : vector<512x128xbf16>, vector<128x128xbf16>, vector<512x128xf32> -> vector<512x128xf32>
    %c0_3 = arith.constant 0 : index
    %c0_4 = arith.constant 0 : index
    %3 = vector.load %arg3[%c0_3, %c0_4] : memref<1x128xf32, #tpu.memory_space<vmem>>, vector<1x128xf32>
    %4 = vector.broadcast %3 : vector<1x128xf32> to vector<512x128xf32>
    %5 = arith.addf %2, %4 : vector<512x128xf32>
    %cst_5 = arith.constant 0.000000e+00 : f32
    %6 = vector.broadcast %cst_5 : f32 to vector<512x128xf32>
    %7 = arith.cmpf oge, %5, %6 : vector<512x128xf32>
    %cst_6 = arith.constant 2.000000e-01 : f32
    %8 = vector.broadcast %cst_6 : f32 to vector<512x128xf32>
    %9 = arith.mulf %8, %5 : vector<512x128xf32>
    %10 = arith.select %7, %5, %9 : vector<512x128xi1>, vector<512x128xf32>
    %11 = arith.truncf %10 : vector<512x128xf32> to vector<512x128xbf16>
    %c0_7 = arith.constant 0 : index
    %c0_8 = arith.constant 0 : index
    %12 = vector.load %arg4[%c0_7, %c0_8] : memref<512x128xbf16, #tpu.memory_space<vmem>>, vector<512x128xbf16>
    tpu.vector_store %arg4[%c0_7, %c0_8], %11 {strides = array<i32>} : memref<512x128xbf16, #tpu.memory_space<vmem>>, vector<512x128xbf16>,
    return
  }
  func.func @transform_0(%arg0: i32) -> (i32, i32) {
    %c0_i32 = arith.constant 0 : i32
    %c0_i32_0 = arith.constant 0 : i32
    return %arg0, %c0_i32 : i32, i32
  }
  func.func @transform_1(%arg0: i32) -> (i32, i32) {
    %c0_i32 = arith.constant 0 : i32
    %c0_i32_0 = arith.constant 0 : i32
    %c0_i32_1 = arith.constant 0 : i32
    return %c0_i32, %c0_i32_0 : i32, i32
  }
  func.func @transform_2(%arg0: i32) -> (i32, i32) {
    %c0_i32 = arith.constant 0 : i32
    %c0_i32_0 = arith.constant 0 : i32
    %c0_i32_1 = arith.constant 0 : i32
    return %c0_i32, %c0_i32_0 : i32, i32
  }
  func.func @transform_3(%arg0: i32) -> (i32, i32) {
    %c0_i32 = arith.constant 0 : i32
    %c0_i32_0 = arith.constant 0 : i32
    return %arg0, %c0_i32 : i32, i32
  }
}

module attributes {stable_mosaic.version = 11 : i64} {
  func.func @_mm_bias_act_kernel(%arg0: i32, %arg1: memref<128x2048xbf16, #tpu.memory_space<vmem>>, %arg2: memref<2048x128xbf16, #tpu.memory_space<vmem>>, %arg3: memref<1x128xf32, #tpu.memory_space<vmem>>, %arg4: memref<128x128xbf16, #tpu.memory_space<vmem>>) attributes {dimension_semantics = [#tpu.dimension_semantics<parallel>], iteration_bounds = array<i64: 1>, scalar_prefetch = 0 : i64, scratch_operands = 0 : i64, tpu.core_type = #tpu.core_type<tc>, window_params = [{transform_indices = @transform_0, window_bounds = array<i64: 128, 2048>}, {pipeline_mode = #tpu.pipeline_mode<synchronous>, transform_indices = @transform_1, window_bounds = array<i64: 2048, 128>}, {pipeline_mode = #tpu.pipeline_mode<synchronous>, transform_indices = @transform_2, window_bounds = array<i64: 1, 128>}, {transform_indices = @transform_3, window_bounds = array<i64: 128, 128>}]} {
    %c0 = arith.constant 0 : index
    %c0_0 = arith.constant 0 : index
    %0 = vector.load %arg1[%c0, %c0_0] : memref<128x2048xbf16, #tpu.memory_space<vmem>>, vector<128x2048xbf16>
    %c0_1 = arith.constant 0 : index
    %c0_2 = arith.constant 0 : index
    %1 = vector.load %arg2[%c0_1, %c0_2] : memref<2048x128xbf16, #tpu.memory_space<vmem>>, vector<2048x128xbf16>
    %cst = arith.constant dense<0.000000e+00> : vector<128x128xf32>
    %2 = tpu.matmul %0, %1, %cst {dimension_numbers = #tpu.dot_dimension_numbers<[1], [0], [0], [1], [0, 0, 1, 1], [], []>} : vector<128x2048xbf16>, vector<2048x128xbf16>, vector<128x128xf32> -> vector<128x128xf32>
    %c0_3 = arith.constant 0 : index
    %c0_4 = arith.constant 0 : index
    %3 = vector.load %arg3[%c0_3, %c0_4] : memref<1x128xf32, #tpu.memory_space<vmem>>, vector<1x128xf32>
    %4 = vector.broadcast %3 : vector<1x128xf32> to vector<128x128xf32>
    %5 = arith.addf %2, %4 : vector<128x128xf32>
    %cst_5 = arith.constant 0.000000e+00 : f32
    %6 = vector.broadcast %cst_5 : f32 to vector<128x128xf32>
    %7 = arith.cmpf oge, %5, %6 : vector<128x128xf32>
    %cst_6 = arith.constant 2.000000e-01 : f32
    %8 = vector.broadcast %cst_6 : f32 to vector<128x128xf32>
    %9 = arith.mulf %8, %5 : vector<128x128xf32>
    %10 = arith.select %7, %5, %9 : vector<128x128xi1>, vector<128x128xf32>
    %11 = arith.truncf %10 : vector<128x128xf32> to vector<128x128xbf16>
    %c0_7 = arith.constant 0 : index
    %c0_8 = arith.constant 0 : index
    %12 = vector.load %arg4[%c0_7, %c0_8] : memref<128x128xbf16, #tpu.memory_space<vmem>>, vector<128x128xbf16>
    tpu.vector_store %arg4[%c0_7, %c0_8], %11 {strides = array<i32>} : memref<128x128xbf16, #tpu.memory_space<vmem>>, vector<128x128xbf16>,
    return
  }
  func.func @transform_0(%arg0: i32) -> (i32, i32) {
    %c0_i32 = arith.constant 0 : i32
    %c0_i32_0 = arith.constant 0 : i32
    return %arg0, %c0_i32 : i32, i32
  }
  func.func @transform_1(%arg0: i32) -> (i32, i32) {
    %c0_i32 = arith.constant 0 : i32
    %c0_i32_0 = arith.constant 0 : i32
    %c0_i32_1 = arith.constant 0 : i32
    return %c0_i32, %c0_i32_0 : i32, i32
  }
  func.func @transform_2(%arg0: i32) -> (i32, i32) {
    %c0_i32 = arith.constant 0 : i32
    %c0_i32_0 = arith.constant 0 : i32
    %c0_i32_1 = arith.constant 0 : i32
    return %c0_i32, %c0_i32_0 : i32, i32
  }
  func.func @transform_3(%arg0: i32) -> (i32, i32) {
    %c0_i32 = arith.constant 0 : i32
    %c0_i32_0 = arith.constant 0 : i32
    return %arg0, %c0_i32 : i32, i32
  }
}

module attributes {stable_mosaic.version = 11 : i64} {
  func.func @_mm_bias_act_kernel(%arg0: i32, %arg1: memref<32x2048xbf16, #tpu.memory_space<vmem>>, %arg2: memref<2048x128xbf16, #tpu.memory_space<vmem>>, %arg3: memref<1x128xf32, #tpu.memory_space<vmem>>, %arg4: memref<32x128xbf16, #tpu.memory_space<vmem>>) attributes {dimension_semantics = [#tpu.dimension_semantics<parallel>], iteration_bounds = array<i64: 1>, scalar_prefetch = 0 : i64, scratch_operands = 0 : i64, tpu.core_type = #tpu.core_type<tc>, window_params = [{transform_indices = @transform_0, window_bounds = array<i64: 32, 2048>}, {pipeline_mode = #tpu.pipeline_mode<synchronous>, transform_indices = @transform_1, window_bounds = array<i64: 2048, 128>}, {pipeline_mode = #tpu.pipeline_mode<synchronous>, transform_indices = @transform_2, window_bounds = array<i64: 1, 128>}, {transform_indices = @transform_3, window_bounds = array<i64: 32, 128>}]} {
    %c0 = arith.constant 0 : index
    %c0_0 = arith.constant 0 : index
    %0 = vector.load %arg1[%c0, %c0_0] : memref<32x2048xbf16, #tpu.memory_space<vmem>>, vector<32x2048xbf16>
    %c0_1 = arith.constant 0 : index
    %c0_2 = arith.constant 0 : index
    %1 = vector.load %arg2[%c0_1, %c0_2] : memref<2048x128xbf16, #tpu.memory_space<vmem>>, vector<2048x128xbf16>
    %cst = arith.constant dense<0.000000e+00> : vector<32x128xf32>
    %2 = tpu.matmul %0, %1, %cst {dimension_numbers = #tpu.dot_dimension_numbers<[1], [0], [0], [1], [0, 0, 1, 1], [], []>} : vector<32x2048xbf16>, vector<2048x128xbf16>, vector<32x128xf32> -> vector<32x128xf32>
    %c0_3 = arith.constant 0 : index
    %c0_4 = arith.constant 0 : index
    %3 = vector.load %arg3[%c0_3, %c0_4] : memref<1x128xf32, #tpu.memory_space<vmem>>, vector<1x128xf32>
    %4 = vector.broadcast %3 : vector<1x128xf32> to vector<32x128xf32>
    %5 = arith.addf %2, %4 : vector<32x128xf32>
    %cst_5 = arith.constant 0.000000e+00 : f32
    %6 = vector.broadcast %cst_5 : f32 to vector<32x128xf32>
    %7 = arith.cmpf oge, %5, %6 : vector<32x128xf32>
    %cst_6 = arith.constant 2.000000e-01 : f32
    %8 = vector.broadcast %cst_6 : f32 to vector<32x128xf32>
    %9 = arith.mulf %8, %5 : vector<32x128xf32>
    %10 = arith.select %7, %5, %9 : vector<32x128xi1>, vector<32x128xf32>
    %11 = arith.truncf %10 : vector<32x128xf32> to vector<32x128xbf16>
    %c0_7 = arith.constant 0 : index
    %c0_8 = arith.constant 0 : index
    %12 = vector.load %arg4[%c0_7, %c0_8] : memref<32x128xbf16, #tpu.memory_space<vmem>>, vector<32x128xbf16>
    tpu.vector_store %arg4[%c0_7, %c0_8], %11 {strides = array<i32>} : memref<32x128xbf16, #tpu.memory_space<vmem>>, vector<32x128xbf16>,
    return
  }
  func.func @transform_0(%arg0: i32) -> (i32, i32) {
    %c0_i32 = arith.constant 0 : i32
    %c0_i32_0 = arith.constant 0 : i32
    return %arg0, %c0_i32 : i32, i32
  }
  func.func @transform_1(%arg0: i32) -> (i32, i32) {
    %c0_i32 = arith.constant 0 : i32
    %c0_i32_0 = arith.constant 0 : i32
    %c0_i32_1 = arith.constant 0 : i32
    return %c0_i32, %c0_i32_0 : i32, i32
  }
  func.func @transform_2(%arg0: i32) -> (i32, i32) {
    %c0_i32 = arith.constant 0 : i32
    %c0_i32_0 = arith.constant 0 : i32
    %c0_i32_1 = arith.constant 0 : i32
    return %c0_i32, %c0_i32_0 : i32, i32
  }
  func.func @transform_3(%arg0: i32) -> (i32, i32) {
    %c0_i32 = arith.constant 0 : i32
    %c0_i32_0 = arith.constant 0 : i32
    return %arg0, %c0_i32 : i32, i32
  }
}

module attributes {stable_mosaic.version = 11 : i64} {
  func.func @_tail_kernel(%arg0: i32, %arg1: memref<2x256xbf16, #tpu.memory_space<vmem>>, %arg2: memref<2x16xbf16, #tpu.memory_space<vmem>>, %arg3: memref<16x256xbf16, #tpu.memory_space<vmem>>, %arg4: memref<1x256xf32, #tpu.memory_space<vmem>>, %arg5: memref<256x256xbf16, #tpu.memory_space<vmem>>, %arg6: memref<1x256xf32, #tpu.memory_space<vmem>>, %arg7: memref<256x1024xbf16, #tpu.memory_space<vmem>>, %arg8: memref<256x1024xbf16, #tpu.memory_space<vmem>>, %arg9: memref<1x1024xf32, #tpu.memory_space<vmem>>, %arg10: memref<1024x1024xbf16, #tpu.memory_space<vmem>>, %arg11: memref<1x1024xf32, #tpu.memory_space<vmem>>, %arg12: memref<1024x1xbf16, #tpu.memory_space<vmem>>, %arg13: memref<1x1xf32, #tpu.memory_space<vmem>>, %arg14: memref<2x1xf32, #tpu.memory_space<vmem>>) attributes {dimension_semantics = [#tpu.dimension_semantics<parallel>], iteration_bounds = array<i64: 1>, scalar_prefetch = 0 : i64, scratch_operands = 0 : i64, tpu.core_type = #tpu.core_type<tc>, window_params = [{transform_indices = @transform_0, window_bounds = array<i64: 2, 256>}, {transform_indices = @transform_1, window_bounds = array<i64: 2, 16>}, {pipeline_mode = #tpu.pipeline_mode<synchronous>, transform_indices = @transform_2, window_bounds = array<i64: 16, 256>}, {pipeline_mode = #tpu.pipeline_mode<synchronous>, transform_indices = @transform_3, window_bounds = array<i64: 1, 256>}, {pipeline_mode = #tpu.pipeline_mode<synchronous>, transform_indices = @transform_4, window_bounds = array<i64: 256, 256>}, {pipeline_mode = #tpu.pipeline_mode<synchronous>, transform_indices = @transform_5, window_bounds = array<i64: 1, 256>}, {pipeline_mode = #tpu.pipeline_mode<synchronous>, transform_indices = @transform_6, window_bounds = array<i64: 256, 1024>}, {pipeline_mode = #tpu.pipeline_mode<synchronous>, transform_indices = @transform_7, window_bounds = array<i64: 256, 1024>}, {pipeline_mode = #tpu.pipeline_mode<synchronous>, transform_indices = @transform_8, window_bounds = array<i64: 1, 1024>}, {pipeline_mode = #tpu.pipeline_mode<synchronous>, transform_indices = @transform_9, window_bounds = array<i64: 1024, 1024>}, {pipeline_mode = #tpu.pipeline_mode<synchronous>, transform_indices = @transform_10, window_bounds = array<i64: 1, 1024>}, {pipeline_mode = #tpu.pipeline_mode<synchronous>, transform_indices = @transform_11, window_bounds = array<i64: 1024, 1>}, {pipeline_mode = #tpu.pipeline_mode<synchronous>, transform_indices = @transform_12, window_bounds = array<i64: 1, 1>}, {transform_indices = @transform_13, window_bounds = array<i64: 2, 1>}]} {
    %c0 = arith.constant 0 : index
    %c0_0 = arith.constant 0 : index
    %0 = vector.load %arg2[%c0, %c0_0] : memref<2x16xbf16, #tpu.memory_space<vmem>>, vector<2x16xbf16>
    %c0_1 = arith.constant 0 : index
    %c0_2 = arith.constant 0 : index
    %1 = vector.load %arg3[%c0_1, %c0_2] : memref<16x256xbf16, #tpu.memory_space<vmem>>, vector<16x256xbf16>
    %cst = arith.constant dense<0.000000e+00> : vector<2x256xf32>
    %2 = tpu.matmul %0, %1, %cst {dimension_numbers = #tpu.dot_dimension_numbers<[1], [0], [0], [1], [0, 0, 1, 1], [], []>} : vector<2x16xbf16>, vector<16x256xbf16>, vector<2x256xf32> -> vector<2x256xf32>
    %c0_3 = arith.constant 0 : index
    %c0_4 = arith.constant 0 : index
    %3 = vector.load %arg4[%c0_3, %c0_4] : memref<1x256xf32, #tpu.memory_space<vmem>>, vector<1x256xf32>
    %4 = vector.broadcast %3 : vector<1x256xf32> to vector<2x256xf32>
    %5 = arith.addf %2, %4 : vector<2x256xf32>
    %cst_5 = arith.constant 0.000000e+00 : f32
    %6 = vector.broadcast %cst_5 : f32 to vector<2x256xf32>
    %7 = arith.cmpf oge, %5, %6 : vector<2x256xf32>
    %cst_6 = arith.constant 2.000000e-01 : f32
    %8 = vector.broadcast %cst_6 : f32 to vector<2x256xf32>
    %9 = arith.mulf %8, %5 : vector<2x256xf32>
    %10 = arith.select %7, %5, %9 : vector<2x256xi1>, vector<2x256xf32>
    %11 = arith.truncf %10 : vector<2x256xf32> to vector<2x256xbf16>
    %c0_7 = arith.constant 0 : index
    %c0_8 = arith.constant 0 : index
    %12 = vector.load %arg5[%c0_7, %c0_8] : memref<256x256xbf16, #tpu.memory_space<vmem>>, vector<256x256xbf16>
    %cst_9 = arith.constant dense<0.000000e+00> : vector<2x256xf32>
    %13 = tpu.matmul %11, %12, %cst_9 {dimension_numbers = #tpu.dot_dimension_numbers<[1], [0], [0], [1], [0, 0, 1, 1], [], []>} : vector<2x256xbf16>, vector<256x256xbf16>, vector<2x256xf32> -> vector<2x256xf32>
    %c0_10 = arith.constant 0 : index
    %c0_11 = arith.constant 0 : index
    %14 = vector.load %arg6[%c0_10, %c0_11] : memref<1x256xf32, #tpu.memory_space<vmem>>, vector<1x256xf32>
    %15 = vector.broadcast %14 : vector<1x256xf32> to vector<2x256xf32>
    %16 = arith.addf %13, %15 : vector<2x256xf32>
    %cst_12 = arith.constant 0.000000e+00 : f32
    %17 = vector.broadcast %cst_12 : f32 to vector<2x256xf32>
    %18 = arith.cmpf oge, %16, %17 : vector<2x256xf32>
    %cst_13 = arith.constant 2.000000e-01 : f32
    %19 = vector.broadcast %cst_13 : f32 to vector<2x256xf32>
    %20 = arith.mulf %19, %16 : vector<2x256xf32>
    %21 = arith.select %18, %16, %20 : vector<2x256xi1>, vector<2x256xf32>
    %c0_14 = arith.constant 0 : index
    %c0_15 = arith.constant 0 : index
    %22 = vector.load %arg1[%c0_14, %c0_15] : memref<2x256xbf16, #tpu.memory_space<vmem>>, vector<2x256xbf16>
    %c0_16 = arith.constant 0 : index
    %c0_17 = arith.constant 0 : index
    %23 = vector.load %arg7[%c0_16, %c0_17] : memref<256x1024xbf16, #tpu.memory_space<vmem>>, vector<256x1024xbf16>
    %cst_18 = arith.constant dense<0.000000e+00> : vector<2x1024xf32>
    %24 = tpu.matmul %22, %23, %cst_18 {dimension_numbers = #tpu.dot_dimension_numbers<[1], [0], [0], [1], [0, 0, 1, 1], [], []>} : vector<2x256xbf16>, vector<256x1024xbf16>, vector<2x1024xf32> -> vector<2x1024xf32>
    %25 = arith.truncf %21 : vector<2x256xf32> to vector<2x256xbf16>
    %c0_19 = arith.constant 0 : index
    %c0_20 = arith.constant 0 : index
    %26 = vector.load %arg8[%c0_19, %c0_20] : memref<256x1024xbf16, #tpu.memory_space<vmem>>, vector<256x1024xbf16>
    %cst_21 = arith.constant dense<0.000000e+00> : vector<2x1024xf32>
    %27 = tpu.matmul %25, %26, %cst_21 {dimension_numbers = #tpu.dot_dimension_numbers<[1], [0], [0], [1], [0, 0, 1, 1], [], []>} : vector<2x256xbf16>, vector<256x1024xbf16>, vector<2x1024xf32> -> vector<2x1024xf32>
    %28 = arith.addf %24, %27 : vector<2x1024xf32>
    %c0_22 = arith.constant 0 : index
    %c0_23 = arith.constant 0 : index
    %29 = vector.load %arg9[%c0_22, %c0_23] : memref<1x1024xf32, #tpu.memory_space<vmem>>, vector<1x1024xf32>
    %30 = vector.broadcast %29 : vector<1x1024xf32> to vector<2x1024xf32>
    %31 = arith.addf %28, %30 : vector<2x1024xf32>
    %cst_24 = arith.constant 0.000000e+00 : f32
    %32 = vector.broadcast %cst_24 : f32 to vector<2x1024xf32>
    %33 = arith.cmpf oge, %31, %32 : vector<2x1024xf32>
    %cst_25 = arith.constant 2.000000e-01 : f32
    %34 = vector.broadcast %cst_25 : f32 to vector<2x1024xf32>
    %35 = arith.mulf %34, %31 : vector<2x1024xf32>
    %36 = arith.select %33, %31, %35 : vector<2x1024xi1>, vector<2x1024xf32>
    %37 = arith.truncf %36 : vector<2x1024xf32> to vector<2x1024xbf16>
    %c0_26 = arith.constant 0 : index
    %c0_27 = arith.constant 0 : index
    %38 = vector.load %arg10[%c0_26, %c0_27] : memref<1024x1024xbf16, #tpu.memory_space<vmem>>, vector<1024x1024xbf16>
    %cst_28 = arith.constant dense<0.000000e+00> : vector<2x1024xf32>
    %39 = tpu.matmul %37, %38, %cst_28 {dimension_numbers = #tpu.dot_dimension_numbers<[1], [0], [0], [1], [0, 0, 1, 1], [], []>} : vector<2x1024xbf16>, vector<1024x1024xbf16>, vector<2x1024xf32> -> vector<2x1024xf32>
    %c0_29 = arith.constant 0 : index
    %c0_30 = arith.constant 0 : index
    %40 = vector.load %arg11[%c0_29, %c0_30] : memref<1x1024xf32, #tpu.memory_space<vmem>>, vector<1x1024xf32>
    %41 = vector.broadcast %40 : vector<1x1024xf32> to vector<2x1024xf32>
    %42 = arith.addf %39, %41 : vector<2x1024xf32>
    %cst_31 = arith.constant 0.000000e+00 : f32
    %43 = vector.broadcast %cst_31 : f32 to vector<2x1024xf32>
    %44 = arith.cmpf oge, %42, %43 : vector<2x1024xf32>
    %cst_32 = arith.constant 2.000000e-01 : f32
    %45 = vector.broadcast %cst_32 : f32 to vector<2x1024xf32>
    %46 = arith.mulf %45, %42 : vector<2x1024xf32>
    %47 = arith.select %44, %42, %46 : vector<2x1024xi1>, vector<2x1024xf32>
    %48 = arith.truncf %47 : vector<2x1024xf32> to vector<2x1024xbf16>
    %c0_33 = arith.constant 0 : index
    %c0_34 = arith.constant 0 : index
    %49 = vector.load %arg12[%c0_33, %c0_34] : memref<1024x1xbf16, #tpu.memory_space<vmem>>, vector<1024x1xbf16>
    %cst_35 = arith.constant dense<0.000000e+00> : vector<2x1xf32>
    %50 = tpu.matmul %48, %49, %cst_35 {dimension_numbers = #tpu.dot_dimension_numbers<[1], [0], [0], [1], [0, 0, 1, 1], [], []>} : vector<2x1024xbf16>, vector<1024x1xbf16>, vector<2x1xf32> -> vector<2x1xf32>
    %c0_36 = arith.constant 0 : index
    %c0_37 = arith.constant 0 : index
    %51 = vector.load %arg13[%c0_36, %c0_37] : memref<1x1xf32, #tpu.memory_space<vmem>>, vector<1x1xf32>
    %52 = vector.broadcast %51 : vector<1x1xf32> to vector<2x1xf32>
    %53 = arith.addf %50, %52 : vector<2x1xf32>
    %c0_38 = arith.constant 0 : index
    %c0_39 = arith.constant 0 : index
    %54 = vector.load %arg14[%c0_38, %c0_39] : memref<2x1xf32, #tpu.memory_space<vmem>>, vector<2x1xf32>
    tpu.vector_store %arg14[%c0_38, %c0_39], %53 {strides = array<i32>} : memref<2x1xf32, #tpu.memory_space<vmem>>, vector<2x1xf32>,
    return
  }
  func.func @transform_0(%arg0: i32) -> (i32, i32) {
    %c0_i32 = arith.constant 0 : i32
    %c0_i32_0 = arith.constant 0 : i32
    return %arg0, %c0_i32 : i32, i32
  }
  func.func @transform_1(%arg0: i32) -> (i32, i32) {
    %c0_i32 = arith.constant 0 : i32
    %c0_i32_0 = arith.constant 0 : i32
    return %arg0, %c0_i32 : i32, i32
  }
  func.func @transform_2(%arg0: i32) -> (i32, i32) {
    %c0_i32 = arith.constant 0 : i32
    %c0_i32_0 = arith.constant 0 : i32
    %c0_i32_1 = arith.constant 0 : i32
    return %c0_i32, %c0_i32_0 : i32, i32
  }
  func.func @transform_3(%arg0: i32) -> (i32, i32) {
    %c0_i32 = arith.constant 0 : i32
    %c0_i32_0 = arith.constant 0 : i32
    %c0_i32_1 = arith.constant 0 : i32
    return %c0_i32, %c0_i32_0 : i32, i32
  }
  func.func @transform_4(%arg0: i32) -> (i32, i32) {
    %c0_i32 = arith.constant 0 : i32
    %c0_i32_0 = arith.constant 0 : i32
    %c0_i32_1 = arith.constant 0 : i32
    return %c0_i32, %c0_i32_0 : i32, i32
  }
  func.func @transform_5(%arg0: i32) -> (i32, i32) {
    %c0_i32 = arith.constant 0 : i32
    %c0_i32_0 = arith.constant 0 : i32
    %c0_i32_1 = arith.constant 0 : i32
    return %c0_i32, %c0_i32_0 : i32, i32
  }
  func.func @transform_6(%arg0: i32) -> (i32, i32) {
    %c0_i32 = arith.constant 0 : i32
    %c0_i32_0 = arith.constant 0 : i32
    %c0_i32_1 = arith.constant 0 : i32
    return %c0_i32, %c0_i32_0 : i32, i32
  }
  func.func @transform_7(%arg0: i32) -> (i32, i32) {
    %c0_i32 = arith.constant 0 : i32
    %c0_i32_0 = arith.constant 0 : i32
    %c0_i32_1 = arith.constant 0 : i32
    return %c0_i32, %c0_i32_0 : i32, i32
  }
  func.func @transform_8(%arg0: i32) -> (i32, i32) {
    %c0_i32 = arith.constant 0 : i32
    %c0_i32_0 = arith.constant 0 : i32
    %c0_i32_1 = arith.constant 0 : i32
    return %c0_i32, %c0_i32_0 : i32, i32
  }
  func.func @transform_9(%arg0: i32) -> (i32, i32) {
    %c0_i32 = arith.constant 0 : i32
    %c0_i32_0 = arith.constant 0 : i32
    %c0_i32_1 = arith.constant 0 : i32
    return %c0_i32, %c0_i32_0 : i32, i32
  }
  func.func @transform_10(%arg0: i32) -> (i32, i32) {
    %c0_i32 = arith.constant 0 : i32
    %c0_i32_0 = arith.constant 0 : i32
    %c0_i32_1 = arith.constant 0 : i32
    return %c0_i32, %c0_i32_0 : i32, i32
  }
  func.func @transform_11(%arg0: i32) -> (i32, i32) {
    %c0_i32 = arith.constant 0 : i32
    %c0_i32_0 = arith.constant 0 : i32
    %c0_i32_1 = arith.constant 0 : i32
    return %c0_i32, %c0_i32_0 : i32, i32
  }
  func.func @transform_12(%arg0: i32) -> (i32, i32) {
    %c0_i32 = arith.constant 0 : i32
    %c0_i32_0 = arith.constant 0 : i32
    %c0_i32_1 = arith.constant 0 : i32
    return %c0_i32, %c0_i32_0 : i32, i32
  }
  func.func @transform_13(%arg0: i32) -> (i32, i32) {
    %c0_i32 = arith.constant 0 : i32
    %c0_i32_0 = arith.constant 0 : i32
    return %arg0, %c0_i32 : i32, i32
  }
}

module attributes {stable_mosaic.version = 11 : i64} {
  func.func @_mm_bias_act_kernel(%arg0: i32, %arg1: memref<2x2048xbf16, #tpu.memory_space<vmem>>, %arg2: memref<2048x256xbf16, #tpu.memory_space<vmem>>, %arg3: memref<1x256xf32, #tpu.memory_space<vmem>>, %arg4: memref<2x256xbf16, #tpu.memory_space<vmem>>) attributes {dimension_semantics = [#tpu.dimension_semantics<parallel>], iteration_bounds = array<i64: 1>, scalar_prefetch = 0 : i64, scratch_operands = 0 : i64, tpu.core_type = #tpu.core_type<tc>, window_params = [{transform_indices = @transform_0, window_bounds = array<i64: 2, 2048>}, {pipeline_mode = #tpu.pipeline_mode<synchronous>, transform_indices = @transform_1, window_bounds = array<i64: 2048, 256>}, {pipeline_mode = #tpu.pipeline_mode<synchronous>, transform_indices = @transform_2, window_bounds = array<i64: 1, 256>}, {transform_indices = @transform_3, window_bounds = array<i64: 2, 256>}]} {
    %c0 = arith.constant 0 : index
    %c0_0 = arith.constant 0 : index
    %0 = vector.load %arg1[%c0, %c0_0] : memref<2x2048xbf16, #tpu.memory_space<vmem>>, vector<2x2048xbf16>
    %c0_1 = arith.constant 0 : index
    %c0_2 = arith.constant 0 : index
    %1 = vector.load %arg2[%c0_1, %c0_2] : memref<2048x256xbf16, #tpu.memory_space<vmem>>, vector<2048x256xbf16>
    %cst = arith.constant dense<0.000000e+00> : vector<2x256xf32>
    %2 = tpu.matmul %0, %1, %cst {dimension_numbers = #tpu.dot_dimension_numbers<[1], [0], [0], [1], [0, 0, 1, 1], [], []>} : vector<2x2048xbf16>, vector<2048x256xbf16>, vector<2x256xf32> -> vector<2x256xf32>
    %c0_3 = arith.constant 0 : index
    %c0_4 = arith.constant 0 : index
    %3 = vector.load %arg3[%c0_3, %c0_4] : memref<1x256xf32, #tpu.memory_space<vmem>>, vector<1x256xf32>
    %4 = vector.broadcast %3 : vector<1x256xf32> to vector<2x256xf32>
    %5 = arith.addf %2, %4 : vector<2x256xf32>
    %cst_5 = arith.constant 0.000000e+00 : f32
    %6 = vector.broadcast %cst_5 : f32 to vector<2x256xf32>
    %7 = arith.cmpf oge, %5, %6 : vector<2x256xf32>
    %cst_6 = arith.constant 2.000000e-01 : f32
    %8 = vector.broadcast %cst_6 : f32 to vector<2x256xf32>
    %9 = arith.mulf %8, %5 : vector<2x256xf32>
    %10 = arith.select %7, %5, %9 : vector<2x256xi1>, vector<2x256xf32>
    %11 = arith.truncf %10 : vector<2x256xf32> to vector<2x256xbf16>
    %c0_7 = arith.constant 0 : index
    %c0_8 = arith.constant 0 : index
    %12 = vector.load %arg4[%c0_7, %c0_8] : memref<2x256xbf16, #tpu.memory_space<vmem>>, vector<2x256xbf16>
    tpu.vector_store %arg4[%c0_7, %c0_8], %11 {strides = array<i32>} : memref<2x256xbf16, #tpu.memory_space<vmem>>, vector<2x256xbf16>,
    return
  }
  func.func @transform_0(%arg0: i32) -> (i32, i32) {
    %c0_i32 = arith.constant 0 : i32
    %c0_i32_0 = arith.constant 0 : i32
    return %arg0, %c0_i32 : i32, i32
  }
  func.func @transform_1(%arg0: i32) -> (i32, i32) {
    %c0_i32 = arith.constant 0 : i32
    %c0_i32_0 = arith.constant 0 : i32
    %c0_i32_1 = arith.constant 0 : i32
    return %c0_i32, %c0_i32_0 : i32, i32
  }
  func.func @transform_2(%arg0: i32) -> (i32, i32) {
    %c0_i32 = arith.constant 0 : i32
    %c0_i32_0 = arith.constant 0 : i32
    %c0_i32_1 = arith.constant 0 : i32
    return %c0_i32, %c0_i32_0 : i32, i32
  }
  func.func @transform_3(%arg0: i32) -> (i32, i32) {
    %c0_i32 = arith.constant 0 : i32
    %c0_i32_0 = arith.constant 0 : i32
    return %arg0, %c0_i32 : i32, i32
  }
}

</mosaic_0001>

<llo_original>
// kernel: xz_discriminator_forward.5
$region0: #{xz_discriminator_forward.5}
  #allocation0 [shape = 'u32[]', space=smem, size = 0x4, offset = 0x4, fixed_abs, tag = 'smem constant byte address 0x4 - core index']
  #allocation1 [shape = 'u32[144,128]{1,0:T(1,128)}', space=vmem, size = 0x12000, scoped, tag = 'internal scratch']
  %s0 = inlined_call_operand.vmem [shape: bf16[512,128], index: 0, kind: input, shape index: {}]
  %s1 = inlined_call_operand.vmem [shape: bf16[128,128], index: 1, kind: input, shape index: {}]
  %s2 = inlined_call_operand.vmem [shape: f32[1,128], index: 2, kind: input, shape index: {}]
  %s3 = inlined_call_operand.vmem [shape: bf16[512,128], index: 3, kind: output, shape index: {}]
  %s4 = sld [smem:[#allocation0]]
  $region22: #{xz_discriminator_forward.5} parent=0
    _
  %s6 = ssub.s32 1, %s4
  %s7 = scalar_select 0, %s6, %s4
  // Predicated region
  $region2: #{xz_discriminator_forward.5} parent=0 // pred_check
    _
  $region3: #{xz_discriminator_forward.5} parent=0 // pred_check_branch
    %9 = sbr.rel (0) target = $region5
  $region4: #{xz_discriminator_forward.5} parent=0 // pred_region
    _
  $region5: #{xz_discriminator_forward.5} parent=0 // pred_fallthru
    _
  // Predicated region
  $region6: #{xz_discriminator_forward.5} parent=0 // pred_check
    _
  $region7: #{xz_discriminator_forward.5} parent=0 // pred_check_branch
    %11 = sbr.rel (0) target = $region9
  $region8: #{xz_discriminator_forward.5} parent=0 // pred_region
    _
  $region9: #{xz_discriminator_forward.5} parent=0 // pred_fallthru
    _
  // Predicated region
  $region10: #{xz_discriminator_forward.5} parent=0 // pred_check
    _
  $region11: #{xz_discriminator_forward.5} parent=0 // pred_check_branch
    %13 = sbr.rel (0) target = $region13
  $region12: #{xz_discriminator_forward.5} parent=0 // pred_region
    _
  $region13: #{xz_discriminator_forward.5} parent=0 // pred_fallthru
    _
  %v15 = vld [vmem:[%s0] sm:$0xf]
  %v16 = vld [vmem:[%s0 + $0x4] sm:$0xf]
  %v17 = vld [vmem:[%s0 + $0x8] sm:$0xf]
  %v18 = vld [vmem:[%s0 + $0xc] sm:$0xf]
  %v19 = vld [vmem:[%s0 + $0x10] sm:$0xf]
  %v20 = vld [vmem:[%s0 + $0x14] sm:$0xf]
  %v21 = vld [vmem:[%s0 + $0x18] sm:$0xf]
  %v22 = vld [vmem:[%s0 + $0x1c] sm:$0xf]
  %v23 = vld [vmem:[%s0 + $0x20] sm:$0xf]
  %v24 = vld [vmem:[%s0 + $0x24] sm:$0xf]
  %v25 = vld [vmem:[%s0 + $0x28] sm:$0xf]
  %v26 = vld [vmem:[%s0 + $0x2c] sm:$0xf]
  %v27 = vld [vmem:[%s0 + $0x30] sm:$0xf]
  %v28 = vld [vmem:[%s0 + $0x34] sm:$0xf]
  %v29 = vld [vmem:[%s0 + $0x38] sm:$0xf]
  %v30 = vld [vmem:[%s0 + $0x3c] sm:$0xf]
  %v31 = vld [vmem:[%s0 + $0x40] sm:$0xf]
  %v32 = vld [vmem:[%s0 + $0x44] sm:$0xf]
  %v33 = vld [vmem:[%s0 + $0x48] sm:$0xf]
  %v34 = vld [vmem:[%s0 + $0x4c] sm:$0xf]
  %v35 = vld [vmem:[%s0 + $0x50] sm:$0xf]
  %v36 = vld [vmem:[%s0 + $0x54] sm:$0xf]
  %v37 = vld [vmem:[%s0 + $0x58] sm:$0xf]
  %v38 = vld [vmem:[%s0 + $0x5c] sm:$0xf]
  %v39 = vld [vmem:[%s0 + $0x60] sm:$0xf]
  %v40 = vld [vmem:[%s0 + $0x64] sm:$0xf]
  %v41 = vld [vmem:[%s0 + $0x68] sm:$0xf]
  %v42 = vld [vmem:[%s0 + $0x6c] sm:$0xf]
  %v43 = vld [vmem:[%s0 + $0x70] sm:$0xf]
  %v44 = vld [vmem:[%s0 + $0x74] sm:$0xf]
  %v45 = vld [vmem:[%s0 + $0x78] sm:$0xf]
  %v46 = vld [vmem:[%s0 + $0x7c] sm:$0xf]
  %v47 = vld [vmem:[%s0 + $0x80] sm:$0xf]
  %v48 = vld [vmem:[%s0 + $0x84] sm:$0xf]
  %v49 = vld [vmem:[%s0 + $0x88] sm:$0xf]
  %v50 = vld [vmem:[%s0 + $0x8c] sm:$0xf]
  %v51 = vld [vmem:[%s0 + $0x90] sm:$0xf]
  %v52 = vld [vmem:[%s0 + $0x94] sm:$0xf]
  %v53 = vld [vmem:[%s0 + $0x98] sm:$0xf]
  %v54 = vld [vmem:[%s0 + $0x9c] sm:$0xf]
  %v55 = vld [vmem:[%s0 + $0xa0] sm:$0xf]
  %v56 = vld [vmem:[%s0 + $0xa4] sm:$0xf]
  %v57 = vld [vmem:[%s0 + $0xa8] sm:$0xf]
  %v58 = vld [vmem:[%s0 + $0xac] sm:$0xf]
  %v59 = vld [vmem:[%s0 + $0xb0] sm:$0xf]
  %v60 = vld [vmem:[%s0 + $0xb4] sm:$0xf]
  %v61 = vld [vmem:[%s0 + $0xb8] sm:$0xf]
  %v62 = vld [vmem:[%s0 + $0xbc] sm:$0xf]
  %v63 = vld [vmem:[%s0 + $0xc0] sm:$0xf]
  %v64 = vld [vmem:[%s0 + $0xc4] sm:$0xf]
  %v65 = vld [vmem:[%s0 + $0xc8] sm:$0xf]
  %v66 = vld [vmem:[%s0 + $0xcc] sm:$0xf]
  %v67 = vld [vmem:[%s0 + $0xd0] sm:$0xf]
  %v68 = vld [vmem:[%s0 + $0xd4] sm:$0xf]
  %v69 = vld [vmem:[%s0 + $0xd8] sm:$0xf]
  %v70 = vld [vmem:[%s0 + $0xdc] sm:$0xf]
  %v71 = vld [vmem:[%s0 + $0xe0] sm:$0xf]
  %v72 = vld [vmem:[%s0 + $0xe4] sm:$0xf]
  %v73 = vld [vmem:[%s0 + $0xe8] sm:$0xf]
  %v74 = vld [vmem:[%s0 + $0xec] sm:$0xf]
  %v75 = vld [vmem:[%s0 + $0xf0] sm:$0xf]
  %v76 = vld [vmem:[%s0 + $0xf4] sm:$0xf]
  %v77 = vld [vmem:[%s0 + $0xf8] sm:$0xf]
  %v78 = vld [vmem:[%s0 + $0xfc] sm:$0xf]
  %v79 = vld [vmem:[%s1] sm:$0xf]
  %v80 = vld [vmem:[%s1 + $0x4] sm:$0xf]
  %v81 = vld [vmem:[%s1 + $0x8] sm:$0xf]
  %v82 = vld [vmem:[%s1 + $0xc] sm:$0xf]
  %v83 = vld [vmem:[%s1 + $0x10] sm:$0xf]
  %v84 = vld [vmem:[%s1 + $0x14] sm:$0xf]
  %v85 = vld [vmem:[%s1 + $0x18] sm:$0xf]
  %v86 = vld [vmem:[%s1 + $0x1c] sm:$0xf]
  %v87 = vld [vmem:[%s1 + $0x20] sm:$0xf]
  %v88 = vld [vmem:[%s1 + $0x24] sm:$0xf]
  %v89 = vld [vmem:[%s1 + $0x28] sm:$0xf]
  %v90 = vld [vmem:[%s1 + $0x2c] sm:$0xf]
  %v91 = vld [vmem:[%s1 + $0x30] sm:$0xf]
  %v92 = vld [vmem:[%s1 + $0x34] sm:$0xf]
  %v93 = vld [vmem:[%s1 + $0x38] sm:$0xf]
  %v94 = vld [vmem:[%s1 + $0x3c] sm:$0xf]
  %v95 = vld [vmem:[%s2] sm:$0x1]
  %v97 = vlaneseq
  %v98 = vshrl.u32 %v97, 7
  %v99 = vsub.s32 0, %v98
  %v100 = vrot.slane %v95, %v99
  %v166 = vunpack.c.l.b16 %v15
  %v167 = vunpack.c.l.b16 %v16
  %v168 = vunpack.c.l.b16 %v17
  %v169 = vunpack.c.l.b16 %v18
  %v170 = vunpack.c.l.b16 %v19
  %v171 = vunpack.c.l.b16 %v20
  %v172 = vunpack.c.l.b16 %v21
  %v173 = vunpack.c.l.b16 %v22
  %v174 = vunpack.c.l.b16 %v23
  %v175 = vunpack.c.l.b16 %v24
  %v176 = vunpack.c.l.b16 %v25
  %v177 = vunpack.c.l.b16 %v26
  %v178 = vunpack.c.l.b16 %v27
  %v179 = vunpack.c.l.b16 %v28
  %v180 = vunpack.c.l.b16 %v29
  %v181 = vunpack.c.l.b16 %v30
  %v182 = vunpack.c.l.b16 %v31
  %v183 = vunpack.c.l.b16 %v32
  %v184 = vunpack.c.l.b16 %v33
  %v185 = vunpack.c.l.b16 %v34
  %v186 = vunpack.c.l.b16 %v35
  %v187 = vunpack.c.l.b16 %v36
  %v188 = vunpack.c.l.b16 %v37
  %v189 = vunpack.c.l.b16 %v38
  %v190 = vunpack.c.l.b16 %v39
  %v191 = vunpack.c.l.b16 %v40
  %v192 = vunpack.c.l.b16 %v41
  %v193 = vunpack.c.l.b16 %v42
  %v194 = vunpack.c.l.b16 %v43
  %v195 = vunpack.c.l.b16 %v44
  %v196 = vunpack.c.l.b16 %v45
  %v197 = vunpack.c.l.b16 %v46
  %v198 = vunpack.c.l.b16 %v47
  %v199 = vunpack.c.l.b16 %v48
  %v200 = vunpack.c.l.b16 %v49
  %v201 = vunpack.c.l.b16 %v50
  %v202 = vunpack.c.l.b16 %v51
  %v203 = vunpack.c.l.b16 %v52
  %v204 = vunpack.c.l.b16 %v53
  %v205 = vunpack.c.l.b16 %v54
  %v206 = vunpack.c.l.b16 %v55
  %v207 = vunpack.c.l.b16 %v56
  %v208 = vunpack.c.l.b16 %v57
  %v209 = vunpack.c.l.b16 %v58
  %v210 = vunpack.c.l.b16 %v59
  %v211 = vunpack.c.l.b16 %v60
  %v212 = vunpack.c.l.b16 %v61
  %v213 = vunpack.c.l.b16 %v62
  %v214 = vunpack.c.l.b16 %v63
  %v215 = vunpack.c.l.b16 %v64
  %v216 = vunpack.c.l.b16 %v65
  %v217 = vunpack.c.l.b16 %v66
  %v218 = vunpack.c.l.b16 %v67
  %v219 = vunpack.c.l.b16 %v68
  %v220 = vunpack.c.l.b16 %v69
  %v221 = vunpack.c.l.b16 %v70
  %v222 = vunpack.c.l.b16 %v71
  %v223 = vunpack.c.l.b16 %v72
  %v224 = vunpack.c.l.b16 %v73
  %v225 = vunpack.c.l.b16 %v74
  %v226 = vunpack.c.l.b16 %v75
  %v227 = vunpack.c.l.b16 %v76
  %v228 = vunpack.c.l.b16 %v77
  %v229 = vunpack.c.l.b16 %v78
  %v230 = vpack.c.b16 %v167, %v166
  %v231 = vpack.c.b16 %v169, %v168
  %v232 = vpack.c.b16 %v171, %v170
  %v233 = vpack.c.b16 %v173, %v172
  %v234 = vpack.c.b16 %v175, %v174
  %v235 = vpack.c.b16 %v177, %v176
  %v236 = vpack.c.b16 %v179, %v178
  %v237 = vpack.c.b16 %v181, %v180
  %v238 = vpack.c.b16 %v183, %v182
  %v239 = vpack.c.b16 %v185, %v184
  %v240 = vpack.c.b16 %v187, %v186
  %v241 = vpack.c.b16 %v189, %v188
  %v242 = vpack.c.b16 %v191, %v190
  %v243 = vpack.c.b16 %v193, %v192
  %v244 = vpack.c.b16 %v195, %v194
  %v245 = vpack.c.b16 %v197, %v196
  %v246 = vpack.c.b16 %v199, %v198
  %v247 = vpack.c.b16 %v201, %v200
  %v248 = vpack.c.b16 %v203, %v202
  %v249 = vpack.c.b16 %v205, %v204
  %v250 = vpack.c.b16 %v207, %v206
  %v251 = vpack.c.b16 %v209, %v208
  %v252 = vpack.c.b16 %v211, %v210
  %v253 = vpack.c.b16 %v213, %v212
  %v254 = vpack.c.b16 %v215, %v214
  %v255 = vpack.c.b16 %v217, %v216
  %v256 = vpack.c.b16 %v219, %v218
  %v257 = vpack.c.b16 %v221, %v220
  %v258 = vpack.c.b16 %v223, %v222
  %v259 = vpack.c.b16 %v225, %v224
  %v260 = vpack.c.b16 %v227, %v226
  %v261 = vpack.c.b16 %v229, %v228
  %v310 = vunpack.c.l.b16 %v79
  %v311 = vunpack.c.l.b16 %v80
  %v312 = vunpack.c.l.b16 %v81
  %v313 = vunpack.c.l.b16 %v82
  %v314 = vunpack.c.l.b16 %v83
  %v315 = vunpack.c.l.b16 %v84
  %v316 = vunpack.c.l.b16 %v85
  %v317 = vunpack.c.l.b16 %v86
  %v318 = vunpack.c.l.b16 %v87
  %v319 = vunpack.c.l.b16 %v88
  %v320 = vunpack.c.l.b16 %v89
  %v321 = vunpack.c.l.b16 %v90
  %v322 = vunpack.c.l.b16 %v91
  %v323 = vunpack.c.l.b16 %v92
  %v324 = vunpack.c.l.b16 %v93
  %v325 = vunpack.c.l.b16 %v94
  %v326 = vpack.c.b16 %v311, %v310
  %v327 = vpack.c.b16 %v313, %v312
  %v328 = vpack.c.b16 %v315, %v314
  %v329 = vpack.c.b16 %v317, %v316
  %v330 = vpack.c.b16 %v319, %v318
  %v331 = vpack.c.b16 %v321, %v320
  %v332 = vpack.c.b16 %v323, %v322
  %v333 = vpack.c.b16 %v325, %v324
  %342 = vmatprep.subr.bf16.mxu0 0
  %343 = vmatpush1.bf16.msra.mxu0 %v326
  %344 = vmatprep.subr.bf16.mxu0 0
  %345 = vmatpush1.bf16.msra.mxu0 %v327
  %346 = vmatprep.subr.bf16.mxu0 0
  %347 = vmatpush1.bf16.msra.mxu0 %v328
  %348 = vmatprep.subr.bf16.mxu0 0
  %349 = vmatpush1.bf16.msra.mxu0 %v329
  %350 = vmatprep.subr.bf16.mxu0 0
  %351 = vmatpush1.bf16.msra.mxu0 %v330
  %352 = vmatprep.subr.bf16.mxu0 0
  %353 = vmatpush1.bf16.msra.mxu0 %v331
  %354 = vmatprep.subr.bf16.mxu0 0
  %355 = vmatpush1.bf16.msra.mxu0 %v332
  %356 = vmatprep.subr.bf16.mxu0 0
  %357 = vmatpush1.bf16.msra.mxu0 %v333
  %358 = vmatprep.subr.bf16.mxu0 0
  %359 = vmatpush1.bf16.msra.mxu0 0
  %360 = vmatprep.subr.bf16.mxu0 0
  %361 = vmatpush1.bf16.msra.mxu0 0
  %362 = vmatprep.subr.bf16.mxu0 0
  %363 = vmatpush1.bf16.msra.mxu0 0
  %364 = vmatprep.subr.bf16.mxu0 0
  %365 = vmatpush1.bf16.msra.mxu0 0
  %366 = vmatprep.subr.bf16.mxu0 0
  %367 = vmatpush1.bf16.msra.mxu0 0
  %368 = vmatprep.subr.bf16.mxu0 0
  %369 = vmatpush1.bf16.msra.mxu0 0
  %370 = vmatprep.subr.bf16.mxu0 0
  %371 = vmatpush1.bf16.msra.mxu0 0
  %372 = vmatprep.subr.bf16.mxu0 0
  %373 = vmatpush1.bf16.msra.mxu0 0
  %374 = vmatprep.mubr.bf16.mxu0 0
  %375 = vmatmul.mubr.bf16.gmra.mrb[0].mxu0 %v230
  %v376 = vpop.f32.mrb[0].mxu0
  %v377 = vadd.f32 %v100, %v376
  %v378 = vpop.f32.mrb[0].mxu0
  %v379 = vpop.f32.mrb[0].mxu0
  %v380 = vadd.f32 %v100, %v379
  %v381 = vpop.f32.mrb[0].mxu0
  %382 = vmatprep.mubr.bf16.mxu0 0
  %383 = vmatmul.mubr.bf16.gmra.mrb[0].mxu0 %v231
  %v384 = vpop.f32.mrb[0].mxu0
  %v385 = vadd.f32 %v100, %v384
  %v386 = vpop.f32.mrb[0].mxu0
  %v387 = vpop.f32.mrb[0].mxu0
  %v388 = vadd.f32 %v100, %v387
  %v389 = vpop.f32.mrb[0].mxu0
  %390 = vmatprep.mubr.bf16.mxu0 0
  %391 = vmatmul.mubr.bf16.gmra.mrb[0].mxu0 %v232
  %v392 = vpop.f32.mrb[0].mxu0
  %v393 = vadd.f32 %v100, %v392
  %v394 = vpop.f32.mrb[0].mxu0
  %v395 = vpop.f32.mrb[0].mxu0
  %v396 = vadd.f32 %v100, %v395
  %v397 = vpop.f32.mrb[0].mxu0
  %398 = vmatprep.mubr.bf16.mxu0 0
  %399 = vmatmul.mubr.bf16.gmra.mrb[0].mxu0 %v233
  %v400 = vpop.f32.mrb[0].mxu0
  %v401 = vadd.f32 %v100, %v400
  %v402 = vpop.f32.mrb[0].mxu0
  %v403 = vpop.f32.mrb[0].mxu0
  %v404 = vadd.f32 %v100, %v403
  %v405 = vpop.f32.mrb[0].mxu0
  %406 = vmatprep.mubr.bf16.mxu0 0
  %407 = vmatmul.mubr.bf16.gmra.mrb[0].mxu0 %v234
  %v408 = vpop.f32.mrb[0].mxu0
  %v409 = vadd.f32 %v100, %v408
  %v410 = vpop.f32.mrb[0].mxu0
  %v411 = vpop.f32.mrb[0].mxu0
  %v412 = vadd.f32 %v100, %v411
  %v413 = vpop.f32.mrb[0].mxu0
  %414 = vmatprep.mubr.bf16.mxu0 0
  %415 = vmatmul.mubr.bf16.gmra.mrb[0].mxu0 %v235
  %v416 = vpop.f32.mrb[0].mxu0
  %v417 = vadd.f32 %v100, %v416
  %v418 = vpop.f32.mrb[0].mxu0
  %v419 = vpop.f32.mrb[0].mxu0
  %v420 = vadd.f32 %v100, %v419
  %v421 = vpop.f32.mrb[0].mxu0
  %422 = vmatprep.mubr.bf16.mxu0 0
  %423 = vmatmul.mubr.bf16.gmra.mrb[0].mxu0 %v236
  %v424 = vpop.f32.mrb[0].mxu0
  %v425 = vadd.f32 %v100, %v424
  %v426 = vpop.f32.mrb[0].mxu0
  %v427 = vpop.f32.mrb[0].mxu0
  %v428 = vadd.f32 %v100, %v427
  %v429 = vpop.f32.mrb[0].mxu0
  %430 = vmatprep.mubr.bf16.mxu0 0
  %431 = vmatmul.mubr.bf16.gmra.mrb[0].mxu0 %v237
  %v432 = vpop.f32.mrb[0].mxu0
  %v433 = vadd.f32 %v100, %v432
  %v434 = vpop.f32.mrb[0].mxu0
  %v435 = vpop.f32.mrb[0].mxu0
  %v436 = vadd.f32 %v100, %v435
  %v437 = vpop.f32.mrb[0].mxu0
  %438 = vmatprep.mubr.bf16.mxu0 0
  %439 = vmatmul.mubr.bf16.gmra.mrb[0].mxu0 %v238
  %v440 = vpop.f32.mrb[0].mxu0
  %v441 = vadd.f32 %v100, %v440
  %v442 = vpop.f32.mrb[0].mxu0
  %v443 = vpop.f32.mrb[0].mxu0
  %v444 = vadd.f32 %v100, %v443
  %v445 = vpop.f32.mrb[0].mxu0
  %446 = vmatprep.mubr.bf16.mxu0 0
  %447 = vmatmul.mubr.bf16.gmra.mrb[0].mxu0 %v239
  %v448 = vpop.f32.mrb[0].mxu0
  %v449 = vadd.f32 %v100, %v448
  %v450 = vpop.f32.mrb[0].mxu0
  %v451 = vpop.f32.mrb[0].mxu0
  %v452 = vadd.f32 %v100, %v451
  %v453 = vpop.f32.mrb[0].mxu0
  %454 = vmatprep.mubr.bf16.mxu0 0
  %455 = vmatmul.mubr.bf16.gmra.mrb[0].mxu0 %v240
  %v456 = vpop.f32.mrb[0].mxu0
  %v457 = vadd.f32 %v100, %v456
  %v458 = vpop.f32.mrb[0].mxu0
  %v459 = vpop.f32.mrb[0].mxu0
  %v460 = vadd.f32 %v100, %v459
  %v461 = vpop.f32.mrb[0].mxu0
  %462 = vmatprep.mubr.bf16.mxu0 0
  %463 = vmatmul.mubr.bf16.gmra.mrb[0].mxu0 %v241
  %v464 = vpop.f32.mrb[0].mxu0
  %v465 = vadd.f32 %v100, %v464
  %v466 = vpop.f32.mrb[0].mxu0
  %v467 = vpop.f32.mrb[0].mxu0
  %v468 = vadd.f32 %v100, %v467
  %v469 = vpop.f32.mrb[0].mxu0
  %470 = vmatprep.mubr.bf16.mxu0 0
  %471 = vmatmul.mubr.bf16.gmra.mrb[0].mxu0 %v242
  %v472 = vpop.f32.mrb[0].mxu0
  %v473 = vadd.f32 %v100, %v472
  %v474 = vpop.f32.mrb[0].mxu0
  %v475 = vpop.f32.mrb[0].mxu0
  %v476 = vadd.f32 %v100, %v475
  %v477 = vpop.f32.mrb[0].mxu0
  %478 = vmatprep.mubr.bf16.mxu0 0
  %479 = vmatmul.mubr.bf16.gmra.mrb[0].mxu0 %v243
  %v480 = vpop.f32.mrb[0].mxu0
  %v481 = vadd.f32 %v100, %v480
  %v482 = vpop.f32.mrb[0].mxu0
  %v483 = vpop.f32.mrb[0].mxu0
  %v484 = vadd.f32 %v100, %v483
  %v485 = vpop.f32.mrb[0].mxu0
  %486 = vmatprep.mubr.bf16.mxu0 0
  %487 = vmatmul.mubr.bf16.gmra.mrb[0].mxu0 %v244
  %v488 = vpop.f32.mrb[0].mxu0
  %v489 = vadd.f32 %v100, %v488
  %v490 = vpop.f32.mrb[0].mxu0
  %v491 = vpop.f32.mrb[0].mxu0
  %v492 = vadd.f32 %v100, %v491
  %v493 = vpop.f32.mrb[0].mxu0
  %494 = vmatprep.mubr.bf16.mxu0 0
  %495 = vmatmul.mubr.bf16.gmra.mrb[0].mxu0 %v245
  %v496 = vpop.f32.mrb[0].mxu0
  %v497 = vadd.f32 %v100, %v496
  %v498 = vpop.f32.mrb[0].mxu0
  %v499 = vpop.f32.mrb[0].mxu0
  %v500 = vadd.f32 %v100, %v499
  %v501 = vpop.f32.mrb[0].mxu0
  %502 = vmatprep.mubr.bf16.mxu0 0
  %503 = vmatmul.mubr.bf16.gmra.mrb[0].mxu0 %v246
  %v504 = vpop.f32.mrb[0].mxu0
  %v505 = vadd.f32 %v100, %v504
  %v506 = vpop.f32.mrb[0].mxu0
  %v507 = vpop.f32.mrb[0].mxu0
  %v508 = vadd.f32 %v100, %v507
  %v509 = vpop.f32.mrb[0].mxu0
  %510 = vmatprep.mubr.bf16.mxu0 0
  %511 = vmatmul.mubr.bf16.gmra.mrb[0].mxu0 %v247
  %v512 = vpop.f32.mrb[0].mxu0
  %v513 = vadd.f32 %v100, %v512
  %v514 = vpop.f32.mrb[0].mxu0
  %v515 = vpop.f32.mrb[0].mxu0
  %v516 = vadd.f32 %v100, %v515
  %v517 = vpop.f32.mrb[0].mxu0
  %518 = vmatprep.mubr.bf16.mxu0 0
  %519 = vmatmul.mubr.bf16.gmra.mrb[0].mxu0 %v248
  %v520 = vpop.f32.mrb[0].mxu0
  %v521 = vadd.f32 %v100, %v520
  %v522 = vpop.f32.mrb[0].mxu0
  %v523 = vpop.f32.mrb[0].mxu0
  %v524 = vadd.f32 %v100, %v523
  %v525 = vpop.f32.mrb[0].mxu0
  %526 = vmatprep.mubr.bf16.mxu0 0
  %527 = vmatmul.mubr.bf16.gmra.mrb[0].mxu0 %v249
  %v528 = vpop.f32.mrb[0].mxu0
  %v529 = vadd.f32 %v100, %v528
  %v530 = vpop.f32.mrb[0].mxu0
  %v531 = vpop.f32.mrb[0].mxu0
  %v532 = vadd.f32 %v100, %v531
  %v533 = vpop.f32.mrb[0].mxu0
  %534 = vmatprep.mubr.bf16.mxu0 0
  %535 = vmatmul.mubr.bf16.gmra.mrb[0].mxu0 %v250
  %v536 = vpop.f32.mrb[0].mxu0
  %v537 = vadd.f32 %v100, %v536
  %v538 = vpop.f32.mrb[0].mxu0
  %v539 = vpop.f32.mrb[0].mxu0
  %v540 = vadd.f32 %v100, %v539
  %v541 = vpop.f32.mrb[0].mxu0
  %542 = vmatprep.mubr.bf16.mxu0 0
  %543 = vmatmul.mubr.bf16.gmra.mrb[0].mxu0 %v251
  %v544 = vpop.f32.mrb[0].mxu0
  %v545 = vadd.f32 %v100, %v544
  %v546 = vpop.f32.mrb[0].mxu0
  %v547 = vpop.f32.mrb[0].mxu0
  %v548 = vadd.f32 %v100, %v547
  %v549 = vpop.f32.mrb[0].mxu0
  %550 = vmatprep.mubr.bf16.mxu0 0
  %551 = vmatmul.mubr.bf16.gmra.mrb[0].mxu0 %v252
  %v552 = vpop.f32.mrb[0].mxu0
  %v553 = vadd.f32 %v100, %v552
  %v554 = vpop.f32.mrb[0].mxu0
  %v555 = vpop.f32.mrb[0].mxu0
  %v556 = vadd.f32 %v100, %v555
  %v557 = vpop.f32.mrb[0].mxu0
  %558 = vmatprep.mubr.bf16.mxu0 0
  %559 = vmatmul.mubr.bf16.gmra.mrb[0].mxu0 %v253
  %v560 = vpop.f32.mrb[0].mxu0
  %v561 = vadd.f32 %v100, %v560
  %v562 = vpop.f32.mrb[0].mxu0
  %v563 = vpop.f32.mrb[0].mxu0
  %v564 = vadd.f32 %v100, %v563
  %v565 = vpop.f32.mrb[0].mxu0
  %566 = vmatprep.mubr.bf16.mxu0 0
  %567 = vmatmul.mubr.bf16.gmra.mrb[0].mxu0 %v254
  %v568 = vpop.f32.mrb[0].mxu0
  %v569 = vadd.f32 %v100, %v568
  %v570 = vpop.f32.mrb[0].mxu0
  %v571 = vpop.f32.mrb[0].mxu0
  %v572 = vadd.f32 %v100, %v571
  %v573 = vpop.f32.mrb[0].mxu0
  %574 = vmatprep.mubr.bf16.mxu0 0
  %575 = vmatmul.mubr.bf16.gmra.mrb[0].mxu0 %v255
  %v576 = vpop.f32.mrb[0].mxu0
  %v577 = vadd.f32 %v100, %v576
  %v578 = vpop.f32.mrb[0].mxu0
  %v579 = vpop.f32.mrb[0].mxu0
  %v580 = vadd.f32 %v100, %v579
  %v581 = vpop.f32.mrb[0].mxu0
  %582 = vmatprep.mubr.bf16.mxu0 0
  %583 = vmatmul.mubr.bf16.gmra.mrb[0].mxu0 %v256
  %v584 = vpop.f32.mrb[0].mxu0
  %v585 = vadd.f32 %v100, %v584
  %v586 = vpop.f32.mrb[0].mxu0
  %v587 = vpop.f32.mrb[0].mxu0
  %v588 = vadd.f32 %v100, %v587
  %v589 = vpop.f32.mrb[0].mxu0
  %590 = vmatprep.mubr.bf16.mxu0 0
  %591 = vmatmul.mubr.bf16.gmra.mrb[0].mxu0 %v257
  %v592 = vpop.f32.mrb[0].mxu0
  %v593 = vadd.f32 %v100, %v592
  %v594 = vpop.f32.mrb[0].mxu0
  %v595 = vpop.f32.mrb[0].mxu0
  %v596 = vadd.f32 %v100, %v595
  %v597 = vpop.f32.mrb[0].mxu0
  %598 = vmatprep.mubr.bf16.mxu0 0
  %599 = vmatmul.mubr.bf16.gmra.mrb[0].mxu0 %v258
  %v600 = vpop.f32.mrb[0].mxu0
  %v601 = vadd.f32 %v100, %v600
  %v602 = vpop.f32.mrb[0].mxu0
  %v603 = vpop.f32.mrb[0].mxu0
  %v604 = vadd.f32 %v100, %v603
  %v605 = vpop.f32.mrb[0].mxu0
  %606 = vmatprep.mubr.bf16.mxu0 0
  %607 = vmatmul.mubr.bf16.gmra.mrb[0].mxu0 %v259
  %v608 = vpop.f32.mrb[0].mxu0
  %v609 = vadd.f32 %v100, %v608
  %v610 = vpop.f32.mrb[0].mxu0
  %v611 = vpop.f32.mrb[0].mxu0
  %v612 = vadd.f32 %v100, %v611
  %v613 = vpop.f32.mrb[0].mxu0
  %614 = vmatprep.mubr.bf16.mxu0 0
  %615 = vmatmul.mubr.bf16.gmra.mrb[0].mxu0 %v260
  %v616 = vpop.f32.mrb[0].mxu0
  %v617 = vadd.f32 %v100, %v616
  %v618 = vpop.f32.mrb[0].mxu0
  %v619 = vpop.f32.mrb[0].mxu0
  %v620 = vadd.f32 %v100, %v619
  %v621 = vpop.f32.mrb[0].mxu0
  %622 = vmatprep.mubr.bf16.mxu0 0
  %623 = vmatmul.mubr.bf16.gmra.mrb[0].mxu0 %v261
  %v624 = vpop.f32.mrb[0].mxu0
  %v625 = vadd.f32 %v100, %v624
  %v626 = vpop.f32.mrb[0].mxu0
  %v627 = vpop.f32.mrb[0].mxu0
  %v628 = vadd.f32 %v100, %v627
  %v629 = vpop.f32.mrb[0].mxu0
  %630 = vdwg.mxu0
  %vm631 = vcmp.ge.f32.partialorder %v377, 0.0
  %vm632 = vcmp.ge.f32.partialorder %v380, 0.0
  %vm633 = vcmp.ge.f32.partialorder %v385, 0.0
  %vm634 = vcmp.ge.f32.partialorder %v388, 0.0
  %vm635 = vcmp.ge.f32.partialorder %v393, 0.0
  %vm636 = vcmp.ge.f32.partialorder %v396, 0.0
  %vm637 = vcmp.ge.f32.partialorder %v401, 0.0
  %vm638 = vcmp.ge.f32.partialorder %v404, 0.0
  %vm639 = vcmp.ge.f32.partialorder %v409, 0.0
  %vm640 = vcmp.ge.f32.partialorder %v412, 0.0
  %vm641 = vcmp.ge.f32.partialorder %v417, 0.0
  %vm642 = vcmp.ge.f32.partialorder %v420, 0.0
  %vm643 = vcmp.ge.f32.partialorder %v425, 0.0
  %vm644 = vcmp.ge.f32.partialorder %v428, 0.0
  %vm645 = vcmp.ge.f32.partialorder %v433, 0.0
  %vm646 = vcmp.ge.f32.partialorder %v436, 0.0
  %vm647 = vcmp.ge.f32.partialorder %v441, 0.0
  %vm648 = vcmp.ge.f32.partialorder %v444, 0.0
  %vm649 = vcmp.ge.f32.partialorder %v449, 0.0
  %vm650 = vcmp.ge.f32.partialorder %v452, 0.0
  %vm651 = vcmp.ge.f32.partialorder %v457, 0.0
  %vm652 = vcmp.ge.f32.partialorder %v460, 0.0
  %vm653 = vcmp.ge.f32.partialorder %v465, 0.0
  %vm654 = vcmp.ge.f32.partialorder %v468, 0.0
  %vm655 = vcmp.ge.f32.partialorder %v473, 0.0
  %vm656 = vcmp.ge.f32.partialorder %v476, 0.0
  %vm657 = vcmp.ge.f32.partialorder %v481, 0.0
  %vm658 = vcmp.ge.f32.partialorder %v484, 0.0
  %vm659 = vcmp.ge.f32.partialorder %v489, 0.0
  %vm660 = vcmp.ge.f32.partialorder %v492, 0.0
  %vm661 = vcmp.ge.f32.partialorder %v497, 0.0
  %vm662 = vcmp.ge.f32.partialorder %v500, 0.0
  %vm663 = vcmp.ge.f32.partialorder %v505, 0.0
  %vm664 = vcmp.ge.f32.partialorder %v508, 0.0
  %vm665 = vcmp.ge.f32.partialorder %v513, 0.0
  %vm666 = vcmp.ge.f32.partialorder %v516, 0.0
  %vm667 = vcmp.ge.f32.partialorder %v521, 0.0
  %vm668 = vcmp.ge.f32.partialorder %v524, 0.0
  %vm669 = vcmp.ge.f32.partialorder %v529, 0.0
  %vm670 = vcmp.ge.f32.partialorder %v532, 0.0
  %vm671 = vcmp.ge.f32.partialorder %v537, 0.0
  %vm672 = vcmp.ge.f32.partialorder %v540, 0.0
  %vm673 = vcmp.ge.f32.partialorder %v545, 0.0
  %vm674 = vcmp.ge.f32.partialorder %v548, 0.0
  %vm675 = vcmp.ge.f32.partialorder %v553, 0.0
  %vm676 = vcmp.ge.f32.partialorder %v556, 0.0
  %vm677 = vcmp.ge.f32.partialorder %v561, 0.0
  %vm678 = vcmp.ge.f32.partialorder %v564, 0.0
  %vm679 = vcmp.ge.f32.partialorder %v569, 0.0
  %vm680 = vcmp.ge.f32.partialorder %v572, 0.0
  %vm681 = vcmp.ge.f32.partialorder %v577, 0.0
  %vm682 = vcmp.ge.f32.partialorder %v580, 0.0
  %vm683 = vcmp.ge.f32.partialorder %v585, 0.0
  %vm684 = vcmp.ge.f32.partialorder %v588, 0.0
  %vm685 = vcmp.ge.f32.partialorder %v593, 0.0
  %vm686 = vcmp.ge.f32.partialorder %v596, 0.0
  %vm687 = vcmp.ge.f32.partialorder %v601, 0.0
  %vm688 = vcmp.ge.f32.partialorder %v604, 0.0
  %vm689 = vcmp.ge.f32.partialorder %v609, 0.0
  %vm690 = vcmp.ge.f32.partialorder %v612, 0.0
  %vm691 = vcmp.ge.f32.partialorder %v617, 0.0
  %vm692 = vcmp.ge.f32.partialorder %v620, 0.0
  %vm693 = vcmp.ge.f32.partialorder %v625, 0.0
  %vm694 = vcmp.ge.f32.partialorder %v628, 0.0
  %v695 = vmul.f32 %v377, 0.2
  %v696 = vmul.f32 %v380, 0.2
  %v697 = vmul.f32 %v385, 0.2
  %v698 = vmul.f32 %v388, 0.2
  %v699 = vmul.f32 %v393, 0.2
  %v700 = vmul.f32 %v396, 0.2
  %v701 = vmul.f32 %v401, 0.2
  %v702 = vmul.f32 %v404, 0.2
  %v703 = vmul.f32 %v409, 0.2
  %v704 = vmul.f32 %v412, 0.2
  %v705 = vmul.f32 %v417, 0.2
  %v706 = vmul.f32 %v420, 0.2
  %v707 = vmul.f32 %v425, 0.2
  %v708 = vmul.f32 %v428, 0.2
  %v709 = vmul.f32 %v433, 0.2
  %v710 = vmul.f32 %v436, 0.2
  %v711 = vmul.f32 %v441, 0.2
  %v712 = vmul.f32 %v444, 0.2
  %v713 = vmul.f32 %v449, 0.2
  %v714 = vmul.f32 %v452, 0.2
  %v715 = vmul.f32 %v457, 0.2
  %v716 = vmul.f32 %v460, 0.2
  %v717 = vmul.f32 %v465, 0.2
  %v718 = vmul.f32 %v468, 0.2
  %v719 = vmul.f32 %v473, 0.2
  %v720 = vmul.f32 %v476, 0.2
  %v721 = vmul.f32 %v481, 0.2
  %v722 = vmul.f32 %v484, 0.2
  %v723 = vmul.f32 %v489, 0.2
  %v724 = vmul.f32 %v492, 0.2
  %v725 = vmul.f32 %v497, 0.2
  %v726 = vmul.f32 %v500, 0.2
  %v727 = vmul.f32 %v505, 0.2
  %v728 = vmul.f32 %v508, 0.2
  %v729 = vmul.f32 %v513, 0.2
  %v730 = vmul.f32 %v516, 0.2
  %v731 = vmul.f32 %v521, 0.2
  %v732 = vmul.f32 %v524, 0.2
  %v733 = vmul.f32 %v529, 0.2
  %v734 = vmul.f32 %v532, 0.2
  %v735 = vmul.f32 %v537, 0.2
  %v736 = vmul.f32 %v540, 0.2
  %v737 = vmul.f32 %v545, 0.2
  %v738 = vmul.f32 %v548, 0.2
  %v739 = vmul.f32 %v553, 0.2
  %v740 = vmul.f32 %v556, 0.2
  %v741 = vmul.f32 %v561, 0.2
  %v742 = vmul.f32 %v564, 0.2
  %v743 = vmul.f32 %v569, 0.2
  %v744 = vmul.f32 %v572, 0.2
  %v745 = vmul.f32 %v577, 0.2
  %v746 = vmul.f32 %v580, 0.2
  %v747 = vmul.f32 %v585, 0.2
  %v748 = vmul.f32 %v588, 0.2
  %v749 = vmul.f32 %v593, 0.2
  %v750 = vmul.f32 %v596, 0.2
  %v751 = vmul.f32 %v601, 0.2
  %v752 = vmul.f32 %v604, 0.2
  %v753 = vmul.f32 %v609, 0.2
  %v754 = vmul.f32 %v612, 0.2
  %v755 = vmul.f32 %v617, 0.2
  %v756 = vmul.f32 %v620, 0.2
  %v757 = vmul.f32 %v625, 0.2
  %v758 = vmul.f32 %v628, 0.2
  %v759 = vsel %vm631, %v377, %v695
  %v760 = vsel %vm632, %v380, %v696
  %v761 = vsel %vm633, %v385, %v697
  %v762 = vsel %vm634, %v388, %v698
  %v763 = vsel %vm635, %v393, %v699
  %v764 = vsel %vm636, %v396, %v700
  %v765 = vsel %vm637, %v401, %v701
  %v766 = vsel %vm638, %v404, %v702
  %v767 = vsel %vm639, %v409, %v703
  %v768 = vsel %vm640, %v412, %v704
  %v769 = vsel %vm641, %v417, %v705
  %v770 = vsel %vm642, %v420, %v706
  %v771 = vsel %vm643, %v425, %v707
  %v772 = vsel %vm644, %v428, %v708
  %v773 = vsel %vm645, %v433, %v709
  %v774 = vsel %vm646, %v436, %v710
  %v775 = vsel %vm647, %v441, %v711
  %v776 = vsel %vm648, %v444, %v712
  %v777 = vsel %vm649, %v449, %v713
  %v778 = vsel %vm650, %v452, %v714
  %v779 = vsel %vm651, %v457, %v715
  %v780 = vsel %vm652, %v460, %v716
  %v781 = vsel %vm653, %v465, %v717
  %v782 = vsel %vm654, %v468, %v718
  %v783 = vsel %vm655, %v473, %v719
  %v784 = vsel %vm656, %v476, %v720
  %v785 = vsel %vm657, %v481, %v721
  %v786 = vsel %vm658, %v484, %v722
  %v787 = vsel %vm659, %v489, %v723
  %v788 = vsel %vm660, %v492, %v724
  %v789 = vsel %vm661, %v497, %v725
  %v790 = vsel %vm662, %v500, %v726
  %v791 = vsel %vm663, %v505, %v727
  %v792 = vsel %vm664, %v508, %v728
  %v793 = vsel %vm665, %v513, %v729
  %v794 = vsel %vm666, %v516, %v730
  %v795 = vsel %vm667, %v521, %v731
  %v796 = vsel %vm668, %v524, %v732
  %v797 = vsel %vm669, %v529, %v733
  %v798 = vsel %vm670, %v532, %v734
  %v799 = vsel %vm671, %v537, %v735
  %v800 = vsel %vm672, %v540, %v736
  %v801 = vsel %vm673, %v545, %v737
  %v802 = vsel %vm674, %v548, %v738
  %v803 = vsel %vm675, %v553, %v739
  %v804 = vsel %vm676, %v556, %v740
  %v805 = vsel %vm677, %v561, %v741
  %v806 = vsel %vm678, %v564, %v742
  %v807 = vsel %vm679, %v569, %v743
  %v808 = vsel %vm680, %v572, %v744
  %v809 = vsel %vm681, %v577, %v745
  %v810 = vsel %vm682, %v580, %v746
  %v811 = vsel %vm683, %v585, %v747
  %v812 = vsel %vm684, %v588, %v748
  %v813 = vsel %vm685, %v593, %v749
  %v814 = vsel %vm686, %v596, %v750
  %v815 = vsel %vm687, %v601, %v751
  %v816 = vsel %vm688, %v604, %v752
  %v817 = vsel %vm689, %v609, %v753
  %v818 = vsel %vm690, %v612, %v754
  %v819 = vsel %vm691, %v617, %v755
  %v820 = vsel %vm692, %v620, %v756
  %v821 = vsel %vm693, %v625, %v757
  %v822 = vsel %vm694, %v628, %v758
  %v823 = vpack.c.bf16 %v760, %v759
  %v824 = vpack.c.bf16 %v762, %v761
  %v825 = vpack.c.bf16 %v764, %v763
  %v826 = vpack.c.bf16 %v766, %v765
  %v827 = vpack.c.bf16 %v768, %v767
  %v828 = vpack.c.bf16 %v770, %v769
  %v829 = vpack.c.bf16 %v772, %v771
  %v830 = vpack.c.bf16 %v774, %v773
  %v831 = vpack.c.bf16 %v776, %v775
  %v832 = vpack.c.bf16 %v778, %v777
  %v833 = vpack.c.bf16 %v780, %v779
  %v834 = vpack.c.bf16 %v782, %v781
  %v835 = vpack.c.bf16 %v784, %v783
  %v836 = vpack.c.bf16 %v786, %v785
  %v837 = vpack.c.bf16 %v788, %v787
  %v838 = vpack.c.bf16 %v790, %v789
  %v839 = vpack.c.bf16 %v792, %v791
  %v840 = vpack.c.bf16 %v794, %v793
  %v841 = vpack.c.bf16 %v796, %v795
  %v842 = vpack.c.bf16 %v798, %v797
  %v843 = vpack.c.bf16 %v800, %v799
  %v844 = vpack.c.bf16 %v802, %v801
  %v845 = vpack.c.bf16 %v804, %v803
  %v846 = vpack.c.bf16 %v806, %v805
  %v847 = vpack.c.bf16 %v808, %v807
  %v848 = vpack.c.bf16 %v810, %v809
  %v849 = vpack.c.bf16 %v812, %v811
  %v850 = vpack.c.bf16 %v814, %v813
  %v851 = vpack.c.bf16 %v816, %v815
  %v852 = vpack.c.bf16 %v818, %v817
  %v853 = vpack.c.bf16 %v820, %v819
  %v854 = vpack.c.bf16 %v822, %v821
  %v887 = vunpack.c.l.b16 %v823
  %v888 = vunpack.c.h.b16 %v823
  %v889 = vunpack.c.l.b16 %v824
  %v890 = vunpack.c.h.b16 %v824
  %v891 = vunpack.c.l.b16 %v825
  %v892 = vunpack.c.h.b16 %v825
  %v893 = vunpack.c.l.b16 %v826
  %v894 = vunpack.c.h.b16 %v826
  %v895 = vunpack.c.l.b16 %v827
  %v896 = vunpack.c.h.b16 %v827
  %v897 = vunpack.c.l.b16 %v828
  %v898 = vunpack.c.h.b16 %v828
  %v899 = vunpack.c.l.b16 %v829
  %v900 = vunpack.c.h.b16 %v829
  %v901 = vunpack.c.l.b16 %v830
  %v902 = vunpack.c.h.b16 %v830
  %v903 = vunpack.c.l.b16 %v831
  %v904 = vunpack.c.h.b16 %v831
  %v905 = vunpack.c.l.b16 %v832
  %v906 = vunpack.c.h.b16 %v832
  %v907 = vunpack.c.l.b16 %v833
  %v908 = vunpack.c.h.b16 %v833
  %v909 = vunpack.c.l.b16 %v834
  %v910 = vunpack.c.h.b16 %v834
  %v911 = vunpack.c.l.b16 %v835
  %v912 = vunpack.c.h.b16 %v835
  %v913 = vunpack.c.l.b16 %v836
  %v914 = vunpack.c.h.b16 %v836
  %v915 = vunpack.c.l.b16 %v837
  %v916 = vunpack.c.h.b16 %v837
  %v917 = vunpack.c.l.b16 %v838
  %v918 = vunpack.c.h.b16 %v838
  %v919 = vunpack.c.l.b16 %v839
  %v920 = vunpack.c.h.b16 %v839
  %v921 = vunpack.c.l.b16 %v840
  %v922 = vunpack.c.h.b16 %v840
  %v923 = vunpack.c.l.b16 %v841
  %v924 = vunpack.c.h.b16 %v841
  %v925 = vunpack.c.l.b16 %v842
  %v926 = vunpack.c.h.b16 %v842
  %v927 = vunpack.c.l.b16 %v843
  %v928 = vunpack.c.h.b16 %v843
  %v929 = vunpack.c.l.b16 %v844
  %v930 = vunpack.c.h.b16 %v844
  %v931 = vunpack.c.l.b16 %v845
  %v932 = vunpack.c.h.b16 %v845
  %v933 = vunpack.c.l.b16 %v846
  %v934 = vunpack.c.h.b16 %v846
  %v935 = vunpack.c.l.b16 %v847
  %v936 = vunpack.c.h.b16 %v847
  %v937 = vunpack.c.l.b16 %v848
  %v938 = vunpack.c.h.b16 %v848
  %v939 = vunpack.c.l.b16 %v849
  %v940 = vunpack.c.h.b16 %v849
  %v941 = vunpack.c.l.b16 %v850
  %v942 = vunpack.c.h.b16 %v850
  %v943 = vunpack.c.l.b16 %v851
  %v944 = vunpack.c.h.b16 %v851
  %v945 = vunpack.c.l.b16 %v852
  %v946 = vunpack.c.h.b16 %v852
  %v947 = vunpack.c.l.b16 %v853
  %v948 = vunpack.c.h.b16 %v853
  %v949 = vunpack.c.l.b16 %v854
  %v950 = vunpack.c.h.b16 %v854
  %v951 = vpack.c.b16 %v887, %v887
  %v952 = vpack.c.b16 %v888, %v888
  %v953 = vpack.c.b16 %v889, %v889
  %v954 = vpack.c.b16 %v890, %v890
  %v955 = vpack.c.b16 %v891, %v891
  %v956 = vpack.c.b16 %v892, %v892
  %v957 = vpack.c.b16 %v893, %v893
  %v958 = vpack.c.b16 %v894, %v894
  %v959 = vpack.c.b16 %v895, %v895
  %v960 = vpack.c.b16 %v896, %v896
  %v961 = vpack.c.b16 %v897, %v897
  %v962 = vpack.c.b16 %v898, %v898
  %v963 = vpack.c.b16 %v899, %v899
  %v964 = vpack.c.b16 %v900, %v900
  %v965 = vpack.c.b16 %v901, %v901
  %v966 = vpack.c.b16 %v902, %v902
  %v967 = vpack.c.b16 %v903, %v903
  %v968 = vpack.c.b16 %v904, %v904
  %v969 = vpack.c.b16 %v905, %v905
  %v970 = vpack.c.b16 %v906, %v906
  %v971 = vpack.c.b16 %v907, %v907
  %v972 = vpack.c.b16 %v908, %v908
  %v973 = vpack.c.b16 %v909, %v909
  %v974 = vpack.c.b16 %v910, %v910
  %v975 = vpack.c.b16 %v911, %v911
  %v976 = vpack.c.b16 %v912, %v912
  %v977 = vpack.c.b16 %v913, %v913
  %v978 = vpack.c.b16 %v914, %v914
  %v979 = vpack.c.b16 %v915, %v915
  %v980 = vpack.c.b16 %v916, %v916
  %v981 = vpack.c.b16 %v917, %v917
  %v982 = vpack.c.b16 %v918, %v918
  %v983 = vpack.c.b16 %v919, %v919
  %v984 = vpack.c.b16 %v920, %v920
  %v985 = vpack.c.b16 %v921, %v921
  %v986 = vpack.c.b16 %v922, %v922
  %v987 = vpack.c.b16 %v923, %v923
  %v988 = vpack.c.b16 %v924, %v924
  %v989 = vpack.c.b16 %v925, %v925
  %v990 = vpack.c.b16 %v926, %v926
  %v991 = vpack.c.b16 %v927, %v927
  %v992 = vpack.c.b16 %v928, %v928
  %v993 = vpack.c.b16 %v929, %v929
  %v994 = vpack.c.b16 %v930, %v930
  %v995 = vpack.c.b16 %v931, %v931
  %v996 = vpack.c.b16 %v932, %v932
  %v997 = vpack.c.b16 %v933, %v933
  %v998 = vpack.c.b16 %v934, %v934
  %v999 = vpack.c.b16 %v935, %v935
  %v1000 = vpack.c.b16 %v936, %v936
  %v1001 = vpack.c.b16 %v937, %v937
  %v1002 = vpack.c.b16 %v938, %v938
  %v1003 = vpack.c.b16 %v939, %v939
  %v1004 = vpack.c.b16 %v940, %v940
  %v1005 = vpack.c.b16 %v941, %v941
  %v1006 = vpack.c.b16 %v942, %v942
  %v1007 = vpack.c.b16 %v943, %v943
  %v1008 = vpack.c.b16 %v944, %v944
  %v1009 = vpack.c.b16 %v945, %v945
  %v1010 = vpack.c.b16 %v946, %v946
  %v1011 = vpack.c.b16 %v947, %v947
  %v1012 = vpack.c.b16 %v948, %v948
  %v1013 = vpack.c.b16 %v949, %v949
  %v1014 = vpack.c.b16 %v950, %v950
  %1079 = vst [vmem:[%s3] sm:$0xf] %v951
  %1080 = vst [vmem:[%s3 + $0x4] sm:$0xf] %v952
  %1081 = vst [vmem:[%s3 + $0x8] sm:$0xf] %v953
  %1082 = vst [vmem:[%s3 + $0xc] sm:$0xf] %v954
  %1083 = vst [vmem:[%s3 + $0x10] sm:$0xf] %v955
  %1084 = vst [vmem:[%s3 + $0x14] sm:$0xf] %v956
  %1085 = vst [vmem:[%s3 + $0x18] sm:$0xf] %v957
  %1086 = vst [vmem:[%s3 + $0x1c] sm:$0xf] %v958
  %1087 = vst [vmem:[%s3 + $0x20] sm:$0xf] %v959
  %1088 = vst [vmem:[%s3 + $0x24] sm:$0xf] %v960
  %1089 = vst [vmem:[%s3 + $0x28] sm:$0xf] %v961
  %1090 = vst [vmem:[%s3 + $0x2c] sm:$0xf] %v962
  %1091 = vst [vmem:[%s3 + $0x30] sm:$0xf] %v963
  %1092 = vst [vmem:[%s3 + $0x34] sm:$0xf] %v964
  %1093 = vst [vmem:[%s3 + $0x38] sm:$0xf] %v965
  %1094 = vst [vmem:[%s3 + $0x3c] sm:$0xf] %v966
  %1095 = vst [vmem:[%s3 + $0x40] sm:$0xf] %v967
  %1096 = vst [vmem:[%s3 + $0x44] sm:$0xf] %v968
  %1097 = vst [vmem:[%s3 + $0x48] sm:$0xf] %v969
  %1098 = vst [vmem:[%s3 + $0x4c] sm:$0xf] %v970
  %1099 = vst [vmem:[%s3 + $0x50] sm:$0xf] %v971
  %1100 = vst [vmem:[%s3 + $0x54] sm:$0xf] %v972
  %1101 = vst [vmem:[%s3 + $0x58] sm:$0xf] %v973
  %1102 = vst [vmem:[%s3 + $0x5c] sm:$0xf] %v974
  %1103 = vst [vmem:[%s3 + $0x60] sm:$0xf] %v975
  %1104 = vst [vmem:[%s3 + $0x64] sm:$0xf] %v976
  %1105 = vst [vmem:[%s3 + $0x68] sm:$0xf] %v977
  %1106 = vst [vmem:[%s3 + $0x6c] sm:$0xf] %v978
  %1107 = vst [vmem:[%s3 + $0x70] sm:$0xf] %v979
  %1108 = vst [vmem:[%s3 + $0x74] sm:$0xf] %v980
  %1109 = vst [vmem:[%s3 + $0x78] sm:$0xf] %v981
  %1110 = vst [vmem:[%s3 + $0x7c] sm:$0xf] %v982
  %1111 = vst [vmem:[%s3 + $0x80] sm:$0xf] %v983
  %1112 = vst [vmem:[%s3 + $0x84] sm:$0xf] %v984
  %1113 = vst [vmem:[%s3 + $0x88] sm:$0xf] %v985
  %1114 = vst [vmem:[%s3 + $0x8c] sm:$0xf] %v986
  %1115 = vst [vmem:[%s3 + $0x90] sm:$0xf] %v987
  %1116 = vst [vmem:[%s3 + $0x94] sm:$0xf] %v988
  %1117 = vst [vmem:[%s3 + $0x98] sm:$0xf] %v989
  %1118 = vst [vmem:[%s3 + $0x9c] sm:$0xf] %v990
  %1119 = vst [vmem:[%s3 + $0xa0] sm:$0xf] %v991
  %1120 = vst [vmem:[%s3 + $0xa4] sm:$0xf] %v992
  %1121 = vst [vmem:[%s3 + $0xa8] sm:$0xf] %v993
  %1122 = vst [vmem:[%s3 + $0xac] sm:$0xf] %v994
  %1123 = vst [vmem:[%s3 + $0xb0] sm:$0xf] %v995
  %1124 = vst [vmem:[%s3 + $0xb4] sm:$0xf] %v996
  %1125 = vst [vmem:[%s3 + $0xb8] sm:$0xf] %v997
  %1126 = vst [vmem:[%s3 + $0xbc] sm:$0xf] %v998
  %1127 = vst [vmem:[%s3 + $0xc0] sm:$0xf] %v999
  %1128 = vst [vmem:[%s3 + $0xc4] sm:$0xf] %v1000
  %1129 = vst [vmem:[%s3 + $0xc8] sm:$0xf] %v1001
  %1130 = vst [vmem:[%s3 + $0xcc] sm:$0xf] %v1002
  %1131 = vst [vmem:[%s3 + $0xd0] sm:$0xf] %v1003
  %1132 = vst [vmem:[%s3 + $0xd4] sm:$0xf] %v1004
  %1133 = vst [vmem:[%s3 + $0xd8] sm:$0xf] %v1005
  %1134 = vst [vmem:[%s3 + $0xdc] sm:$0xf] %v1006
  %1135 = vst [vmem:[%s3 + $0xe0] sm:$0xf] %v1007
  %1136 = vst [vmem:[%s3 + $0xe4] sm:$0xf] %v1008
  %1137 = vst [vmem:[%s3 + $0xe8] sm:$0xf] %v1009
  %1138 = vst [vmem:[%s3 + $0xec] sm:$0xf] %v1010
  %1139 = vst [vmem:[%s3 + $0xf0] sm:$0xf] %v1011
  %1140 = vst [vmem:[%s3 + $0xf4] sm:$0xf] %v1012
  %1141 = vst [vmem:[%s3 + $0xf8] sm:$0xf] %v1013
  %1142 = vst [vmem:[%s3 + $0xfc] sm:$0xf] %v1014
  // Predicated region
  $region14: #{xz_discriminator_forward.5} parent=0 // pred_check
    _
  $region15: #{xz_discriminator_forward.5} parent=0 // pred_check_branch
    %1144 = sbr.rel (0) target = $region17
  $region16: #{xz_discriminator_forward.5} parent=0 // pred_region
    _
  $region17: #{xz_discriminator_forward.5} parent=0 // pred_fallthru
    _
  // Predicated region
  $region18: #{xz_discriminator_forward.5} parent=0 // pred_check
    _
  $region19: #{xz_discriminator_forward.5} parent=0 // pred_check_branch
    %1146 = sbr.rel (0) target = $region21
  $region20: #{xz_discriminator_forward.5} parent=0 // pred_region
    _
  $region21: #{xz_discriminator_forward.5} parent=0 // pred_fallthru
    _

// kernel: xz_discriminator_forward.6
$region0: #{xz_discriminator_forward.6}
  #allocation0 [shape = 'u32[]', space=smem, size = 0x4, offset = 0x4, fixed_abs, tag = 'smem constant byte address 0x4 - core index']
  #allocation1 [shape = 'u32[144,128]{1,0:T(1,128)}', space=vmem, size = 0x12000, scoped, tag = 'internal scratch']
  %s0 = inlined_call_operand.vmem [shape: bf16[128,2048], index: 0, kind: input, shape index: {}]
  %s1 = inlined_call_operand.vmem [shape: bf16[2048,128], index: 1, kind: input, shape index: {}]
  %s2 = inlined_call_operand.vmem [shape: f32[1,128], index: 2, kind: input, shape index: {}]
  %s3 = inlined_call_operand.vmem [shape: bf16[128,128], index: 3, kind: output, shape index: {}]
  %s4 = sld [smem:[#allocation0]]
  $region22: #{xz_discriminator_forward.6} parent=0
    _
  %s6 = ssub.s32 1, %s4
  %s7 = scalar_select 0, %s6, %s4
  // Predicated region
  $region2: #{xz_discriminator_forward.6} parent=0 // pred_check
    _
  $region3: #{xz_discriminator_forward.6} parent=0 // pred_check_branch
    %9 = sbr.rel (0) target = $region5
  $region4: #{xz_discriminator_forward.6} parent=0 // pred_region
    _
  $region5: #{xz_discriminator_forward.6} parent=0 // pred_fallthru
    _
  // Predicated region
  $region6: #{xz_discriminator_forward.6} parent=0 // pred_check
    _
  $region7: #{xz_discriminator_forward.6} parent=0 // pred_check_branch
    %11 = sbr.rel (0) target = $region9
  $region8: #{xz_discriminator_forward.6} parent=0 // pred_region
    _
  $region9: #{xz_discriminator_forward.6} parent=0 // pred_fallthru
    _
  // Predicated region
  $region10: #{xz_discriminator_forward.6} parent=0 // pred_check
    _
  $region11: #{xz_discriminator_forward.6} parent=0 // pred_check_branch
    %13 = sbr.rel (0) target = $region13
  $region12: #{xz_discriminator_forward.6} parent=0 // pred_region
    _
  $region13: #{xz_discriminator_forward.6} parent=0 // pred_fallthru
    _
  %v15 = vld [vmem:[%s0] sm:$0xff]
  %v16 = vld [vmem:[%s0 + $0x8] sm:$0xff]
  %v17 = vld [vmem:[%s0 + $0x10] sm:$0xff]
  %v18 = vld [vmem:[%s0 + $0x18] sm:$0xff]
  %v19 = vld [vmem:[%s0 + $0x20] sm:$0xff]
  %v20 = vld [vmem:[%s0 + $0x28] sm:$0xff]
  %v21 = vld [vmem:[%s0 + $0x30] sm:$0xff]
  %v22 = vld [vmem:[%s0 + $0x38] sm:$0xff]
  %v23 = vld [vmem:[%s0 + $0x40] sm:$0xff]
  %v24 = vld [vmem:[%s0 + $0x48] sm:$0xff]
  %v25 = vld [vmem:[%s0 + $0x50] sm:$0xff]
  %v26 = vld [vmem:[%s0 + $0x58] sm:$0xff]
  %v27 = vld [vmem:[%s0 + $0x60] sm:$0xff]
  %v28 = vld [vmem:[%s0 + $0x68] sm:$0xff]
  %v29 = vld [vmem:[%s0 + $0x70] sm:$0xff]
  %v30 = vld [vmem:[%s0 + $0x78] sm:$0xff]
  %v31 = vld [vmem:[%s0 + $0x80] sm:$0xff]
  %v32 = vld [vmem:[%s0 + $0x88] sm:$0xff]
  %v33 = vld [vmem:[%s0 + $0x90] sm:$0xff]
  %v34 = vld [vmem:[%s0 + $0x98] sm:$0xff]
  %v35 = vld [vmem:[%s0 + $0xa0] sm:$0xff]
  %v36 = vld [vmem:[%s0 + $0xa8] sm:$0xff]
  %v37 = vld [vmem:[%s0 + $0xb0] sm:$0xff]
  %v38 = vld [vmem:[%s0 + $0xb8] sm:$0xff]
  %v39 = vld [vmem:[%s0 + $0xc0] sm:$0xff]
  %v40 = vld [vmem:[%s0 + $0xc8] sm:$0xff]
  %v41 = vld [vmem:[%s0 + $0xd0] sm:$0xff]
  %v42 = vld [vmem:[%s0 + $0xd8] sm:$0xff]
  %v43 = vld [vmem:[%s0 + $0xe0] sm:$0xff]
  %v44 = vld [vmem:[%s0 + $0xe8] sm:$0xff]
  %v45 = vld [vmem:[%s0 + $0xf0] sm:$0xff]
  %v46 = vld [vmem:[%s0 + $0xf8] sm:$0xff]
  %v47 = vld [vmem:[%s0 + $0x100] sm:$0xff]
  %v48 = vld [vmem:[%s0 + $0x108] sm:$0xff]
  %v49 = vld [vmem:[%s0 + $0x110] sm:$0xff]
  %v50 = vld [vmem:[%s0 + $0x118] sm:$0xff]
  %v51 = vld [vmem:[%s0 + $0x120] sm:$0xff]
  %v52 = vld [vmem:[%s0 + $0x128] sm:$0xff]
  %v53 = vld [vmem:[%s0 + $0x130] sm:$0xff]
  %v54 = vld [vmem:[%s0 + $0x138] sm:$0xff]
  %v55 = vld [vmem:[%s0 + $0x140] sm:$0xff]
  %v56 = vld [vmem:[%s0 + $0x148] sm:$0xff]
  %v57 = vld [vmem:[%s0 + $0x150] sm:$0xff]
  %v58 = vld [vmem:[%s0 + $0x158] sm:$0xff]
  %v59 = vld [vmem:[%s0 + $0x160] sm:$0xff]
  %v60 = vld [vmem:[%s0 + $0x168] sm:$0xff]
  %v61 = vld [vmem:[%s0 + $0x170] sm:$0xff]
  %v62 = vld [vmem:[%s0 + $0x178] sm:$0xff]
  %v63 = vld [vmem:[%s0 + $0x180] sm:$0xff]
  %v64 = vld [vmem:[%s0 + $0x188] sm:$0xff]
  %v65 = vld [vmem:[%s0 + $0x190] sm:$0xff]
  %v66 = vld [vmem:[%s0 + $0x198] sm:$0xff]
  %v67 = vld [vmem:[%s0 + $0x1a0] sm:$0xff]
  %v68 = vld [vmem:[%s0 + $0x1a8] sm:$0xff]
  %v69 = vld [vmem:[%s0 + $0x1b0] sm:$0xff]
  %v70 = vld [vmem:[%s0 + $0x1b8] sm:$0xff]
  %v71 = vld [vmem:[%s0 + $0x1c0] sm:$0xff]
  %v72 = vld [vmem:[%s0 + $0x1c8] sm:$0xff]
  %v73 = vld [vmem:[%s0 + $0x1d0] sm:$0xff]
  %v74 = vld [vmem:[%s0 + $0x1d8] sm:$0xff]
  %v75 = vld [vmem:[%s0 + $0x1e0] sm:$0xff]
  %v76 = vld [vmem:[%s0 + $0x1e8] sm:$0xff]
  %v77 = vld [vmem:[%s0 + $0x1f0] sm:$0xff]
  %v78 = vld [vmem:[%s0 + $0x1f8] sm:$0xff]
  %v79 = vld [vmem:[%s0 + $0x200] sm:$0xff]
  %v80 = vld [vmem:[%s0 + $0x208] sm:$0xff]
  %v81 = vld [vmem:[%s0 + $0x210] sm:$0xff]
  %v82 = vld [vmem:[%s0 + $0x218] sm:$0xff]
  %v83 = vld [vmem:[%s0 + $0x220] sm:$0xff]
  %v84 = vld [vmem:[%s0 + $0x228] sm:$0xff]
  %v85 = vld [vmem:[%s0 + $0x230] sm:$0xff]
  %v86 = vld [vmem:[%s0 + $0x238] sm:$0xff]
  %v87 = vld [vmem:[%s0 + $0x240] sm:$0xff]
  %v88 = vld [vmem:[%s0 + $0x248] sm:$0xff]
  %v89 = vld [vmem:[%s0 + $0x250] sm:$0xff]
  %v90 = vld [vmem:[%s0 + $0x258] sm:$0xff]
  %v91 = vld [vmem:[%s0 + $0x260] sm:$0xff]
  %v92 = vld [vmem:[%s0 + $0x268] sm:$0xff]
  %v93 = vld [vmem:[%s0 + $0x270] sm:$0xff]
  %v94 = vld [vmem:[%s0 + $0x278] sm:$0xff]
  %v95 = vld [vmem:[%s0 + $0x280] sm:$0xff]
  %v96 = vld [vmem:[%s0 + $0x288] sm:$0xff]
  %v97 = vld [vmem:[%s0 + $0x290] sm:$0xff]
  %v98 = vld [vmem:[%s0 + $0x298] sm:$0xff]
  %v99 = vld [vmem:[%s0 + $0x2a0] sm:$0xff]
  %v100 = vld [vmem:[%s0 + $0x2a8] sm:$0xff]
  %v101 = vld [vmem:[%s0 + $0x2b0] sm:$0xff]
  %v102 = vld [vmem:[%s0 + $0x2b8] sm:$0xff]
  %v103 = vld [vmem:[%s0 + $0x2c0] sm:$0xff]
  %v104 = vld [vmem:[%s0 + $0x2c8] sm:$0xff]
  %v105 = vld [vmem:[%s0 + $0x2d0] sm:$0xff]
  %v106 = vld [vmem:[%s0 + $0x2d8] sm:$0xff]
  %v107 = vld [vmem:[%s0 + $0x2e0] sm:$0xff]
  %v108 = vld [vmem:[%s0 + $0x2e8] sm:$0xff]
  %v109 = vld [vmem:[%s0 + $0x2f0] sm:$0xff]
  %v110 = vld [vmem:[%s0 + $0x2f8] sm:$0xff]
  %v111 = vld [vmem:[%s0 + $0x300] sm:$0xff]
  %v112 = vld [vmem:[%s0 + $0x308] sm:$0xff]
  %v113 = vld [vmem:[%s0 + $0x310] sm:$0xff]
  %v114 = vld [vmem:[%s0 + $0x318] sm:$0xff]
  %v115 = vld [vmem:[%s0 + $0x320] sm:$0xff]
  %v116 = vld [vmem:[%s0 + $0x328] sm:$0xff]
  %v117 = vld [vmem:[%s0 + $0x330] sm:$0xff]
  %v118 = vld [vmem:[%s0 + $0x338] sm:$0xff]
  %v119 = vld [vmem:[%s0 + $0x340] sm:$0xff]
  %v120 = vld [vmem:[%s0 + $0x348] sm:$0xff]
  %v121 = vld [vmem:[%s0 + $0x350] sm:$0xff]
  %v122 = vld [vmem:[%s0 + $0x358] sm:$0xff]
  %v123 = vld [vmem:[%s0 + $0x360] sm:$0xff]
  %v124 = vld [vmem:[%s0 + $0x368] sm:$0xff]
  %v125 = vld [vmem:[%s0 + $0x370] sm:$0xff]
  %v126 = vld [vmem:[%s0 + $0x378] sm:$0xff]
  %v127 = vld [vmem:[%s0 + $0x380] sm:$0xff]
  %v128 = vld [vmem:[%s0 + $0x388] sm:$0xff]
  %v129 = vld [vmem:[%s0 + $0x390] sm:$0xff]
  %v130 = vld [vmem:[%s0 + $0x398] sm:$0xff]
  %v131 = vld [vmem:[%s0 + $0x3a0] sm:$0xff]
  %v132 = vld [vmem:[%s0 + $0x3a8] sm:$0xff]
  %v133 = vld [vmem:[%s0 + $0x3b0] sm:$0xff]
  %v134 = vld [vmem:[%s0 + $0x3b8] sm:$0xff]
  %v135 = vld [vmem:[%s0 + $0x3c0] sm:$0xff]
  %v136 = vld [vmem:[%s0 + $0x3c8] sm:$0xff]
  %v137 = vld [vmem:[%s0 + $0x3d0] sm:$0xff]
  %v138 = vld [vmem:[%s0 + $0x3d8] sm:$0xff]
  %v139 = vld [vmem:[%s0 + $0x3e0] sm:$0xff]
  %v140 = vld [vmem:[%s0 + $0x3e8] sm:$0xff]
  %v141 = vld [vmem:[%s0 + $0x3f0] sm:$0xff]
  %v142 = vld [vmem:[%s0 + $0x3f8] sm:$0xff]
  %v143 = vld [vmem:[%s1] sm:$0xf]
  %v144 = vld [vmem:[%s1 + $0x4] sm:$0xf]
  %v145 = vld [vmem:[%s1 + $0x8] sm:$0xf]
  %v146 = vld [vmem:[%s1 + $0xc] sm:$0xf]
  %v147 = vld [vmem:[%s1 + $0x10] sm:$0xf]
  %v148 = vld [vmem:[%s1 + $0x14] sm:$0xf]
  %v149 = vld [vmem:[%s1 + $0x18] sm:$0xf]
  %v150 = vld [vmem:[%s1 + $0x1c] sm:$0xf]
  %v151 = vld [vmem:[%s1 + $0x20] sm:$0xf]
  %v152 = vld [vmem:[%s1 + $0x24] sm:$0xf]
  %v153 = vld [vmem:[%s1 + $0x28] sm:$0xf]
  %v154 = vld [vmem:[%s1 + $0x2c] sm:$0xf]
  %v155 = vld [vmem:[%s1 + $0x30] sm:$0xf]
  %v156 = vld [vmem:[%s1 + $0x34] sm:$0xf]
  %v157 = vld [vmem:[%s1 + $0x38] sm:$0xf]
  %v158 = vld [vmem:[%s1 + $0x3c] sm:$0xf]
  %v159 = vld [vmem:[%s1 + $0x40] sm:$0xf]
  %v160 = vld [vmem:[%s1 + $0x44] sm:$0xf]
  %v161 = vld [vmem:[%s1 + $0x48] sm:$0xf]
  %v162 = vld [vmem:[%s1 + $0x4c] sm:$0xf]
  %v163 = vld [vmem:[%s1 + $0x50] sm:$0xf]
  %v164 = vld [vmem:[%s1 + $0x54] sm:$0xf]
  %v165 = vld [vmem:[%s1 + $0x58] sm:$0xf]
  %v166 = vld [vmem:[%s1 + $0x5c] sm:$0xf]
  %v167 = vld [vmem:[%s1 + $0x60] sm:$0xf]
  %v168 = vld [vmem:[%s1 + $0x64] sm:$0xf]
  %v169 = vld [vmem:[%s1 + $0x68] sm:$0xf]
  %v170 = vld [vmem:[%s1 + $0x6c] sm:$0xf]
  %v171 = vld [vmem:[%s1 + $0x70] sm:$0xf]
  %v172 = vld [vmem:[%s1 + $0x74] sm:$0xf]
  %v173 = vld [vmem:[%s1 + $0x78] sm:$0xf]
  %v174 = vld [vmem:[%s1 + $0x7c] sm:$0xf]
  %v175 = vld [vmem:[%s1 + $0x80] sm:$0xf]
  %v176 = vld [vmem:[%s1 + $0x84] sm:$0xf]
  %v177 = vld [vmem:[%s1 + $0x88] sm:$0xf]
  %v178 = vld [vmem:[%s1 + $0x8c] sm:$0xf]
  %v179 = vld [vmem:[%s1 + $0x90] sm:$0xf]
  %v180 = vld [vmem:[%s1 + $0x94] sm:$0xf]
  %v181 = vld [vmem:[%s1 + $0x98] sm:$0xf]
  %v182 = vld [vmem:[%s1 + $0x9c] sm:$0xf]
  %v183 = vld [vmem:[%s1 + $0xa0] sm:$0xf]
  %v184 = vld [vmem:[%s1 + $0xa4] sm:$0xf]
  %v185 = vld [vmem:[%s1 + $0xa8] sm:$0xf]
  %v186 = vld [vmem:[%s1 + $0xac] sm:$0xf]
  %v187 = vld [vmem:[%s1 + $0xb0] sm:$0xf]
  %v188 = vld [vmem:[%s1 + $0xb4] sm:$0xf]
  %v189 = vld [vmem:[%s1 + $0xb8] sm:$0xf]
  %v190 = vld [vmem:[%s1 + $0xbc] sm:$0xf]
  %v191 = vld [vmem:[%s1 + $0xc0] sm:$0xf]
  %v192 = vld [vmem:[%s1 + $0xc4] sm:$0xf]
  %v193 = vld [vmem:[%s1 + $0xc8] sm:$0xf]
  %v194 = vld [vmem:[%s1 + $0xcc] sm:$0xf]
  %v195 = vld [vmem:[%s1 + $0xd0] sm:$0xf]
  %v196 = vld [vmem:[%s1 + $0xd4] sm:$0xf]
  %v197 = vld [vmem:[%s1 + $0xd8] sm:$0xf]
  %v198 = vld [vmem:[%s1 + $0xdc] sm:$0xf]
  %v199 = vld [vmem:[%s1 + $0xe0] sm:$0xf]
  %v200 = vld [vmem:[%s1 + $0xe4] sm:$0xf]
  %v201 = vld [vmem:[%s1 + $0xe8] sm:$0xf]
  %v202 = vld [vmem:[%s1 + $0xec] sm:$0xf]
  %v203 = vld [vmem:[%s1 + $0xf0] sm:$0xf]
  %v204 = vld [vmem:[%s1 + $0xf4] sm:$0xf]
  %v205 = vld [vmem:[%s1 + $0xf8] sm:$0xf]
  %v206 = vld [vmem:[%s1 + $0xfc] sm:$0xf]
  %v207 = vld [vmem:[%s1 + $0x100] sm:$0xf]
  %v208 = vld [vmem:[%s1 + $0x104] sm:$0xf]
  %v209 = vld [vmem:[%s1 + $0x108] sm:$0xf]
  %v210 = vld [vmem:[%s1 + $0x10c] sm:$0xf]
  %v211 = vld [vmem:[%s1 + $0x110] sm:$0xf]
  %v212 = vld [vmem:[%s1 + $0x114] sm:$0xf]
  %v213 = vld [vmem:[%s1 + $0x118] sm:$0xf]
  %v214 = vld [vmem:[%s1 + $0x11c] sm:$0xf]
  %v215 = vld [vmem:[%s1 + $0x120] sm:$0xf]
  %v216 = vld [vmem:[%s1 + $0x124] sm:$0xf]
  %v217 = vld [vmem:[%s1 + $0x128] sm:$0xf]
  %v218 = vld [vmem:[%s1 + $0x12c] sm:$0xf]
  %v219 = vld [vmem:[%s1 + $0x130] sm:$0xf]
  %v220 = vld [vmem:[%s1 + $0x134] sm:$0xf]
  %v221 = vld [vmem:[%s1 + $0x138] sm:$0xf]
  %v222 = vld [vmem:[%s1 + $0x13c] sm:$0xf]
  %v223 = vld [vmem:[%s1 + $0x140] sm:$0xf]
  %v224 = vld [vmem:[%s1 + $0x144] sm:$0xf]
  %v225 = vld [vmem:[%s1 + $0x148] sm:$0xf]
  %v226 = vld [vmem:[%s1 + $0x14c] sm:$0xf]
  %v227 = vld [vmem:[%s1 + $0x150] sm:$0xf]
  %v228 = vld [vmem:[%s1 + $0x154] sm:$0xf]
  %v229 = vld [vmem:[%s1 + $0x158] sm:$0xf]
  %v230 = vld [vmem:[%s1 + $0x15c] sm:$0xf]
  %v231 = vld [vmem:[%s1 + $0x160] sm:$0xf]
  %v232 = vld [vmem:[%s1 + $0x164] sm:$0xf]
  %v233 = vld [vmem:[%s1 + $0x168] sm:$0xf]
  %v234 = vld [vmem:[%s1 + $0x16c] sm:$0xf]
  %v235 = vld [vmem:[%s1 + $0x170] sm:$0xf]
  %v236 = vld [vmem:[%s1 + $0x174] sm:$0xf]
  %v237 = vld [vmem:[%s1 + $0x178] sm:$0xf]
  %v238 = vld [vmem:[%s1 + $0x17c] sm:$0xf]
  %v239 = vld [vmem:[%s1 + $0x180] sm:$0xf]
  %v240 = vld [vmem:[%s1 + $0x184] sm:$0xf]
  %v241 = vld [vmem:[%s1 + $0x188] sm:$0xf]
  %v242 = vld [vmem:[%s1 + $0x18c] sm:$0xf]
  %v243 = vld [vmem:[%s1 + $0x190] sm:$0xf]
  %v244 = vld [vmem:[%s1 + $0x194] sm:$0xf]
  %v245 = vld [vmem:[%s1 + $0x198] sm:$0xf]
  %v246 = vld [vmem:[%s1 + $0x19c] sm:$0xf]
  %v247 = vld [vmem:[%s1 + $0x1a0] sm:$0xf]
  %v248 = vld [vmem:[%s1 + $0x1a4] sm:$0xf]
  %v249 = vld [vmem:[%s1 + $0x1a8] sm:$0xf]
  %v250 = vld [vmem:[%s1 + $0x1ac] sm:$0xf]
  %v251 = vld [vmem:[%s1 + $0x1b0] sm:$0xf]
  %v252 = vld [vmem:[%s1 + $0x1b4] sm:$0xf]
  %v253 = vld [vmem:[%s1 + $0x1b8] sm:$0xf]
  %v254 = vld [vmem:[%s1 + $0x1bc] sm:$0xf]
  %v255 = vld [vmem:[%s1 + $0x1c0] sm:$0xf]
  %v256 = vld [vmem:[%s1 + $0x1c4] sm:$0xf]
  %v257 = vld [vmem:[%s1 + $0x1c8] sm:$0xf]
  %v258 = vld [vmem:[%s1 + $0x1cc] sm:$0xf]
  %v259 = vld [vmem:[%s1 + $0x1d0] sm:$0xf]
  %v260 = vld [vmem:[%s1 + $0x1d4] sm:$0xf]
  %v261 = vld [vmem:[%s1 + $0x1d8] sm:$0xf]
  %v262 = vld [vmem:[%s1 + $0x1dc] sm:$0xf]
  %v263 = vld [vmem:[%s1 + $0x1e0] sm:$0xf]
  %v264 = vld [vmem:[%s1 + $0x1e4] sm:$0xf]
  %v265 = vld [vmem:[%s1 + $0x1e8] sm:$0xf]
  %v266 = vld [vmem:[%s1 + $0x1ec] sm:$0xf]
  %v267 = vld [vmem:[%s1 + $0x1f0] sm:$0xf]
  %v268 = vld [vmem:[%s1 + $0x1f4] sm:$0xf]
  %v269 = vld [vmem:[%s1 + $0x1f8] sm:$0xf]
  %v270 = vld [vmem:[%s1 + $0x1fc] sm:$0xf]
  %v271 = vld [vmem:[%s1 + $0x200] sm:$0xf]
  %v272 = vld [vmem:[%s1 + $0x204] sm:$0xf]
  %v273 = vld [vmem:[%s1 + $0x208] sm:$0xf]
  %v274 = vld [vmem:[%s1 + $0x20c] sm:$0xf]
  %v275 = vld [vmem:[%s1 + $0x210] sm:$0xf]
  %v276 = vld [vmem:[%s1 + $0x214] sm:$0xf]
  %v277 = vld [vmem:[%s1 + $0x218] sm:$0xf]
  %v278 = vld [vmem:[%s1 + $0x21c] sm:$0xf]
  %v279 = vld [vmem:[%s1 + $0x220] sm:$0xf]
  %v280 = vld [vmem:[%s1 + $0x224] sm:$0xf]
  %v281 = vld [vmem:[%s1 + $0x228] sm:$0xf]
  %v282 = vld [vmem:[%s1 + $0x22c] sm:$0xf]
  %v283 = vld [vmem:[%s1 + $0x230] sm:$0xf]
  %v284 = vld [vmem:[%s1 + $0x234] sm:$0xf]
  %v285 = vld [vmem:[%s1 + $0x238] sm:$0xf]
  %v286 = vld [vmem:[%s1 + $0x23c] sm:$0xf]
  %v287 = vld [vmem:[%s1 + $0x240] sm:$0xf]
  %v288 = vld [vmem:[%s1 + $0x244] sm:$0xf]
  %v289 = vld [vmem:[%s1 + $0x248] sm:$0xf]
  %v290 = vld [vmem:[%s1 + $0x24c] sm:$0xf]
  %v291 = vld [vmem:[%s1 + $0x250] sm:$0xf]
  %v292 = vld [vmem:[%s1 + $0x254] sm:$0xf]
  %v293 = vld [vmem:[%s1 + $0x258] sm:$0xf]
  %v294 = vld [vmem:[%s1 + $0x25c] sm:$0xf]
  %v295 = vld [vmem:[%s1 + $0x260] sm:$0xf]
  %v296 = vld [vmem:[%s1 + $0x264] sm:$0xf]
  %v297 = vld [vmem:[%s1 + $0x268] sm:$0xf]
  %v298 = vld [vmem:[%s1 + $0x26c] sm:$0xf]
  %v299 = vld [vmem:[%s1 + $0x270] sm:$0xf]
  %v300 = vld [vmem:[%s1 + $0x274] sm:$0xf]
  %v301 = vld [vmem:[%s1 + $0x278] sm:$0xf]
  %v302 = vld [vmem:[%s1 + $0x27c] sm:$0xf]
  %v303 = vld [vmem:[%s1 + $0x280] sm:$0xf]
  %v304 = vld [vmem:[%s1 + $0x284] sm:$0xf]
  %v305 = vld [vmem:[%s1 + $0x288] sm:$0xf]
  %v306 = vld [vmem:[%s1 + $0x28c] sm:$0xf]
  %v307 = vld [vmem:[%s1 + $0x290] sm:$0xf]
  %v308 = vld [vmem:[%s1 + $0x294] sm:$0xf]
  %v309 = vld [vmem:[%s1 + $0x298] sm:$0xf]
  %v310 = vld [vmem:[%s1 + $0x29c] sm:$0xf]
  %v311 = vld [vmem:[%s1 + $0x2a0] sm:$0xf]
  %v312 = vld [vmem:[%s1 + $0x2a4] sm:$0xf]
  %v313 = vld [vmem:[%s1 + $0x2a8] sm:$0xf]
  %v314 = vld [vmem:[%s1 + $0x2ac] sm:$0xf]
  %v315 = vld [vmem:[%s1 + $0x2b0] sm:$0xf]
  %v316 = vld [vmem:[%s1 + $0x2b4] sm:$0xf]
  %v317 = vld [vmem:[%s1 + $0x2b8] sm:$0xf]
  %v318 = vld [vmem:[%s1 + $0x2bc] sm:$0xf]
  %v319 = vld [vmem:[%s1 + $0x2c0] sm:$0xf]
  %v320 = vld [vmem:[%s1 + $0x2c4] sm:$0xf]
  %v321 = vld [vmem:[%s1 + $0x2c8] sm:$0xf]
  %v322 = vld [vmem:[%s1 + $0x2cc] sm:$0xf]
  %v323 = vld [vmem:[%s1 + $0x2d0] sm:$0xf]
  %v324 = vld [vmem:[%s1 + $0x2d4] sm:$0xf]
  %v325 = vld [vmem:[%s1 + $0x2d8] sm:$0xf]
  %v326 = vld [vmem:[%s1 + $0x2dc] sm:$0xf]
  %v327 = vld [vmem:[%s1 + $0x2e0] sm:$0xf]
  %v328 = vld [vmem:[%s1 + $0x2e4] sm:$0xf]
  %v329 = vld [vmem:[%s1 + $0x2e8] sm:$0xf]
  %v330 = vld [vmem:[%s1 + $0x2ec] sm:$0xf]
  %v331 = vld [vmem:[%s1 + $0x2f0] sm:$0xf]
  %v332 = vld [vmem:[%s1 + $0x2f4] sm:$0xf]
  %v333 = vld [vmem:[%s1 + $0x2f8] sm:$0xf]
  %v334 = vld [vmem:[%s1 + $0x2fc] sm:$0xf]
  %v335 = vld [vmem:[%s1 + $0x300] sm:$0xf]
  %v336 = vld [vmem:[%s1 + $0x304] sm:$0xf]
  %v337 = vld [vmem:[%s1 + $0x308] sm:$0xf]
  %v338 = vld [vmem:[%s1 + $0x30c] sm:$0xf]
  %v339 = vld [vmem:[%s1 + $0x310] sm:$0xf]
  %v340 = vld [vmem:[%s1 + $0x314] sm:$0xf]
  %v341 = vld [vmem:[%s1 + $0x318] sm:$0xf]
  %v342 = vld [vmem:[%s1 + $0x31c] sm:$0xf]
  %v343 = vld [vmem:[%s1 + $0x320] sm:$0xf]
  %v344 = vld [vmem:[%s1 + $0x324] sm:$0xf]
  %v345 = vld [vmem:[%s1 + $0x328] sm:$0xf]
  %v346 = vld [vmem:[%s1 + $0x32c] sm:$0xf]
  %v347 = vld [vmem:[%s1 + $0x330] sm:$0xf]
  %v348 = vld [vmem:[%s1 + $0x334] sm:$0xf]
  %v349 = vld [vmem:[%s1 + $0x338] sm:$0xf]
  %v350 = vld [vmem:[%s1 + $0x33c] sm:$0xf]
  %v351 = vld [vmem:[%s1 + $0x340] sm:$0xf]
  %v352 = vld [vmem:[%s1 + $0x344] sm:$0xf]
  %v353 = vld [vmem:[%s1 + $0x348] sm:$0xf]
  %v354 = vld [vmem:[%s1 + $0x34c] sm:$0xf]
  %v355 = vld [vmem:[%s1 + $0x350] sm:$0xf]
  %v356 = vld [vmem:[%s1 + $0x354] sm:$0xf]
  %v357 = vld [vmem:[%s1 + $0x358] sm:$0xf]
  %v358 = vld [vmem:[%s1 + $0x35c] sm:$0xf]
  %v359 = vld [vmem:[%s1 + $0x360] sm:$0xf]
  %v360 = vld [vmem:[%s1 + $0x364] sm:$0xf]
  %v361 = vld [vmem:[%s1 + $0x368] sm:$0xf]
  %v362 = vld [vmem:[%s1 + $0x36c] sm:$0xf]
  %v363 = vld [vmem:[%s1 + $0x370] sm:$0xf]
  %v364 = vld [vmem:[%s1 + $0x374] sm:$0xf]
  %v365 = vld [vmem:[%s1 + $0x378] sm:$0xf]
  %v366 = vld [vmem:[%s1 + $0x37c] sm:$0xf]
  %v367 = vld [vmem:[%s1 + $0x380] sm:$0xf]
  %v368 = vld [vmem:[%s1 + $0x384] sm:$0xf]
  %v369 = vld [vmem:[%s1 + $0x388] sm:$0xf]
  %v370 = vld [vmem:[%s1 + $0x38c] sm:$0xf]
  %v371 = vld [vmem:[%s1 + $0x390] sm:$0xf]
  %v372 = vld [vmem:[%s1 + $0x394] sm:$0xf]
  %v373 = vld [vmem:[%s1 + $0x398] sm:$0xf]
  %v374 = vld [vmem:[%s1 + $0x39c] sm:$0xf]
  %v375 = vld [vmem:[%s1 + $0x3a0] sm:$0xf]
  %v376 = vld [vmem:[%s1 + $0x3a4] sm:$0xf]
  %v377 = vld [vmem:[%s1 + $0x3a8] sm:$0xf]
  %v378 = vld [vmem:[%s1 + $0x3ac] sm:$0xf]
  %v379 = vld [vmem:[%s1 + $0x3b0] sm:$0xf]
  %v380 = vld [vmem:[%s1 + $0x3b4] sm:$0xf]
  %v381 = vld [vmem:[%s1 + $0x3b8] sm:$0xf]
  %v382 = vld [vmem:[%s1 + $0x3bc] sm:$0xf]
  %v383 = vld [vmem:[%s1 + $0x3c0] sm:$0xf]
  %v384 = vld [vmem:[%s1 + $0x3c4] sm:$0xf]
  %v385 = vld [vmem:[%s1 + $0x3c8] sm:$0xf]
  %v386 = vld [vmem:[%s1 + $0x3cc] sm:$0xf]
  %v387 = vld [vmem:[%s1 + $0x3d0] sm:$0xf]
  %v388 = vld [vmem:[%s1 + $0x3d4] sm:$0xf]
  %v389 = vld [vmem:[%s1 + $0x3d8] sm:$0xf]
  %v390 = vld [vmem:[%s1 + $0x3dc] sm:$0xf]
  %v391 = vld [vmem:[%s1 + $0x3e0] sm:$0xf]
  %v392 = vld [vmem:[%s1 + $0x3e4] sm:$0xf]
  %v393 = vld [vmem:[%s1 + $0x3e8] sm:$0xf]
  %v394 = vld [vmem:[%s1 + $0x3ec] sm:$0xf]
  %v395 = vld [vmem:[%s1 + $0x3f0] sm:$0xf]
  %v396 = vld [vmem:[%s1 + $0x3f4] sm:$0xf]
  %v397 = vld [vmem:[%s1 + $0x3f8] sm:$0xf]
  %v398 = vld [vmem:[%s1 + $0x3fc] sm:$0xf]
  %v399 = vld [vmem:[%s2] sm:$0x1]
  %v401 = vlaneseq
  %v402 = vshrl.u32 %v401, 7
  %v403 = vsub.s32 0, %v402
  %v404 = vrot.slane %v399, %v403
  %v534 = vunpack.c.l.b16 %v15
  %v535 = vunpack.c.h.b16 %v15
  %v536 = vunpack.c.l.b16 %v16
  %v537 = vunpack.c.h.b16 %v16
  %v538 = vunpack.c.l.b16 %v17
  %v539 = vunpack.c.h.b16 %v17
  %v540 = vunpack.c.l.b16 %v18
  %v541 = vunpack.c.h.b16 %v18
  %v542 = vunpack.c.l.b16 %v19
  %v543 = vunpack.c.h.b16 %v19
  %v544 = vunpack.c.l.b16 %v20
  %v545 = vunpack.c.h.b16 %v20
  %v546 = vunpack.c.l.b16 %v21
  %v547 = vunpack.c.h.b16 %v21
  %v548 = vunpack.c.l.b16 %v22
  %v549 = vunpack.c.h.b16 %v22
  %v550 = vunpack.c.l.b16 %v23
  %v551 = vunpack.c.h.b16 %v23
  %v552 = vunpack.c.l.b16 %v24
  %v553 = vunpack.c.h.b16 %v24
  %v554 = vunpack.c.l.b16 %v25
  %v555 = vunpack.c.h.b16 %v25
  %v556 = vunpack.c.l.b16 %v26
  %v557 = vunpack.c.h.b16 %v26
  %v558 = vunpack.c.l.b16 %v27
  %v559 = vunpack.c.h.b16 %v27
  %v560 = vunpack.c.l.b16 %v28
  %v561 = vunpack.c.h.b16 %v28
  %v562 = vunpack.c.l.b16 %v29
  %v563 = vunpack.c.h.b16 %v29
  %v564 = vunpack.c.l.b16 %v30
  %v565 = vunpack.c.h.b16 %v30
  %v566 = vunpack.c.l.b16 %v31
  %v567 = vunpack.c.h.b16 %v31
  %v568 = vunpack.c.l.b16 %v32
  %v569 = vunpack.c.h.b16 %v32
  %v570 = vunpack.c.l.b16 %v33
  %v571 = vunpack.c.h.b16 %v33
  %v572 = vunpack.c.l.b16 %v34
  %v573 = vunpack.c.h.b16 %v34
  %v574 = vunpack.c.l.b16 %v35
  %v575 = vunpack.c.h.b16 %v35
  %v576 = vunpack.c.l.b16 %v36
  %v577 = vunpack.c.h.b16 %v36
  %v578 = vunpack.c.l.b16 %v37
  %v579 = vunpack.c.h.b16 %v37
  %v580 = vunpack.c.l.b16 %v38
  %v581 = vunpack.c.h.b16 %v38
  %v582 = vunpack.c.l.b16 %v39
  %v583 = vunpack.c.h.b16 %v39
  %v584 = vunpack.c.l.b16 %v40
  %v585 = vunpack.c.h.b16 %v40
  %v586 = vunpack.c.l.b16 %v41
  %v587 = vunpack.c.h.b16 %v41
  %v588 = vunpack.c.l.b16 %v42
  %v589 = vunpack.c.h.b16 %v42
  %v590 = vunpack.c.l.b16 %v43
  %v591 = vunpack.c.h.b16 %v43
  %v592 = vunpack.c.l.b16 %v44
  %v593 = vunpack.c.h.b16 %v44
  %v594 = vunpack.c.l.b16 %v45
  %v595 = vunpack.c.h.b16 %v45
  %v596 = vunpack.c.l.b16 %v46
  %v597 = vunpack.c.h.b16 %v46
  %v598 = vunpack.c.l.b16 %v47
  %v599 = vunpack.c.h.b16 %v47
  %v600 = vunpack.c.l.b16 %v48
  %v601 = vunpack.c.h.b16 %v48
  %v602 = vunpack.c.l.b16 %v49
  %v603 = vunpack.c.h.b16 %v49
  %v604 = vunpack.c.l.b16 %v50
  %v605 = vunpack.c.h.b16 %v50
  %v606 = vunpack.c.l.b16 %v51
  %v607 = vunpack.c.h.b16 %v51
  %v608 = vunpack.c.l.b16 %v52
  %v609 = vunpack.c.h.b16 %v52
  %v610 = vunpack.c.l.b16 %v53
  %v611 = vunpack.c.h.b16 %v53
  %v612 = vunpack.c.l.b16 %v54
  %v613 = vunpack.c.h.b16 %v54
  %v614 = vunpack.c.l.b16 %v55
  %v615 = vunpack.c.h.b16 %v55
  %v616 = vunpack.c.l.b16 %v56
  %v617 = vunpack.c.h.b16 %v56
  %v618 = vunpack.c.l.b16 %v57
  %v619 = vunpack.c.h.b16 %v57
  %v620 = vunpack.c.l.b16 %v58
  %v621 = vunpack.c.h.b16 %v58
  %v622 = vunpack.c.l.b16 %v59
  %v623 = vunpack.c.h.b16 %v59
  %v624 = vunpack.c.l.b16 %v60
  %v625 = vunpack.c.h.b16 %v60
  %v626 = vunpack.c.l.b16 %v61
  %v627 = vunpack.c.h.b16 %v61
  %v628 = vunpack.c.l.b16 %v62
  %v629 = vunpack.c.h.b16 %v62
  %v630 = vunpack.c.l.b16 %v63
  %v631 = vunpack.c.h.b16 %v63
  %v632 = vunpack.c.l.b16 %v64
  %v633 = vunpack.c.h.b16 %v64
  %v634 = vunpack.c.l.b16 %v65
  %v635 = vunpack.c.h.b16 %v65
  %v636 = vunpack.c.l.b16 %v66
  %v637 = vunpack.c.h.b16 %v66
  %v638 = vunpack.c.l.b16 %v67
  %v639 = vunpack.c.h.b16 %v67
  %v640 = vunpack.c.l.b16 %v68
  %v641 = vunpack.c.h.b16 %v68
  %v642 = vunpack.c.l.b16 %v69
  %v643 = vunpack.c.h.b16 %v69
  %v644 = vunpack.c.l.b16 %v70
  %v645 = vunpack.c.h.b16 %v70
  %v646 = vunpack.c.l.b16 %v71
  %v647 = vunpack.c.h.b16 %v71
  %v648 = vunpack.c.l.b16 %v72
  %v649 = vunpack.c.h.b16 %v72
  %v650 = vunpack.c.l.b16 %v73
  %v651 = vunpack.c.h.b16 %v73
  %v652 = vunpack.c.l.b16 %v74
  %v653 = vunpack.c.h.b16 %v74
  %v654 = vunpack.c.l.b16 %v75
  %v655 = vunpack.c.h.b16 %v75
  %v656 = vunpack.c.l.b16 %v76
  %v657 = vunpack.c.h.b16 %v76
  %v658 = vunpack.c.l.b16 %v77
  %v659 = vunpack.c.h.b16 %v77
  %v660 = vunpack.c.l.b16 %v78
  %v661 = vunpack.c.h.b16 %v78
  %v662 = vunpack.c.l.b16 %v79
  %v663 = vunpack.c.h.b16 %v79
  %v664 = vunpack.c.l.b16 %v80
  %v665 = vunpack.c.h.b16 %v80
  %v666 = vunpack.c.l.b16 %v81
  %v667 = vunpack.c.h.b16 %v81
  %v668 = vunpack.c.l.b16 %v82
  %v669 = vunpack.c.h.b16 %v82
  %v670 = vunpack.c.l.b16 %v83
  %v671 = vunpack.c.h.b16 %v83
  %v672 = vunpack.c.l.b16 %v84
  %v673 = vunpack.c.h.b16 %v84
  %v674 = vunpack.c.l.b16 %v85
  %v675 = vunpack.c.h.b16 %v85
  %v676 = vunpack.c.l.b16 %v86
  %v677 = vunpack.c.h.b16 %v86
  %v678 = vunpack.c.l.b16 %v87
  %v679 = vunpack.c.h.b16 %v87
  %v680 = vunpack.c.l.b16 %v88
  %v681 = vunpack.c.h.b16 %v88
  %v682 = vunpack.c.l.b16 %v89
  %v683 = vunpack.c.h.b16 %v89
  %v684 = vunpack.c.l.b16 %v90
  %v685 = vunpack.c.h.b16 %v90
  %v686 = vunpack.c.l.b16 %v91
  %v687 = vunpack.c.h.b16 %v91
  %v688 = vunpack.c.l.b16 %v92
  %v689 = vunpack.c.h.b16 %v92
  %v690 = vunpack.c.l.b16 %v93
  %v691 = vunpack.c.h.b16 %v93
  %v692 = vunpack.c.l.b16 %v94
  %v693 = vunpack.c.h.b16 %v94
  %v694 = vunpack.c.l.b16 %v95
  %v695 = vunpack.c.h.b16 %v95
  %v696 = vunpack.c.l.b16 %v96
  %v697 = vunpack.c.h.b16 %v96
  %v698 = vunpack.c.l.b16 %v97
  %v699 = vunpack.c.h.b16 %v97
  %v700 = vunpack.c.l.b16 %v98
  %v701 = vunpack.c.h.b16 %v98
  %v702 = vunpack.c.l.b16 %v99
  %v703 = vunpack.c.h.b16 %v99
  %v704 = vunpack.c.l.b16 %v100
  %v705 = vunpack.c.h.b16 %v100
  %v706 = vunpack.c.l.b16 %v101
  %v707 = vunpack.c.h.b16 %v101
  %v708 = vunpack.c.l.b16 %v102
  %v709 = vunpack.c.h.b16 %v102
  %v710 = vunpack.c.l.b16 %v103
  %v711 = vunpack.c.h.b16 %v103
  %v712 = vunpack.c.l.b16 %v104
  %v713 = vunpack.c.h.b16 %v104
  %v714 = vunpack.c.l.b16 %v105
  %v715 = vunpack.c.h.b16 %v105
  %v716 = vunpack.c.l.b16 %v106
  %v717 = vunpack.c.h.b16 %v106
  %v718 = vunpack.c.l.b16 %v107
  %v719 = vunpack.c.h.b16 %v107
  %v720 = vunpack.c.l.b16 %v108
  %v721 = vunpack.c.h.b16 %v108
  %v722 = vunpack.c.l.b16 %v109
  %v723 = vunpack.c.h.b16 %v109
  %v724 = vunpack.c.l.b16 %v110
  %v725 = vunpack.c.h.b16 %v110
  %v726 = vunpack.c.l.b16 %v111
  %v727 = vunpack.c.h.b16 %v111
  %v728 = vunpack.c.l.b16 %v112
  %v729 = vunpack.c.h.b16 %v112
  %v730 = vunpack.c.l.b16 %v113
  %v731 = vunpack.c.h.b16 %v113
  %v732 = vunpack.c.l.b16 %v114
  %v733 = vunpack.c.h.b16 %v114
  %v734 = vunpack.c.l.b16 %v115
  %v735 = vunpack.c.h.b16 %v115
  %v736 = vunpack.c.l.b16 %v116
  %v737 = vunpack.c.h.b16 %v116
  %v738 = vunpack.c.l.b16 %v117
  %v739 = vunpack.c.h.b16 %v117
  %v740 = vunpack.c.l.b16 %v118
  %v741 = vunpack.c.h.b16 %v118
  %v742 = vunpack.c.l.b16 %v119
  %v743 = vunpack.c.h.b16 %v119
  %v744 = vunpack.c.l.b16 %v120
  %v745 = vunpack.c.h.b16 %v120
  %v746 = vunpack.c.l.b16 %v121
  %v747 = vunpack.c.h.b16 %v121
  %v748 = vunpack.c.l.b16 %v122
  %v749 = vunpack.c.h.b16 %v122
  %v750 = vunpack.c.l.b16 %v123
  %v751 = vunpack.c.h.b16 %v123
  %v752 = vunpack.c.l.b16 %v124
  %v753 = vunpack.c.h.b16 %v124
  %v754 = vunpack.c.l.b16 %v125
  %v755 = vunpack.c.h.b16 %v125
  %v756 = vunpack.c.l.b16 %v126
  %v757 = vunpack.c.h.b16 %v126
  %v758 = vunpack.c.l.b16 %v127
  %v759 = vunpack.c.h.b16 %v127
  %v760 = vunpack.c.l.b16 %v128
  %v761 = vunpack.c.h.b16 %v128
  %v762 = vunpack.c.l.b16 %v129
  %v763 = vunpack.c.h.b16 %v129
  %v764 = vunpack.c.l.b16 %v130
  %v765 = vunpack.c.h.b16 %v130
  %v766 = vunpack.c.l.b16 %v131
  %v767 = vunpack.c.h.b16 %v131
  %v768 = vunpack.c.l.b16 %v132
  %v769 = vunpack.c.h.b16 %v132
  %v770 = vunpack.c.l.b16 %v133
  %v771 = vunpack.c.h.b16 %v133
  %v772 = vunpack.c.l.b16 %v134
  %v773 = vunpack.c.h.b16 %v134
  %v774 = vunpack.c.l.b16 %v135
  %v775 = vunpack.c.h.b16 %v135
  %v776 = vunpack.c.l.b16 %v136
  %v777 = vunpack.c.h.b16 %v136
  %v778 = vunpack.c.l.b16 %v137
  %v779 = vunpack.c.h.b16 %v137
  %v780 = vunpack.c.l.b16 %v138
  %v781 = vunpack.c.h.b16 %v138
  %v782 = vunpack.c.l.b16 %v139
  %v783 = vunpack.c.h.b16 %v139
  %v784 = vunpack.c.l.b16 %v140
  %v785 = vunpack.c.h.b16 %v140
  %v786 = vunpack.c.l.b16 %v141
  %v787 = vunpack.c.h.b16 %v141
  %v788 = vunpack.c.l.b16 %v142
  %v789 = vunpack.c.h.b16 %v142
  %v790 = vpack.c.b16 %v550, %v534
  %v791 = vpack.c.b16 %v551, %v535
  %v792 = vpack.c.b16 %v552, %v536
  %v793 = vpack.c.b16 %v553, %v537
  %v794 = vpack.c.b16 %v554, %v538
  %v795 = vpack.c.b16 %v555, %v539
  %v796 = vpack.c.b16 %v556, %v540
  %v797 = vpack.c.b16 %v557, %v541
  %v798 = vpack.c.b16 %v558, %v542
  %v799 = vpack.c.b16 %v559, %v543
  %v800 = vpack.c.b16 %v560, %v544
  %v801 = vpack.c.b16 %v561, %v545
  %v802 = vpack.c.b16 %v562, %v546
  %v803 = vpack.c.b16 %v563, %v547
  %v804 = vpack.c.b16 %v564, %v548
  %v805 = vpack.c.b16 %v565, %v549
  %v806 = vpack.c.b16 %v582, %v566
  %v807 = vpack.c.b16 %v583, %v567
  %v808 = vpack.c.b16 %v584, %v568
  %v809 = vpack.c.b16 %v585, %v569
  %v810 = vpack.c.b16 %v586, %v570
  %v811 = vpack.c.b16 %v587, %v571
  %v812 = vpack.c.b16 %v588, %v572
  %v813 = vpack.c.b16 %v589, %v573
  %v814 = vpack.c.b16 %v590, %v574
  %v815 = vpack.c.b16 %v591, %v575
  %v816 = vpack.c.b16 %v592, %v576
  %v817 = vpack.c.b16 %v593, %v577
  %v818 = vpack.c.b16 %v594, %v578
  %v819 = vpack.c.b16 %v595, %v579
  %v820 = vpack.c.b16 %v596, %v580
  %v821 = vpack.c.b16 %v597, %v581
  %v822 = vpack.c.b16 %v614, %v598
  %v823 = vpack.c.b16 %v615, %v599
  %v824 = vpack.c.b16 %v616, %v600
  %v825 = vpack.c.b16 %v617, %v601
  %v826 = vpack.c.b16 %v618, %v602
  %v827 = vpack.c.b16 %v619, %v603
  %v828 = vpack.c.b16 %v620, %v604
  %v829 = vpack.c.b16 %v621, %v605
  %v830 = vpack.c.b16 %v622, %v606
  %v831 = vpack.c.b16 %v623, %v607
  %v832 = vpack.c.b16 %v624, %v608
  %v833 = vpack.c.b16 %v625, %v609
  %v834 = vpack.c.b16 %v626, %v610
  %v835 = vpack.c.b16 %v627, %v611
  %v836 = vpack.c.b16 %v628, %v612
  %v837 = vpack.c.b16 %v629, %v613
  %v838 = vpack.c.b16 %v646, %v630
  %v839 = vpack.c.b16 %v647, %v631
  %v840 = vpack.c.b16 %v648, %v632
  %v841 = vpack.c.b16 %v649, %v633
  %v842 = vpack.c.b16 %v650, %v634
  %v843 = vpack.c.b16 %v651, %v635
  %v844 = vpack.c.b16 %v652, %v636
  %v845 = vpack.c.b16 %v653, %v637
  %v846 = vpack.c.b16 %v654, %v638
  %v847 = vpack.c.b16 %v655, %v639
  %v848 = vpack.c.b16 %v656, %v640
  %v849 = vpack.c.b16 %v657, %v641
  %v850 = vpack.c.b16 %v658, %v642
  %v851 = vpack.c.b16 %v659, %v643
  %v852 = vpack.c.b16 %v660, %v644
  %v853 = vpack.c.b16 %v661, %v645
  %v854 = vpack.c.b16 %v678, %v662
  %v855 = vpack.c.b16 %v679, %v663
  %v856 = vpack.c.b16 %v680, %v664
  %v857 = vpack.c.b16 %v681, %v665
  %v858 = vpack.c.b16 %v682, %v666
  %v859 = vpack.c.b16 %v683, %v667
  %v860 = vpack.c.b16 %v684, %v668
  %v861 = vpack.c.b16 %v685, %v669
  %v862 = vpack.c.b16 %v686, %v670
  %v863 = vpack.c.b16 %v687, %v671
  %v864 = vpack.c.b16 %v688, %v672
  %v865 = vpack.c.b16 %v689, %v673
  %v866 = vpack.c.b16 %v690, %v674
  %v867 = vpack.c.b16 %v691, %v675
  %v868 = vpack.c.b16 %v692, %v676
  %v869 = vpack.c.b16 %v693, %v677
  %v870 = vpack.c.b16 %v710, %v694
  %v871 = vpack.c.b16 %v711, %v695
  %v872 = vpack.c.b16 %v712, %v696
  %v873 = vpack.c.b16 %v713, %v697
  %v874 = vpack.c.b16 %v714, %v698
  %v875 = vpack.c.b16 %v715, %v699
  %v876 = vpack.c.b16 %v716, %v700
  %v877 = vpack.c.b16 %v717, %v701
  %v878 = vpack.c.b16 %v718, %v702
  %v879 = vpack.c.b16 %v719, %v703
  %v880 = vpack.c.b16 %v720, %v704
  %v881 = vpack.c.b16 %v721, %v705
  %v882 = vpack.c.b16 %v722, %v706
  %v883 = vpack.c.b16 %v723, %v707
  %v884 = vpack.c.b16 %v724, %v708
  %v885 = vpack.c.b16 %v725, %v709
  %v886 = vpack.c.b16 %v742, %v726
  %v887 = vpack.c.b16 %v743, %v727
  %v888 = vpack.c.b16 %v744, %v728
  %v889 = vpack.c.b16 %v745, %v729
  %v890 = vpack.c.b16 %v746, %v730
  %v891 = vpack.c.b16 %v747, %v731
  %v892 = vpack.c.b16 %v748, %v732
  %v893 = vpack.c.b16 %v749, %v733
  %v894 = vpack.c.b16 %v750, %v734
  %v895 = vpack.c.b16 %v751, %v735
  %v896 = vpack.c.b16 %v752, %v736
  %v897 = vpack.c.b16 %v753, %v737
  %v898 = vpack.c.b16 %v754, %v738
  %v899 = vpack.c.b16 %v755, %v739
  %v900 = vpack.c.b16 %v756, %v740
  %v901 = vpack.c.b16 %v757, %v741
  %v902 = vpack.c.b16 %v774, %v758
  %v903 = vpack.c.b16 %v775, %v759
  %v904 = vpack.c.b16 %v776, %v760
  %v905 = vpack.c.b16 %v777, %v761
  %v906 = vpack.c.b16 %v778, %v762
  %v907 = vpack.c.b16 %v779, %v763
  %v908 = vpack.c.b16 %v780, %v764
  %v909 = vpack.c.b16 %v781, %v765
  %v910 = vpack.c.b16 %v782, %v766
  %v911 = vpack.c.b16 %v783, %v767
  %v912 = vpack.c.b16 %v784, %v768
  %v913 = vpack.c.b16 %v785, %v769
  %v914 = vpack.c.b16 %v786, %v770
  %v915 = vpack.c.b16 %v787, %v771
  %v916 = vpack.c.b16 %v788, %v772
  %v917 = vpack.c.b16 %v789, %v773
  %v1302 = vunpack.c.l.b16 %v143
  %v1303 = vunpack.c.l.b16 %v144
  %v1304 = vunpack.c.l.b16 %v145
  %v1305 = vunpack.c.l.b16 %v146
  %v1306 = vunpack.c.l.b16 %v147
  %v1307 = vunpack.c.l.b16 %v148
  %v1308 = vunpack.c.l.b16 %v149
  %v1309 = vunpack.c.l.b16 %v150
  %v1310 = vunpack.c.l.b16 %v151
  %v1311 = vunpack.c.l.b16 %v152
  %v1312 = vunpack.c.l.b16 %v153
  %v1313 = vunpack.c.l.b16 %v154
  %v1314 = vunpack.c.l.b16 %v155
  %v1315 = vunpack.c.l.b16 %v156
  %v1316 = vunpack.c.l.b16 %v157
  %v1317 = vunpack.c.l.b16 %v158
  %v1318 = vunpack.c.l.b16 %v159
  %v1319 = vunpack.c.l.b16 %v160
  %v1320 = vunpack.c.l.b16 %v161
  %v1321 = vunpack.c.l.b16 %v162
  %v1322 = vunpack.c.l.b16 %v163
  %v1323 = vunpack.c.l.b16 %v164
  %v1324 = vunpack.c.l.b16 %v165
  %v1325 = vunpack.c.l.b16 %v166
  %v1326 = vunpack.c.l.b16 %v167
  %v1327 = vunpack.c.l.b16 %v168
  %v1328 = vunpack.c.l.b16 %v169
  %v1329 = vunpack.c.l.b16 %v170
  %v1330 = vunpack.c.l.b16 %v171
  %v1331 = vunpack.c.l.b16 %v172
  %v1332 = vunpack.c.l.b16 %v173
  %v1333 = vunpack.c.l.b16 %v174
  %v1334 = vunpack.c.l.b16 %v175
  %v1335 = vunpack.c.l.b16 %v176
  %v1336 = vunpack.c.l.b16 %v177
  %v1337 = vunpack.c.l.b16 %v178
  %v1338 = vunpack.c.l.b16 %v179
  %v1339 = vunpack.c.l.b16 %v180
  %v1340 = vunpack.c.l.b16 %v181
  %v1341 = vunpack.c.l.b16 %v182
  %v1342 = vunpack.c.l.b16 %v183
  %v1343 = vunpack.c.l.b16 %v184
  %v1344 = vunpack.c.l.b16 %v185
  %v1345 = vunpack.c.l.b16 %v186
  %v1346 = vunpack.c.l.b16 %v187
  %v1347 = vunpack.c.l.b16 %v188
  %v1348 = vunpack.c.l.b16 %v189
  %v1349 = vunpack.c.l.b16 %v190
  %v1350 = vunpack.c.l.b16 %v191
  %v1351 = vunpack.c.l.b16 %v192
  %v1352 = vunpack.c.l.b16 %v193
  %v1353 = vunpack.c.l.b16 %v194
  %v1354 = vunpack.c.l.b16 %v195
  %v1355 = vunpack.c.l.b16 %v196
  %v1356 = vunpack.c.l.b16 %v197
  %v1357 = vunpack.c.l.b16 %v198
  %v1358 = vunpack.c.l.b16 %v199
  %v1359 = vunpack.c.l.b16 %v200
  %v1360 = vunpack.c.l.b16 %v201
  %v1361 = vunpack.c.l.b16 %v202
  %v1362 = vunpack.c.l.b16 %v203
  %v1363 = vunpack.c.l.b16 %v204
  %v1364 = vunpack.c.l.b16 %v205
  %v1365 = vunpack.c.l.b16 %v206
  %v1366 = vunpack.c.l.b16 %v207
  %v1367 = vunpack.c.l.b16 %v208
  %v1368 = vunpack.c.l.b16 %v209
  %v1369 = vunpack.c.l.b16 %v210
  %v1370 = vunpack.c.l.b16 %v211
  %v1371 = vunpack.c.l.b16 %v212
  %v1372 = vunpack.c.l.b16 %v213
  %v1373 = vunpack.c.l.b16 %v214
  %v1374 = vunpack.c.l.b16 %v215
  %v1375 = vunpack.c.l.b16 %v216
  %v1376 = vunpack.c.l.b16 %v217
  %v1377 = vunpack.c.l.b16 %v218
  %v1378 = vunpack.c.l.b16 %v219
  %v1379 = vunpack.c.l.b16 %v220
  %v1380 = vunpack.c.l.b16 %v221
  %v1381 = vunpack.c.l.b16 %v222
  %v1382 = vunpack.c.l.b16 %v223
  %v1383 = vunpack.c.l.b16 %v224
  %v1384 = vunpack.c.l.b16 %v225
  %v1385 = vunpack.c.l.b16 %v226
  %v1386 = vunpack.c.l.b16 %v227
  %v1387 = vunpack.c.l.b16 %v228
  %v1388 = vunpack.c.l.b16 %v229
  %v1389 = vunpack.c.l.b16 %v230
  %v1390 = vunpack.c.l.b16 %v231
  %v1391 = vunpack.c.l.b16 %v232
  %v1392 = vunpack.c.l.b16 %v233
  %v1393 = vunpack.c.l.b16 %v234
  %v1394 = vunpack.c.l.b16 %v235
  %v1395 = vunpack.c.l.b16 %v236
  %v1396 = vunpack.c.l.b16 %v237
  %v1397 = vunpack.c.l.b16 %v238
  %v1398 = vunpack.c.l.b16 %v239
  %v1399 = vunpack.c.l.b16 %v240
  %v1400 = vunpack.c.l.b16 %v241
  %v1401 = vunpack.c.l.b16 %v242
  %v1402 = vunpack.c.l.b16 %v243
  %v1403 = vunpack.c.l.b16 %v244
  %v1404 = vunpack.c.l.b16 %v245
  %v1405 = vunpack.c.l.b16 %v246
  %v1406 = vunpack.c.l.b16 %v247
  %v1407 = vunpack.c.l.b16 %v248
  %v1408 = vunpack.c.l.b16 %v249
  %v1409 = vunpack.c.l.b16 %v250
  %v1410 = vunpack.c.l.b16 %v251
  %v1411 = vunpack.c.l.b16 %v252
  %v1412 = vunpack.c.l.b16 %v253
  %v1413 = vunpack.c.l.b16 %v254
  %v1414 = vunpack.c.l.b16 %v255
  %v1415 = vunpack.c.l.b16 %v256
  %v1416 = vunpack.c.l.b16 %v257
  %v1417 = vunpack.c.l.b16 %v258
  %v1418 = vunpack.c.l.b16 %v259
  %v1419 = vunpack.c.l.b16 %v260
  %v1420 = vunpack.c.l.b16 %v261
  %v1421 = vunpack.c.l.b16 %v262
  %v1422 = vunpack.c.l.b16 %v263
  %v1423 = vunpack.c.l.b16 %v264
  %v1424 = vunpack.c.l.b16 %v265
  %v1425 = vunpack.c.l.b16 %v266
  %v1426 = vunpack.c.l.b16 %v267
  %v1427 = vunpack.c.l.b16 %v268
  %v1428 = vunpack.c.l.b16 %v269
  %v1429 = vunpack.c.l.b16 %v270
  %v1430 = vunpack.c.l.b16 %v271
  %v1431 = vunpack.c.l.b16 %v272
  %v1432 = vunpack.c.l.b16 %v273
  %v1433 = vunpack.c.l.b16 %v274
  %v1434 = vunpack.c.l.b16 %v275
  %v1435 = vunpack.c.l.b16 %v276
  %v1436 = vunpack.c.l.b16 %v277
  %v1437 = vunpack.c.l.b16 %v278
  %v1438 = vunpack.c.l.b16 %v279
  %v1439 = vunpack.c.l.b16 %v280
  %v1440 = vunpack.c.l.b16 %v281
  %v1441 = vunpack.c.l.b16 %v282
  %v1442 = vunpack.c.l.b16 %v283
  %v1443 = vunpack.c.l.b16 %v284
  %v1444 = vunpack.c.l.b16 %v285
  %v1445 = vunpack.c.l.b16 %v286
  %v1446 = vunpack.c.l.b16 %v287
  %v1447 = vunpack.c.l.b16 %v288
  %v1448 = vunpack.c.l.b16 %v289
  %v1449 = vunpack.c.l.b16 %v290
  %v1450 = vunpack.c.l.b16 %v291
  %v1451 = vunpack.c.l.b16 %v292
  %v1452 = vunpack.c.l.b16 %v293
  %v1453 = vunpack.c.l.b16 %v294
  %v1454 = vunpack.c.l.b16 %v295
  %v1455 = vunpack.c.l.b16 %v296
  %v1456 = vunpack.c.l.b16 %v297
  %v1457 = vunpack.c.l.b16 %v298
  %v1458 = vunpack.c.l.b16 %v299
  %v1459 = vunpack.c.l.b16 %v300
  %v1460 = vunpack.c.l.b16 %v301
  %v1461 = vunpack.c.l.b16 %v302
  %v1462 = vunpack.c.l.b16 %v303
  %v1463 = vunpack.c.l.b16 %v304
  %v1464 = vunpack.c.l.b16 %v305
  %v1465 = vunpack.c.l.b16 %v306
  %v1466 = vunpack.c.l.b16 %v307
  %v1467 = vunpack.c.l.b16 %v308
  %v1468 = vunpack.c.l.b16 %v309
  %v1469 = vunpack.c.l.b16 %v310
  %v1470 = vunpack.c.l.b16 %v311
  %v1471 = vunpack.c.l.b16 %v312
  %v1472 = vunpack.c.l.b16 %v313
  %v1473 = vunpack.c.l.b16 %v314
  %v1474 = vunpack.c.l.b16 %v315
  %v1475 = vunpack.c.l.b16 %v316
  %v1476 = vunpack.c.l.b16 %v317
  %v1477 = vunpack.c.l.b16 %v318
  %v1478 = vunpack.c.l.b16 %v319
  %v1479 = vunpack.c.l.b16 %v320
  %v1480 = vunpack.c.l.b16 %v321
  %v1481 = vunpack.c.l.b16 %v322
  %v1482 = vunpack.c.l.b16 %v323
  %v1483 = vunpack.c.l.b16 %v324
  %v1484 = vunpack.c.l.b16 %v325
  %v1485 = vunpack.c.l.b16 %v326
  %v1486 = vunpack.c.l.b16 %v327
  %v1487 = vunpack.c.l.b16 %v328
  %v1488 = vunpack.c.l.b16 %v329
  %v1489 = vunpack.c.l.b16 %v330
  %v1490 = vunpack.c.l.b16 %v331
  %v1491 = vunpack.c.l.b16 %v332
  %v1492 = vunpack.c.l.b16 %v333
  %v1493 = vunpack.c.l.b16 %v334
  %v1494 = vunpack.c.l.b16 %v335
  %v1495 = vunpack.c.l.b16 %v336
  %v1496 = vunpack.c.l.b16 %v337
  %v1497 = vunpack.c.l.b16 %v338
  %v1498 = vunpack.c.l.b16 %v339
  %v1499 = vunpack.c.l.b16 %v340
  %v1500 = vunpack.c.l.b16 %v341
  %v1501 = vunpack.c.l.b16 %v342
  %v1502 = vunpack.c.l.b16 %v343
  %v1503 = vunpack.c.l.b16 %v344
  %v1504 = vunpack.c.l.b16 %v345
  %v1505 = vunpack.c.l.b16 %v346
  %v1506 = vunpack.c.l.b16 %v347
  %v1507 = vunpack.c.l.b16 %v348
  %v1508 = vunpack.c.l.b16 %v349
  %v1509 = vunpack.c.l.b16 %v350
  %v1510 = vunpack.c.l.b16 %v351
  %v1511 = vunpack.c.l.b16 %v352
  %v1512 = vunpack.c.l.b16 %v353
  %v1513 = vunpack.c.l.b16 %v354
  %v1514 = vunpack.c.l.b16 %v355
  %v1515 = vunpack.c.l.b16 %v356
  %v1516 = vunpack.c.l.b16 %v357
  %v1517 = vunpack.c.l.b16 %v358
  %v1518 = vunpack.c.l.b16 %v359
  %v1519 = vunpack.c.l.b16 %v360
  %v1520 = vunpack.c.l.b16 %v361
  %v1521 = vunpack.c.l.b16 %v362
  %v1522 = vunpack.c.l.b16 %v363
  %v1523 = vunpack.c.l.b16 %v364
  %v1524 = vunpack.c.l.b16 %v365
  %v1525 = vunpack.c.l.b16 %v366
  %v1526 = vunpack.c.l.b16 %v367
  %v1527 = vunpack.c.l.b16 %v368
  %v1528 = vunpack.c.l.b16 %v369
  %v1529 = vunpack.c.l.b16 %v370
  %v1530 = vunpack.c.l.b16 %v371
  %v1531 = vunpack.c.l.b16 %v372
  %v1532 = vunpack.c.l.b16 %v373
  %v1533 = vunpack.c.l.b16 %v374
  %v1534 = vunpack.c.l.b16 %v375
  %v1535 = vunpack.c.l.b16 %v376
  %v1536 = vunpack.c.l.b16 %v377
  %v1537 = vunpack.c.l.b16 %v378
  %v1538 = vunpack.c.l.b16 %v379
  %v1539 = vunpack.c.l.b16 %v380
  %v1540 = vunpack.c.l.b16 %v381
  %v1541 = vunpack.c.l.b16 %v382
  %v1542 = vunpack.c.l.b16 %v383
  %v1543 = vunpack.c.l.b16 %v384
  %v1544 = vunpack.c.l.b16 %v385
  %v1545 = vunpack.c.l.b16 %v386
  %v1546 = vunpack.c.l.b16 %v387
  %v1547 = vunpack.c.l.b16 %v388
  %v1548 = vunpack.c.l.b16 %v389
  %v1549 = vunpack.c.l.b16 %v390
  %v1550 = vunpack.c.l.b16 %v391
  %v1551 = vunpack.c.l.b16 %v392
  %v1552 = vunpack.c.l.b16 %v393
  %v1553 = vunpack.c.l.b16 %v394
  %v1554 = vunpack.c.l.b16 %v395
  %v1555 = vunpack.c.l.b16 %v396
  %v1556 = vunpack.c.l.b16 %v397
  %v1557 = vunpack.c.l.b16 %v398
  %v1558 = vpack.c.b16 %v1303, %v1302
  %v1559 = vpack.c.b16 %v1305, %v1304
  %v1560 = vpack.c.b16 %v1307, %v1306
  %v1561 = vpack.c.b16 %v1309, %v1308
  %v1562 = vpack.c.b16 %v1311, %v1310
  %v1563 = vpack.c.b16 %v1313, %v1312
  %v1564 = vpack.c.b16 %v1315, %v1314
  %v1565 = vpack.c.b16 %v1317, %v1316
  %v1566 = vpack.c.b16 %v1319, %v1318
  %v1567 = vpack.c.b16 %v1321, %v1320
  %v1568 = vpack.c.b16 %v1323, %v1322
  %v1569 = vpack.c.b16 %v1325, %v1324
  %v1570 = vpack.c.b16 %v1327, %v1326
  %v1571 = vpack.c.b16 %v1329, %v1328
  %v1572 = vpack.c.b16 %v1331, %v1330
  %v1573 = vpack.c.b16 %v1333, %v1332
  %v1574 = vpack.c.b16 %v1335, %v1334
  %v1575 = vpack.c.b16 %v1337, %v1336
  %v1576 = vpack.c.b16 %v1339, %v1338
  %v1577 = vpack.c.b16 %v1341, %v1340
  %v1578 = vpack.c.b16 %v1343, %v1342
  %v1579 = vpack.c.b16 %v1345, %v1344
  %v1580 = vpack.c.b16 %v1347, %v1346
  %v1581 = vpack.c.b16 %v1349, %v1348
  %v1582 = vpack.c.b16 %v1351, %v1350
  %v1583 = vpack.c.b16 %v1353, %v1352
  %v1584 = vpack.c.b16 %v1355, %v1354
  %v1585 = vpack.c.b16 %v1357, %v1356
  %v1586 = vpack.c.b16 %v1359, %v1358
  %v1587 = vpack.c.b16 %v1361, %v1360
  %v1588 = vpack.c.b16 %v1363, %v1362
  %v1589 = vpack.c.b16 %v1365, %v1364
  %v1590 = vpack.c.b16 %v1367, %v1366
  %v1591 = vpack.c.b16 %v1369, %v1368
  %v1592 = vpack.c.b16 %v1371, %v1370
  %v1593 = vpack.c.b16 %v1373, %v1372
  %v1594 = vpack.c.b16 %v1375, %v1374
  %v1595 = vpack.c.b16 %v1377, %v1376
  %v1596 = vpack.c.b16 %v1379, %v1378
  %v1597 = vpack.c.b16 %v1381, %v1380
  %v1598 = vpack.c.b16 %v1383, %v1382
  %v1599 = vpack.c.b16 %v1385, %v1384
  %v1600 = vpack.c.b16 %v1387, %v1386
  %v1601 = vpack.c.b16 %v1389, %v1388
  %v1602 = vpack.c.b16 %v1391, %v1390
  %v1603 = vpack.c.b16 %v1393, %v1392
  %v1604 = vpack.c.b16 %v1395, %v1394
  %v1605 = vpack.c.b16 %v1397, %v1396
  %v1606 = vpack.c.b16 %v1399, %v1398
  %v1607 = vpack.c.b16 %v1401, %v1400
  %v1608 = vpack.c.b16 %v1403, %v1402
  %v1609 = vpack.c.b16 %v1405, %v1404
  %v1610 = vpack.c.b16 %v1407, %v1406
  %v1611 = vpack.c.b16 %v1409, %v1408
  %v1612 = vpack.c.b16 %v1411, %v1410
  %v1613 = vpack.c.b16 %v1413, %v1412
  %v1614 = vpack.c.b16 %v1415, %v1414
  %v1615 = vpack.c.b16 %v1417, %v1416
  %v1616 = vpack.c.b16 %v1419, %v1418
  %v1617 = vpack.c.b16 %v1421, %v1420
  %v1618 = vpack.c.b16 %v1423, %v1422
  %v1619 = vpack.c.b16 %v1425, %v1424
  %v1620 = vpack.c.b16 %v1427, %v1426
  %v1621 = vpack.c.b16 %v1429, %v1428
  %v1622 = vpack.c.b16 %v1431, %v1430
  %v1623 = vpack.c.b16 %v1433, %v1432
  %v1624 = vpack.c.b16 %v1435, %v1434
  %v1625 = vpack.c.b16 %v1437, %v1436
  %v1626 = vpack.c.b16 %v1439, %v1438
  %v1627 = vpack.c.b16 %v1441, %v1440
  %v1628 = vpack.c.b16 %v1443, %v1442
  %v1629 = vpack.c.b16 %v1445, %v1444
  %v1630 = vpack.c.b16 %v1447, %v1446
  %v1631 = vpack.c.b16 %v1449, %v1448
  %v1632 = vpack.c.b16 %v1451, %v1450
  %v1633 = vpack.c.b16 %v1453, %v1452
  %v1634 = vpack.c.b16 %v1455, %v1454
  %v1635 = vpack.c.b16 %v1457, %v1456
  %v1636 = vpack.c.b16 %v1459, %v1458
  %v1637 = vpack.c.b16 %v1461, %v1460
  %v1638 = vpack.c.b16 %v1463, %v1462
  %v1639 = vpack.c.b16 %v1465, %v1464
  %v1640 = vpack.c.b16 %v1467, %v1466
  %v1641 = vpack.c.b16 %v1469, %v1468
  %v1642 = vpack.c.b16 %v1471, %v1470
  %v1643 = vpack.c.b16 %v1473, %v1472
  %v1644 = vpack.c.b16 %v1475, %v1474
  %v1645 = vpack.c.b16 %v1477, %v1476
  %v1646 = vpack.c.b16 %v1479, %v1478
  %v1647 = vpack.c.b16 %v1481, %v1480
  %v1648 = vpack.c.b16 %v1483, %v1482
  %v1649 = vpack.c.b16 %v1485, %v1484
  %v1650 = vpack.c.b16 %v1487, %v1486
  %v1651 = vpack.c.b16 %v1489, %v1488
  %v1652 = vpack.c.b16 %v1491, %v1490
  %v1653 = vpack.c.b16 %v1493, %v1492
  %v1654 = vpack.c.b16 %v1495, %v1494
  %v1655 = vpack.c.b16 %v1497, %v1496
  %v1656 = vpack.c.b16 %v1499, %v1498
  %v1657 = vpack.c.b16 %v1501, %v1500
  %v1658 = vpack.c.b16 %v1503, %v1502
  %v1659 = vpack.c.b16 %v1505, %v1504
  %v1660 = vpack.c.b16 %v1507, %v1506
  %v1661 = vpack.c.b16 %v1509, %v1508
  %v1662 = vpack.c.b16 %v1511, %v1510
  %v1663 = vpack.c.b16 %v1513, %v1512
  %v1664 = vpack.c.b16 %v1515, %v1514
  %v1665 = vpack.c.b16 %v1517, %v1516
  %v1666 = vpack.c.b16 %v1519, %v1518
  %v1667 = vpack.c.b16 %v1521, %v1520
  %v1668 = vpack.c.b16 %v1523, %v1522
  %v1669 = vpack.c.b16 %v1525, %v1524
  %v1670 = vpack.c.b16 %v1527, %v1526
  %v1671 = vpack.c.b16 %v1529, %v1528
  %v1672 = vpack.c.b16 %v1531, %v1530
  %v1673 = vpack.c.b16 %v1533, %v1532
  %v1674 = vpack.c.b16 %v1535, %v1534
  %v1675 = vpack.c.b16 %v1537, %v1536
  %v1676 = vpack.c.b16 %v1539, %v1538
  %v1677 = vpack.c.b16 %v1541, %v1540
  %v1678 = vpack.c.b16 %v1543, %v1542
  %v1679 = vpack.c.b16 %v1545, %v1544
  %v1680 = vpack.c.b16 %v1547, %v1546
  %v1681 = vpack.c.b16 %v1549, %v1548
  %v1682 = vpack.c.b16 %v1551, %v1550
  %v1683 = vpack.c.b16 %v1553, %v1552
  %v1684 = vpack.c.b16 %v1555, %v1554
  %v1685 = vpack.c.b16 %v1557, %v1556
  %1814 = vmatprep.subr.bf16.mxu0 0
  %1815 = vmatpush1.bf16.msra.mxu0 %v1558
  %1816 = vmatprep.subr.bf16.mxu0 0
  %1817 = vmatpush1.bf16.msra.mxu0 %v1559
  %1818 = vmatprep.subr.bf16.mxu0 0
  %1819 = vmatpush1.bf16.msra.mxu0 %v1560
  %1820 = vmatprep.subr.bf16.mxu0 0
  %1821 = vmatpush1.bf16.msra.mxu0 %v1561
  %1822 = vmatprep.subr.bf16.mxu0 0
  %1823 = vmatpush1.bf16.msra.mxu0 %v1562
  %1824 = vmatprep.subr.bf16.mxu0 0
  %1825 = vmatpush1.bf16.msra.mxu0 %v1563
  %1826 = vmatprep.subr.bf16.mxu0 0
  %1827 = vmatpush1.bf16.msra.mxu0 %v1564
  %1828 = vmatprep.subr.bf16.mxu0 0
  %1829 = vmatpush1.bf16.msra.mxu0 %v1565
  %1830 = vmatprep.subr.bf16.mxu0 0
  %1831 = vmatpush1.bf16.msra.mxu0 %v1566
  %1832 = vmatprep.subr.bf16.mxu0 0
  %1833 = vmatpush1.bf16.msra.mxu0 %v1567
  %1834 = vmatprep.subr.bf16.mxu0 0
  %1835 = vmatpush1.bf16.msra.mxu0 %v1568
  %1836 = vmatprep.subr.bf16.mxu0 0
  %1837 = vmatpush1.bf16.msra.mxu0 %v1569
  %1838 = vmatprep.subr.bf16.mxu0 0
  %1839 = vmatpush1.bf16.msra.mxu0 %v1570
  %1840 = vmatprep.subr.bf16.mxu0 0
  %1841 = vmatpush1.bf16.msra.mxu0 %v1571
  %1842 = vmatprep.subr.bf16.mxu0 0
  %1843 = vmatpush1.bf16.msra.mxu0 %v1572
  %1844 = vmatprep.subr.bf16.mxu0 0
  %1845 = vmatpush1.bf16.msra.mxu0 %v1573
  %1846 = vmatprep.mubr.bf16.mxu0 %v791
  %1847 = vmatmul.mubr.bf16.gmra.mrb[0].mxu0 %v790
  %v1848 = vpop.f32.mrb[0].mxu0
  %v1849 = vadd.f32 %v404, %v1848
  %v1850 = vpop.f32.mrb[0].mxu0
  %v1851 = vpop.f32.mrb[0].mxu0
  %v1852 = vadd.f32 %v404, %v1851
  %v1853 = vpop.f32.mrb[0].mxu0
  %1854 = vmatprep.mubr.bf16.mxu0 %v807
  %1855 = vmatmul.mubr.bf16.gmra.mrb[0].mxu0 %v806
  %v1856 = vpop.f32.mrb[0].mxu0
  %v1857 = vadd.f32 %v404, %v1856
  %v1858 = vpop.f32.mrb[0].mxu0
  %v1859 = vpop.f32.mrb[0].mxu0
  %v1860 = vadd.f32 %v404, %v1859
  %v1861 = vpop.f32.mrb[0].mxu0
  %1862 = vmatprep.mubr.bf16.mxu0 %v823
  %1863 = vmatmul.mubr.bf16.gmra.mrb[0].mxu0 %v822
  %v1864 = vpop.f32.mrb[0].mxu0
  %v1865 = vadd.f32 %v404, %v1864
  %v1866 = vpop.f32.mrb[0].mxu0
  %v1867 = vpop.f32.mrb[0].mxu0
  %v1868 = vadd.f32 %v404, %v1867
  %v1869 = vpop.f32.mrb[0].mxu0
  %1870 = vmatprep.mubr.bf16.mxu0 %v839
  %1871 = vmatmul.mubr.bf16.gmra.mrb[0].mxu0 %v838
  %v1872 = vpop.f32.mrb[0].mxu0
  %v1873 = vadd.f32 %v404, %v1872
  %v1874 = vpop.f32.mrb[0].mxu0
  %v1875 = vpop.f32.mrb[0].mxu0
  %v1876 = vadd.f32 %v404, %v1875
  %v1877 = vpop.f32.mrb[0].mxu0
  %1878 = vmatprep.mubr.bf16.mxu0 %v855
  %1879 = vmatmul.mubr.bf16.gmra.mrb[0].mxu0 %v854
  %v1880 = vpop.f32.mrb[0].mxu0
  %v1881 = vadd.f32 %v404, %v1880
  %v1882 = vpop.f32.mrb[0].mxu0
  %v1883 = vpop.f32.mrb[0].mxu0
  %v1884 = vadd.f32 %v404, %v1883
  %v1885 = vpop.f32.mrb[0].mxu0
  %1886 = vmatprep.mubr.bf16.mxu0 %v871
  %1887 = vmatmul.mubr.bf16.gmra.mrb[0].mxu0 %v870
  %v1888 = vpop.f32.mrb[0].mxu0
  %v1889 = vadd.f32 %v404, %v1888
  %v1890 = vpop.f32.mrb[0].mxu0
  %v1891 = vpop.f32.mrb[0].mxu0
  %v1892 = vadd.f32 %v404, %v1891
  %v1893 = vpop.f32.mrb[0].mxu0
  %1894 = vmatprep.mubr.bf16.mxu0 %v887
  %1895 = vmatmul.mubr.bf16.gmra.mrb[0].mxu0 %v886
  %v1896 = vpop.f32.mrb[0].mxu0
  %v1897 = vadd.f32 %v404, %v1896
  %v1898 = vpop.f32.mrb[0].mxu0
  %v1899 = vpop.f32.mrb[0].mxu0
  %v1900 = vadd.f32 %v404, %v1899
  %v1901 = vpop.f32.mrb[0].mxu0
  %1902 = vmatprep.mubr.bf16.mxu0 %v903
  %1903 = vmatmul.mubr.bf16.gmra.mrb[0].mxu0 %v902
  %v1904 = vpop.f32.mrb[0].mxu0
  %v1905 = vadd.f32 %v404, %v1904
  %v1906 = vpop.f32.mrb[0].mxu0
  %v1907 = vpop.f32.mrb[0].mxu0
  %v1908 = vadd.f32 %v404, %v1907
  %v1909 = vpop.f32.mrb[0].mxu0
  %1910 = vdwg.mxu0
  %1911 = vmatprep.subr.bf16.mxu0 0
  %1912 = vmatpush1.bf16.msra.mxu0 %v1574
  %1913 = vmatprep.subr.bf16.mxu0 0
  %1914 = vmatpush1.bf16.msra.mxu0 %v1575
  %1915 = vmatprep.subr.bf16.mxu0 0
  %1916 = vmatpush1.bf16.msra.mxu0 %v1576
  %1917 = vmatprep.subr.bf16.mxu0 0
  %1918 = vmatpush1.bf16.msra.mxu0 %v1577
  %1919 = vmatprep.subr.bf16.mxu0 0
  %1920 = vmatpush1.bf16.msra.mxu0 %v1578
  %1921 = vmatprep.subr.bf16.mxu0 0
  %1922 = vmatpush1.bf16.msra.mxu0 %v1579
  %1923 = vmatprep.subr.bf16.mxu0 0
  %1924 = vmatpush1.bf16.msra.mxu0 %v1580
  %1925 = vmatprep.subr.bf16.mxu0 0
  %1926 = vmatpush1.bf16.msra.mxu0 %v1581
  %1927 = vmatprep.subr.bf16.mxu0 0
  %1928 = vmatpush1.bf16.msra.mxu0 %v1582
  %1929 = vmatprep.subr.bf16.mxu0 0
  %1930 = vmatpush1.bf16.msra.mxu0 %v1583
  %1931 = vmatprep.subr.bf16.mxu0 0
  %1932 = vmatpush1.bf16.msra.mxu0 %v1584
  %1933 = vmatprep.subr.bf16.mxu0 0
  %1934 = vmatpush1.bf16.msra.mxu0 %v1585
  %1935 = vmatprep.subr.bf16.mxu0 0
  %1936 = vmatpush1.bf16.msra.mxu0 %v1586
  %1937 = vmatprep.subr.bf16.mxu0 0
  %1938 = vmatpush1.bf16.msra.mxu0 %v1587
  %1939 = vmatprep.subr.bf16.mxu0 0
  %1940 = vmatpush1.bf16.msra.mxu0 %v1588
  %1941 = vmatprep.subr.bf16.mxu0 0
  %1942 = vmatpush1.bf16.msra.mxu0 %v1589
  %1943 = vmatprep.mubr.bf16.mxu0 %v793
  %1944 = vmatmul.mubr.bf16.gmra.mrb[0].mxu0 %v792
  %v1945 = vpop.f32.mrb[0].mxu0
  %v1946 = vadd.f32 %v1849, %v1945
  %v1947 = vpop.f32.mrb[0].mxu0
  %v1948 = vpop.f32.mrb[0].mxu0
  %v1949 = vadd.f32 %v1852, %v1948
  %v1950 = vpop.f32.mrb[0].mxu0
  %1951 = vmatprep.mubr.bf16.mxu0 %v809
  %1952 = vmatmul.mubr.bf16.gmra.mrb[0].mxu0 %v808
  %v1953 = vpop.f32.mrb[0].mxu0
  %v1954 = vadd.f32 %v1857, %v1953
  %v1955 = vpop.f32.mrb[0].mxu0
  %v1956 = vpop.f32.mrb[0].mxu0
  %v1957 = vadd.f32 %v1860, %v1956
  %v1958 = vpop.f32.mrb[0].mxu0
  %1959 = vmatprep.mubr.bf16.mxu0 %v825
  %1960 = vmatmul.mubr.bf16.gmra.mrb[0].mxu0 %v824
  %v1961 = vpop.f32.mrb[0].mxu0
  %v1962 = vadd.f32 %v1865, %v1961
  %v1963 = vpop.f32.mrb[0].mxu0
  %v1964 = vpop.f32.mrb[0].mxu0
  %v1965 = vadd.f32 %v1868, %v1964
  %v1966 = vpop.f32.mrb[0].mxu0
  %1967 = vmatprep.mubr.bf16.mxu0 %v841
  %1968 = vmatmul.mubr.bf16.gmra.mrb[0].mxu0 %v840
  %v1969 = vpop.f32.mrb[0].mxu0
  %v1970 = vadd.f32 %v1873, %v1969
  %v1971 = vpop.f32.mrb[0].mxu0
  %v1972 = vpop.f32.mrb[0].mxu0
  %v1973 = vadd.f32 %v1876, %v1972
  %v1974 = vpop.f32.mrb[0].mxu0
  %1975 = vmatprep.mubr.bf16.mxu0 %v857
  %1976 = vmatmul.mubr.bf16.gmra.mrb[0].mxu0 %v856
  %v1977 = vpop.f32.mrb[0].mxu0
  %v1978 = vadd.f32 %v1881, %v1977
  %v1979 = vpop.f32.mrb[0].mxu0
  %v1980 = vpop.f32.mrb[0].mxu0
  %v1981 = vadd.f32 %v1884, %v1980
  %v1982 = vpop.f32.mrb[0].mxu0
  %1983 = vmatprep.mubr.bf16.mxu0 %v873
  %1984 = vmatmul.mubr.bf16.gmra.mrb[0].mxu0 %v872
  %v1985 = vpop.f32.mrb[0].mxu0
  %v1986 = vadd.f32 %v1889, %v1985
  %v1987 = vpop.f32.mrb[0].mxu0
  %v1988 = vpop.f32.mrb[0].mxu0
  %v1989 = vadd.f32 %v1892, %v1988
  %v1990 = vpop.f32.mrb[0].mxu0
  %1991 = vmatprep.mubr.bf16.mxu0 %v889
  %1992 = vmatmul.mubr.bf16.gmra.mrb[0].mxu0 %v888
  %v1993 = vpop.f32.mrb[0].mxu0
  %v1994 = vadd.f32 %v1897, %v1993
  %v1995 = vpop.f32.mrb[0].mxu0
  %v1996 = vpop.f32.mrb[0].mxu0
  %v1997 = vadd.f32 %v1900, %v1996
  %v1998 = vpop.f32.mrb[0].mxu0
  %1999 = vmatprep.mubr.bf16.mxu0 %v905
  %2000 = vmatmul.mubr.bf16.gmra.mrb[0].mxu0 %v904
  %v2001 = vpop.f32.mrb[0].mxu0
  %v2002 = vadd.f32 %v1905, %v2001
  %v2003 = vpop.f32.mrb[0].mxu0
  %v2004 = vpop.f32.mrb[0].mxu0
  %v2005 = vadd.f32 %v1908, %v2004
  %v2006 = vpop.f32.mrb[0].mxu0
  %2007 = vdwg.mxu0
  %2008 = vmatprep.subr.bf16.mxu0 0
  %2009 = vmatpush1.bf16.msra.mxu0 %v1590
  %2010 = vmatprep.subr.bf16.mxu0 0
  %2011 = vmatpush1.bf16.msra.mxu0 %v1591
  %2012 = vmatprep.subr.bf16.mxu0 0
  %2013 = vmatpush1.bf16.msra.mxu0 %v1592
  %2014 = vmatprep.subr.bf16.mxu0 0
  %2015 = vmatpush1.bf16.msra.mxu0 %v1593
  %2016 = vmatprep.subr.bf16.mxu0 0
  %2017 = vmatpush1.bf16.msra.mxu0 %v1594
  %2018 = vmatprep.subr.bf16.mxu0 0
  %2019 = vmatpush1.bf16.msra.mxu0 %v1595
  %2020 = vmatprep.subr.bf16.mxu0 0
  %2021 = vmatpush1.bf16.msra.mxu0 %v1596
  %2022 = vmatprep.subr.bf16.mxu0 0
  %2023 = vmatpush1.bf16.msra.mxu0 %v1597
  %2024 = vmatprep.subr.bf16.mxu0 0
  %2025 = vmatpush1.bf16.msra.mxu0 %v1598
  %2026 = vmatprep.subr.bf16.mxu0 0
  %2027 = vmatpush1.bf16.msra.mxu0 %v1599
  %2028 = vmatprep.subr.bf16.mxu0 0
  %2029 = vmatpush1.bf16.msra.mxu0 %v1600
  %2030 = vmatprep.subr.bf16.mxu0 0
  %2031 = vmatpush1.bf16.msra.mxu0 %v1601
  %2032 = vmatprep.subr.bf16.mxu0 0
  %2033 = vmatpush1.bf16.msra.mxu0 %v1602
  %2034 = vmatprep.subr.bf16.mxu0 0
  %2035 = vmatpush1.bf16.msra.mxu0 %v1603
  %2036 = vmatprep.subr.bf16.mxu0 0
  %2037 = vmatpush1.bf16.msra.mxu0 %v1604
  %2038 = vmatprep.subr.bf16.mxu0 0
  %2039 = vmatpush1.bf16.msra.mxu0 %v1605
  %2040 = vmatprep.mubr.bf16.mxu0 %v795
  %2041 = vmatmul.mubr.bf16.gmra.mrb[0].mxu0 %v794
  %v2042 = vpop.f32.mrb[0].mxu0
  %v2043 = vadd.f32 %v1946, %v2042
  %v2044 = vpop.f32.mrb[0].mxu0
  %v2045 = vpop.f32.mrb[0].mxu0
  %v2046 = vadd.f32 %v1949, %v2045
  %v2047 = vpop.f32.mrb[0].mxu0
  %2048 = vmatprep.mubr.bf16.mxu0 %v811
  %2049 = vmatmul.mubr.bf16.gmra.mrb[0].mxu0 %v810
  %v2050 = vpop.f32.mrb[0].mxu0
  %v2051 = vadd.f32 %v1954, %v2050
  %v2052 = vpop.f32.mrb[0].mxu0
  %v2053 = vpop.f32.mrb[0].mxu0
  %v2054 = vadd.f32 %v1957, %v2053
  %v2055 = vpop.f32.mrb[0].mxu0
  %2056 = vmatprep.mubr.bf16.mxu0 %v827
  %2057 = vmatmul.mubr.bf16.gmra.mrb[0].mxu0 %v826
  %v2058 = vpop.f32.mrb[0].mxu0
  %v2059 = vadd.f32 %v1962, %v2058
  %v2060 = vpop.f32.mrb[0].mxu0
  %v2061 = vpop.f32.mrb[0].mxu0
  %v2062 = vadd.f32 %v1965, %v2061
  %v2063 = vpop.f32.mrb[0].mxu0
  %2064 = vmatprep.mubr.bf16.mxu0 %v843
  %2065 = vmatmul.mubr.bf16.gmra.mrb[0].mxu0 %v842
  %v2066 = vpop.f32.mrb[0].mxu0
  %v2067 = vadd.f32 %v1970, %v2066
  %v2068 = vpop.f32.mrb[0].mxu0
  %v2069 = vpop.f32.mrb[0].mxu0
  %v2070 = vadd.f32 %v1973, %v2069
  %v2071 = vpop.f32.mrb[0].mxu0
  %2072 = vmatprep.mubr.bf16.mxu0 %v859
  %2073 = vmatmul.mubr.bf16.gmra.mrb[0].mxu0 %v858
  %v2074 = vpop.f32.mrb[0].mxu0
  %v2075 = vadd.f32 %v1978, %v2074
  %v2076 = vpop.f32.mrb[0].mxu0
  %v2077 = vpop.f32.mrb[0].mxu0
  %v2078 = vadd.f32 %v1981, %v2077
  %v2079 = vpop.f32.mrb[0].mxu0
  %2080 = vmatprep.mubr.bf16.mxu0 %v875
  %2081 = vmatmul.mubr.bf16.gmra.mrb[0].mxu0 %v874
  %v2082 = vpop.f32.mrb[0].mxu0
  %v2083 = vadd.f32 %v1986, %v2082
  %v2084 = vpop.f32.mrb[0].mxu0
  %v2085 = vpop.f32.mrb[0].mxu0
  %v2086 = vadd.f32 %v1989, %v2085
  %v2087 = vpop.f32.mrb[0].mxu0
  %2088 = vmatprep.mubr.bf16.mxu0 %v891
  %2089 = vmatmul.mubr.bf16.gmra.mrb[0].mxu0 %v890
  %v2090 = vpop.f32.mrb[0].mxu0
  %v2091 = vadd.f32 %v1994, %v2090
  %v2092 = vpop.f32.mrb[0].mxu0
  %v2093 = vpop.f32.mrb[0].mxu0
  %v2094 = vadd.f32 %v1997, %v2093
  %v2095 = vpop.f32.mrb[0].mxu0
  %2096 = vmatprep.mubr.bf16.mxu0 %v907
  %2097 = vmatmul.mubr.bf16.gmra.mrb[0].mxu0 %v906
  %v2098 = vpop.f32.mrb[0].mxu0
  %v2099 = vadd.f32 %v2002, %v2098
  %v2100 = vpop.f32.mrb[0].mxu0
  %v2101 = vpop.f32.mrb[0].mxu0
  %v2102 = vadd.f32 %v2005, %v2101
  %v2103 = vpop.f32.mrb[0].mxu0
  %2104 = vdwg.mxu0
  %2105 = vmatprep.subr.bf16.mxu0 0
  %2106 = vmatpush1.bf16.msra.mxu0 %v1606
  %2107 = vmatprep.subr.bf16.mxu0 0
  %2108 = vmatpush1.bf16.msra.mxu0 %v1607
  %2109 = vmatprep.subr.bf16.mxu0 0
  %2110 = vmatpush1.bf16.msra.mxu0 %v1608
  %2111 = vmatprep.subr.bf16.mxu0 0
  %2112 = vmatpush1.bf16.msra.mxu0 %v1609
  %2113 = vmatprep.subr.bf16.mxu0 0
  %2114 = vmatpush1.bf16.msra.mxu0 %v1610
  %2115 = vmatprep.subr.bf16.mxu0 0
  %2116 = vmatpush1.bf16.msra.mxu0 %v1611
  %2117 = vmatprep.subr.bf16.mxu0 0
  %2118 = vmatpush1.bf16.msra.mxu0 %v1612
  %2119 = vmatprep.subr.bf16.mxu0 0
  %2120 = vmatpush1.bf16.msra.mxu0 %v1613
  %2121 = vmatprep.subr.bf16.mxu0 0
  %2122 = vmatpush1.bf16.msra.mxu0 %v1614
  %2123 = vmatprep.subr.bf16.mxu0 0
  %2124 = vmatpush1.bf16.msra.mxu0 %v1615
  %2125 = vmatprep.subr.bf16.mxu0 0
  %2126 = vmatpush1.bf16.msra.mxu0 %v1616
  %2127 = vmatprep.subr.bf16.mxu0 0
  %2128 = vmatpush1.bf16.msra.mxu0 %v1617
  %2129 = vmatprep.subr.bf16.mxu0 0
  %2130 = vmatpush1.bf16.msra.mxu0 %v1618
  %2131 = vmatprep.subr.bf16.mxu0 0
  %2132 = vmatpush1.bf16.msra.mxu0 %v1619
  %2133 = vmatprep.subr.bf16.mxu0 0
  %2134 = vmatpush1.bf16.msra.mxu0 %v1620
  %2135 = vmatprep.subr.bf16.mxu0 0
  %2136 = vmatpush1.bf16.msra.mxu0 %v1621
  %2137 = vmatprep.mubr.bf16.mxu0 %v797
  %2138 = vmatmul.mubr.bf16.gmra.mrb[0].mxu0 %v796
  %v2139 = vpop.f32.mrb[0].mxu0
  %v2140 = vadd.f32 %v2043, %v2139
  %v2141 = vpop.f32.mrb[0].mxu0
  %v2142 = vpop.f32.mrb[0].mxu0
  %v2143 = vadd.f32 %v2046, %v2142
  %v2144 = vpop.f32.mrb[0].mxu0
  %2145 = vmatprep.mubr.bf16.mxu0 %v813
  %2146 = vmatmul.mubr.bf16.gmra.mrb[0].mxu0 %v812
  %v2147 = vpop.f32.mrb[0].mxu0
  %v2148 = vadd.f32 %v2051, %v2147
  %v2149 = vpop.f32.mrb[0].mxu0
  %v2150 = vpop.f32.mrb[0].mxu0
  %v2151 = vadd.f32 %v2054, %v2150
  %v2152 = vpop.f32.mrb[0].mxu0
  %2153 = vmatprep.mubr.bf16.mxu0 %v829
  %2154 = vmatmul.mubr.bf16.gmra.mrb[0].mxu0 %v828
  %v2155 = vpop.f32.mrb[0].mxu0
  %v2156 = vadd.f32 %v2059, %v2155
  %v2157 = vpop.f32.mrb[0].mxu0
  %v2158 = vpop.f32.mrb[0].mxu0
  %v2159 = vadd.f32 %v2062, %v2158
  %v2160 = vpop.f32.mrb[0].mxu0
  %2161 = vmatprep.mubr.bf16.mxu0 %v845
  %2162 = vmatmul.mubr.bf16.gmra.mrb[0].mxu0 %v844
  %v2163 = vpop.f32.mrb[0].mxu0
  %v2164 = vadd.f32 %v2067, %v2163
  %v2165 = vpop.f32.mrb[0].mxu0
  %v2166 = vpop.f32.mrb[0].mxu0
  %v2167 = vadd.f32 %v2070, %v2166
  %v2168 = vpop.f32.mrb[0].mxu0
  %2169 = vmatprep.mubr.bf16.mxu0 %v861
  %2170 = vmatmul.mubr.bf16.gmra.mrb[0].mxu0 %v860
  %v2171 = vpop.f32.mrb[0].mxu0
  %v2172 = vadd.f32 %v2075, %v2171
  %v2173 = vpop.f32.mrb[0].mxu0
  %v2174 = vpop.f32.mrb[0].mxu0
  %v2175 = vadd.f32 %v2078, %v2174
  %v2176 = vpop.f32.mrb[0].mxu0
  %2177 = vmatprep.mubr.bf16.mxu0 %v877
  %2178 = vmatmul.mubr.bf16.gmra.mrb[0].mxu0 %v876
  %v2179 = vpop.f32.mrb[0].mxu0
  %v2180 = vadd.f32 %v2083, %v2179
  %v2181 = vpop.f32.mrb[0].mxu0
  %v2182 = vpop.f32.mrb[0].mxu0
  %v2183 = vadd.f32 %v2086, %v2182
  %v2184 = vpop.f32.mrb[0].mxu0
  %2185 = vmatprep.mubr.bf16.mxu0 %v893
  %2186 = vmatmul.mubr.bf16.gmra.mrb[0].mxu0 %v892
  %v2187 = vpop.f32.mrb[0].mxu0
  %v2188 = vadd.f32 %v2091, %v2187
  %v2189 = vpop.f32.mrb[0].mxu0
  %v2190 = vpop.f32.mrb[0].mxu0
  %v2191 = vadd.f32 %v2094, %v2190
  %v2192 = vpop.f32.mrb[0].mxu0
  %2193 = vmatprep.mubr.bf16.mxu0 %v909
  %2194 = vmatmul.mubr.bf16.gmra.mrb[0].mxu0 %v908
  %v2195 = vpop.f32.mrb[0].mxu0
  %v2196 = vadd.f32 %v2099, %v2195
  %v2197 = vpop.f32.mrb[0].mxu0
  %v2198 = vpop.f32.mrb[0].mxu0
  %v2199 = vadd.f32 %v2102, %v2198
  %v2200 = vpop.f32.mrb[0].mxu0
  %2201 = vdwg.mxu0
  %2202 = vmatprep.subr.bf16.mxu0 0
  %2203 = vmatpush1.bf16.msra.mxu0 %v1622
  %2204 = vmatprep.subr.bf16.mxu0 0
  %2205 = vmatpush1.bf16.msra.mxu0 %v1623
  %2206 = vmatprep.subr.bf16.mxu0 0
  %2207 = vmatpush1.bf16.msra.mxu0 %v1624
  %2208 = vmatprep.subr.bf16.mxu0 0
  %2209 = vmatpush1.bf16.msra.mxu0 %v1625
  %2210 = vmatprep.subr.bf16.mxu0 0
  %2211 = vmatpush1.bf16.msra.mxu0 %v1626
  %2212 = vmatprep.subr.bf16.mxu0 0
  %2213 = vmatpush1.bf16.msra.mxu0 %v1627
  %2214 = vmatprep.subr.bf16.mxu0 0
  %2215 = vmatpush1.bf16.msra.mxu0 %v1628
  %2216 = vmatprep.subr.bf16.mxu0 0
  %2217 = vmatpush1.bf16.msra.mxu0 %v1629
  %2218 = vmatprep.subr.bf16.mxu0 0
  %2219 = vmatpush1.bf16.msra.mxu0 %v1630
  %2220 = vmatprep.subr.bf16.mxu0 0
  %2221 = vmatpush1.bf16.msra.mxu0 %v1631
  %2222 = vmatprep.subr.bf16.mxu0 0
  %2223 = vmatpush1.bf16.msra.mxu0 %v1632
  %2224 = vmatprep.subr.bf16.mxu0 0
  %2225 = vmatpush1.bf16.msra.mxu0 %v1633
  %2226 = vmatprep.subr.bf16.mxu0 0
  %2227 = vmatpush1.bf16.msra.mxu0 %v1634
  %2228 = vmatprep.subr.bf16.mxu0 0
  %2229 = vmatpush1.bf16.msra.mxu0 %v1635
  %2230 = vmatprep.subr.bf16.mxu0 0
  %2231 = vmatpush1.bf16.msra.mxu0 %v1636
  %2232 = vmatprep.subr.bf16.mxu0 0
  %2233 = vmatpush1.bf16.msra.mxu0 %v1637
  %2234 = vmatprep.mubr.bf16.mxu0 %v799
  %2235 = vmatmul.mubr.bf16.gmra.mrb[0].mxu0 %v798
  %v2236 = vpop.f32.mrb[0].mxu0
  %v2237 = vadd.f32 %v2140, %v2236
  %v2238 = vpop.f32.mrb[0].mxu0
  %v2239 = vpop.f32.mrb[0].mxu0
  %v2240 = vadd.f32 %v2143, %v2239
  %v2241 = vpop.f32.mrb[0].mxu0
  %2242 = vmatprep.mubr.bf16.mxu0 %v815
  %2243 = vmatmul.mubr.bf16.gmra.mrb[0].mxu0 %v814
  %v2244 = vpop.f32.mrb[0].mxu0
  %v2245 = vadd.f32 %v2148, %v2244
  %v2246 = vpop.f32.mrb[0].mxu0
  %v2247 = vpop.f32.mrb[0].mxu0
  %v2248 = vadd.f32 %v2151, %v2247
  %v2249 = vpop.f32.mrb[0].mxu0
  %2250 = vmatprep.mubr.bf16.mxu0 %v831
  %2251 = vmatmul.mubr.bf16.gmra.mrb[0].mxu0 %v830
  %v2252 = vpop.f32.mrb[0].mxu0
  %v2253 = vadd.f32 %v2156, %v2252
  %v2254 = vpop.f32.mrb[0].mxu0
  %v2255 = vpop.f32.mrb[0].mxu0
  %v2256 = vadd.f32 %v2159, %v2255
  %v2257 = vpop.f32.mrb[0].mxu0
  %2258 = vmatprep.mubr.bf16.mxu0 %v847
  %2259 = vmatmul.mubr.bf16.gmra.mrb[0].mxu0 %v846
  %v2260 = vpop.f32.mrb[0].mxu0
  %v2261 = vadd.f32 %v2164, %v2260
  %v2262 = vpop.f32.mrb[0].mxu0
  %v2263 = vpop.f32.mrb[0].mxu0
  %v2264 = vadd.f32 %v2167, %v2263
  %v2265 = vpop.f32.mrb[0].mxu0
  %2266 = vmatprep.mubr.bf16.mxu0 %v863
  %2267 = vmatmul.mubr.bf16.gmra.mrb[0].mxu0 %v862
  %v2268 = vpop.f32.mrb[0].mxu0
  %v2269 = vadd.f32 %v2172, %v2268
  %v2270 = vpop.f32.mrb[0].mxu0
  %v2271 = vpop.f32.mrb[0].mxu0
  %v2272 = vadd.f32 %v2175, %v2271
  %v2273 = vpop.f32.mrb[0].mxu0
  %2274 = vmatprep.mubr.bf16.mxu0 %v879
  %2275 = vmatmul.mubr.bf16.gmra.mrb[0].mxu0 %v878
  %v2276 = vpop.f32.mrb[0].mxu0
  %v2277 = vadd.f32 %v2180, %v2276
  %v2278 = vpop.f32.mrb[0].mxu0
  %v2279 = vpop.f32.mrb[0].mxu0
  %v2280 = vadd.f32 %v2183, %v2279
  %v2281 = vpop.f32.mrb[0].mxu0
  %2282 = vmatprep.mubr.bf16.mxu0 %v895
  %2283 = vmatmul.mubr.bf16.gmra.mrb[0].mxu0 %v894
  %v2284 = vpop.f32.mrb[0].mxu0
  %v2285 = vadd.f32 %v2188, %v2284
  %v2286 = vpop.f32.mrb[0].mxu0
  %v2287 = vpop.f32.mrb[0].mxu0
  %v2288 = vadd.f32 %v2191, %v2287
  %v2289 = vpop.f32.mrb[0].mxu0
  %2290 = vmatprep.mubr.bf16.mxu0 %v911
  %2291 = vmatmul.mubr.bf16.gmra.mrb[0].mxu0 %v910
  %v2292 = vpop.f32.mrb[0].mxu0
  %v2293 = vadd.f32 %v2196, %v2292
  %v2294 = vpop.f32.mrb[0].mxu0
  %v2295 = vpop.f32.mrb[0].mxu0
  %v2296 = vadd.f32 %v2199, %v2295
  %v2297 = vpop.f32.mrb[0].mxu0
  %2298 = vdwg.mxu0
  %2299 = vmatprep.subr.bf16.mxu0 0
  %2300 = vmatpush1.bf16.msra.mxu0 %v1638
  %2301 = vmatprep.subr.bf16.mxu0 0
  %2302 = vmatpush1.bf16.msra.mxu0 %v1639
  %2303 = vmatprep.subr.bf16.mxu0 0
  %2304 = vmatpush1.bf16.msra.mxu0 %v1640
  %2305 = vmatprep.subr.bf16.mxu0 0
  %2306 = vmatpush1.bf16.msra.mxu0 %v1641
  %2307 = vmatprep.subr.bf16.mxu0 0
  %2308 = vmatpush1.bf16.msra.mxu0 %v1642
  %2309 = vmatprep.subr.bf16.mxu0 0
  %2310 = vmatpush1.bf16.msra.mxu0 %v1643
  %2311 = vmatprep.subr.bf16.mxu0 0
  %2312 = vmatpush1.bf16.msra.mxu0 %v1644
  %2313 = vmatprep.subr.bf16.mxu0 0
  %2314 = vmatpush1.bf16.msra.mxu0 %v1645
  %2315 = vmatprep.subr.bf16.mxu0 0
  %2316 = vmatpush1.bf16.msra.mxu0 %v1646
  %2317 = vmatprep.subr.bf16.mxu0 0
  %2318 = vmatpush1.bf16.msra.mxu0 %v1647
  %2319 = vmatprep.subr.bf16.mxu0 0
  %2320 = vmatpush1.bf16.msra.mxu0 %v1648
  %2321 = vmatprep.subr.bf16.mxu0 0
  %2322 = vmatpush1.bf16.msra.mxu0 %v1649
  %2323 = vmatprep.subr.bf16.mxu0 0
  %2324 = vmatpush1.bf16.msra.mxu0 %v1650
  %2325 = vmatprep.subr.bf16.mxu0 0
  %2326 = vmatpush1.bf16.msra.mxu0 %v1651
  %2327 = vmatprep.subr.bf16.mxu0 0
  %2328 = vmatpush1.bf16.msra.mxu0 %v1652
  %2329 = vmatprep.subr.bf16.mxu0 0
  %2330 = vmatpush1.bf16.msra.mxu0 %v1653
  %2331 = vmatprep.mubr.bf16.mxu0 %v801
  %2332 = vmatmul.mubr.bf16.gmra.mrb[0].mxu0 %v800
  %v2333 = vpop.f32.mrb[0].mxu0
  %v2334 = vadd.f32 %v2237, %v2333
  %v2335 = vpop.f32.mrb[0].mxu0
  %v2336 = vpop.f32.mrb[0].mxu0
  %v2337 = vadd.f32 %v2240, %v2336
  %v2338 = vpop.f32.mrb[0].mxu0
  %2339 = vmatprep.mubr.bf16.mxu0 %v817
  %2340 = vmatmul.mubr.bf16.gmra.mrb[0].mxu0 %v816
  %v2341 = vpop.f32.mrb[0].mxu0
  %v2342 = vadd.f32 %v2245, %v2341
  %v2343 = vpop.f32.mrb[0].mxu0
  %v2344 = vpop.f32.mrb[0].mxu0
  %v2345 = vadd.f32 %v2248, %v2344
  %v2346 = vpop.f32.mrb[0].mxu0
  %2347 = vmatprep.mubr.bf16.mxu0 %v833
  %2348 = vmatmul.mubr.bf16.gmra.mrb[0].mxu0 %v832
  %v2349 = vpop.f32.mrb[0].mxu0
  %v2350 = vadd.f32 %v2253, %v2349
  %v2351 = vpop.f32.mrb[0].mxu0
  %v2352 = vpop.f32.mrb[0].mxu0
  %v2353 = vadd.f32 %v2256, %v2352
  %v2354 = vpop.f32.mrb[0].mxu0
  %2355 = vmatprep.mubr.bf16.mxu0 %v849
  %2356 = vmatmul.mubr.bf16.gmra.mrb[0].mxu0 %v848
  %v2357 = vpop.f32.mrb[0].mxu0
  %v2358 = vadd.f32 %v2261, %v2357
  %v2359 = vpop.f32.mrb[0].mxu0
  %v2360 = vpop.f32.mrb[0].mxu0
  %v2361 = vadd.f32 %v2264, %v2360
  %v2362 = vpop.f32.mrb[0].mxu0
  %2363 = vmatprep.mubr.bf16.mxu0 %v865
  %2364 = vmatmul.mubr.bf16.gmra.mrb[0].mxu0 %v864
  %v2365 = vpop.f32.mrb[0].mxu0
  %v2366 = vadd.f32 %v2269, %v2365
  %v2367 = vpop.f32.mrb[0].mxu0
  %v2368 = vpop.f32.mrb[0].mxu0
  %v2369 = vadd.f32 %v2272, %v2368
  %v2370 = vpop.f32.mrb[0].mxu0
  %2371 = vmatprep.mubr.bf16.mxu0 %v881
  %2372 = vmatmul.mubr.bf16.gmra.mrb[0].mxu0 %v880
  %v2373 = vpop.f32.mrb[0].mxu0
  %v2374 = vadd.f32 %v2277, %v2373
  %v2375 = vpop.f32.mrb[0].mxu0
  %v2376 = vpop.f32.mrb[0].mxu0
  %v2377 = vadd.f32 %v2280, %v2376
  %v2378 = vpop.f32.mrb[0].mxu0
  %2379 = vmatprep.mubr.bf16.mxu0 %v897
  %2380 = vmatmul.mubr.bf16.gmra.mrb[0].mxu0 %v896
  %v2381 = vpop.f32.mrb[0].mxu0
  %v2382 = vadd.f32 %v2285, %v2381
  %v2383 = vpop.f32.mrb[0].mxu0
  %v2384 = vpop.f32.mrb[0].mxu0
  %v2385 = vadd.f32 %v2288, %v2384
  %v2386 = vpop.f32.mrb[0].mxu0
  %2387 = vmatprep.mubr.bf16.mxu0 %v913
  %2388 = vmatmul.mubr.bf16.gmra.mrb[0].mxu0 %v912
  %v2389 = vpop.f32.mrb[0].mxu0
  %v2390 = vadd.f32 %v2293, %v2389
  %v2391 = vpop.f32.mrb[0].mxu0
  %v2392 = vpop.f32.mrb[0].mxu0
  %v2393 = vadd.f32 %v2296, %v2392
  %v2394 = vpop.f32.mrb[0].mxu0
  %2395 = vdwg.mxu0
  %2396 = vmatprep.subr.bf16.mxu0 0
  %2397 = vmatpush1.bf16.msra.mxu0 %v1654
  %2398 = vmatprep.subr.bf16.mxu0 0
  %2399 = vmatpush1.bf16.msra.mxu0 %v1655
  %2400 = vmatprep.subr.bf16.mxu0 0
  %2401 = vmatpush1.bf16.msra.mxu0 %v1656
  %2402 = vmatprep.subr.bf16.mxu0 0
  %2403 = vmatpush1.bf16.msra.mxu0 %v1657
  %2404 = vmatprep.subr.bf16.mxu0 0
  %2405 = vmatpush1.bf16.msra.mxu0 %v1658
  %2406 = vmatprep.subr.bf16.mxu0 0
  %2407 = vmatpush1.bf16.msra.mxu0 %v1659
  %2408 = vmatprep.subr.bf16.mxu0 0
  %2409 = vmatpush1.bf16.msra.mxu0 %v1660
  %2410 = vmatprep.subr.bf16.mxu0 0
  %2411 = vmatpush1.bf16.msra.mxu0 %v1661
  %2412 = vmatprep.subr.bf16.mxu0 0
  %2413 = vmatpush1.bf16.msra.mxu0 %v1662
  %2414 = vmatprep.subr.bf16.mxu0 0
  %2415 = vmatpush1.bf16.msra.mxu0 %v1663
  %2416 = vmatprep.subr.bf16.mxu0 0
  %2417 = vmatpush1.bf16.msra.mxu0 %v1664
  %2418 = vmatprep.subr.bf16.mxu0 0
  %2419 = vmatpush1.bf16.msra.mxu0 %v1665
  %2420 = vmatprep.subr.bf16.mxu0 0
  %2421 = vmatpush1.bf16.msra.mxu0 %v1666
  %2422 = vmatprep.subr.bf16.mxu0 0
  %2423 = vmatpush1.bf16.msra.mxu0 %v1667
  %2424 = vmatprep.subr.bf16.mxu0 0
  %2425 = vmatpush1.bf16.msra.mxu0 %v1668
  %2426 = vmatprep.subr.bf16.mxu0 0
  %2427 = vmatpush1.bf16.msra.mxu0 %v1669
  %2428 = vmatprep.mubr.bf16.mxu0 %v803
  %2429 = vmatmul.mubr.bf16.gmra.mrb[0].mxu0 %v802
  %v2430 = vpop.f32.mrb[0].mxu0
  %v2431 = vadd.f32 %v2334, %v2430
  %v2432 = vpop.f32.mrb[0].mxu0
  %v2433 = vpop.f32.mrb[0].mxu0
  %v2434 = vadd.f32 %v2337, %v2433
  %v2435 = vpop.f32.mrb[0].mxu0
  %2436 = vmatprep.mubr.bf16.mxu0 %v819
  %2437 = vmatmul.mubr.bf16.gmra.mrb[0].mxu0 %v818
  %v2438 = vpop.f32.mrb[0].mxu0
  %v2439 = vadd.f32 %v2342, %v2438
  %v2440 = vpop.f32.mrb[0].mxu0
  %v2441 = vpop.f32.mrb[0].mxu0
  %v2442 = vadd.f32 %v2345, %v2441
  %v2443 = vpop.f32.mrb[0].mxu0
  %2444 = vmatprep.mubr.bf16.mxu0 %v835
  %2445 = vmatmul.mubr.bf16.gmra.mrb[0].mxu0 %v834
  %v2446 = vpop.f32.mrb[0].mxu0
  %v2447 = vadd.f32 %v2350, %v2446
  %v2448 = vpop.f32.mrb[0].mxu0
  %v2449 = vpop.f32.mrb[0].mxu0
  %v2450 = vadd.f32 %v2353, %v2449
  %v2451 = vpop.f32.mrb[0].mxu0
  %2452 = vmatprep.mubr.bf16.mxu0 %v851
  %2453 = vmatmul.mubr.bf16.gmra.mrb[0].mxu0 %v850
  %v2454 = vpop.f32.mrb[0].mxu0
  %v2455 = vadd.f32 %v2358, %v2454
  %v2456 = vpop.f32.mrb[0].mxu0
  %v2457 = vpop.f32.mrb[0].mxu0
  %v2458 = vadd.f32 %v2361, %v2457
  %v2459 = vpop.f32.mrb[0].mxu0
  %2460 = vmatprep.mubr.bf16.mxu0 %v867
  %2461 = vmatmul.mubr.bf16.gmra.mrb[0].mxu0 %v866
  %v2462 = vpop.f32.mrb[0].mxu0
  %v2463 = vadd.f32 %v2366, %v2462
  %v2464 = vpop.f32.mrb[0].mxu0
  %v2465 = vpop.f32.mrb[0].mxu0
  %v2466 = vadd.f32 %v2369, %v2465
  %v2467 = vpop.f32.mrb[0].mxu0
  %2468 = vmatprep.mubr.bf16.mxu0 %v883
  %2469 = vmatmul.mubr.bf16.gmra.mrb[0].mxu0 %v882
  %v2470 = vpop.f32.mrb[0].mxu0
  %v2471 = vadd.f32 %v2374, %v2470
  %v2472 = vpop.f32.mrb[0].mxu0
  %v2473 = vpop.f32.mrb[0].mxu0
  %v2474 = vadd.f32 %v2377, %v2473
  %v2475 = vpop.f32.mrb[0].mxu0
  %2476 = vmatprep.mubr.bf16.mxu0 %v899
  %2477 = vmatmul.mubr.bf16.gmra.mrb[0].mxu0 %v898
  %v2478 = vpop.f32.mrb[0].mxu0
  %v2479 = vadd.f32 %v2382, %v2478
  %v2480 = vpop.f32.mrb[0].mxu0
  %v2481 = vpop.f32.mrb[0].mxu0
  %v2482 = vadd.f32 %v2385, %v2481
  %v2483 = vpop.f32.mrb[0].mxu0
  %2484 = vmatprep.mubr.bf16.mxu0 %v915
  %2485 = vmatmul.mubr.bf16.gmra.mrb[0].mxu0 %v914
  %v2486 = vpop.f32.mrb[0].mxu0
  %v2487 = vadd.f32 %v2390, %v2486
  %v2488 = vpop.f32.mrb[0].mxu0
  %v2489 = vpop.f32.mrb[0].mxu0
  %v2490 = vadd.f32 %v2393, %v2489
  %v2491 = vpop.f32.mrb[0].mxu0
  %2492 = vdwg.mxu0
  %2493 = vmatprep.subr.bf16.mxu0 0
  %2494 = vmatpush1.bf16.msra.mxu0 %v1670
  %2495 = vmatprep.subr.bf16.mxu0 0
  %2496 = vmatpush1.bf16.msra.mxu0 %v1671
  %2497 = vmatprep.subr.bf16.mxu0 0
  %2498 = vmatpush1.bf16.msra.mxu0 %v1672
  %2499 = vmatprep.subr.bf16.mxu0 0
  %2500 = vmatpush1.bf16.msra.mxu0 %v1673
  %2501 = vmatprep.subr.bf16.mxu0 0
  %2502 = vmatpush1.bf16.msra.mxu0 %v1674
  %2503 = vmatprep.subr.bf16.mxu0 0
  %2504 = vmatpush1.bf16.msra.mxu0 %v1675
  %2505 = vmatprep.subr.bf16.mxu0 0
  %2506 = vmatpush1.bf16.msra.mxu0 %v1676
  %2507 = vmatprep.subr.bf16.mxu0 0
  %2508 = vmatpush1.bf16.msra.mxu0 %v1677
  %2509 = vmatprep.subr.bf16.mxu0 0
  %2510 = vmatpush1.bf16.msra.mxu0 %v1678
  %2511 = vmatprep.subr.bf16.mxu0 0
  %2512 = vmatpush1.bf16.msra.mxu0 %v1679
  %2513 = vmatprep.subr.bf16.mxu0 0
  %2514 = vmatpush1.bf16.msra.mxu0 %v1680
  %2515 = vmatprep.subr.bf16.mxu0 0
  %2516 = vmatpush1.bf16.msra.mxu0 %v1681
  %2517 = vmatprep.subr.bf16.mxu0 0
  %2518 = vmatpush1.bf16.msra.mxu0 %v1682
  %2519 = vmatprep.subr.bf16.mxu0 0
  %2520 = vmatpush1.bf16.msra.mxu0 %v1683
  %2521 = vmatprep.subr.bf16.mxu0 0
  %2522 = vmatpush1.bf16.msra.mxu0 %v1684
  %2523 = vmatprep.subr.bf16.mxu0 0
  %2524 = vmatpush1.bf16.msra.mxu0 %v1685
  %2525 = vmatprep.mubr.bf16.mxu0 %v805
  %2526 = vmatmul.mubr.bf16.gmra.mrb[0].mxu0 %v804
  %v2527 = vpop.f32.mrb[0].mxu0
  %v2528 = vadd.f32 %v2431, %v2527
  %v2529 = vpop.f32.mrb[0].mxu0
  %v2530 = vpop.f32.mrb[0].mxu0
  %v2531 = vadd.f32 %v2434, %v2530
  %v2532 = vpop.f32.mrb[0].mxu0
  %2533 = vmatprep.mubr.bf16.mxu0 %v821
  %2534 = vmatmul.mubr.bf16.gmra.mrb[0].mxu0 %v820
  %v2535 = vpop.f32.mrb[0].mxu0
  %v2536 = vadd.f32 %v2439, %v2535
  %v2537 = vpop.f32.mrb[0].mxu0
  %v2538 = vpop.f32.mrb[0].mxu0
  %v2539 = vadd.f32 %v2442, %v2538
  %v2540 = vpop.f32.mrb[0].mxu0
  %2541 = vmatprep.mubr.bf16.mxu0 %v837
  %2542 = vmatmul.mubr.bf16.gmra.mrb[0].mxu0 %v836
  %v2543 = vpop.f32.mrb[0].mxu0
  %v2544 = vadd.f32 %v2447, %v2543
  %v2545 = vpop.f32.mrb[0].mxu0
  %v2546 = vpop.f32.mrb[0].mxu0
  %v2547 = vadd.f32 %v2450, %v2546
  %v2548 = vpop.f32.mrb[0].mxu0
  %2549 = vmatprep.mubr.bf16.mxu0 %v853
  %2550 = vmatmul.mubr.bf16.gmra.mrb[0].mxu0 %v852
  %v2551 = vpop.f32.mrb[0].mxu0
  %v2552 = vadd.f32 %v2455, %v2551
  %v2553 = vpop.f32.mrb[0].mxu0
  %v2554 = vpop.f32.mrb[0].mxu0
  %v2555 = vadd.f32 %v2458, %v2554
  %v2556 = vpop.f32.mrb[0].mxu0
  %2557 = vmatprep.mubr.bf16.mxu0 %v869
  %2558 = vmatmul.mubr.bf16.gmra.mrb[0].mxu0 %v868
  %v2559 = vpop.f32.mrb[0].mxu0
  %v2560 = vadd.f32 %v2463, %v2559
  %v2561 = vpop.f32.mrb[0].mxu0
  %v2562 = vpop.f32.mrb[0].mxu0
  %v2563 = vadd.f32 %v2466, %v2562
  %v2564 = vpop.f32.mrb[0].mxu0
  %2565 = vmatprep.mubr.bf16.mxu0 %v885
  %2566 = vmatmul.mubr.bf16.gmra.mrb[0].mxu0 %v884
  %v2567 = vpop.f32.mrb[0].mxu0
  %v2568 = vadd.f32 %v2471, %v2567
  %v2569 = vpop.f32.mrb[0].mxu0
  %v2570 = vpop.f32.mrb[0].mxu0
  %v2571 = vadd.f32 %v2474, %v2570
  %v2572 = vpop.f32.mrb[0].mxu0
  %2573 = vmatprep.mubr.bf16.mxu0 %v901
  %2574 = vmatmul.mubr.bf16.gmra.mrb[0].mxu0 %v900
  %v2575 = vpop.f32.mrb[0].mxu0
  %v2576 = vadd.f32 %v2479, %v2575
  %v2577 = vpop.f32.mrb[0].mxu0
  %v2578 = vpop.f32.mrb[0].mxu0
  %v2579 = vadd.f32 %v2482, %v2578
  %v2580 = vpop.f32.mrb[0].mxu0
  %2581 = vmatprep.mubr.bf16.mxu0 %v917
  %2582 = vmatmul.mubr.bf16.gmra.mrb[0].mxu0 %v916
  %v2583 = vpop.f32.mrb[0].mxu0
  %v2584 = vadd.f32 %v2487, %v2583
  %v2585 = vpop.f32.mrb[0].mxu0
  %v2586 = vpop.f32.mrb[0].mxu0
  %v2587 = vadd.f32 %v2490, %v2586
  %v2588 = vpop.f32.mrb[0].mxu0
  %2589 = vdwg.mxu0
  %vm2590 = vcmp.ge.f32.partialorder %v2528, 0.0
  %vm2591 = vcmp.ge.f32.partialorder %v2531, 0.0
  %vm2592 = vcmp.ge.f32.partialorder %v2536, 0.0
  %vm2593 = vcmp.ge.f32.partialorder %v2539, 0.0
  %vm2594 = vcmp.ge.f32.partialorder %v2544, 0.0
  %vm2595 = vcmp.ge.f32.partialorder %v2547, 0.0
  %vm2596 = vcmp.ge.f32.partialorder %v2552, 0.0
  %vm2597 = vcmp.ge.f32.partialorder %v2555, 0.0
  %vm2598 = vcmp.ge.f32.partialorder %v2560, 0.0
  %vm2599 = vcmp.ge.f32.partialorder %v2563, 0.0
  %vm2600 = vcmp.ge.f32.partialorder %v2568, 0.0
  %vm2601 = vcmp.ge.f32.partialorder %v2571, 0.0
  %vm2602 = vcmp.ge.f32.partialorder %v2576, 0.0
  %vm2603 = vcmp.ge.f32.partialorder %v2579, 0.0
  %vm2604 = vcmp.ge.f32.partialorder %v2584, 0.0
  %vm2605 = vcmp.ge.f32.partialorder %v2587, 0.0
  %v2606 = vmul.f32 %v2528, 0.2
  %v2607 = vmul.f32 %v2531, 0.2
  %v2608 = vmul.f32 %v2536, 0.2
  %v2609 = vmul.f32 %v2539, 0.2
  %v2610 = vmul.f32 %v2544, 0.2
  %v2611 = vmul.f32 %v2547, 0.2
  %v2612 = vmul.f32 %v2552, 0.2
  %v2613 = vmul.f32 %v2555, 0.2
  %v2614 = vmul.f32 %v2560, 0.2
  %v2615 = vmul.f32 %v2563, 0.2
  %v2616 = vmul.f32 %v2568, 0.2
  %v2617 = vmul.f32 %v2571, 0.2
  %v2618 = vmul.f32 %v2576, 0.2
  %v2619 = vmul.f32 %v2579, 0.2
  %v2620 = vmul.f32 %v2584, 0.2
  %v2621 = vmul.f32 %v2587, 0.2
  %v2622 = vsel %vm2590, %v2528, %v2606
  %v2623 = vsel %vm2591, %v2531, %v2607
  %v2624 = vsel %vm2592, %v2536, %v2608
  %v2625 = vsel %vm2593, %v2539, %v2609
  %v2626 = vsel %vm2594, %v2544, %v2610
  %v2627 = vsel %vm2595, %v2547, %v2611
  %v2628 = vsel %vm2596, %v2552, %v2612
  %v2629 = vsel %vm2597, %v2555, %v2613
  %v2630 = vsel %vm2598, %v2560, %v2614
  %v2631 = vsel %vm2599, %v2563, %v2615
  %v2632 = vsel %vm2600, %v2568, %v2616
  %v2633 = vsel %vm2601, %v2571, %v2617
  %v2634 = vsel %vm2602, %v2576, %v2618
  %v2635 = vsel %vm2603, %v2579, %v2619
  %v2636 = vsel %vm2604, %v2584, %v2620
  %v2637 = vsel %vm2605, %v2587, %v2621
  %v2638 = vpack.c.bf16 %v2623, %v2622
  %v2639 = vpack.c.bf16 %v2625, %v2624
  %v2640 = vpack.c.bf16 %v2627, %v2626
  %v2641 = vpack.c.bf16 %v2629, %v2628
  %v2642 = vpack.c.bf16 %v2631, %v2630
  %v2643 = vpack.c.bf16 %v2633, %v2632
  %v2644 = vpack.c.bf16 %v2635, %v2634
  %v2645 = vpack.c.bf16 %v2637, %v2636
  %v2654 = vunpack.c.l.b16 %v2638
  %v2655 = vunpack.c.h.b16 %v2638
  %v2656 = vunpack.c.l.b16 %v2639
  %v2657 = vunpack.c.h.b16 %v2639
  %v2658 = vunpack.c.l.b16 %v2640
  %v2659 = vunpack.c.h.b16 %v2640
  %v2660 = vunpack.c.l.b16 %v2641
  %v2661 = vunpack.c.h.b16 %v2641
  %v2662 = vunpack.c.l.b16 %v2642
  %v2663 = vunpack.c.h.b16 %v2642
  %v2664 = vunpack.c.l.b16 %v2643
  %v2665 = vunpack.c.h.b16 %v2643
  %v2666 = vunpack.c.l.b16 %v2644
  %v2667 = vunpack.c.h.b16 %v2644
  %v2668 = vunpack.c.l.b16 %v2645
  %v2669 = vunpack.c.h.b16 %v2645
  %v2670 = vpack.c.b16 %v2654, %v2654
  %v2671 = vpack.c.b16 %v2655, %v2655
  %v2672 = vpack.c.b16 %v2656, %v2656
  %v2673 = vpack.c.b16 %v2657, %v2657
  %v2674 = vpack.c.b16 %v2658, %v2658
  %v2675 = vpack.c.b16 %v2659, %v2659
  %v2676 = vpack.c.b16 %v2660, %v2660
  %v2677 = vpack.c.b16 %v2661, %v2661
  %v2678 = vpack.c.b16 %v2662, %v2662
  %v2679 = vpack.c.b16 %v2663, %v2663
  %v2680 = vpack.c.b16 %v2664, %v2664
  %v2681 = vpack.c.b16 %v2665, %v2665
  %v2682 = vpack.c.b16 %v2666, %v2666
  %v2683 = vpack.c.b16 %v2667, %v2667
  %v2684 = vpack.c.b16 %v2668, %v2668
  %v2685 = vpack.c.b16 %v2669, %v2669
  %2702 = vst [vmem:[%s3] sm:$0xf] %v2670
  %2703 = vst [vmem:[%s3 + $0x4] sm:$0xf] %v2671
  %2704 = vst [vmem:[%s3 + $0x8] sm:$0xf] %v2672
  %2705 = vst [vmem:[%s3 + $0xc] sm:$0xf] %v2673
  %2706 = vst [vmem:[%s3 + $0x10] sm:$0xf] %v2674
  %2707 = vst [vmem:[%s3 + $0x14] sm:$0xf] %v2675
  %2708 = vst [vmem:[%s3 + $0x18] sm:$0xf] %v2676
  %2709 = vst [vmem:[%s3 + $0x1c] sm:$0xf] %v2677
  %2710 = vst [vmem:[%s3 + $0x20] sm:$0xf] %v2678
  %2711 = vst [vmem:[%s3 + $0x24] sm:$0xf] %v2679
  %2712 = vst [vmem:[%s3 + $0x28] sm:$0xf] %v2680
  %2713 = vst [vmem:[%s3 + $0x2c] sm:$0xf] %v2681
  %2714 = vst [vmem:[%s3 + $0x30] sm:$0xf] %v2682
  %2715 = vst [vmem:[%s3 + $0x34] sm:$0xf] %v2683
  %2716 = vst [vmem:[%s3 + $0x38] sm:$0xf] %v2684
  %2717 = vst [vmem:[%s3 + $0x3c] sm:$0xf] %v2685
  // Predicated region
  $region14: #{xz_discriminator_forward.6} parent=0 // pred_check
    _
  $region15: #{xz_discriminator_forward.6} parent=0 // pred_check_branch
    %2719 = sbr.rel (0) target = $region17
  $region16: #{xz_discriminator_forward.6} parent=0 // pred_region
    _
  $region17: #{xz_discriminator_forward.6} parent=0 // pred_fallthru
    _
  // Predicated region
  $region18: #{xz_discriminator_forward.6} parent=0 // pred_check
    _
  $region19: #{xz_discriminator_forward.6} parent=0 // pred_check_branch
    %2721 = sbr.rel (0) target = $region21
  $region20: #{xz_discriminator_forward.6} parent=0 // pred_region
    _
  $region21: #{xz_discriminator_forward.6} parent=0 // pred_fallthru
    _

// kernel: xz_discriminator_forward.7
$region0: #{xz_discriminator_forward.7}
  #allocation0 [shape = 'u32[]', space=smem, size = 0x4, offset = 0x4, fixed_abs, tag = 'smem constant byte address 0x4 - core index']
  #allocation1 [shape = 'u32[144,128]{1,0:T(1,128)}', space=vmem, size = 0x12000, scoped, tag = 'internal scratch']
  %s0 = inlined_call_operand.vmem [shape: bf16[32,2048], index: 0, kind: input, shape index: {}]
  %s1 = inlined_call_operand.vmem [shape: bf16[2048,128], index: 1, kind: input, shape index: {}]
  %s2 = inlined_call_operand.vmem [shape: f32[1,128], index: 2, kind: input, shape index: {}]
  %s3 = inlined_call_operand.vmem [shape: bf16[32,128], index: 3, kind: output, shape index: {}]
  %s4 = sld [smem:[#allocation0]]
  $region22: #{xz_discriminator_forward.7} parent=0
    _
  %s6 = ssub.s32 1, %s4
  %s7 = scalar_select 0, %s6, %s4
  // Predicated region
  $region2: #{xz_discriminator_forward.7} parent=0 // pred_check
    _
  $region3: #{xz_discriminator_forward.7} parent=0 // pred_check_branch
    %9 = sbr.rel (0) target = $region5
  $region4: #{xz_discriminator_forward.7} parent=0 // pred_region
    _
  $region5: #{xz_discriminator_forward.7} parent=0 // pred_fallthru
    _
  // Predicated region
  $region6: #{xz_discriminator_forward.7} parent=0 // pred_check
    _
  $region7: #{xz_discriminator_forward.7} parent=0 // pred_check_branch
    %11 = sbr.rel (0) target = $region9
  $region8: #{xz_discriminator_forward.7} parent=0 // pred_region
    _
  $region9: #{xz_discriminator_forward.7} parent=0 // pred_fallthru
    _
  // Predicated region
  $region10: #{xz_discriminator_forward.7} parent=0 // pred_check
    _
  $region11: #{xz_discriminator_forward.7} parent=0 // pred_check_branch
    %13 = sbr.rel (0) target = $region13
  $region12: #{xz_discriminator_forward.7} parent=0 // pred_region
    _
  $region13: #{xz_discriminator_forward.7} parent=0 // pred_fallthru
    _
  %v15 = vld [vmem:[%s0] sm:$0xff]
  %v16 = vld [vmem:[%s0 + $0x8] sm:$0xff]
  %v17 = vld [vmem:[%s0 + $0x10] sm:$0xff]
  %v18 = vld [vmem:[%s0 + $0x18] sm:$0xff]
  %v19 = vld [vmem:[%s0 + $0x20] sm:$0xff]
  %v20 = vld [vmem:[%s0 + $0x28] sm:$0xff]
  %v21 = vld [vmem:[%s0 + $0x30] sm:$0xff]
  %v22 = vld [vmem:[%s0 + $0x38] sm:$0xff]
  %v23 = vld [vmem:[%s0 + $0x40] sm:$0xff]
  %v24 = vld [vmem:[%s0 + $0x48] sm:$0xff]
  %v25 = vld [vmem:[%s0 + $0x50] sm:$0xff]
  %v26 = vld [vmem:[%s0 + $0x58] sm:$0xff]
  %v27 = vld [vmem:[%s0 + $0x60] sm:$0xff]
  %v28 = vld [vmem:[%s0 + $0x68] sm:$0xff]
  %v29 = vld [vmem:[%s0 + $0x70] sm:$0xff]
  %v30 = vld [vmem:[%s0 + $0x78] sm:$0xff]
  %v31 = vld [vmem:[%s0 + $0x80] sm:$0xff]
  %v32 = vld [vmem:[%s0 + $0x88] sm:$0xff]
  %v33 = vld [vmem:[%s0 + $0x90] sm:$0xff]
  %v34 = vld [vmem:[%s0 + $0x98] sm:$0xff]
  %v35 = vld [vmem:[%s0 + $0xa0] sm:$0xff]
  %v36 = vld [vmem:[%s0 + $0xa8] sm:$0xff]
  %v37 = vld [vmem:[%s0 + $0xb0] sm:$0xff]
  %v38 = vld [vmem:[%s0 + $0xb8] sm:$0xff]
  %v39 = vld [vmem:[%s0 + $0xc0] sm:$0xff]
  %v40 = vld [vmem:[%s0 + $0xc8] sm:$0xff]
  %v41 = vld [vmem:[%s0 + $0xd0] sm:$0xff]
  %v42 = vld [vmem:[%s0 + $0xd8] sm:$0xff]
  %v43 = vld [vmem:[%s0 + $0xe0] sm:$0xff]
  %v44 = vld [vmem:[%s0 + $0xe8] sm:$0xff]
  %v45 = vld [vmem:[%s0 + $0xf0] sm:$0xff]
  %v46 = vld [vmem:[%s0 + $0xf8] sm:$0xff]
  %v47 = vld [vmem:[%s1] sm:$0xf]
  %v48 = vld [vmem:[%s1 + $0x4] sm:$0xf]
  %v49 = vld [vmem:[%s1 + $0x8] sm:$0xf]
  %v50 = vld [vmem:[%s1 + $0xc] sm:$0xf]
  %v51 = vld [vmem:[%s1 + $0x10] sm:$0xf]
  %v52 = vld [vmem:[%s1 + $0x14] sm:$0xf]
  %v53 = vld [vmem:[%s1 + $0x18] sm:$0xf]
  %v54 = vld [vmem:[%s1 + $0x1c] sm:$0xf]
  %v55 = vld [vmem:[%s1 + $0x20] sm:$0xf]
  %v56 = vld [vmem:[%s1 + $0x24] sm:$0xf]
  %v57 = vld [vmem:[%s1 + $0x28] sm:$0xf]
  %v58 = vld [vmem:[%s1 + $0x2c] sm:$0xf]
  %v59 = vld [vmem:[%s1 + $0x30] sm:$0xf]
  %v60 = vld [vmem:[%s1 + $0x34] sm:$0xf]
  %v61 = vld [vmem:[%s1 + $0x38] sm:$0xf]
  %v62 = vld [vmem:[%s1 + $0x3c] sm:$0xf]
  %v63 = vld [vmem:[%s1 + $0x40] sm:$0xf]
  %v64 = vld [vmem:[%s1 + $0x44] sm:$0xf]
  %v65 = vld [vmem:[%s1 + $0x48] sm:$0xf]
  %v66 = vld [vmem:[%s1 + $0x4c] sm:$0xf]
  %v67 = vld [vmem:[%s1 + $0x50] sm:$0xf]
  %v68 = vld [vmem:[%s1 + $0x54] sm:$0xf]
  %v69 = vld [vmem:[%s1 + $0x58] sm:$0xf]
  %v70 = vld [vmem:[%s1 + $0x5c] sm:$0xf]
  %v71 = vld [vmem:[%s1 + $0x60] sm:$0xf]
  %v72 = vld [vmem:[%s1 + $0x64] sm:$0xf]
  %v73 = vld [vmem:[%s1 + $0x68] sm:$0xf]
  %v74 = vld [vmem:[%s1 + $0x6c] sm:$0xf]
  %v75 = vld [vmem:[%s1 + $0x70] sm:$0xf]
  %v76 = vld [vmem:[%s1 + $0x74] sm:$0xf]
  %v77 = vld [vmem:[%s1 + $0x78] sm:$0xf]
  %v78 = vld [vmem:[%s1 + $0x7c] sm:$0xf]
  %v79 = vld [vmem:[%s1 + $0x80] sm:$0xf]
  %v80 = vld [vmem:[%s1 + $0x84] sm:$0xf]
  %v81 = vld [vmem:[%s1 + $0x88] sm:$0xf]
  %v82 = vld [vmem:[%s1 + $0x8c] sm:$0xf]
  %v83 = vld [vmem:[%s1 + $0x90] sm:$0xf]
  %v84 = vld [vmem:[%s1 + $0x94] sm:$0xf]
  %v85 = vld [vmem:[%s1 + $0x98] sm:$0xf]
  %v86 = vld [vmem:[%s1 + $0x9c] sm:$0xf]
  %v87 = vld [vmem:[%s1 + $0xa0] sm:$0xf]
  %v88 = vld [vmem:[%s1 + $0xa4] sm:$0xf]
  %v89 = vld [vmem:[%s1 + $0xa8] sm:$0xf]
  %v90 = vld [vmem:[%s1 + $0xac] sm:$0xf]
  %v91 = vld [vmem:[%s1 + $0xb0] sm:$0xf]
  %v92 = vld [vmem:[%s1 + $0xb4] sm:$0xf]
  %v93 = vld [vmem:[%s1 + $0xb8] sm:$0xf]
  %v94 = vld [vmem:[%s1 + $0xbc] sm:$0xf]
  %v95 = vld [vmem:[%s1 + $0xc0] sm:$0xf]
  %v96 = vld [vmem:[%s1 + $0xc4] sm:$0xf]
  %v97 = vld [vmem:[%s1 + $0xc8] sm:$0xf]
  %v98 = vld [vmem:[%s1 + $0xcc] sm:$0xf]
  %v99 = vld [vmem:[%s1 + $0xd0] sm:$0xf]
  %v100 = vld [vmem:[%s1 + $0xd4] sm:$0xf]
  %v101 = vld [vmem:[%s1 + $0xd8] sm:$0xf]
  %v102 = vld [vmem:[%s1 + $0xdc] sm:$0xf]
  %v103 = vld [vmem:[%s1 + $0xe0] sm:$0xf]
  %v104 = vld [vmem:[%s1 + $0xe4] sm:$0xf]
  %v105 = vld [vmem:[%s1 + $0xe8] sm:$0xf]
  %v106 = vld [vmem:[%s1 + $0xec] sm:$0xf]
  %v107 = vld [vmem:[%s1 + $0xf0] sm:$0xf]
  %v108 = vld [vmem:[%s1 + $0xf4] sm:$0xf]
  %v109 = vld [vmem:[%s1 + $0xf8] sm:$0xf]
  %v110 = vld [vmem:[%s1 + $0xfc] sm:$0xf]
  %v111 = vld [vmem:[%s1 + $0x100] sm:$0xf]
  %v112 = vld [vmem:[%s1 + $0x104] sm:$0xf]
  %v113 = vld [vmem:[%s1 + $0x108] sm:$0xf]
  %v114 = vld [vmem:[%s1 + $0x10c] sm:$0xf]
  %v115 = vld [vmem:[%s1 + $0x110] sm:$0xf]
  %v116 = vld [vmem:[%s1 + $0x114] sm:$0xf]
  %v117 = vld [vmem:[%s1 + $0x118] sm:$0xf]
  %v118 = vld [vmem:[%s1 + $0x11c] sm:$0xf]
  %v119 = vld [vmem:[%s1 + $0x120] sm:$0xf]
  %v120 = vld [vmem:[%s1 + $0x124] sm:$0xf]
  %v121 = vld [vmem:[%s1 + $0x128] sm:$0xf]
  %v122 = vld [vmem:[%s1 + $0x12c] sm:$0xf]
  %v123 = vld [vmem:[%s1 + $0x130] sm:$0xf]
  %v124 = vld [vmem:[%s1 + $0x134] sm:$0xf]
  %v125 = vld [vmem:[%s1 + $0x138] sm:$0xf]
  %v126 = vld [vmem:[%s1 + $0x13c] sm:$0xf]
  %v127 = vld [vmem:[%s1 + $0x140] sm:$0xf]
  %v128 = vld [vmem:[%s1 + $0x144] sm:$0xf]
  %v129 = vld [vmem:[%s1 + $0x148] sm:$0xf]
  %v130 = vld [vmem:[%s1 + $0x14c] sm:$0xf]
  %v131 = vld [vmem:[%s1 + $0x150] sm:$0xf]
  %v132 = vld [vmem:[%s1 + $0x154] sm:$0xf]
  %v133 = vld [vmem:[%s1 + $0x158] sm:$0xf]
  %v134 = vld [vmem:[%s1 + $0x15c] sm:$0xf]
  %v135 = vld [vmem:[%s1 + $0x160] sm:$0xf]
  %v136 = vld [vmem:[%s1 + $0x164] sm:$0xf]
  %v137 = vld [vmem:[%s1 + $0x168] sm:$0xf]
  %v138 = vld [vmem:[%s1 + $0x16c] sm:$0xf]
  %v139 = vld [vmem:[%s1 + $0x170] sm:$0xf]
  %v140 = vld [vmem:[%s1 + $0x174] sm:$0xf]
  %v141 = vld [vmem:[%s1 + $0x178] sm:$0xf]
  %v142 = vld [vmem:[%s1 + $0x17c] sm:$0xf]
  %v143 = vld [vmem:[%s1 + $0x180] sm:$0xf]
  %v144 = vld [vmem:[%s1 + $0x184] sm:$0xf]
  %v145 = vld [vmem:[%s1 + $0x188] sm:$0xf]
  %v146 = vld [vmem:[%s1 + $0x18c] sm:$0xf]
  %v147 = vld [vmem:[%s1 + $0x190] sm:$0xf]
  %v148 = vld [vmem:[%s1 + $0x194] sm:$0xf]
  %v149 = vld [vmem:[%s1 + $0x198] sm:$0xf]
  %v150 = vld [vmem:[%s1 + $0x19c] sm:$0xf]
  %v151 = vld [vmem:[%s1 + $0x1a0] sm:$0xf]
  %v152 = vld [vmem:[%s1 + $0x1a4] sm:$0xf]
  %v153 = vld [vmem:[%s1 + $0x1a8] sm:$0xf]
  %v154 = vld [vmem:[%s1 + $0x1ac] sm:$0xf]
  %v155 = vld [vmem:[%s1 + $0x1b0] sm:$0xf]
  %v156 = vld [vmem:[%s1 + $0x1b4] sm:$0xf]
  %v157 = vld [vmem:[%s1 + $0x1b8] sm:$0xf]
  %v158 = vld [vmem:[%s1 + $0x1bc] sm:$0xf]
  %v159 = vld [vmem:[%s1 + $0x1c0] sm:$0xf]
  %v160 = vld [vmem:[%s1 + $0x1c4] sm:$0xf]
  %v161 = vld [vmem:[%s1 + $0x1c8] sm:$0xf]
  %v162 = vld [vmem:[%s1 + $0x1cc] sm:$0xf]
  %v163 = vld [vmem:[%s1 + $0x1d0] sm:$0xf]
  %v164 = vld [vmem:[%s1 + $0x1d4] sm:$0xf]
  %v165 = vld [vmem:[%s1 + $0x1d8] sm:$0xf]
  %v166 = vld [vmem:[%s1 + $0x1dc] sm:$0xf]
  %v167 = vld [vmem:[%s1 + $0x1e0] sm:$0xf]
  %v168 = vld [vmem:[%s1 + $0x1e4] sm:$0xf]
  %v169 = vld [vmem:[%s1 + $0x1e8] sm:$0xf]
  %v170 = vld [vmem:[%s1 + $0x1ec] sm:$0xf]
  %v171 = vld [vmem:[%s1 + $0x1f0] sm:$0xf]
  %v172 = vld [vmem:[%s1 + $0x1f4] sm:$0xf]
  %v173 = vld [vmem:[%s1 + $0x1f8] sm:$0xf]
  %v174 = vld [vmem:[%s1 + $0x1fc] sm:$0xf]
  %v175 = vld [vmem:[%s1 + $0x200] sm:$0xf]
  %v176 = vld [vmem:[%s1 + $0x204] sm:$0xf]
  %v177 = vld [vmem:[%s1 + $0x208] sm:$0xf]
  %v178 = vld [vmem:[%s1 + $0x20c] sm:$0xf]
  %v179 = vld [vmem:[%s1 + $0x210] sm:$0xf]
  %v180 = vld [vmem:[%s1 + $0x214] sm:$0xf]
  %v181 = vld [vmem:[%s1 + $0x218] sm:$0xf]
  %v182 = vld [vmem:[%s1 + $0x21c] sm:$0xf]
  %v183 = vld [vmem:[%s1 + $0x220] sm:$0xf]
  %v184 = vld [vmem:[%s1 + $0x224] sm:$0xf]
  %v185 = vld [vmem:[%s1 + $0x228] sm:$0xf]
  %v186 = vld [vmem:[%s1 + $0x22c] sm:$0xf]
  %v187 = vld [vmem:[%s1 + $0x230] sm:$0xf]
  %v188 = vld [vmem:[%s1 + $0x234] sm:$0xf]
  %v189 = vld [vmem:[%s1 + $0x238] sm:$0xf]
  %v190 = vld [vmem:[%s1 + $0x23c] sm:$0xf]
  %v191 = vld [vmem:[%s1 + $0x240] sm:$0xf]
  %v192 = vld [vmem:[%s1 + $0x244] sm:$0xf]
  %v193 = vld [vmem:[%s1 + $0x248] sm:$0xf]
  %v194 = vld [vmem:[%s1 + $0x24c] sm:$0xf]
  %v195 = vld [vmem:[%s1 + $0x250] sm:$0xf]
  %v196 = vld [vmem:[%s1 + $0x254] sm:$0xf]
  %v197 = vld [vmem:[%s1 + $0x258] sm:$0xf]
  %v198 = vld [vmem:[%s1 + $0x25c] sm:$0xf]
  %v199 = vld [vmem:[%s1 + $0x260] sm:$0xf]
  %v200 = vld [vmem:[%s1 + $0x264] sm:$0xf]
  %v201 = vld [vmem:[%s1 + $0x268] sm:$0xf]
  %v202 = vld [vmem:[%s1 + $0x26c] sm:$0xf]
  %v203 = vld [vmem:[%s1 + $0x270] sm:$0xf]
  %v204 = vld [vmem:[%s1 + $0x274] sm:$0xf]
  %v205 = vld [vmem:[%s1 + $0x278] sm:$0xf]
  %v206 = vld [vmem:[%s1 + $0x27c] sm:$0xf]
  %v207 = vld [vmem:[%s1 + $0x280] sm:$0xf]
  %v208 = vld [vmem:[%s1 + $0x284] sm:$0xf]
  %v209 = vld [vmem:[%s1 + $0x288] sm:$0xf]
  %v210 = vld [vmem:[%s1 + $0x28c] sm:$0xf]
  %v211 = vld [vmem:[%s1 + $0x290] sm:$0xf]
  %v212 = vld [vmem:[%s1 + $0x294] sm:$0xf]
  %v213 = vld [vmem:[%s1 + $0x298] sm:$0xf]
  %v214 = vld [vmem:[%s1 + $0x29c] sm:$0xf]
  %v215 = vld [vmem:[%s1 + $0x2a0] sm:$0xf]
  %v216 = vld [vmem:[%s1 + $0x2a4] sm:$0xf]
  %v217 = vld [vmem:[%s1 + $0x2a8] sm:$0xf]
  %v218 = vld [vmem:[%s1 + $0x2ac] sm:$0xf]
  %v219 = vld [vmem:[%s1 + $0x2b0] sm:$0xf]
  %v220 = vld [vmem:[%s1 + $0x2b4] sm:$0xf]
  %v221 = vld [vmem:[%s1 + $0x2b8] sm:$0xf]
  %v222 = vld [vmem:[%s1 + $0x2bc] sm:$0xf]
  %v223 = vld [vmem:[%s1 + $0x2c0] sm:$0xf]
  %v224 = vld [vmem:[%s1 + $0x2c4] sm:$0xf]
  %v225 = vld [vmem:[%s1 + $0x2c8] sm:$0xf]
  %v226 = vld [vmem:[%s1 + $0x2cc] sm:$0xf]
  %v227 = vld [vmem:[%s1 + $0x2d0] sm:$0xf]
  %v228 = vld [vmem:[%s1 + $0x2d4] sm:$0xf]
  %v229 = vld [vmem:[%s1 + $0x2d8] sm:$0xf]
  %v230 = vld [vmem:[%s1 + $0x2dc] sm:$0xf]
  %v231 = vld [vmem:[%s1 + $0x2e0] sm:$0xf]
  %v232 = vld [vmem:[%s1 + $0x2e4] sm:$0xf]
  %v233 = vld [vmem:[%s1 + $0x2e8] sm:$0xf]
  %v234 = vld [vmem:[%s1 + $0x2ec] sm:$0xf]
  %v235 = vld [vmem:[%s1 + $0x2f0] sm:$0xf]
  %v236 = vld [vmem:[%s1 + $0x2f4] sm:$0xf]
  %v237 = vld [vmem:[%s1 + $0x2f8] sm:$0xf]
  %v238 = vld [vmem:[%s1 + $0x2fc] sm:$0xf]
  %v239 = vld [vmem:[%s1 + $0x300] sm:$0xf]
  %v240 = vld [vmem:[%s1 + $0x304] sm:$0xf]
  %v241 = vld [vmem:[%s1 + $0x308] sm:$0xf]
  %v242 = vld [vmem:[%s1 + $0x30c] sm:$0xf]
  %v243 = vld [vmem:[%s1 + $0x310] sm:$0xf]
  %v244 = vld [vmem:[%s1 + $0x314] sm:$0xf]
  %v245 = vld [vmem:[%s1 + $0x318] sm:$0xf]
  %v246 = vld [vmem:[%s1 + $0x31c] sm:$0xf]
  %v247 = vld [vmem:[%s1 + $0x320] sm:$0xf]
  %v248 = vld [vmem:[%s1 + $0x324] sm:$0xf]
  %v249 = vld [vmem:[%s1 + $0x328] sm:$0xf]
  %v250 = vld [vmem:[%s1 + $0x32c] sm:$0xf]
  %v251 = vld [vmem:[%s1 + $0x330] sm:$0xf]
  %v252 = vld [vmem:[%s1 + $0x334] sm:$0xf]
  %v253 = vld [vmem:[%s1 + $0x338] sm:$0xf]
  %v254 = vld [vmem:[%s1 + $0x33c] sm:$0xf]
  %v255 = vld [vmem:[%s1 + $0x340] sm:$0xf]
  %v256 = vld [vmem:[%s1 + $0x344] sm:$0xf]
  %v257 = vld [vmem:[%s1 + $0x348] sm:$0xf]
  %v258 = vld [vmem:[%s1 + $0x34c] sm:$0xf]
  %v259 = vld [vmem:[%s1 + $0x350] sm:$0xf]
  %v260 = vld [vmem:[%s1 + $0x354] sm:$0xf]
  %v261 = vld [vmem:[%s1 + $0x358] sm:$0xf]
  %v262 = vld [vmem:[%s1 + $0x35c] sm:$0xf]
  %v263 = vld [vmem:[%s1 + $0x360] sm:$0xf]
  %v264 = vld [vmem:[%s1 + $0x364] sm:$0xf]
  %v265 = vld [vmem:[%s1 + $0x368] sm:$0xf]
  %v266 = vld [vmem:[%s1 + $0x36c] sm:$0xf]
  %v267 = vld [vmem:[%s1 + $0x370] sm:$0xf]
  %v268 = vld [vmem:[%s1 + $0x374] sm:$0xf]
  %v269 = vld [vmem:[%s1 + $0x378] sm:$0xf]
  %v270 = vld [vmem:[%s1 + $0x37c] sm:$0xf]
  %v271 = vld [vmem:[%s1 + $0x380] sm:$0xf]
  %v272 = vld [vmem:[%s1 + $0x384] sm:$0xf]
  %v273 = vld [vmem:[%s1 + $0x388] sm:$0xf]
  %v274 = vld [vmem:[%s1 + $0x38c] sm:$0xf]
  %v275 = vld [vmem:[%s1 + $0x390] sm:$0xf]
  %v276 = vld [vmem:[%s1 + $0x394] sm:$0xf]
  %v277 = vld [vmem:[%s1 + $0x398] sm:$0xf]
  %v278 = vld [vmem:[%s1 + $0x39c] sm:$0xf]
  %v279 = vld [vmem:[%s1 + $0x3a0] sm:$0xf]
  %v280 = vld [vmem:[%s1 + $0x3a4] sm:$0xf]
  %v281 = vld [vmem:[%s1 + $0x3a8] sm:$0xf]
  %v282 = vld [vmem:[%s1 + $0x3ac] sm:$0xf]
  %v283 = vld [vmem:[%s1 + $0x3b0] sm:$0xf]
  %v284 = vld [vmem:[%s1 + $0x3b4] sm:$0xf]
  %v285 = vld [vmem:[%s1 + $0x3b8] sm:$0xf]
  %v286 = vld [vmem:[%s1 + $0x3bc] sm:$0xf]
  %v287 = vld [vmem:[%s1 + $0x3c0] sm:$0xf]
  %v288 = vld [vmem:[%s1 + $0x3c4] sm:$0xf]
  %v289 = vld [vmem:[%s1 + $0x3c8] sm:$0xf]
  %v290 = vld [vmem:[%s1 + $0x3cc] sm:$0xf]
  %v291 = vld [vmem:[%s1 + $0x3d0] sm:$0xf]
  %v292 = vld [vmem:[%s1 + $0x3d4] sm:$0xf]
  %v293 = vld [vmem:[%s1 + $0x3d8] sm:$0xf]
  %v294 = vld [vmem:[%s1 + $0x3dc] sm:$0xf]
  %v295 = vld [vmem:[%s1 + $0x3e0] sm:$0xf]
  %v296 = vld [vmem:[%s1 + $0x3e4] sm:$0xf]
  %v297 = vld [vmem:[%s1 + $0x3e8] sm:$0xf]
  %v298 = vld [vmem:[%s1 + $0x3ec] sm:$0xf]
  %v299 = vld [vmem:[%s1 + $0x3f0] sm:$0xf]
  %v300 = vld [vmem:[%s1 + $0x3f4] sm:$0xf]
  %v301 = vld [vmem:[%s1 + $0x3f8] sm:$0xf]
  %v302 = vld [vmem:[%s1 + $0x3fc] sm:$0xf]
  %v303 = vld [vmem:[%s2] sm:$0x1]
  %v305 = vlaneseq
  %v306 = vshrl.u32 %v305, 7
  %v307 = vsub.s32 0, %v306
  %v308 = vrot.slane %v303, %v307
  %v342 = vunpack.c.l.b16 %v15
  %v343 = vunpack.c.h.b16 %v15
  %v344 = vunpack.c.l.b16 %v16
  %v345 = vunpack.c.h.b16 %v16
  %v346 = vunpack.c.l.b16 %v17
  %v347 = vunpack.c.h.b16 %v17
  %v348 = vunpack.c.l.b16 %v18
  %v349 = vunpack.c.h.b16 %v18
  %v350 = vunpack.c.l.b16 %v19
  %v351 = vunpack.c.h.b16 %v19
  %v352 = vunpack.c.l.b16 %v20
  %v353 = vunpack.c.h.b16 %v20
  %v354 = vunpack.c.l.b16 %v21
  %v355 = vunpack.c.h.b16 %v21
  %v356 = vunpack.c.l.b16 %v22
  %v357 = vunpack.c.h.b16 %v22
  %v358 = vunpack.c.l.b16 %v23
  %v359 = vunpack.c.h.b16 %v23
  %v360 = vunpack.c.l.b16 %v24
  %v361 = vunpack.c.h.b16 %v24
  %v362 = vunpack.c.l.b16 %v25
  %v363 = vunpack.c.h.b16 %v25
  %v364 = vunpack.c.l.b16 %v26
  %v365 = vunpack.c.h.b16 %v26
  %v366 = vunpack.c.l.b16 %v27
  %v367 = vunpack.c.h.b16 %v27
  %v368 = vunpack.c.l.b16 %v28
  %v369 = vunpack.c.h.b16 %v28
  %v370 = vunpack.c.l.b16 %v29
  %v371 = vunpack.c.h.b16 %v29
  %v372 = vunpack.c.l.b16 %v30
  %v373 = vunpack.c.h.b16 %v30
  %v374 = vunpack.c.l.b16 %v31
  %v375 = vunpack.c.h.b16 %v31
  %v376 = vunpack.c.l.b16 %v32
  %v377 = vunpack.c.h.b16 %v32
  %v378 = vunpack.c.l.b16 %v33
  %v379 = vunpack.c.h.b16 %v33
  %v380 = vunpack.c.l.b16 %v34
  %v381 = vunpack.c.h.b16 %v34
  %v382 = vunpack.c.l.b16 %v35
  %v383 = vunpack.c.h.b16 %v35
  %v384 = vunpack.c.l.b16 %v36
  %v385 = vunpack.c.h.b16 %v36
  %v386 = vunpack.c.l.b16 %v37
  %v387 = vunpack.c.h.b16 %v37
  %v388 = vunpack.c.l.b16 %v38
  %v389 = vunpack.c.h.b16 %v38
  %v390 = vunpack.c.l.b16 %v39
  %v391 = vunpack.c.h.b16 %v39
  %v392 = vunpack.c.l.b16 %v40
  %v393 = vunpack.c.h.b16 %v40
  %v394 = vunpack.c.l.b16 %v41
  %v395 = vunpack.c.h.b16 %v41
  %v396 = vunpack.c.l.b16 %v42
  %v397 = vunpack.c.h.b16 %v42
  %v398 = vunpack.c.l.b16 %v43
  %v399 = vunpack.c.h.b16 %v43
  %v400 = vunpack.c.l.b16 %v44
  %v401 = vunpack.c.h.b16 %v44
  %v402 = vunpack.c.l.b16 %v45
  %v403 = vunpack.c.h.b16 %v45
  %v404 = vunpack.c.l.b16 %v46
  %v405 = vunpack.c.h.b16 %v46
  %v406 = vpack.c.b16 %v358, %v342
  %v407 = vpack.c.b16 %v359, %v343
  %v408 = vpack.c.b16 %v360, %v344
  %v409 = vpack.c.b16 %v361, %v345
  %v410 = vpack.c.b16 %v362, %v346
  %v411 = vpack.c.b16 %v363, %v347
  %v412 = vpack.c.b16 %v364, %v348
  %v413 = vpack.c.b16 %v365, %v349
  %v414 = vpack.c.b16 %v366, %v350
  %v415 = vpack.c.b16 %v367, %v351
  %v416 = vpack.c.b16 %v368, %v352
  %v417 = vpack.c.b16 %v369, %v353
  %v418 = vpack.c.b16 %v370, %v354
  %v419 = vpack.c.b16 %v371, %v355
  %v420 = vpack.c.b16 %v372, %v356
  %v421 = vpack.c.b16 %v373, %v357
  %v422 = vpack.c.b16 %v390, %v374
  %v423 = vpack.c.b16 %v391, %v375
  %v424 = vpack.c.b16 %v392, %v376
  %v425 = vpack.c.b16 %v393, %v377
  %v426 = vpack.c.b16 %v394, %v378
  %v427 = vpack.c.b16 %v395, %v379
  %v428 = vpack.c.b16 %v396, %v380
  %v429 = vpack.c.b16 %v397, %v381
  %v430 = vpack.c.b16 %v398, %v382
  %v431 = vpack.c.b16 %v399, %v383
  %v432 = vpack.c.b16 %v400, %v384
  %v433 = vpack.c.b16 %v401, %v385
  %v434 = vpack.c.b16 %v402, %v386
  %v435 = vpack.c.b16 %v403, %v387
  %v436 = vpack.c.b16 %v404, %v388
  %v437 = vpack.c.b16 %v405, %v389
  %v726 = vunpack.c.l.b16 %v47
  %v727 = vunpack.c.l.b16 %v48
  %v728 = vunpack.c.l.b16 %v49
  %v729 = vunpack.c.l.b16 %v50
  %v730 = vunpack.c.l.b16 %v51
  %v731 = vunpack.c.l.b16 %v52
  %v732 = vunpack.c.l.b16 %v53
  %v733 = vunpack.c.l.b16 %v54
  %v734 = vunpack.c.l.b16 %v55
  %v735 = vunpack.c.l.b16 %v56
  %v736 = vunpack.c.l.b16 %v57
  %v737 = vunpack.c.l.b16 %v58
  %v738 = vunpack.c.l.b16 %v59
  %v739 = vunpack.c.l.b16 %v60
  %v740 = vunpack.c.l.b16 %v61
  %v741 = vunpack.c.l.b16 %v62
  %v742 = vunpack.c.l.b16 %v63
  %v743 = vunpack.c.l.b16 %v64
  %v744 = vunpack.c.l.b16 %v65
  %v745 = vunpack.c.l.b16 %v66
  %v746 = vunpack.c.l.b16 %v67
  %v747 = vunpack.c.l.b16 %v68
  %v748 = vunpack.c.l.b16 %v69
  %v749 = vunpack.c.l.b16 %v70
  %v750 = vunpack.c.l.b16 %v71
  %v751 = vunpack.c.l.b16 %v72
  %v752 = vunpack.c.l.b16 %v73
  %v753 = vunpack.c.l.b16 %v74
  %v754 = vunpack.c.l.b16 %v75
  %v755 = vunpack.c.l.b16 %v76
  %v756 = vunpack.c.l.b16 %v77
  %v757 = vunpack.c.l.b16 %v78
  %v758 = vunpack.c.l.b16 %v79
  %v759 = vunpack.c.l.b16 %v80
  %v760 = vunpack.c.l.b16 %v81
  %v761 = vunpack.c.l.b16 %v82
  %v762 = vunpack.c.l.b16 %v83
  %v763 = vunpack.c.l.b16 %v84
  %v764 = vunpack.c.l.b16 %v85
  %v765 = vunpack.c.l.b16 %v86
  %v766 = vunpack.c.l.b16 %v87
  %v767 = vunpack.c.l.b16 %v88
  %v768 = vunpack.c.l.b16 %v89
  %v769 = vunpack.c.l.b16 %v90
  %v770 = vunpack.c.l.b16 %v91
  %v771 = vunpack.c.l.b16 %v92
  %v772 = vunpack.c.l.b16 %v93
  %v773 = vunpack.c.l.b16 %v94
  %v774 = vunpack.c.l.b16 %v95
  %v775 = vunpack.c.l.b16 %v96
  %v776 = vunpack.c.l.b16 %v97
  %v777 = vunpack.c.l.b16 %v98
  %v778 = vunpack.c.l.b16 %v99
  %v779 = vunpack.c.l.b16 %v100
  %v780 = vunpack.c.l.b16 %v101
  %v781 = vunpack.c.l.b16 %v102
  %v782 = vunpack.c.l.b16 %v103
  %v783 = vunpack.c.l.b16 %v104
  %v784 = vunpack.c.l.b16 %v105
  %v785 = vunpack.c.l.b16 %v106
  %v786 = vunpack.c.l.b16 %v107
  %v787 = vunpack.c.l.b16 %v108
  %v788 = vunpack.c.l.b16 %v109
  %v789 = vunpack.c.l.b16 %v110
  %v790 = vunpack.c.l.b16 %v111
  %v791 = vunpack.c.l.b16 %v112
  %v792 = vunpack.c.l.b16 %v113
  %v793 = vunpack.c.l.b16 %v114
  %v794 = vunpack.c.l.b16 %v115
  %v795 = vunpack.c.l.b16 %v116
  %v796 = vunpack.c.l.b16 %v117
  %v797 = vunpack.c.l.b16 %v118
  %v798 = vunpack.c.l.b16 %v119
  %v799 = vunpack.c.l.b16 %v120
  %v800 = vunpack.c.l.b16 %v121
  %v801 = vunpack.c.l.b16 %v122
  %v802 = vunpack.c.l.b16 %v123
  %v803 = vunpack.c.l.b16 %v124
  %v804 = vunpack.c.l.b16 %v125
  %v805 = vunpack.c.l.b16 %v126
  %v806 = vunpack.c.l.b16 %v127
  %v807 = vunpack.c.l.b16 %v128
  %v808 = vunpack.c.l.b16 %v129
  %v809 = vunpack.c.l.b16 %v130
  %v810 = vunpack.c.l.b16 %v131
  %v811 = vunpack.c.l.b16 %v132
  %v812 = vunpack.c.l.b16 %v133
  %v813 = vunpack.c.l.b16 %v134
  %v814 = vunpack.c.l.b16 %v135
  %v815 = vunpack.c.l.b16 %v136
  %v816 = vunpack.c.l.b16 %v137
  %v817 = vunpack.c.l.b16 %v138
  %v818 = vunpack.c.l.b16 %v139
  %v819 = vunpack.c.l.b16 %v140
  %v820 = vunpack.c.l.b16 %v141
  %v821 = vunpack.c.l.b16 %v142
  %v822 = vunpack.c.l.b16 %v143
  %v823 = vunpack.c.l.b16 %v144
  %v824 = vunpack.c.l.b16 %v145
  %v825 = vunpack.c.l.b16 %v146
  %v826 = vunpack.c.l.b16 %v147
  %v827 = vunpack.c.l.b16 %v148
  %v828 = vunpack.c.l.b16 %v149
  %v829 = vunpack.c.l.b16 %v150
  %v830 = vunpack.c.l.b16 %v151
  %v831 = vunpack.c.l.b16 %v152
  %v832 = vunpack.c.l.b16 %v153
  %v833 = vunpack.c.l.b16 %v154
  %v834 = vunpack.c.l.b16 %v155
  %v835 = vunpack.c.l.b16 %v156
  %v836 = vunpack.c.l.b16 %v157
  %v837 = vunpack.c.l.b16 %v158
  %v838 = vunpack.c.l.b16 %v159
  %v839 = vunpack.c.l.b16 %v160
  %v840 = vunpack.c.l.b16 %v161
  %v841 = vunpack.c.l.b16 %v162
  %v842 = vunpack.c.l.b16 %v163
  %v843 = vunpack.c.l.b16 %v164
  %v844 = vunpack.c.l.b16 %v165
  %v845 = vunpack.c.l.b16 %v166
  %v846 = vunpack.c.l.b16 %v167
  %v847 = vunpack.c.l.b16 %v168
  %v848 = vunpack.c.l.b16 %v169
  %v849 = vunpack.c.l.b16 %v170
  %v850 = vunpack.c.l.b16 %v171
  %v851 = vunpack.c.l.b16 %v172
  %v852 = vunpack.c.l.b16 %v173
  %v853 = vunpack.c.l.b16 %v174
  %v854 = vunpack.c.l.b16 %v175
  %v855 = vunpack.c.l.b16 %v176
  %v856 = vunpack.c.l.b16 %v177
  %v857 = vunpack.c.l.b16 %v178
  %v858 = vunpack.c.l.b16 %v179
  %v859 = vunpack.c.l.b16 %v180
  %v860 = vunpack.c.l.b16 %v181
  %v861 = vunpack.c.l.b16 %v182
  %v862 = vunpack.c.l.b16 %v183
  %v863 = vunpack.c.l.b16 %v184
  %v864 = vunpack.c.l.b16 %v185
  %v865 = vunpack.c.l.b16 %v186
  %v866 = vunpack.c.l.b16 %v187
  %v867 = vunpack.c.l.b16 %v188
  %v868 = vunpack.c.l.b16 %v189
  %v869 = vunpack.c.l.b16 %v190
  %v870 = vunpack.c.l.b16 %v191
  %v871 = vunpack.c.l.b16 %v192
  %v872 = vunpack.c.l.b16 %v193
  %v873 = vunpack.c.l.b16 %v194
  %v874 = vunpack.c.l.b16 %v195
  %v875 = vunpack.c.l.b16 %v196
  %v876 = vunpack.c.l.b16 %v197
  %v877 = vunpack.c.l.b16 %v198
  %v878 = vunpack.c.l.b16 %v199
  %v879 = vunpack.c.l.b16 %v200
  %v880 = vunpack.c.l.b16 %v201
  %v881 = vunpack.c.l.b16 %v202
  %v882 = vunpack.c.l.b16 %v203
  %v883 = vunpack.c.l.b16 %v204
  %v884 = vunpack.c.l.b16 %v205
  %v885 = vunpack.c.l.b16 %v206
  %v886 = vunpack.c.l.b16 %v207
  %v887 = vunpack.c.l.b16 %v208
  %v888 = vunpack.c.l.b16 %v209
  %v889 = vunpack.c.l.b16 %v210
  %v890 = vunpack.c.l.b16 %v211
  %v891 = vunpack.c.l.b16 %v212
  %v892 = vunpack.c.l.b16 %v213
  %v893 = vunpack.c.l.b16 %v214
  %v894 = vunpack.c.l.b16 %v215
  %v895 = vunpack.c.l.b16 %v216
  %v896 = vunpack.c.l.b16 %v217
  %v897 = vunpack.c.l.b16 %v218
  %v898 = vunpack.c.l.b16 %v219
  %v899 = vunpack.c.l.b16 %v220
  %v900 = vunpack.c.l.b16 %v221
  %v901 = vunpack.c.l.b16 %v222
  %v902 = vunpack.c.l.b16 %v223
  %v903 = vunpack.c.l.b16 %v224
  %v904 = vunpack.c.l.b16 %v225
  %v905 = vunpack.c.l.b16 %v226
  %v906 = vunpack.c.l.b16 %v227
  %v907 = vunpack.c.l.b16 %v228
  %v908 = vunpack.c.l.b16 %v229
  %v909 = vunpack.c.l.b16 %v230
  %v910 = vunpack.c.l.b16 %v231
  %v911 = vunpack.c.l.b16 %v232
  %v912 = vunpack.c.l.b16 %v233
  %v913 = vunpack.c.l.b16 %v234
  %v914 = vunpack.c.l.b16 %v235
  %v915 = vunpack.c.l.b16 %v236
  %v916 = vunpack.c.l.b16 %v237
  %v917 = vunpack.c.l.b16 %v238
  %v918 = vunpack.c.l.b16 %v239
  %v919 = vunpack.c.l.b16 %v240
  %v920 = vunpack.c.l.b16 %v241
  %v921 = vunpack.c.l.b16 %v242
  %v922 = vunpack.c.l.b16 %v243
  %v923 = vunpack.c.l.b16 %v244
  %v924 = vunpack.c.l.b16 %v245
  %v925 = vunpack.c.l.b16 %v246
  %v926 = vunpack.c.l.b16 %v247
  %v927 = vunpack.c.l.b16 %v248
  %v928 = vunpack.c.l.b16 %v249
  %v929 = vunpack.c.l.b16 %v250
  %v930 = vunpack.c.l.b16 %v251
  %v931 = vunpack.c.l.b16 %v252
  %v932 = vunpack.c.l.b16 %v253
  %v933 = vunpack.c.l.b16 %v254
  %v934 = vunpack.c.l.b16 %v255
  %v935 = vunpack.c.l.b16 %v256
  %v936 = vunpack.c.l.b16 %v257
  %v937 = vunpack.c.l.b16 %v258
  %v938 = vunpack.c.l.b16 %v259
  %v939 = vunpack.c.l.b16 %v260
  %v940 = vunpack.c.l.b16 %v261
  %v941 = vunpack.c.l.b16 %v262
  %v942 = vunpack.c.l.b16 %v263
  %v943 = vunpack.c.l.b16 %v264
  %v944 = vunpack.c.l.b16 %v265
  %v945 = vunpack.c.l.b16 %v266
  %v946 = vunpack.c.l.b16 %v267
  %v947 = vunpack.c.l.b16 %v268
  %v948 = vunpack.c.l.b16 %v269
  %v949 = vunpack.c.l.b16 %v270
  %v950 = vunpack.c.l.b16 %v271
  %v951 = vunpack.c.l.b16 %v272
  %v952 = vunpack.c.l.b16 %v273
  %v953 = vunpack.c.l.b16 %v274
  %v954 = vunpack.c.l.b16 %v275
  %v955 = vunpack.c.l.b16 %v276
  %v956 = vunpack.c.l.b16 %v277
  %v957 = vunpack.c.l.b16 %v278
  %v958 = vunpack.c.l.b16 %v279
  %v959 = vunpack.c.l.b16 %v280
  %v960 = vunpack.c.l.b16 %v281
  %v961 = vunpack.c.l.b16 %v282
  %v962 = vunpack.c.l.b16 %v283
  %v963 = vunpack.c.l.b16 %v284
  %v964 = vunpack.c.l.b16 %v285
  %v965 = vunpack.c.l.b16 %v286
  %v966 = vunpack.c.l.b16 %v287
  %v967 = vunpack.c.l.b16 %v288
  %v968 = vunpack.c.l.b16 %v289
  %v969 = vunpack.c.l.b16 %v290
  %v970 = vunpack.c.l.b16 %v291
  %v971 = vunpack.c.l.b16 %v292
  %v972 = vunpack.c.l.b16 %v293
  %v973 = vunpack.c.l.b16 %v294
  %v974 = vunpack.c.l.b16 %v295
  %v975 = vunpack.c.l.b16 %v296
  %v976 = vunpack.c.l.b16 %v297
  %v977 = vunpack.c.l.b16 %v298
  %v978 = vunpack.c.l.b16 %v299
  %v979 = vunpack.c.l.b16 %v300
  %v980 = vunpack.c.l.b16 %v301
  %v981 = vunpack.c.l.b16 %v302
  %v982 = vpack.c.b16 %v727, %v726
  %v983 = vpack.c.b16 %v729, %v728
  %v984 = vpack.c.b16 %v731, %v730
  %v985 = vpack.c.b16 %v733, %v732
  %v986 = vpack.c.b16 %v735, %v734
  %v987 = vpack.c.b16 %v737, %v736
  %v988 = vpack.c.b16 %v739, %v738
  %v989 = vpack.c.b16 %v741, %v740
  %v990 = vpack.c.b16 %v743, %v742
  %v991 = vpack.c.b16 %v745, %v744
  %v992 = vpack.c.b16 %v747, %v746
  %v993 = vpack.c.b16 %v749, %v748
  %v994 = vpack.c.b16 %v751, %v750
  %v995 = vpack.c.b16 %v753, %v752
  %v996 = vpack.c.b16 %v755, %v754
  %v997 = vpack.c.b16 %v757, %v756
  %v998 = vpack.c.b16 %v759, %v758
  %v999 = vpack.c.b16 %v761, %v760
  %v1000 = vpack.c.b16 %v763, %v762
  %v1001 = vpack.c.b16 %v765, %v764
  %v1002 = vpack.c.b16 %v767, %v766
  %v1003 = vpack.c.b16 %v769, %v768
  %v1004 = vpack.c.b16 %v771, %v770
  %v1005 = vpack.c.b16 %v773, %v772
  %v1006 = vpack.c.b16 %v775, %v774
  %v1007 = vpack.c.b16 %v777, %v776
  %v1008 = vpack.c.b16 %v779, %v778
  %v1009 = vpack.c.b16 %v781, %v780
  %v1010 = vpack.c.b16 %v783, %v782
  %v1011 = vpack.c.b16 %v785, %v784
  %v1012 = vpack.c.b16 %v787, %v786
  %v1013 = vpack.c.b16 %v789, %v788
  %v1014 = vpack.c.b16 %v791, %v790
  %v1015 = vpack.c.b16 %v793, %v792
  %v1016 = vpack.c.b16 %v795, %v794
  %v1017 = vpack.c.b16 %v797, %v796
  %v1018 = vpack.c.b16 %v799, %v798
  %v1019 = vpack.c.b16 %v801, %v800
  %v1020 = vpack.c.b16 %v803, %v802
  %v1021 = vpack.c.b16 %v805, %v804
  %v1022 = vpack.c.b16 %v807, %v806
  %v1023 = vpack.c.b16 %v809, %v808
  %v1024 = vpack.c.b16 %v811, %v810
  %v1025 = vpack.c.b16 %v813, %v812
  %v1026 = vpack.c.b16 %v815, %v814
  %v1027 = vpack.c.b16 %v817, %v816
  %v1028 = vpack.c.b16 %v819, %v818
  %v1029 = vpack.c.b16 %v821, %v820
  %v1030 = vpack.c.b16 %v823, %v822
  %v1031 = vpack.c.b16 %v825, %v824
  %v1032 = vpack.c.b16 %v827, %v826
  %v1033 = vpack.c.b16 %v829, %v828
  %v1034 = vpack.c.b16 %v831, %v830
  %v1035 = vpack.c.b16 %v833, %v832
  %v1036 = vpack.c.b16 %v835, %v834
  %v1037 = vpack.c.b16 %v837, %v836
  %v1038 = vpack.c.b16 %v839, %v838
  %v1039 = vpack.c.b16 %v841, %v840
  %v1040 = vpack.c.b16 %v843, %v842
  %v1041 = vpack.c.b16 %v845, %v844
  %v1042 = vpack.c.b16 %v847, %v846
  %v1043 = vpack.c.b16 %v849, %v848
  %v1044 = vpack.c.b16 %v851, %v850
  %v1045 = vpack.c.b16 %v853, %v852
  %v1046 = vpack.c.b16 %v855, %v854
  %v1047 = vpack.c.b16 %v857, %v856
  %v1048 = vpack.c.b16 %v859, %v858
  %v1049 = vpack.c.b16 %v861, %v860
  %v1050 = vpack.c.b16 %v863, %v862
  %v1051 = vpack.c.b16 %v865, %v864
  %v1052 = vpack.c.b16 %v867, %v866
  %v1053 = vpack.c.b16 %v869, %v868
  %v1054 = vpack.c.b16 %v871, %v870
  %v1055 = vpack.c.b16 %v873, %v872
  %v1056 = vpack.c.b16 %v875, %v874
  %v1057 = vpack.c.b16 %v877, %v876
  %v1058 = vpack.c.b16 %v879, %v878
  %v1059 = vpack.c.b16 %v881, %v880
  %v1060 = vpack.c.b16 %v883, %v882
  %v1061 = vpack.c.b16 %v885, %v884
  %v1062 = vpack.c.b16 %v887, %v886
  %v1063 = vpack.c.b16 %v889, %v888
  %v1064 = vpack.c.b16 %v891, %v890
  %v1065 = vpack.c.b16 %v893, %v892
  %v1066 = vpack.c.b16 %v895, %v894
  %v1067 = vpack.c.b16 %v897, %v896
  %v1068 = vpack.c.b16 %v899, %v898
  %v1069 = vpack.c.b16 %v901, %v900
  %v1070 = vpack.c.b16 %v903, %v902
  %v1071 = vpack.c.b16 %v905, %v904
  %v1072 = vpack.c.b16 %v907, %v906
  %v1073 = vpack.c.b16 %v909, %v908
  %v1074 = vpack.c.b16 %v911, %v910
  %v1075 = vpack.c.b16 %v913, %v912
  %v1076 = vpack.c.b16 %v915, %v914
  %v1077 = vpack.c.b16 %v917, %v916
  %v1078 = vpack.c.b16 %v919, %v918
  %v1079 = vpack.c.b16 %v921, %v920
  %v1080 = vpack.c.b16 %v923, %v922
  %v1081 = vpack.c.b16 %v925, %v924
  %v1082 = vpack.c.b16 %v927, %v926
  %v1083 = vpack.c.b16 %v929, %v928
  %v1084 = vpack.c.b16 %v931, %v930
  %v1085 = vpack.c.b16 %v933, %v932
  %v1086 = vpack.c.b16 %v935, %v934
  %v1087 = vpack.c.b16 %v937, %v936
  %v1088 = vpack.c.b16 %v939, %v938
  %v1089 = vpack.c.b16 %v941, %v940
  %v1090 = vpack.c.b16 %v943, %v942
  %v1091 = vpack.c.b16 %v945, %v944
  %v1092 = vpack.c.b16 %v947, %v946
  %v1093 = vpack.c.b16 %v949, %v948
  %v1094 = vpack.c.b16 %v951, %v950
  %v1095 = vpack.c.b16 %v953, %v952
  %v1096 = vpack.c.b16 %v955, %v954
  %v1097 = vpack.c.b16 %v957, %v956
  %v1098 = vpack.c.b16 %v959, %v958
  %v1099 = vpack.c.b16 %v961, %v960
  %v1100 = vpack.c.b16 %v963, %v962
  %v1101 = vpack.c.b16 %v965, %v964
  %v1102 = vpack.c.b16 %v967, %v966
  %v1103 = vpack.c.b16 %v969, %v968
  %v1104 = vpack.c.b16 %v971, %v970
  %v1105 = vpack.c.b16 %v973, %v972
  %v1106 = vpack.c.b16 %v975, %v974
  %v1107 = vpack.c.b16 %v977, %v976
  %v1108 = vpack.c.b16 %v979, %v978
  %v1109 = vpack.c.b16 %v981, %v980
  %1238 = vmatprep.subr.bf16.mxu0 0
  %1239 = vmatpush1.bf16.msra.mxu0 %v982
  %1240 = vmatprep.subr.bf16.mxu0 0
  %1241 = vmatpush1.bf16.msra.mxu0 %v983
  %1242 = vmatprep.subr.bf16.mxu0 0
  %1243 = vmatpush1.bf16.msra.mxu0 %v984
  %1244 = vmatprep.subr.bf16.mxu0 0
  %1245 = vmatpush1.bf16.msra.mxu0 %v985
  %1246 = vmatprep.subr.bf16.mxu0 0
  %1247 = vmatpush1.bf16.msra.mxu0 %v986
  %1248 = vmatprep.subr.bf16.mxu0 0
  %1249 = vmatpush1.bf16.msra.mxu0 %v987
  %1250 = vmatprep.subr.bf16.mxu0 0
  %1251 = vmatpush1.bf16.msra.mxu0 %v988
  %1252 = vmatprep.subr.bf16.mxu0 0
  %1253 = vmatpush1.bf16.msra.mxu0 %v989
  %1254 = vmatprep.subr.bf16.mxu0 0
  %1255 = vmatpush1.bf16.msra.mxu0 %v990
  %1256 = vmatprep.subr.bf16.mxu0 0
  %1257 = vmatpush1.bf16.msra.mxu0 %v991
  %1258 = vmatprep.subr.bf16.mxu0 0
  %1259 = vmatpush1.bf16.msra.mxu0 %v992
  %1260 = vmatprep.subr.bf16.mxu0 0
  %1261 = vmatpush1.bf16.msra.mxu0 %v993
  %1262 = vmatprep.subr.bf16.mxu0 0
  %1263 = vmatpush1.bf16.msra.mxu0 %v994
  %1264 = vmatprep.subr.bf16.mxu0 0
  %1265 = vmatpush1.bf16.msra.mxu0 %v995
  %1266 = vmatprep.subr.bf16.mxu0 0
  %1267 = vmatpush1.bf16.msra.mxu0 %v996
  %1268 = vmatprep.subr.bf16.mxu0 0
  %1269 = vmatpush1.bf16.msra.mxu0 %v997
  %1270 = vmatprep.mubr.bf16.mxu0 %v407
  %1271 = vmatmul.mubr.bf16.gmra.mrb[0].mxu0 %v406
  %v1272 = vpop.f32.mrb[0].mxu0
  %v1273 = vadd.f32 %v308, %v1272
  %v1274 = vpop.f32.mrb[0].mxu0
  %v1275 = vpop.f32.mrb[0].mxu0
  %v1276 = vadd.f32 %v308, %v1275
  %v1277 = vpop.f32.mrb[0].mxu0
  %1278 = vmatprep.mubr.bf16.mxu0 %v423
  %1279 = vmatmul.mubr.bf16.gmra.mrb[0].mxu0 %v422
  %v1280 = vpop.f32.mrb[0].mxu0
  %v1281 = vadd.f32 %v308, %v1280
  %v1282 = vpop.f32.mrb[0].mxu0
  %v1283 = vpop.f32.mrb[0].mxu0
  %v1284 = vadd.f32 %v308, %v1283
  %v1285 = vpop.f32.mrb[0].mxu0
  %1286 = vdwg.mxu0
  %1287 = vmatprep.subr.bf16.mxu0 0
  %1288 = vmatpush1.bf16.msra.mxu0 %v998
  %1289 = vmatprep.subr.bf16.mxu0 0
  %1290 = vmatpush1.bf16.msra.mxu0 %v999
  %1291 = vmatprep.subr.bf16.mxu0 0
  %1292 = vmatpush1.bf16.msra.mxu0 %v1000
  %1293 = vmatprep.subr.bf16.mxu0 0
  %1294 = vmatpush1.bf16.msra.mxu0 %v1001
  %1295 = vmatprep.subr.bf16.mxu0 0
  %1296 = vmatpush1.bf16.msra.mxu0 %v1002
  %1297 = vmatprep.subr.bf16.mxu0 0
  %1298 = vmatpush1.bf16.msra.mxu0 %v1003
  %1299 = vmatprep.subr.bf16.mxu0 0
  %1300 = vmatpush1.bf16.msra.mxu0 %v1004
  %1301 = vmatprep.subr.bf16.mxu0 0
  %1302 = vmatpush1.bf16.msra.mxu0 %v1005
  %1303 = vmatprep.subr.bf16.mxu0 0
  %1304 = vmatpush1.bf16.msra.mxu0 %v1006
  %1305 = vmatprep.subr.bf16.mxu0 0
  %1306 = vmatpush1.bf16.msra.mxu0 %v1007
  %1307 = vmatprep.subr.bf16.mxu0 0
  %1308 = vmatpush1.bf16.msra.mxu0 %v1008
  %1309 = vmatprep.subr.bf16.mxu0 0
  %1310 = vmatpush1.bf16.msra.mxu0 %v1009
  %1311 = vmatprep.subr.bf16.mxu0 0
  %1312 = vmatpush1.bf16.msra.mxu0 %v1010
  %1313 = vmatprep.subr.bf16.mxu0 0
  %1314 = vmatpush1.bf16.msra.mxu0 %v1011
  %1315 = vmatprep.subr.bf16.mxu0 0
  %1316 = vmatpush1.bf16.msra.mxu0 %v1012
  %1317 = vmatprep.subr.bf16.mxu0 0
  %1318 = vmatpush1.bf16.msra.mxu0 %v1013
  %1319 = vmatprep.mubr.bf16.mxu0 %v409
  %1320 = vmatmul.mubr.bf16.gmra.mrb[0].mxu0 %v408
  %v1321 = vpop.f32.mrb[0].mxu0
  %v1322 = vadd.f32 %v1273, %v1321
  %v1323 = vpop.f32.mrb[0].mxu0
  %v1324 = vpop.f32.mrb[0].mxu0
  %v1325 = vadd.f32 %v1276, %v1324
  %v1326 = vpop.f32.mrb[0].mxu0
  %1327 = vmatprep.mubr.bf16.mxu0 %v425
  %1328 = vmatmul.mubr.bf16.gmra.mrb[0].mxu0 %v424
  %v1329 = vpop.f32.mrb[0].mxu0
  %v1330 = vadd.f32 %v1281, %v1329
  %v1331 = vpop.f32.mrb[0].mxu0
  %v1332 = vpop.f32.mrb[0].mxu0
  %v1333 = vadd.f32 %v1284, %v1332
  %v1334 = vpop.f32.mrb[0].mxu0
  %1335 = vdwg.mxu0
  %1336 = vmatprep.subr.bf16.mxu0 0
  %1337 = vmatpush1.bf16.msra.mxu0 %v1014
  %1338 = vmatprep.subr.bf16.mxu0 0
  %1339 = vmatpush1.bf16.msra.mxu0 %v1015
  %1340 = vmatprep.subr.bf16.mxu0 0
  %1341 = vmatpush1.bf16.msra.mxu0 %v1016
  %1342 = vmatprep.subr.bf16.mxu0 0
  %1343 = vmatpush1.bf16.msra.mxu0 %v1017
  %1344 = vmatprep.subr.bf16.mxu0 0
  %1345 = vmatpush1.bf16.msra.mxu0 %v1018
  %1346 = vmatprep.subr.bf16.mxu0 0
  %1347 = vmatpush1.bf16.msra.mxu0 %v1019
  %1348 = vmatprep.subr.bf16.mxu0 0
  %1349 = vmatpush1.bf16.msra.mxu0 %v1020
  %1350 = vmatprep.subr.bf16.mxu0 0
  %1351 = vmatpush1.bf16.msra.mxu0 %v1021
  %1352 = vmatprep.subr.bf16.mxu0 0
  %1353 = vmatpush1.bf16.msra.mxu0 %v1022
  %1354 = vmatprep.subr.bf16.mxu0 0
  %1355 = vmatpush1.bf16.msra.mxu0 %v1023
  %1356 = vmatprep.subr.bf16.mxu0 0
  %1357 = vmatpush1.bf16.msra.mxu0 %v1024
  %1358 = vmatprep.subr.bf16.mxu0 0
  %1359 = vmatpush1.bf16.msra.mxu0 %v1025
  %1360 = vmatprep.subr.bf16.mxu0 0
  %1361 = vmatpush1.bf16.msra.mxu0 %v1026
  %1362 = vmatprep.subr.bf16.mxu0 0
  %1363 = vmatpush1.bf16.msra.mxu0 %v1027
  %1364 = vmatprep.subr.bf16.mxu0 0
  %1365 = vmatpush1.bf16.msra.mxu0 %v1028
  %1366 = vmatprep.subr.bf16.mxu0 0
  %1367 = vmatpush1.bf16.msra.mxu0 %v1029
  %1368 = vmatprep.mubr.bf16.mxu0 %v411
  %1369 = vmatmul.mubr.bf16.gmra.mrb[0].mxu0 %v410
  %v1370 = vpop.f32.mrb[0].mxu0
  %v1371 = vadd.f32 %v1322, %v1370
  %v1372 = vpop.f32.mrb[0].mxu0
  %v1373 = vpop.f32.mrb[0].mxu0
  %v1374 = vadd.f32 %v1325, %v1373
  %v1375 = vpop.f32.mrb[0].mxu0
  %1376 = vmatprep.mubr.bf16.mxu0 %v427
  %1377 = vmatmul.mubr.bf16.gmra.mrb[0].mxu0 %v426
  %v1378 = vpop.f32.mrb[0].mxu0
  %v1379 = vadd.f32 %v1330, %v1378
  %v1380 = vpop.f32.mrb[0].mxu0
  %v1381 = vpop.f32.mrb[0].mxu0
  %v1382 = vadd.f32 %v1333, %v1381
  %v1383 = vpop.f32.mrb[0].mxu0
  %1384 = vdwg.mxu0
  %1385 = vmatprep.subr.bf16.mxu0 0
  %1386 = vmatpush1.bf16.msra.mxu0 %v1030
  %1387 = vmatprep.subr.bf16.mxu0 0
  %1388 = vmatpush1.bf16.msra.mxu0 %v1031
  %1389 = vmatprep.subr.bf16.mxu0 0
  %1390 = vmatpush1.bf16.msra.mxu0 %v1032
  %1391 = vmatprep.subr.bf16.mxu0 0
  %1392 = vmatpush1.bf16.msra.mxu0 %v1033
  %1393 = vmatprep.subr.bf16.mxu0 0
  %1394 = vmatpush1.bf16.msra.mxu0 %v1034
  %1395 = vmatprep.subr.bf16.mxu0 0
  %1396 = vmatpush1.bf16.msra.mxu0 %v1035
  %1397 = vmatprep.subr.bf16.mxu0 0
  %1398 = vmatpush1.bf16.msra.mxu0 %v1036
  %1399 = vmatprep.subr.bf16.mxu0 0
  %1400 = vmatpush1.bf16.msra.mxu0 %v1037
  %1401 = vmatprep.subr.bf16.mxu0 0
  %1402 = vmatpush1.bf16.msra.mxu0 %v1038
  %1403 = vmatprep.subr.bf16.mxu0 0
  %1404 = vmatpush1.bf16.msra.mxu0 %v1039
  %1405 = vmatprep.subr.bf16.mxu0 0
  %1406 = vmatpush1.bf16.msra.mxu0 %v1040
  %1407 = vmatprep.subr.bf16.mxu0 0
  %1408 = vmatpush1.bf16.msra.mxu0 %v1041
  %1409 = vmatprep.subr.bf16.mxu0 0
  %1410 = vmatpush1.bf16.msra.mxu0 %v1042
  %1411 = vmatprep.subr.bf16.mxu0 0
  %1412 = vmatpush1.bf16.msra.mxu0 %v1043
  %1413 = vmatprep.subr.bf16.mxu0 0
  %1414 = vmatpush1.bf16.msra.mxu0 %v1044
  %1415 = vmatprep.subr.bf16.mxu0 0
  %1416 = vmatpush1.bf16.msra.mxu0 %v1045
  %1417 = vmatprep.mubr.bf16.mxu0 %v413
  %1418 = vmatmul.mubr.bf16.gmra.mrb[0].mxu0 %v412
  %v1419 = vpop.f32.mrb[0].mxu0
  %v1420 = vadd.f32 %v1371, %v1419
  %v1421 = vpop.f32.mrb[0].mxu0
  %v1422 = vpop.f32.mrb[0].mxu0
  %v1423 = vadd.f32 %v1374, %v1422
  %v1424 = vpop.f32.mrb[0].mxu0
  %1425 = vmatprep.mubr.bf16.mxu0 %v429
  %1426 = vmatmul.mubr.bf16.gmra.mrb[0].mxu0 %v428
  %v1427 = vpop.f32.mrb[0].mxu0
  %v1428 = vadd.f32 %v1379, %v1427
  %v1429 = vpop.f32.mrb[0].mxu0
  %v1430 = vpop.f32.mrb[0].mxu0
  %v1431 = vadd.f32 %v1382, %v1430
  %v1432 = vpop.f32.mrb[0].mxu0
  %1433 = vdwg.mxu0
  %1434 = vmatprep.subr.bf16.mxu0 0
  %1435 = vmatpush1.bf16.msra.mxu0 %v1046
  %1436 = vmatprep.subr.bf16.mxu0 0
  %1437 = vmatpush1.bf16.msra.mxu0 %v1047
  %1438 = vmatprep.subr.bf16.mxu0 0
  %1439 = vmatpush1.bf16.msra.mxu0 %v1048
  %1440 = vmatprep.subr.bf16.mxu0 0
  %1441 = vmatpush1.bf16.msra.mxu0 %v1049
  %1442 = vmatprep.subr.bf16.mxu0 0
  %1443 = vmatpush1.bf16.msra.mxu0 %v1050
  %1444 = vmatprep.subr.bf16.mxu0 0
  %1445 = vmatpush1.bf16.msra.mxu0 %v1051
  %1446 = vmatprep.subr.bf16.mxu0 0
  %1447 = vmatpush1.bf16.msra.mxu0 %v1052
  %1448 = vmatprep.subr.bf16.mxu0 0
  %1449 = vmatpush1.bf16.msra.mxu0 %v1053
  %1450 = vmatprep.subr.bf16.mxu0 0
  %1451 = vmatpush1.bf16.msra.mxu0 %v1054
  %1452 = vmatprep.subr.bf16.mxu0 0
  %1453 = vmatpush1.bf16.msra.mxu0 %v1055
  %1454 = vmatprep.subr.bf16.mxu0 0
  %1455 = vmatpush1.bf16.msra.mxu0 %v1056
  %1456 = vmatprep.subr.bf16.mxu0 0
  %1457 = vmatpush1.bf16.msra.mxu0 %v1057
  %1458 = vmatprep.subr.bf16.mxu0 0
  %1459 = vmatpush1.bf16.msra.mxu0 %v1058
  %1460 = vmatprep.subr.bf16.mxu0 0
  %1461 = vmatpush1.bf16.msra.mxu0 %v1059
  %1462 = vmatprep.subr.bf16.mxu0 0
  %1463 = vmatpush1.bf16.msra.mxu0 %v1060
  %1464 = vmatprep.subr.bf16.mxu0 0
  %1465 = vmatpush1.bf16.msra.mxu0 %v1061
  %1466 = vmatprep.mubr.bf16.mxu0 %v415
  %1467 = vmatmul.mubr.bf16.gmra.mrb[0].mxu0 %v414
  %v1468 = vpop.f32.mrb[0].mxu0
  %v1469 = vadd.f32 %v1420, %v1468
  %v1470 = vpop.f32.mrb[0].mxu0
  %v1471 = vpop.f32.mrb[0].mxu0
  %v1472 = vadd.f32 %v1423, %v1471
  %v1473 = vpop.f32.mrb[0].mxu0
  %1474 = vmatprep.mubr.bf16.mxu0 %v431
  %1475 = vmatmul.mubr.bf16.gmra.mrb[0].mxu0 %v430
  %v1476 = vpop.f32.mrb[0].mxu0
  %v1477 = vadd.f32 %v1428, %v1476
  %v1478 = vpop.f32.mrb[0].mxu0
  %v1479 = vpop.f32.mrb[0].mxu0
  %v1480 = vadd.f32 %v1431, %v1479
  %v1481 = vpop.f32.mrb[0].mxu0
  %1482 = vdwg.mxu0
  %1483 = vmatprep.subr.bf16.mxu0 0
  %1484 = vmatpush1.bf16.msra.mxu0 %v1062
  %1485 = vmatprep.subr.bf16.mxu0 0
  %1486 = vmatpush1.bf16.msra.mxu0 %v1063
  %1487 = vmatprep.subr.bf16.mxu0 0
  %1488 = vmatpush1.bf16.msra.mxu0 %v1064
  %1489 = vmatprep.subr.bf16.mxu0 0
  %1490 = vmatpush1.bf16.msra.mxu0 %v1065
  %1491 = vmatprep.subr.bf16.mxu0 0
  %1492 = vmatpush1.bf16.msra.mxu0 %v1066
  %1493 = vmatprep.subr.bf16.mxu0 0
  %1494 = vmatpush1.bf16.msra.mxu0 %v1067
  %1495 = vmatprep.subr.bf16.mxu0 0
  %1496 = vmatpush1.bf16.msra.mxu0 %v1068
  %1497 = vmatprep.subr.bf16.mxu0 0
  %1498 = vmatpush1.bf16.msra.mxu0 %v1069
  %1499 = vmatprep.subr.bf16.mxu0 0
  %1500 = vmatpush1.bf16.msra.mxu0 %v1070
  %1501 = vmatprep.subr.bf16.mxu0 0
  %1502 = vmatpush1.bf16.msra.mxu0 %v1071
  %1503 = vmatprep.subr.bf16.mxu0 0
  %1504 = vmatpush1.bf16.msra.mxu0 %v1072
  %1505 = vmatprep.subr.bf16.mxu0 0
  %1506 = vmatpush1.bf16.msra.mxu0 %v1073
  %1507 = vmatprep.subr.bf16.mxu0 0
  %1508 = vmatpush1.bf16.msra.mxu0 %v1074
  %1509 = vmatprep.subr.bf16.mxu0 0
  %1510 = vmatpush1.bf16.msra.mxu0 %v1075
  %1511 = vmatprep.subr.bf16.mxu0 0
  %1512 = vmatpush1.bf16.msra.mxu0 %v1076
  %1513 = vmatprep.subr.bf16.mxu0 0
  %1514 = vmatpush1.bf16.msra.mxu0 %v1077
  %1515 = vmatprep.mubr.bf16.mxu0 %v417
  %1516 = vmatmul.mubr.bf16.gmra.mrb[0].mxu0 %v416
  %v1517 = vpop.f32.mrb[0].mxu0
  %v1518 = vadd.f32 %v1469, %v1517
  %v1519 = vpop.f32.mrb[0].mxu0
  %v1520 = vpop.f32.mrb[0].mxu0
  %v1521 = vadd.f32 %v1472, %v1520
  %v1522 = vpop.f32.mrb[0].mxu0
  %1523 = vmatprep.mubr.bf16.mxu0 %v433
  %1524 = vmatmul.mubr.bf16.gmra.mrb[0].mxu0 %v432
  %v1525 = vpop.f32.mrb[0].mxu0
  %v1526 = vadd.f32 %v1477, %v1525
  %v1527 = vpop.f32.mrb[0].mxu0
  %v1528 = vpop.f32.mrb[0].mxu0
  %v1529 = vadd.f32 %v1480, %v1528
  %v1530 = vpop.f32.mrb[0].mxu0
  %1531 = vdwg.mxu0
  %1532 = vmatprep.subr.bf16.mxu0 0
  %1533 = vmatpush1.bf16.msra.mxu0 %v1078
  %1534 = vmatprep.subr.bf16.mxu0 0
  %1535 = vmatpush1.bf16.msra.mxu0 %v1079
  %1536 = vmatprep.subr.bf16.mxu0 0
  %1537 = vmatpush1.bf16.msra.mxu0 %v1080
  %1538 = vmatprep.subr.bf16.mxu0 0
  %1539 = vmatpush1.bf16.msra.mxu0 %v1081
  %1540 = vmatprep.subr.bf16.mxu0 0
  %1541 = vmatpush1.bf16.msra.mxu0 %v1082
  %1542 = vmatprep.subr.bf16.mxu0 0
  %1543 = vmatpush1.bf16.msra.mxu0 %v1083
  %1544 = vmatprep.subr.bf16.mxu0 0
  %1545 = vmatpush1.bf16.msra.mxu0 %v1084
  %1546 = vmatprep.subr.bf16.mxu0 0
  %1547 = vmatpush1.bf16.msra.mxu0 %v1085
  %1548 = vmatprep.subr.bf16.mxu0 0
  %1549 = vmatpush1.bf16.msra.mxu0 %v1086
  %1550 = vmatprep.subr.bf16.mxu0 0
  %1551 = vmatpush1.bf16.msra.mxu0 %v1087
  %1552 = vmatprep.subr.bf16.mxu0 0
  %1553 = vmatpush1.bf16.msra.mxu0 %v1088
  %1554 = vmatprep.subr.bf16.mxu0 0
  %1555 = vmatpush1.bf16.msra.mxu0 %v1089
  %1556 = vmatprep.subr.bf16.mxu0 0
  %1557 = vmatpush1.bf16.msra.mxu0 %v1090
  %1558 = vmatprep.subr.bf16.mxu0 0
  %1559 = vmatpush1.bf16.msra.mxu0 %v1091
  %1560 = vmatprep.subr.bf16.mxu0 0
  %1561 = vmatpush1.bf16.msra.mxu0 %v1092
  %1562 = vmatprep.subr.bf16.mxu0 0
  %1563 = vmatpush1.bf16.msra.mxu0 %v1093
  %1564 = vmatprep.mubr.bf16.mxu0 %v419
  %1565 = vmatmul.mubr.bf16.gmra.mrb[0].mxu0 %v418
  %v1566 = vpop.f32.mrb[0].mxu0
  %v1567 = vadd.f32 %v1518, %v1566
  %v1568 = vpop.f32.mrb[0].mxu0
  %v1569 = vpop.f32.mrb[0].mxu0
  %v1570 = vadd.f32 %v1521, %v1569
  %v1571 = vpop.f32.mrb[0].mxu0
  %1572 = vmatprep.mubr.bf16.mxu0 %v435
  %1573 = vmatmul.mubr.bf16.gmra.mrb[0].mxu0 %v434
  %v1574 = vpop.f32.mrb[0].mxu0
  %v1575 = vadd.f32 %v1526, %v1574
  %v1576 = vpop.f32.mrb[0].mxu0
  %v1577 = vpop.f32.mrb[0].mxu0
  %v1578 = vadd.f32 %v1529, %v1577
  %v1579 = vpop.f32.mrb[0].mxu0
  %1580 = vdwg.mxu0
  %1581 = vmatprep.subr.bf16.mxu0 0
  %1582 = vmatpush1.bf16.msra.mxu0 %v1094
  %1583 = vmatprep.subr.bf16.mxu0 0
  %1584 = vmatpush1.bf16.msra.mxu0 %v1095
  %1585 = vmatprep.subr.bf16.mxu0 0
  %1586 = vmatpush1.bf16.msra.mxu0 %v1096
  %1587 = vmatprep.subr.bf16.mxu0 0
  %1588 = vmatpush1.bf16.msra.mxu0 %v1097
  %1589 = vmatprep.subr.bf16.mxu0 0
  %1590 = vmatpush1.bf16.msra.mxu0 %v1098
  %1591 = vmatprep.subr.bf16.mxu0 0
  %1592 = vmatpush1.bf16.msra.mxu0 %v1099
  %1593 = vmatprep.subr.bf16.mxu0 0
  %1594 = vmatpush1.bf16.msra.mxu0 %v1100
  %1595 = vmatprep.subr.bf16.mxu0 0
  %1596 = vmatpush1.bf16.msra.mxu0 %v1101
  %1597 = vmatprep.subr.bf16.mxu0 0
  %1598 = vmatpush1.bf16.msra.mxu0 %v1102
  %1599 = vmatprep.subr.bf16.mxu0 0
  %1600 = vmatpush1.bf16.msra.mxu0 %v1103
  %1601 = vmatprep.subr.bf16.mxu0 0
  %1602 = vmatpush1.bf16.msra.mxu0 %v1104
  %1603 = vmatprep.subr.bf16.mxu0 0
  %1604 = vmatpush1.bf16.msra.mxu0 %v1105
  %1605 = vmatprep.subr.bf16.mxu0 0
  %1606 = vmatpush1.bf16.msra.mxu0 %v1106
  %1607 = vmatprep.subr.bf16.mxu0 0
  %1608 = vmatpush1.bf16.msra.mxu0 %v1107
  %1609 = vmatprep.subr.bf16.mxu0 0
  %1610 = vmatpush1.bf16.msra.mxu0 %v1108
  %1611 = vmatprep.subr.bf16.mxu0 0
  %1612 = vmatpush1.bf16.msra.mxu0 %v1109
  %1613 = vmatprep.mubr.bf16.mxu0 %v421
  %1614 = vmatmul.mubr.bf16.gmra.mrb[0].mxu0 %v420
  %v1615 = vpop.f32.mrb[0].mxu0
  %v1616 = vadd.f32 %v1567, %v1615
  %v1617 = vpop.f32.mrb[0].mxu0
  %v1618 = vpop.f32.mrb[0].mxu0
  %v1619 = vadd.f32 %v1570, %v1618
  %v1620 = vpop.f32.mrb[0].mxu0
  %1621 = vmatprep.mubr.bf16.mxu0 %v437
  %1622 = vmatmul.mubr.bf16.gmra.mrb[0].mxu0 %v436
  %v1623 = vpop.f32.mrb[0].mxu0
  %v1624 = vadd.f32 %v1575, %v1623
  %v1625 = vpop.f32.mrb[0].mxu0
  %v1626 = vpop.f32.mrb[0].mxu0
  %v1627 = vadd.f32 %v1578, %v1626
  %v1628 = vpop.f32.mrb[0].mxu0
  %1629 = vdwg.mxu0
  %vm1630 = vcmp.ge.f32.partialorder %v1616, 0.0
  %vm1631 = vcmp.ge.f32.partialorder %v1619, 0.0
  %vm1632 = vcmp.ge.f32.partialorder %v1624, 0.0
  %vm1633 = vcmp.ge.f32.partialorder %v1627, 0.0
  %v1634 = vmul.f32 %v1616, 0.2
  %v1635 = vmul.f32 %v1619, 0.2
  %v1636 = vmul.f32 %v1624, 0.2
  %v1637 = vmul.f32 %v1627, 0.2
  %v1638 = vsel %vm1630, %v1616, %v1634
  %v1639 = vsel %vm1631, %v1619, %v1635
  %v1640 = vsel %vm1632, %v1624, %v1636
  %v1641 = vsel %vm1633, %v1627, %v1637
  %v1642 = vpack.c.bf16 %v1639, %v1638
  %v1643 = vpack.c.bf16 %v1641, %v1640
  %v1646 = vunpack.c.l.b16 %v1642
  %v1647 = vunpack.c.h.b16 %v1642
  %v1648 = vunpack.c.l.b16 %v1643
  %v1649 = vunpack.c.h.b16 %v1643
  %v1650 = vpack.c.b16 %v1646, %v1646
  %v1651 = vpack.c.b16 %v1647, %v1647
  %v1652 = vpack.c.b16 %v1648, %v1648
  %v1653 = vpack.c.b16 %v1649, %v1649
  %1658 = vst [vmem:[%s3] sm:$0xf] %v1650
  %1659 = vst [vmem:[%s3 + $0x4] sm:$0xf] %v1651
  %1660 = vst [vmem:[%s3 + $0x8] sm:$0xf] %v1652
  %1661 = vst [vmem:[%s3 + $0xc] sm:$0xf] %v1653
  // Predicated region
  $region14: #{xz_discriminator_forward.7} parent=0 // pred_check
    _
  $region15: #{xz_discriminator_forward.7} parent=0 // pred_check_branch
    %1663 = sbr.rel (0) target = $region17
  $region16: #{xz_discriminator_forward.7} parent=0 // pred_region
    _
  $region17: #{xz_discriminator_forward.7} parent=0 // pred_fallthru
    _
  // Predicated region
  $region18: #{xz_discriminator_forward.7} parent=0 // pred_check
    _
  $region19: #{xz_discriminator_forward.7} parent=0 // pred_check_branch
    %1665 = sbr.rel (0) target = $region21
  $region20: #{xz_discriminator_forward.7} parent=0 // pred_region
    _
  $region21: #{xz_discriminator_forward.7} parent=0 // pred_fallthru
    _

// kernel: xz_discriminator_forward.8
$region0: #{xz_discriminator_forward.8}
  #allocation0 [shape = 'u32[]', space=smem, size = 0x4, offset = 0x4, fixed_abs, tag = 'smem constant byte address 0x4 - core index']
  #allocation1 [shape = 'u32[144,128]{1,0:T(1,128)}', space=vmem, size = 0x12000, scoped, tag = 'internal scratch']
  %s0 = inlined_call_operand.vmem [shape: bf16[2,2048], index: 0, kind: input, shape index: {}]
  %s1 = inlined_call_operand.vmem [shape: bf16[2048,256], index: 1, kind: input, shape index: {}]
  %s2 = inlined_call_operand.vmem [shape: f32[1,256], index: 2, kind: input, shape index: {}]
  %s3 = inlined_call_operand.vmem [shape: bf16[2,256], index: 3, kind: output, shape index: {}]
  %s4 = sld [smem:[#allocation0]]
  $region22: #{xz_discriminator_forward.8} parent=0
    _
  %s6 = ssub.s32 1, %s4
  %s7 = scalar_select 0, %s6, %s4
  // Predicated region
  $region2: #{xz_discriminator_forward.8} parent=0 // pred_check
    _
  $region3: #{xz_discriminator_forward.8} parent=0 // pred_check_branch
    %9 = sbr.rel (0) target = $region5
  $region4: #{xz_discriminator_forward.8} parent=0 // pred_region
    _
  $region5: #{xz_discriminator_forward.8} parent=0 // pred_fallthru
    _
  // Predicated region
  $region6: #{xz_discriminator_forward.8} parent=0 // pred_check
    _
  $region7: #{xz_discriminator_forward.8} parent=0 // pred_check_branch
    %11 = sbr.rel (0) target = $region9
  $region8: #{xz_discriminator_forward.8} parent=0 // pred_region
    _
  $region9: #{xz_discriminator_forward.8} parent=0 // pred_fallthru
    _
  // Predicated region
  $region10: #{xz_discriminator_forward.8} parent=0 // pred_check
    _
  $region11: #{xz_discriminator_forward.8} parent=0 // pred_check_branch
    %13 = sbr.rel (0) target = $region13
  $region12: #{xz_discriminator_forward.8} parent=0 // pred_region
    _
  $region13: #{xz_discriminator_forward.8} parent=0 // pred_fallthru
    _
  %v14 = vld [vmem:[%s0] sm:$0xff]
  %v15 = vld [vmem:[%s0 + $0x8] sm:$0xff]
  %v16 = vld [vmem:[%s1] sm:$0xff]
  %v17 = vld [vmem:[%s1 + $0x8] sm:$0xff]
  %v18 = vld [vmem:[%s1 + $0x10] sm:$0xff]
  %v19 = vld [vmem:[%s1 + $0x18] sm:$0xff]
  %v20 = vld [vmem:[%s1 + $0x20] sm:$0xff]
  %v21 = vld [vmem:[%s1 + $0x28] sm:$0xff]
  %v22 = vld [vmem:[%s1 + $0x30] sm:$0xff]
  %v23 = vld [vmem:[%s1 + $0x38] sm:$0xff]
  %v24 = vld [vmem:[%s1 + $0x40] sm:$0xff]
  %v25 = vld [vmem:[%s1 + $0x48] sm:$0xff]
  %v26 = vld [vmem:[%s1 + $0x50] sm:$0xff]
  %v27 = vld [vmem:[%s1 + $0x58] sm:$0xff]
  %v28 = vld [vmem:[%s1 + $0x60] sm:$0xff]
  %v29 = vld [vmem:[%s1 + $0x68] sm:$0xff]
  %v30 = vld [vmem:[%s1 + $0x70] sm:$0xff]
  %v31 = vld [vmem:[%s1 + $0x78] sm:$0xff]
  %v32 = vld [vmem:[%s1 + $0x80] sm:$0xff]
  %v33 = vld [vmem:[%s1 + $0x88] sm:$0xff]
  %v34 = vld [vmem:[%s1 + $0x90] sm:$0xff]
  %v35 = vld [vmem:[%s1 + $0x98] sm:$0xff]
  %v36 = vld [vmem:[%s1 + $0xa0] sm:$0xff]
  %v37 = vld [vmem:[%s1 + $0xa8] sm:$0xff]
  %v38 = vld [vmem:[%s1 + $0xb0] sm:$0xff]
  %v39 = vld [vmem:[%s1 + $0xb8] sm:$0xff]
  %v40 = vld [vmem:[%s1 + $0xc0] sm:$0xff]
  %v41 = vld [vmem:[%s1 + $0xc8] sm:$0xff]
  %v42 = vld [vmem:[%s1 + $0xd0] sm:$0xff]
  %v43 = vld [vmem:[%s1 + $0xd8] sm:$0xff]
  %v44 = vld [vmem:[%s1 + $0xe0] sm:$0xff]
  %v45 = vld [vmem:[%s1 + $0xe8] sm:$0xff]
  %v46 = vld [vmem:[%s1 + $0xf0] sm:$0xff]
  %v47 = vld [vmem:[%s1 + $0xf8] sm:$0xff]
  %v48 = vld [vmem:[%s1 + $0x100] sm:$0xff]
  %v49 = vld [vmem:[%s1 + $0x108] sm:$0xff]
  %v50 = vld [vmem:[%s1 + $0x110] sm:$0xff]
  %v51 = vld [vmem:[%s1 + $0x118] sm:$0xff]
  %v52 = vld [vmem:[%s1 + $0x120] sm:$0xff]
  %v53 = vld [vmem:[%s1 + $0x128] sm:$0xff]
  %v54 = vld [vmem:[%s1 + $0x130] sm:$0xff]
  %v55 = vld [vmem:[%s1 + $0x138] sm:$0xff]
  %v56 = vld [vmem:[%s1 + $0x140] sm:$0xff]
  %v57 = vld [vmem:[%s1 + $0x148] sm:$0xff]
  %v58 = vld [vmem:[%s1 + $0x150] sm:$0xff]
  %v59 = vld [vmem:[%s1 + $0x158] sm:$0xff]
  %v60 = vld [vmem:[%s1 + $0x160] sm:$0xff]
  %v61 = vld [vmem:[%s1 + $0x168] sm:$0xff]
  %v62 = vld [vmem:[%s1 + $0x170] sm:$0xff]
  %v63 = vld [vmem:[%s1 + $0x178] sm:$0xff]
  %v64 = vld [vmem:[%s1 + $0x180] sm:$0xff]
  %v65 = vld [vmem:[%s1 + $0x188] sm:$0xff]
  %v66 = vld [vmem:[%s1 + $0x190] sm:$0xff]
  %v67 = vld [vmem:[%s1 + $0x198] sm:$0xff]
  %v68 = vld [vmem:[%s1 + $0x1a0] sm:$0xff]
  %v69 = vld [vmem:[%s1 + $0x1a8] sm:$0xff]
  %v70 = vld [vmem:[%s1 + $0x1b0] sm:$0xff]
  %v71 = vld [vmem:[%s1 + $0x1b8] sm:$0xff]
  %v72 = vld [vmem:[%s1 + $0x1c0] sm:$0xff]
  %v73 = vld [vmem:[%s1 + $0x1c8] sm:$0xff]
  %v74 = vld [vmem:[%s1 + $0x1d0] sm:$0xff]
  %v75 = vld [vmem:[%s1 + $0x1d8] sm:$0xff]
  %v76 = vld [vmem:[%s1 + $0x1e0] sm:$0xff]
  %v77 = vld [vmem:[%s1 + $0x1e8] sm:$0xff]
  %v78 = vld [vmem:[%s1 + $0x1f0] sm:$0xff]
  %v79 = vld [vmem:[%s1 + $0x1f8] sm:$0xff]
  %v80 = vld [vmem:[%s1 + $0x200] sm:$0xff]
  %v81 = vld [vmem:[%s1 + $0x208] sm:$0xff]
  %v82 = vld [vmem:[%s1 + $0x210] sm:$0xff]
  %v83 = vld [vmem:[%s1 + $0x218] sm:$0xff]
  %v84 = vld [vmem:[%s1 + $0x220] sm:$0xff]
  %v85 = vld [vmem:[%s1 + $0x228] sm:$0xff]
  %v86 = vld [vmem:[%s1 + $0x230] sm:$0xff]
  %v87 = vld [vmem:[%s1 + $0x238] sm:$0xff]
  %v88 = vld [vmem:[%s1 + $0x240] sm:$0xff]
  %v89 = vld [vmem:[%s1 + $0x248] sm:$0xff]
  %v90 = vld [vmem:[%s1 + $0x250] sm:$0xff]
  %v91 = vld [vmem:[%s1 + $0x258] sm:$0xff]
  %v92 = vld [vmem:[%s1 + $0x260] sm:$0xff]
  %v93 = vld [vmem:[%s1 + $0x268] sm:$0xff]
  %v94 = vld [vmem:[%s1 + $0x270] sm:$0xff]
  %v95 = vld [vmem:[%s1 + $0x278] sm:$0xff]
  %v96 = vld [vmem:[%s1 + $0x280] sm:$0xff]
  %v97 = vld [vmem:[%s1 + $0x288] sm:$0xff]
  %v98 = vld [vmem:[%s1 + $0x290] sm:$0xff]
  %v99 = vld [vmem:[%s1 + $0x298] sm:$0xff]
  %v100 = vld [vmem:[%s1 + $0x2a0] sm:$0xff]
  %v101 = vld [vmem:[%s1 + $0x2a8] sm:$0xff]
  %v102 = vld [vmem:[%s1 + $0x2b0] sm:$0xff]
  %v103 = vld [vmem:[%s1 + $0x2b8] sm:$0xff]
  %v104 = vld [vmem:[%s1 + $0x2c0] sm:$0xff]
  %v105 = vld [vmem:[%s1 + $0x2c8] sm:$0xff]
  %v106 = vld [vmem:[%s1 + $0x2d0] sm:$0xff]
  %v107 = vld [vmem:[%s1 + $0x2d8] sm:$0xff]
  %v108 = vld [vmem:[%s1 + $0x2e0] sm:$0xff]
  %v109 = vld [vmem:[%s1 + $0x2e8] sm:$0xff]
  %v110 = vld [vmem:[%s1 + $0x2f0] sm:$0xff]
  %v111 = vld [vmem:[%s1 + $0x2f8] sm:$0xff]
  %v112 = vld [vmem:[%s1 + $0x300] sm:$0xff]
  %v113 = vld [vmem:[%s1 + $0x308] sm:$0xff]
  %v114 = vld [vmem:[%s1 + $0x310] sm:$0xff]
  %v115 = vld [vmem:[%s1 + $0x318] sm:$0xff]
  %v116 = vld [vmem:[%s1 + $0x320] sm:$0xff]
  %v117 = vld [vmem:[%s1 + $0x328] sm:$0xff]
  %v118 = vld [vmem:[%s1 + $0x330] sm:$0xff]
  %v119 = vld [vmem:[%s1 + $0x338] sm:$0xff]
  %v120 = vld [vmem:[%s1 + $0x340] sm:$0xff]
  %v121 = vld [vmem:[%s1 + $0x348] sm:$0xff]
  %v122 = vld [vmem:[%s1 + $0x350] sm:$0xff]
  %v123 = vld [vmem:[%s1 + $0x358] sm:$0xff]
  %v124 = vld [vmem:[%s1 + $0x360] sm:$0xff]
  %v125 = vld [vmem:[%s1 + $0x368] sm:$0xff]
  %v126 = vld [vmem:[%s1 + $0x370] sm:$0xff]
  %v127 = vld [vmem:[%s1 + $0x378] sm:$0xff]
  %v128 = vld [vmem:[%s1 + $0x380] sm:$0xff]
  %v129 = vld [vmem:[%s1 + $0x388] sm:$0xff]
  %v130 = vld [vmem:[%s1 + $0x390] sm:$0xff]
  %v131 = vld [vmem:[%s1 + $0x398] sm:$0xff]
  %v132 = vld [vmem:[%s1 + $0x3a0] sm:$0xff]
  %v133 = vld [vmem:[%s1 + $0x3a8] sm:$0xff]
  %v134 = vld [vmem:[%s1 + $0x3b0] sm:$0xff]
  %v135 = vld [vmem:[%s1 + $0x3b8] sm:$0xff]
  %v136 = vld [vmem:[%s1 + $0x3c0] sm:$0xff]
  %v137 = vld [vmem:[%s1 + $0x3c8] sm:$0xff]
  %v138 = vld [vmem:[%s1 + $0x3d0] sm:$0xff]
  %v139 = vld [vmem:[%s1 + $0x3d8] sm:$0xff]
  %v140 = vld [vmem:[%s1 + $0x3e0] sm:$0xff]
  %v141 = vld [vmem:[%s1 + $0x3e8] sm:$0xff]
  %v142 = vld [vmem:[%s1 + $0x3f0] sm:$0xff]
  %v143 = vld [vmem:[%s1 + $0x3f8] sm:$0xff]
  %v144 = vld [vmem:[%s1 + $0x400] sm:$0xff]
  %v145 = vld [vmem:[%s1 + $0x408] sm:$0xff]
  %v146 = vld [vmem:[%s1 + $0x410] sm:$0xff]
  %v147 = vld [vmem:[%s1 + $0x418] sm:$0xff]
  %v148 = vld [vmem:[%s1 + $0x420] sm:$0xff]
  %v149 = vld [vmem:[%s1 + $0x428] sm:$0xff]
  %v150 = vld [vmem:[%s1 + $0x430] sm:$0xff]
  %v151 = vld [vmem:[%s1 + $0x438] sm:$0xff]
  %v152 = vld [vmem:[%s1 + $0x440] sm:$0xff]
  %v153 = vld [vmem:[%s1 + $0x448] sm:$0xff]
  %v154 = vld [vmem:[%s1 + $0x450] sm:$0xff]
  %v155 = vld [vmem:[%s1 + $0x458] sm:$0xff]
  %v156 = vld [vmem:[%s1 + $0x460] sm:$0xff]
  %v157 = vld [vmem:[%s1 + $0x468] sm:$0xff]
  %v158 = vld [vmem:[%s1 + $0x470] sm:$0xff]
  %v159 = vld [vmem:[%s1 + $0x478] sm:$0xff]
  %v160 = vld [vmem:[%s1 + $0x480] sm:$0xff]
  %v161 = vld [vmem:[%s1 + $0x488] sm:$0xff]
  %v162 = vld [vmem:[%s1 + $0x490] sm:$0xff]
  %v163 = vld [vmem:[%s1 + $0x498] sm:$0xff]
  %v164 = vld [vmem:[%s1 + $0x4a0] sm:$0xff]
  %v165 = vld [vmem:[%s1 + $0x4a8] sm:$0xff]
  %v166 = vld [vmem:[%s1 + $0x4b0] sm:$0xff]
  %v167 = vld [vmem:[%s1 + $0x4b8] sm:$0xff]
  %v168 = vld [vmem:[%s1 + $0x4c0] sm:$0xff]
  %v169 = vld [vmem:[%s1 + $0x4c8] sm:$0xff]
  %v170 = vld [vmem:[%s1 + $0x4d0] sm:$0xff]
  %v171 = vld [vmem:[%s1 + $0x4d8] sm:$0xff]
  %v172 = vld [vmem:[%s1 + $0x4e0] sm:$0xff]
  %v173 = vld [vmem:[%s1 + $0x4e8] sm:$0xff]
  %v174 = vld [vmem:[%s1 + $0x4f0] sm:$0xff]
  %v175 = vld [vmem:[%s1 + $0x4f8] sm:$0xff]
  %v176 = vld [vmem:[%s1 + $0x500] sm:$0xff]
  %v177 = vld [vmem:[%s1 + $0x508] sm:$0xff]
  %v178 = vld [vmem:[%s1 + $0x510] sm:$0xff]
  %v179 = vld [vmem:[%s1 + $0x518] sm:$0xff]
  %v180 = vld [vmem:[%s1 + $0x520] sm:$0xff]
  %v181 = vld [vmem:[%s1 + $0x528] sm:$0xff]
  %v182 = vld [vmem:[%s1 + $0x530] sm:$0xff]
  %v183 = vld [vmem:[%s1 + $0x538] sm:$0xff]
  %v184 = vld [vmem:[%s1 + $0x540] sm:$0xff]
  %v185 = vld [vmem:[%s1 + $0x548] sm:$0xff]
  %v186 = vld [vmem:[%s1 + $0x550] sm:$0xff]
  %v187 = vld [vmem:[%s1 + $0x558] sm:$0xff]
  %v188 = vld [vmem:[%s1 + $0x560] sm:$0xff]
  %v189 = vld [vmem:[%s1 + $0x568] sm:$0xff]
  %v190 = vld [vmem:[%s1 + $0x570] sm:$0xff]
  %v191 = vld [vmem:[%s1 + $0x578] sm:$0xff]
  %v192 = vld [vmem:[%s1 + $0x580] sm:$0xff]
  %v193 = vld [vmem:[%s1 + $0x588] sm:$0xff]
  %v194 = vld [vmem:[%s1 + $0x590] sm:$0xff]
  %v195 = vld [vmem:[%s1 + $0x598] sm:$0xff]
  %v196 = vld [vmem:[%s1 + $0x5a0] sm:$0xff]
  %v197 = vld [vmem:[%s1 + $0x5a8] sm:$0xff]
  %v198 = vld [vmem:[%s1 + $0x5b0] sm:$0xff]
  %v199 = vld [vmem:[%s1 + $0x5b8] sm:$0xff]
  %v200 = vld [vmem:[%s1 + $0x5c0] sm:$0xff]
  %v201 = vld [vmem:[%s1 + $0x5c8] sm:$0xff]
  %v202 = vld [vmem:[%s1 + $0x5d0] sm:$0xff]
  %v203 = vld [vmem:[%s1 + $0x5d8] sm:$0xff]
  %v204 = vld [vmem:[%s1 + $0x5e0] sm:$0xff]
  %v205 = vld [vmem:[%s1 + $0x5e8] sm:$0xff]
  %v206 = vld [vmem:[%s1 + $0x5f0] sm:$0xff]
  %v207 = vld [vmem:[%s1 + $0x5f8] sm:$0xff]
  %v208 = vld [vmem:[%s1 + $0x600] sm:$0xff]
  %v209 = vld [vmem:[%s1 + $0x608] sm:$0xff]
  %v210 = vld [vmem:[%s1 + $0x610] sm:$0xff]
  %v211 = vld [vmem:[%s1 + $0x618] sm:$0xff]
  %v212 = vld [vmem:[%s1 + $0x620] sm:$0xff]
  %v213 = vld [vmem:[%s1 + $0x628] sm:$0xff]
  %v214 = vld [vmem:[%s1 + $0x630] sm:$0xff]
  %v215 = vld [vmem:[%s1 + $0x638] sm:$0xff]
  %v216 = vld [vmem:[%s1 + $0x640] sm:$0xff]
  %v217 = vld [vmem:[%s1 + $0x648] sm:$0xff]
  %v218 = vld [vmem:[%s1 + $0x650] sm:$0xff]
  %v219 = vld [vmem:[%s1 + $0x658] sm:$0xff]
  %v220 = vld [vmem:[%s1 + $0x660] sm:$0xff]
  %v221 = vld [vmem:[%s1 + $0x668] sm:$0xff]
  %v222 = vld [vmem:[%s1 + $0x670] sm:$0xff]
  %v223 = vld [vmem:[%s1 + $0x678] sm:$0xff]
  %v224 = vld [vmem:[%s1 + $0x680] sm:$0xff]
  %v225 = vld [vmem:[%s1 + $0x688] sm:$0xff]
  %v226 = vld [vmem:[%s1 + $0x690] sm:$0xff]
  %v227 = vld [vmem:[%s1 + $0x698] sm:$0xff]
  %v228 = vld [vmem:[%s1 + $0x6a0] sm:$0xff]
  %v229 = vld [vmem:[%s1 + $0x6a8] sm:$0xff]
  %v230 = vld [vmem:[%s1 + $0x6b0] sm:$0xff]
  %v231 = vld [vmem:[%s1 + $0x6b8] sm:$0xff]
  %v232 = vld [vmem:[%s1 + $0x6c0] sm:$0xff]
  %v233 = vld [vmem:[%s1 + $0x6c8] sm:$0xff]
  %v234 = vld [vmem:[%s1 + $0x6d0] sm:$0xff]
  %v235 = vld [vmem:[%s1 + $0x6d8] sm:$0xff]
  %v236 = vld [vmem:[%s1 + $0x6e0] sm:$0xff]
  %v237 = vld [vmem:[%s1 + $0x6e8] sm:$0xff]
  %v238 = vld [vmem:[%s1 + $0x6f0] sm:$0xff]
  %v239 = vld [vmem:[%s1 + $0x6f8] sm:$0xff]
  %v240 = vld [vmem:[%s1 + $0x700] sm:$0xff]
  %v241 = vld [vmem:[%s1 + $0x708] sm:$0xff]
  %v242 = vld [vmem:[%s1 + $0x710] sm:$0xff]
  %v243 = vld [vmem:[%s1 + $0x718] sm:$0xff]
  %v244 = vld [vmem:[%s1 + $0x720] sm:$0xff]
  %v245 = vld [vmem:[%s1 + $0x728] sm:$0xff]
  %v246 = vld [vmem:[%s1 + $0x730] sm:$0xff]
  %v247 = vld [vmem:[%s1 + $0x738] sm:$0xff]
  %v248 = vld [vmem:[%s1 + $0x740] sm:$0xff]
  %v249 = vld [vmem:[%s1 + $0x748] sm:$0xff]
  %v250 = vld [vmem:[%s1 + $0x750] sm:$0xff]
  %v251 = vld [vmem:[%s1 + $0x758] sm:$0xff]
  %v252 = vld [vmem:[%s1 + $0x760] sm:$0xff]
  %v253 = vld [vmem:[%s1 + $0x768] sm:$0xff]
  %v254 = vld [vmem:[%s1 + $0x770] sm:$0xff]
  %v255 = vld [vmem:[%s1 + $0x778] sm:$0xff]
  %v256 = vld [vmem:[%s1 + $0x780] sm:$0xff]
  %v257 = vld [vmem:[%s1 + $0x788] sm:$0xff]
  %v258 = vld [vmem:[%s1 + $0x790] sm:$0xff]
  %v259 = vld [vmem:[%s1 + $0x798] sm:$0xff]
  %v260 = vld [vmem:[%s1 + $0x7a0] sm:$0xff]
  %v261 = vld [vmem:[%s1 + $0x7a8] sm:$0xff]
  %v262 = vld [vmem:[%s1 + $0x7b0] sm:$0xff]
  %v263 = vld [vmem:[%s1 + $0x7b8] sm:$0xff]
  %v264 = vld [vmem:[%s1 + $0x7c0] sm:$0xff]
  %v265 = vld [vmem:[%s1 + $0x7c8] sm:$0xff]
  %v266 = vld [vmem:[%s1 + $0x7d0] sm:$0xff]
  %v267 = vld [vmem:[%s1 + $0x7d8] sm:$0xff]
  %v268 = vld [vmem:[%s1 + $0x7e0] sm:$0xff]
  %v269 = vld [vmem:[%s1 + $0x7e8] sm:$0xff]
  %v270 = vld [vmem:[%s1 + $0x7f0] sm:$0xff]
  %v271 = vld [vmem:[%s1 + $0x7f8] sm:$0xff]
  %v272 = vld [vmem:[%s2] sm:$0x3]
  %v274 = vlaneseq
  %v275 = vshrl.u32 %v274, 7
  %v276 = vsub.s32 0, %v275
  %v277 = vrot.slane %v272, %v276
  %v278 = vlaneseq
  %v279 = vshrl.u32 %v278, 7
  %v280 = vsub.s32 1, %v279
  %v281 = vrot.slane %v272, %v280
  %v286 = vcombine.high %v14, %v14
  %v288 = vunpack.c.l.s4 1966171168
  %v289 = vunpack.c.0.s8 %v288
  %v290 = vlaneseq
  %v291 = vshrl.u32 %v290, 7
  %v292 = vsub.s32 %v289, %v291
  %v293 = vrot.slane %v14, %v292
  %v295 = vunpack.c.l.s4 1966171168
  %v296 = vunpack.c.0.s8 %v295
  %v297 = vlaneseq
  %v298 = vshrl.u32 %v297, 7
  %v299 = vsub.s32 %v296, %v298
  %v300 = vrot.slane %v286, %v299
  %v301 = vcombine.high %v293, %v293
  %v302 = vcombine.high %v300, %v300
  %v304 = vunpack.c.l.s4 1966171168
  %v305 = vunpack.c.0.s8 %v304
  %v306 = vlaneseq
  %v307 = vshrl.u32 %v306, 7
  %v308 = vsub.s32 %v305, %v307
  %v309 = vrot.slane %v293, %v308
  %v311 = vunpack.c.l.s4 1966171168
  %v312 = vunpack.c.0.s8 %v311
  %v313 = vlaneseq
  %v314 = vshrl.u32 %v313, 7
  %v315 = vsub.s32 %v312, %v314
  %v316 = vrot.slane %v300, %v315
  %v318 = vunpack.c.l.s4 1966171168
  %v319 = vunpack.c.0.s8 %v318
  %v320 = vlaneseq
  %v321 = vshrl.u32 %v320, 7
  %v322 = vsub.s32 %v319, %v321
  %v323 = vrot.slane %v301, %v322
  %v325 = vunpack.c.l.s4 1966171168
  %v326 = vunpack.c.0.s8 %v325
  %v327 = vlaneseq
  %v328 = vshrl.u32 %v327, 7
  %v329 = vsub.s32 %v326, %v328
  %v330 = vrot.slane %v302, %v329
  %v331 = vcombine.high %v309, %v309
  %v332 = vcombine.high %v316, %v316
  %v333 = vcombine.high %v323, %v323
  %v334 = vcombine.high %v330, %v330
  %v335 = vcombine.high %v15, %v15
  %v337 = vunpack.c.l.s4 1966171168
  %v338 = vunpack.c.0.s8 %v337
  %v339 = vlaneseq
  %v340 = vshrl.u32 %v339, 7
  %v341 = vsub.s32 %v338, %v340
  %v342 = vrot.slane %v15, %v341
  %v344 = vunpack.c.l.s4 1966171168
  %v345 = vunpack.c.0.s8 %v344
  %v346 = vlaneseq
  %v347 = vshrl.u32 %v346, 7
  %v348 = vsub.s32 %v345, %v347
  %v349 = vrot.slane %v335, %v348
  %v350 = vcombine.high %v342, %v342
  %v351 = vcombine.high %v349, %v349
  %v353 = vunpack.c.l.s4 1966171168
  %v354 = vunpack.c.0.s8 %v353
  %v355 = vlaneseq
  %v356 = vshrl.u32 %v355, 7
  %v357 = vsub.s32 %v354, %v356
  %v358 = vrot.slane %v342, %v357
  %v360 = vunpack.c.l.s4 1966171168
  %v361 = vunpack.c.0.s8 %v360
  %v362 = vlaneseq
  %v363 = vshrl.u32 %v362, 7
  %v364 = vsub.s32 %v361, %v363
  %v365 = vrot.slane %v349, %v364
  %v367 = vunpack.c.l.s4 1966171168
  %v368 = vunpack.c.0.s8 %v367
  %v369 = vlaneseq
  %v370 = vshrl.u32 %v369, 7
  %v371 = vsub.s32 %v368, %v370
  %v372 = vrot.slane %v350, %v371
  %v374 = vunpack.c.l.s4 1966171168
  %v375 = vunpack.c.0.s8 %v374
  %v376 = vlaneseq
  %v377 = vshrl.u32 %v376, 7
  %v378 = vsub.s32 %v375, %v377
  %v379 = vrot.slane %v351, %v378
  %v380 = vcombine.high %v358, %v358
  %v381 = vcombine.high %v365, %v365
  %v382 = vcombine.high %v372, %v372
  %v383 = vcombine.high %v379, %v379
  %v656 = vunpack.c.l.b16 %v16
  %v657 = vunpack.c.h.b16 %v16
  %v658 = vunpack.c.l.b16 %v17
  %v659 = vunpack.c.h.b16 %v17
  %v660 = vunpack.c.l.b16 %v18
  %v661 = vunpack.c.h.b16 %v18
  %v662 = vunpack.c.l.b16 %v19
  %v663 = vunpack.c.h.b16 %v19
  %v664 = vunpack.c.l.b16 %v20
  %v665 = vunpack.c.h.b16 %v20
  %v666 = vunpack.c.l.b16 %v21
  %v667 = vunpack.c.h.b16 %v21
  %v668 = vunpack.c.l.b16 %v22
  %v669 = vunpack.c.h.b16 %v22
  %v670 = vunpack.c.l.b16 %v23
  %v671 = vunpack.c.h.b16 %v23
  %v672 = vunpack.c.l.b16 %v24
  %v673 = vunpack.c.h.b16 %v24
  %v674 = vunpack.c.l.b16 %v25
  %v675 = vunpack.c.h.b16 %v25
  %v676 = vunpack.c.l.b16 %v26
  %v677 = vunpack.c.h.b16 %v26
  %v678 = vunpack.c.l.b16 %v27
  %v679 = vunpack.c.h.b16 %v27
  %v680 = vunpack.c.l.b16 %v28
  %v681 = vunpack.c.h.b16 %v28
  %v682 = vunpack.c.l.b16 %v29
  %v683 = vunpack.c.h.b16 %v29
  %v684 = vunpack.c.l.b16 %v30
  %v685 = vunpack.c.h.b16 %v30
  %v686 = vunpack.c.l.b16 %v31
  %v687 = vunpack.c.h.b16 %v31
  %v688 = vunpack.c.l.b16 %v32
  %v689 = vunpack.c.h.b16 %v32
  %v690 = vunpack.c.l.b16 %v33
  %v691 = vunpack.c.h.b16 %v33
  %v692 = vunpack.c.l.b16 %v34
  %v693 = vunpack.c.h.b16 %v34
  %v694 = vunpack.c.l.b16 %v35
  %v695 = vunpack.c.h.b16 %v35
  %v696 = vunpack.c.l.b16 %v36
  %v697 = vunpack.c.h.b16 %v36
  %v698 = vunpack.c.l.b16 %v37
  %v699 = vunpack.c.h.b16 %v37
  %v700 = vunpack.c.l.b16 %v38
  %v701 = vunpack.c.h.b16 %v38
  %v702 = vunpack.c.l.b16 %v39
  %v703 = vunpack.c.h.b16 %v39
  %v704 = vunpack.c.l.b16 %v40
  %v705 = vunpack.c.h.b16 %v40
  %v706 = vunpack.c.l.b16 %v41
  %v707 = vunpack.c.h.b16 %v41
  %v708 = vunpack.c.l.b16 %v42
  %v709 = vunpack.c.h.b16 %v42
  %v710 = vunpack.c.l.b16 %v43
  %v711 = vunpack.c.h.b16 %v43
  %v712 = vunpack.c.l.b16 %v44
  %v713 = vunpack.c.h.b16 %v44
  %v714 = vunpack.c.l.b16 %v45
  %v715 = vunpack.c.h.b16 %v45
  %v716 = vunpack.c.l.b16 %v46
  %v717 = vunpack.c.h.b16 %v46
  %v718 = vunpack.c.l.b16 %v47
  %v719 = vunpack.c.h.b16 %v47
  %v720 = vunpack.c.l.b16 %v48
  %v721 = vunpack.c.h.b16 %v48
  %v722 = vunpack.c.l.b16 %v49
  %v723 = vunpack.c.h.b16 %v49
  %v724 = vunpack.c.l.b16 %v50
  %v725 = vunpack.c.h.b16 %v50
  %v726 = vunpack.c.l.b16 %v51
  %v727 = vunpack.c.h.b16 %v51
  %v728 = vunpack.c.l.b16 %v52
  %v729 = vunpack.c.h.b16 %v52
  %v730 = vunpack.c.l.b16 %v53
  %v731 = vunpack.c.h.b16 %v53
  %v732 = vunpack.c.l.b16 %v54
  %v733 = vunpack.c.h.b16 %v54
  %v734 = vunpack.c.l.b16 %v55
  %v735 = vunpack.c.h.b16 %v55
  %v736 = vunpack.c.l.b16 %v56
  %v737 = vunpack.c.h.b16 %v56
  %v738 = vunpack.c.l.b16 %v57
  %v739 = vunpack.c.h.b16 %v57
  %v740 = vunpack.c.l.b16 %v58
  %v741 = vunpack.c.h.b16 %v58
  %v742 = vunpack.c.l.b16 %v59
  %v743 = vunpack.c.h.b16 %v59
  %v744 = vunpack.c.l.b16 %v60
  %v745 = vunpack.c.h.b16 %v60
  %v746 = vunpack.c.l.b16 %v61
  %v747 = vunpack.c.h.b16 %v61
  %v748 = vunpack.c.l.b16 %v62
  %v749 = vunpack.c.h.b16 %v62
  %v750 = vunpack.c.l.b16 %v63
  %v751 = vunpack.c.h.b16 %v63
  %v752 = vunpack.c.l.b16 %v64
  %v753 = vunpack.c.h.b16 %v64
  %v754 = vunpack.c.l.b16 %v65
  %v755 = vunpack.c.h.b16 %v65
  %v756 = vunpack.c.l.b16 %v66
  %v757 = vunpack.c.h.b16 %v66
  %v758 = vunpack.c.l.b16 %v67
  %v759 = vunpack.c.h.b16 %v67
  %v760 = vunpack.c.l.b16 %v68
  %v761 = vunpack.c.h.b16 %v68
  %v762 = vunpack.c.l.b16 %v69
  %v763 = vunpack.c.h.b16 %v69
  %v764 = vunpack.c.l.b16 %v70
  %v765 = vunpack.c.h.b16 %v70
  %v766 = vunpack.c.l.b16 %v71
  %v767 = vunpack.c.h.b16 %v71
  %v768 = vunpack.c.l.b16 %v72
  %v769 = vunpack.c.h.b16 %v72
  %v770 = vunpack.c.l.b16 %v73
  %v771 = vunpack.c.h.b16 %v73
  %v772 = vunpack.c.l.b16 %v74
  %v773 = vunpack.c.h.b16 %v74
  %v774 = vunpack.c.l.b16 %v75
  %v775 = vunpack.c.h.b16 %v75
  %v776 = vunpack.c.l.b16 %v76
  %v777 = vunpack.c.h.b16 %v76
  %v778 = vunpack.c.l.b16 %v77
  %v779 = vunpack.c.h.b16 %v77
  %v780 = vunpack.c.l.b16 %v78
  %v781 = vunpack.c.h.b16 %v78
  %v782 = vunpack.c.l.b16 %v79
  %v783 = vunpack.c.h.b16 %v79
  %v784 = vunpack.c.l.b16 %v80
  %v785 = vunpack.c.h.b16 %v80
  %v786 = vunpack.c.l.b16 %v81
  %v787 = vunpack.c.h.b16 %v81
  %v788 = vunpack.c.l.b16 %v82
  %v789 = vunpack.c.h.b16 %v82
  %v790 = vunpack.c.l.b16 %v83
  %v791 = vunpack.c.h.b16 %v83
  %v792 = vunpack.c.l.b16 %v84
  %v793 = vunpack.c.h.b16 %v84
  %v794 = vunpack.c.l.b16 %v85
  %v795 = vunpack.c.h.b16 %v85
  %v796 = vunpack.c.l.b16 %v86
  %v797 = vunpack.c.h.b16 %v86
  %v798 = vunpack.c.l.b16 %v87
  %v799 = vunpack.c.h.b16 %v87
  %v800 = vunpack.c.l.b16 %v88
  %v801 = vunpack.c.h.b16 %v88
  %v802 = vunpack.c.l.b16 %v89
  %v803 = vunpack.c.h.b16 %v89
  %v804 = vunpack.c.l.b16 %v90
  %v805 = vunpack.c.h.b16 %v90
  %v806 = vunpack.c.l.b16 %v91
  %v807 = vunpack.c.h.b16 %v91
  %v808 = vunpack.c.l.b16 %v92
  %v809 = vunpack.c.h.b16 %v92
  %v810 = vunpack.c.l.b16 %v93
  %v811 = vunpack.c.h.b16 %v93
  %v812 = vunpack.c.l.b16 %v94
  %v813 = vunpack.c.h.b16 %v94
  %v814 = vunpack.c.l.b16 %v95
  %v815 = vunpack.c.h.b16 %v95
  %v816 = vunpack.c.l.b16 %v96
  %v817 = vunpack.c.h.b16 %v96
  %v818 = vunpack.c.l.b16 %v97
  %v819 = vunpack.c.h.b16 %v97
  %v820 = vunpack.c.l.b16 %v98
  %v821 = vunpack.c.h.b16 %v98
  %v822 = vunpack.c.l.b16 %v99
  %v823 = vunpack.c.h.b16 %v99
  %v824 = vunpack.c.l.b16 %v100
  %v825 = vunpack.c.h.b16 %v100
  %v826 = vunpack.c.l.b16 %v101
  %v827 = vunpack.c.h.b16 %v101
  %v828 = vunpack.c.l.b16 %v102
  %v829 = vunpack.c.h.b16 %v102
  %v830 = vunpack.c.l.b16 %v103
  %v831 = vunpack.c.h.b16 %v103
  %v832 = vunpack.c.l.b16 %v104
  %v833 = vunpack.c.h.b16 %v104
  %v834 = vunpack.c.l.b16 %v105
  %v835 = vunpack.c.h.b16 %v105
  %v836 = vunpack.c.l.b16 %v106
  %v837 = vunpack.c.h.b16 %v106
  %v838 = vunpack.c.l.b16 %v107
  %v839 = vunpack.c.h.b16 %v107
  %v840 = vunpack.c.l.b16 %v108
  %v841 = vunpack.c.h.b16 %v108
  %v842 = vunpack.c.l.b16 %v109
  %v843 = vunpack.c.h.b16 %v109
  %v844 = vunpack.c.l.b16 %v110
  %v845 = vunpack.c.h.b16 %v110
  %v846 = vunpack.c.l.b16 %v111
  %v847 = vunpack.c.h.b16 %v111
  %v848 = vunpack.c.l.b16 %v112
  %v849 = vunpack.c.h.b16 %v112
  %v850 = vunpack.c.l.b16 %v113
  %v851 = vunpack.c.h.b16 %v113
  %v852 = vunpack.c.l.b16 %v114
  %v853 = vunpack.c.h.b16 %v114
  %v854 = vunpack.c.l.b16 %v115
  %v855 = vunpack.c.h.b16 %v115
  %v856 = vunpack.c.l.b16 %v116
  %v857 = vunpack.c.h.b16 %v116
  %v858 = vunpack.c.l.b16 %v117
  %v859 = vunpack.c.h.b16 %v117
  %v860 = vunpack.c.l.b16 %v118
  %v861 = vunpack.c.h.b16 %v118
  %v862 = vunpack.c.l.b16 %v119
  %v863 = vunpack.c.h.b16 %v119
  %v864 = vunpack.c.l.b16 %v120
  %v865 = vunpack.c.h.b16 %v120
  %v866 = vunpack.c.l.b16 %v121
  %v867 = vunpack.c.h.b16 %v121
  %v868 = vunpack.c.l.b16 %v122
  %v869 = vunpack.c.h.b16 %v122
  %v870 = vunpack.c.l.b16 %v123
  %v871 = vunpack.c.h.b16 %v123
  %v872 = vunpack.c.l.b16 %v124
  %v873 = vunpack.c.h.b16 %v124
  %v874 = vunpack.c.l.b16 %v125
  %v875 = vunpack.c.h.b16 %v125
  %v876 = vunpack.c.l.b16 %v126
  %v877 = vunpack.c.h.b16 %v126
  %v878 = vunpack.c.l.b16 %v127
  %v879 = vunpack.c.h.b16 %v127
  %v880 = vunpack.c.l.b16 %v128
  %v881 = vunpack.c.h.b16 %v128
  %v882 = vunpack.c.l.b16 %v129
  %v883 = vunpack.c.h.b16 %v129
  %v884 = vunpack.c.l.b16 %v130
  %v885 = vunpack.c.h.b16 %v130
  %v886 = vunpack.c.l.b16 %v131
  %v887 = vunpack.c.h.b16 %v131
  %v888 = vunpack.c.l.b16 %v132
  %v889 = vunpack.c.h.b16 %v132
  %v890 = vunpack.c.l.b16 %v133
  %v891 = vunpack.c.h.b16 %v133
  %v892 = vunpack.c.l.b16 %v134
  %v893 = vunpack.c.h.b16 %v134
  %v894 = vunpack.c.l.b16 %v135
  %v895 = vunpack.c.h.b16 %v135
  %v896 = vunpack.c.l.b16 %v136
  %v897 = vunpack.c.h.b16 %v136
  %v898 = vunpack.c.l.b16 %v137
  %v899 = vunpack.c.h.b16 %v137
  %v900 = vunpack.c.l.b16 %v138
  %v901 = vunpack.c.h.b16 %v138
  %v902 = vunpack.c.l.b16 %v139
  %v903 = vunpack.c.h.b16 %v139
  %v904 = vunpack.c.l.b16 %v140
  %v905 = vunpack.c.h.b16 %v140
  %v906 = vunpack.c.l.b16 %v141
  %v907 = vunpack.c.h.b16 %v141
  %v908 = vunpack.c.l.b16 %v142
  %v909 = vunpack.c.h.b16 %v142
  %v910 = vunpack.c.l.b16 %v143
  %v911 = vunpack.c.h.b16 %v143
  %v912 = vunpack.c.l.b16 %v144
  %v913 = vunpack.c.h.b16 %v144
  %v914 = vunpack.c.l.b16 %v145
  %v915 = vunpack.c.h.b16 %v145
  %v916 = vunpack.c.l.b16 %v146
  %v917 = vunpack.c.h.b16 %v146
  %v918 = vunpack.c.l.b16 %v147
  %v919 = vunpack.c.h.b16 %v147
  %v920 = vunpack.c.l.b16 %v148
  %v921 = vunpack.c.h.b16 %v148
  %v922 = vunpack.c.l.b16 %v149
  %v923 = vunpack.c.h.b16 %v149
  %v924 = vunpack.c.l.b16 %v150
  %v925 = vunpack.c.h.b16 %v150
  %v926 = vunpack.c.l.b16 %v151
  %v927 = vunpack.c.h.b16 %v151
  %v928 = vunpack.c.l.b16 %v152
  %v929 = vunpack.c.h.b16 %v152
  %v930 = vunpack.c.l.b16 %v153
  %v931 = vunpack.c.h.b16 %v153
  %v932 = vunpack.c.l.b16 %v154
  %v933 = vunpack.c.h.b16 %v154
  %v934 = vunpack.c.l.b16 %v155
  %v935 = vunpack.c.h.b16 %v155
  %v936 = vunpack.c.l.b16 %v156
  %v937 = vunpack.c.h.b16 %v156
  %v938 = vunpack.c.l.b16 %v157
  %v939 = vunpack.c.h.b16 %v157
  %v940 = vunpack.c.l.b16 %v158
  %v941 = vunpack.c.h.b16 %v158
  %v942 = vunpack.c.l.b16 %v159
  %v943 = vunpack.c.h.b16 %v159
  %v944 = vunpack.c.l.b16 %v160
  %v945 = vunpack.c.h.b16 %v160
  %v946 = vunpack.c.l.b16 %v161
  %v947 = vunpack.c.h.b16 %v161
  %v948 = vunpack.c.l.b16 %v162
  %v949 = vunpack.c.h.b16 %v162
  %v950 = vunpack.c.l.b16 %v163
  %v951 = vunpack.c.h.b16 %v163
  %v952 = vunpack.c.l.b16 %v164
  %v953 = vunpack.c.h.b16 %v164
  %v954 = vunpack.c.l.b16 %v165
  %v955 = vunpack.c.h.b16 %v165
  %v956 = vunpack.c.l.b16 %v166
  %v957 = vunpack.c.h.b16 %v166
  %v958 = vunpack.c.l.b16 %v167
  %v959 = vunpack.c.h.b16 %v167
  %v960 = vunpack.c.l.b16 %v168
  %v961 = vunpack.c.h.b16 %v168
  %v962 = vunpack.c.l.b16 %v169
  %v963 = vunpack.c.h.b16 %v169
  %v964 = vunpack.c.l.b16 %v170
  %v965 = vunpack.c.h.b16 %v170
  %v966 = vunpack.c.l.b16 %v171
  %v967 = vunpack.c.h.b16 %v171
  %v968 = vunpack.c.l.b16 %v172
  %v969 = vunpack.c.h.b16 %v172
  %v970 = vunpack.c.l.b16 %v173
  %v971 = vunpack.c.h.b16 %v173
  %v972 = vunpack.c.l.b16 %v174
  %v973 = vunpack.c.h.b16 %v174
  %v974 = vunpack.c.l.b16 %v175
  %v975 = vunpack.c.h.b16 %v175
  %v976 = vunpack.c.l.b16 %v176
  %v977 = vunpack.c.h.b16 %v176
  %v978 = vunpack.c.l.b16 %v177
  %v979 = vunpack.c.h.b16 %v177
  %v980 = vunpack.c.l.b16 %v178
  %v981 = vunpack.c.h.b16 %v178
  %v982 = vunpack.c.l.b16 %v179
  %v983 = vunpack.c.h.b16 %v179
  %v984 = vunpack.c.l.b16 %v180
  %v985 = vunpack.c.h.b16 %v180
  %v986 = vunpack.c.l.b16 %v181
  %v987 = vunpack.c.h.b16 %v181
  %v988 = vunpack.c.l.b16 %v182
  %v989 = vunpack.c.h.b16 %v182
  %v990 = vunpack.c.l.b16 %v183
  %v991 = vunpack.c.h.b16 %v183
  %v992 = vunpack.c.l.b16 %v184
  %v993 = vunpack.c.h.b16 %v184
  %v994 = vunpack.c.l.b16 %v185
  %v995 = vunpack.c.h.b16 %v185
  %v996 = vunpack.c.l.b16 %v186
  %v997 = vunpack.c.h.b16 %v186
  %v998 = vunpack.c.l.b16 %v187
  %v999 = vunpack.c.h.b16 %v187
  %v1000 = vunpack.c.l.b16 %v188
  %v1001 = vunpack.c.h.b16 %v188
  %v1002 = vunpack.c.l.b16 %v189
  %v1003 = vunpack.c.h.b16 %v189
  %v1004 = vunpack.c.l.b16 %v190
  %v1005 = vunpack.c.h.b16 %v190
  %v1006 = vunpack.c.l.b16 %v191
  %v1007 = vunpack.c.h.b16 %v191
  %v1008 = vunpack.c.l.b16 %v192
  %v1009 = vunpack.c.h.b16 %v192
  %v1010 = vunpack.c.l.b16 %v193
  %v1011 = vunpack.c.h.b16 %v193
  %v1012 = vunpack.c.l.b16 %v194
  %v1013 = vunpack.c.h.b16 %v194
  %v1014 = vunpack.c.l.b16 %v195
  %v1015 = vunpack.c.h.b16 %v195
  %v1016 = vunpack.c.l.b16 %v196
  %v1017 = vunpack.c.h.b16 %v196
  %v1018 = vunpack.c.l.b16 %v197
  %v1019 = vunpack.c.h.b16 %v197
  %v1020 = vunpack.c.l.b16 %v198
  %v1021 = vunpack.c.h.b16 %v198
  %v1022 = vunpack.c.l.b16 %v199
  %v1023 = vunpack.c.h.b16 %v199
  %v1024 = vunpack.c.l.b16 %v200
  %v1025 = vunpack.c.h.b16 %v200
  %v1026 = vunpack.c.l.b16 %v201
  %v1027 = vunpack.c.h.b16 %v201
  %v1028 = vunpack.c.l.b16 %v202
  %v1029 = vunpack.c.h.b16 %v202
  %v1030 = vunpack.c.l.b16 %v203
  %v1031 = vunpack.c.h.b16 %v203
  %v1032 = vunpack.c.l.b16 %v204
  %v1033 = vunpack.c.h.b16 %v204
  %v1034 = vunpack.c.l.b16 %v205
  %v1035 = vunpack.c.h.b16 %v205
  %v1036 = vunpack.c.l.b16 %v206
  %v1037 = vunpack.c.h.b16 %v206
  %v1038 = vunpack.c.l.b16 %v207
  %v1039 = vunpack.c.h.b16 %v207
  %v1040 = vunpack.c.l.b16 %v208
  %v1041 = vunpack.c.h.b16 %v208
  %v1042 = vunpack.c.l.b16 %v209
  %v1043 = vunpack.c.h.b16 %v209
  %v1044 = vunpack.c.l.b16 %v210
  %v1045 = vunpack.c.h.b16 %v210
  %v1046 = vunpack.c.l.b16 %v211
  %v1047 = vunpack.c.h.b16 %v211
  %v1048 = vunpack.c.l.b16 %v212
  %v1049 = vunpack.c.h.b16 %v212
  %v1050 = vunpack.c.l.b16 %v213
  %v1051 = vunpack.c.h.b16 %v213
  %v1052 = vunpack.c.l.b16 %v214
  %v1053 = vunpack.c.h.b16 %v214
  %v1054 = vunpack.c.l.b16 %v215
  %v1055 = vunpack.c.h.b16 %v215
  %v1056 = vunpack.c.l.b16 %v216
  %v1057 = vunpack.c.h.b16 %v216
  %v1058 = vunpack.c.l.b16 %v217
  %v1059 = vunpack.c.h.b16 %v217
  %v1060 = vunpack.c.l.b16 %v218
  %v1061 = vunpack.c.h.b16 %v218
  %v1062 = vunpack.c.l.b16 %v219
  %v1063 = vunpack.c.h.b16 %v219
  %v1064 = vunpack.c.l.b16 %v220
  %v1065 = vunpack.c.h.b16 %v220
  %v1066 = vunpack.c.l.b16 %v221
  %v1067 = vunpack.c.h.b16 %v221
  %v1068 = vunpack.c.l.b16 %v222
  %v1069 = vunpack.c.h.b16 %v222
  %v1070 = vunpack.c.l.b16 %v223
  %v1071 = vunpack.c.h.b16 %v223
  %v1072 = vunpack.c.l.b16 %v224
  %v1073 = vunpack.c.h.b16 %v224
  %v1074 = vunpack.c.l.b16 %v225
  %v1075 = vunpack.c.h.b16 %v225
  %v1076 = vunpack.c.l.b16 %v226
  %v1077 = vunpack.c.h.b16 %v226
  %v1078 = vunpack.c.l.b16 %v227
  %v1079 = vunpack.c.h.b16 %v227
  %v1080 = vunpack.c.l.b16 %v228
  %v1081 = vunpack.c.h.b16 %v228
  %v1082 = vunpack.c.l.b16 %v229
  %v1083 = vunpack.c.h.b16 %v229
  %v1084 = vunpack.c.l.b16 %v230
  %v1085 = vunpack.c.h.b16 %v230
  %v1086 = vunpack.c.l.b16 %v231
  %v1087 = vunpack.c.h.b16 %v231
  %v1088 = vunpack.c.l.b16 %v232
  %v1089 = vunpack.c.h.b16 %v232
  %v1090 = vunpack.c.l.b16 %v233
  %v1091 = vunpack.c.h.b16 %v233
  %v1092 = vunpack.c.l.b16 %v234
  %v1093 = vunpack.c.h.b16 %v234
  %v1094 = vunpack.c.l.b16 %v235
  %v1095 = vunpack.c.h.b16 %v235
  %v1096 = vunpack.c.l.b16 %v236
  %v1097 = vunpack.c.h.b16 %v236
  %v1098 = vunpack.c.l.b16 %v237
  %v1099 = vunpack.c.h.b16 %v237
  %v1100 = vunpack.c.l.b16 %v238
  %v1101 = vunpack.c.h.b16 %v238
  %v1102 = vunpack.c.l.b16 %v239
  %v1103 = vunpack.c.h.b16 %v239
  %v1104 = vunpack.c.l.b16 %v240
  %v1105 = vunpack.c.h.b16 %v240
  %v1106 = vunpack.c.l.b16 %v241
  %v1107 = vunpack.c.h.b16 %v241
  %v1108 = vunpack.c.l.b16 %v242
  %v1109 = vunpack.c.h.b16 %v242
  %v1110 = vunpack.c.l.b16 %v243
  %v1111 = vunpack.c.h.b16 %v243
  %v1112 = vunpack.c.l.b16 %v244
  %v1113 = vunpack.c.h.b16 %v244
  %v1114 = vunpack.c.l.b16 %v245
  %v1115 = vunpack.c.h.b16 %v245
  %v1116 = vunpack.c.l.b16 %v246
  %v1117 = vunpack.c.h.b16 %v246
  %v1118 = vunpack.c.l.b16 %v247
  %v1119 = vunpack.c.h.b16 %v247
  %v1120 = vunpack.c.l.b16 %v248
  %v1121 = vunpack.c.h.b16 %v248
  %v1122 = vunpack.c.l.b16 %v249
  %v1123 = vunpack.c.h.b16 %v249
  %v1124 = vunpack.c.l.b16 %v250
  %v1125 = vunpack.c.h.b16 %v250
  %v1126 = vunpack.c.l.b16 %v251
  %v1127 = vunpack.c.h.b16 %v251
  %v1128 = vunpack.c.l.b16 %v252
  %v1129 = vunpack.c.h.b16 %v252
  %v1130 = vunpack.c.l.b16 %v253
  %v1131 = vunpack.c.h.b16 %v253
  %v1132 = vunpack.c.l.b16 %v254
  %v1133 = vunpack.c.h.b16 %v254
  %v1134 = vunpack.c.l.b16 %v255
  %v1135 = vunpack.c.h.b16 %v255
  %v1136 = vunpack.c.l.b16 %v256
  %v1137 = vunpack.c.h.b16 %v256
  %v1138 = vunpack.c.l.b16 %v257
  %v1139 = vunpack.c.h.b16 %v257
  %v1140 = vunpack.c.l.b16 %v258
  %v1141 = vunpack.c.h.b16 %v258
  %v1142 = vunpack.c.l.b16 %v259
  %v1143 = vunpack.c.h.b16 %v259
  %v1144 = vunpack.c.l.b16 %v260
  %v1145 = vunpack.c.h.b16 %v260
  %v1146 = vunpack.c.l.b16 %v261
  %v1147 = vunpack.c.h.b16 %v261
  %v1148 = vunpack.c.l.b16 %v262
  %v1149 = vunpack.c.h.b16 %v262
  %v1150 = vunpack.c.l.b16 %v263
  %v1151 = vunpack.c.h.b16 %v263
  %v1152 = vunpack.c.l.b16 %v264
  %v1153 = vunpack.c.h.b16 %v264
  %v1154 = vunpack.c.l.b16 %v265
  %v1155 = vunpack.c.h.b16 %v265
  %v1156 = vunpack.c.l.b16 %v266
  %v1157 = vunpack.c.h.b16 %v266
  %v1158 = vunpack.c.l.b16 %v267
  %v1159 = vunpack.c.h.b16 %v267
  %v1160 = vunpack.c.l.b16 %v268
  %v1161 = vunpack.c.h.b16 %v268
  %v1162 = vunpack.c.l.b16 %v269
  %v1163 = vunpack.c.h.b16 %v269
  %v1164 = vunpack.c.l.b16 %v270
  %v1165 = vunpack.c.h.b16 %v270
  %v1166 = vunpack.c.l.b16 %v271
  %v1167 = vunpack.c.h.b16 %v271
  %v1168 = vpack.c.b16 %v658, %v656
  %v1169 = vpack.c.b16 %v659, %v657
  %v1170 = vpack.c.b16 %v662, %v660
  %v1171 = vpack.c.b16 %v663, %v661
  %v1172 = vpack.c.b16 %v666, %v664
  %v1173 = vpack.c.b16 %v667, %v665
  %v1174 = vpack.c.b16 %v670, %v668
  %v1175 = vpack.c.b16 %v671, %v669
  %v1176 = vpack.c.b16 %v674, %v672
  %v1177 = vpack.c.b16 %v675, %v673
  %v1178 = vpack.c.b16 %v678, %v676
  %v1179 = vpack.c.b16 %v679, %v677
  %v1180 = vpack.c.b16 %v682, %v680
  %v1181 = vpack.c.b16 %v683, %v681
  %v1182 = vpack.c.b16 %v686, %v684
  %v1183 = vpack.c.b16 %v687, %v685
  %v1184 = vpack.c.b16 %v690, %v688
  %v1185 = vpack.c.b16 %v691, %v689
  %v1186 = vpack.c.b16 %v694, %v692
  %v1187 = vpack.c.b16 %v695, %v693
  %v1188 = vpack.c.b16 %v698, %v696
  %v1189 = vpack.c.b16 %v699, %v697
  %v1190 = vpack.c.b16 %v702, %v700
  %v1191 = vpack.c.b16 %v703, %v701
  %v1192 = vpack.c.b16 %v706, %v704
  %v1193 = vpack.c.b16 %v707, %v705
  %v1194 = vpack.c.b16 %v710, %v708
  %v1195 = vpack.c.b16 %v711, %v709
  %v1196 = vpack.c.b16 %v714, %v712
  %v1197 = vpack.c.b16 %v715, %v713
  %v1198 = vpack.c.b16 %v718, %v716
  %v1199 = vpack.c.b16 %v719, %v717
  %v1200 = vpack.c.b16 %v722, %v720
  %v1201 = vpack.c.b16 %v723, %v721
  %v1202 = vpack.c.b16 %v726, %v724
  %v1203 = vpack.c.b16 %v727, %v725
  %v1204 = vpack.c.b16 %v730, %v728
  %v1205 = vpack.c.b16 %v731, %v729
  %v1206 = vpack.c.b16 %v734, %v732
  %v1207 = vpack.c.b16 %v735, %v733
  %v1208 = vpack.c.b16 %v738, %v736
  %v1209 = vpack.c.b16 %v739, %v737
  %v1210 = vpack.c.b16 %v742, %v740
  %v1211 = vpack.c.b16 %v743, %v741
  %v1212 = vpack.c.b16 %v746, %v744
  %v1213 = vpack.c.b16 %v747, %v745
  %v1214 = vpack.c.b16 %v750, %v748
  %v1215 = vpack.c.b16 %v751, %v749
  %v1216 = vpack.c.b16 %v754, %v752
  %v1217 = vpack.c.b16 %v755, %v753
  %v1218 = vpack.c.b16 %v758, %v756
  %v1219 = vpack.c.b16 %v759, %v757
  %v1220 = vpack.c.b16 %v762, %v760
  %v1221 = vpack.c.b16 %v763, %v761
  %v1222 = vpack.c.b16 %v766, %v764
  %v1223 = vpack.c.b16 %v767, %v765
  %v1224 = vpack.c.b16 %v770, %v768
  %v1225 = vpack.c.b16 %v771, %v769
  %v1226 = vpack.c.b16 %v774, %v772
  %v1227 = vpack.c.b16 %v775, %v773
  %v1228 = vpack.c.b16 %v778, %v776
  %v1229 = vpack.c.b16 %v779, %v777
  %v1230 = vpack.c.b16 %v782, %v780
  %v1231 = vpack.c.b16 %v783, %v781
  %v1232 = vpack.c.b16 %v786, %v784
  %v1233 = vpack.c.b16 %v787, %v785
  %v1234 = vpack.c.b16 %v790, %v788
  %v1235 = vpack.c.b16 %v791, %v789
  %v1236 = vpack.c.b16 %v794, %v792
  %v1237 = vpack.c.b16 %v795, %v793
  %v1238 = vpack.c.b16 %v798, %v796
  %v1239 = vpack.c.b16 %v799, %v797
  %v1240 = vpack.c.b16 %v802, %v800
  %v1241 = vpack.c.b16 %v803, %v801
  %v1242 = vpack.c.b16 %v806, %v804
  %v1243 = vpack.c.b16 %v807, %v805
  %v1244 = vpack.c.b16 %v810, %v808
  %v1245 = vpack.c.b16 %v811, %v809
  %v1246 = vpack.c.b16 %v814, %v812
  %v1247 = vpack.c.b16 %v815, %v813
  %v1248 = vpack.c.b16 %v818, %v816
  %v1249 = vpack.c.b16 %v819, %v817
  %v1250 = vpack.c.b16 %v822, %v820
  %v1251 = vpack.c.b16 %v823, %v821
  %v1252 = vpack.c.b16 %v826, %v824
  %v1253 = vpack.c.b16 %v827, %v825
  %v1254 = vpack.c.b16 %v830, %v828
  %v1255 = vpack.c.b16 %v831, %v829
  %v1256 = vpack.c.b16 %v834, %v832
  %v1257 = vpack.c.b16 %v835, %v833
  %v1258 = vpack.c.b16 %v838, %v836
  %v1259 = vpack.c.b16 %v839, %v837
  %v1260 = vpack.c.b16 %v842, %v840
  %v1261 = vpack.c.b16 %v843, %v841
  %v1262 = vpack.c.b16 %v846, %v844
  %v1263 = vpack.c.b16 %v847, %v845
  %v1264 = vpack.c.b16 %v850, %v848
  %v1265 = vpack.c.b16 %v851, %v849
  %v1266 = vpack.c.b16 %v854, %v852
  %v1267 = vpack.c.b16 %v855, %v853
  %v1268 = vpack.c.b16 %v858, %v856
  %v1269 = vpack.c.b16 %v859, %v857
  %v1270 = vpack.c.b16 %v862, %v860
  %v1271 = vpack.c.b16 %v863, %v861
  %v1272 = vpack.c.b16 %v866, %v864
  %v1273 = vpack.c.b16 %v867, %v865
  %v1274 = vpack.c.b16 %v870, %v868
  %v1275 = vpack.c.b16 %v871, %v869
  %v1276 = vpack.c.b16 %v874, %v872
  %v1277 = vpack.c.b16 %v875, %v873
  %v1278 = vpack.c.b16 %v878, %v876
  %v1279 = vpack.c.b16 %v879, %v877
  %v1280 = vpack.c.b16 %v882, %v880
  %v1281 = vpack.c.b16 %v883, %v881
  %v1282 = vpack.c.b16 %v886, %v884
  %v1283 = vpack.c.b16 %v887, %v885
  %v1284 = vpack.c.b16 %v890, %v888
  %v1285 = vpack.c.b16 %v891, %v889
  %v1286 = vpack.c.b16 %v894, %v892
  %v1287 = vpack.c.b16 %v895, %v893
  %v1288 = vpack.c.b16 %v898, %v896
  %v1289 = vpack.c.b16 %v899, %v897
  %v1290 = vpack.c.b16 %v902, %v900
  %v1291 = vpack.c.b16 %v903, %v901
  %v1292 = vpack.c.b16 %v906, %v904
  %v1293 = vpack.c.b16 %v907, %v905
  %v1294 = vpack.c.b16 %v910, %v908
  %v1295 = vpack.c.b16 %v911, %v909
  %v1296 = vpack.c.b16 %v914, %v912
  %v1297 = vpack.c.b16 %v915, %v913
  %v1298 = vpack.c.b16 %v918, %v916
  %v1299 = vpack.c.b16 %v919, %v917
  %v1300 = vpack.c.b16 %v922, %v920
  %v1301 = vpack.c.b16 %v923, %v921
  %v1302 = vpack.c.b16 %v926, %v924
  %v1303 = vpack.c.b16 %v927, %v925
  %v1304 = vpack.c.b16 %v930, %v928
  %v1305 = vpack.c.b16 %v931, %v929
  %v1306 = vpack.c.b16 %v934, %v932
  %v1307 = vpack.c.b16 %v935, %v933
  %v1308 = vpack.c.b16 %v938, %v936
  %v1309 = vpack.c.b16 %v939, %v937
  %v1310 = vpack.c.b16 %v942, %v940
  %v1311 = vpack.c.b16 %v943, %v941
  %v1312 = vpack.c.b16 %v946, %v944
  %v1313 = vpack.c.b16 %v947, %v945
  %v1314 = vpack.c.b16 %v950, %v948
  %v1315 = vpack.c.b16 %v951, %v949
  %v1316 = vpack.c.b16 %v954, %v952
  %v1317 = vpack.c.b16 %v955, %v953
  %v1318 = vpack.c.b16 %v958, %v956
  %v1319 = vpack.c.b16 %v959, %v957
  %v1320 = vpack.c.b16 %v962, %v960
  %v1321 = vpack.c.b16 %v963, %v961
  %v1322 = vpack.c.b16 %v966, %v964
  %v1323 = vpack.c.b16 %v967, %v965
  %v1324 = vpack.c.b16 %v970, %v968
  %v1325 = vpack.c.b16 %v971, %v969
  %v1326 = vpack.c.b16 %v974, %v972
  %v1327 = vpack.c.b16 %v975, %v973
  %v1328 = vpack.c.b16 %v978, %v976
  %v1329 = vpack.c.b16 %v979, %v977
  %v1330 = vpack.c.b16 %v982, %v980
  %v1331 = vpack.c.b16 %v983, %v981
  %v1332 = vpack.c.b16 %v986, %v984
  %v1333 = vpack.c.b16 %v987, %v985
  %v1334 = vpack.c.b16 %v990, %v988
  %v1335 = vpack.c.b16 %v991, %v989
  %v1336 = vpack.c.b16 %v994, %v992
  %v1337 = vpack.c.b16 %v995, %v993
  %v1338 = vpack.c.b16 %v998, %v996
  %v1339 = vpack.c.b16 %v999, %v997
  %v1340 = vpack.c.b16 %v1002, %v1000
  %v1341 = vpack.c.b16 %v1003, %v1001
  %v1342 = vpack.c.b16 %v1006, %v1004
  %v1343 = vpack.c.b16 %v1007, %v1005
  %v1344 = vpack.c.b16 %v1010, %v1008
  %v1345 = vpack.c.b16 %v1011, %v1009
  %v1346 = vpack.c.b16 %v1014, %v1012
  %v1347 = vpack.c.b16 %v1015, %v1013
  %v1348 = vpack.c.b16 %v1018, %v1016
  %v1349 = vpack.c.b16 %v1019, %v1017
  %v1350 = vpack.c.b16 %v1022, %v1020
  %v1351 = vpack.c.b16 %v1023, %v1021
  %v1352 = vpack.c.b16 %v1026, %v1024
  %v1353 = vpack.c.b16 %v1027, %v1025
  %v1354 = vpack.c.b16 %v1030, %v1028
  %v1355 = vpack.c.b16 %v1031, %v1029
  %v1356 = vpack.c.b16 %v1034, %v1032
  %v1357 = vpack.c.b16 %v1035, %v1033
  %v1358 = vpack.c.b16 %v1038, %v1036
  %v1359 = vpack.c.b16 %v1039, %v1037
  %v1360 = vpack.c.b16 %v1042, %v1040
  %v1361 = vpack.c.b16 %v1043, %v1041
  %v1362 = vpack.c.b16 %v1046, %v1044
  %v1363 = vpack.c.b16 %v1047, %v1045
  %v1364 = vpack.c.b16 %v1050, %v1048
  %v1365 = vpack.c.b16 %v1051, %v1049
  %v1366 = vpack.c.b16 %v1054, %v1052
  %v1367 = vpack.c.b16 %v1055, %v1053
  %v1368 = vpack.c.b16 %v1058, %v1056
  %v1369 = vpack.c.b16 %v1059, %v1057
  %v1370 = vpack.c.b16 %v1062, %v1060
  %v1371 = vpack.c.b16 %v1063, %v1061
  %v1372 = vpack.c.b16 %v1066, %v1064
  %v1373 = vpack.c.b16 %v1067, %v1065
  %v1374 = vpack.c.b16 %v1070, %v1068
  %v1375 = vpack.c.b16 %v1071, %v1069
  %v1376 = vpack.c.b16 %v1074, %v1072
  %v1377 = vpack.c.b16 %v1075, %v1073
  %v1378 = vpack.c.b16 %v1078, %v1076
  %v1379 = vpack.c.b16 %v1079, %v1077
  %v1380 = vpack.c.b16 %v1082, %v1080
  %v1381 = vpack.c.b16 %v1083, %v1081
  %v1382 = vpack.c.b16 %v1086, %v1084
  %v1383 = vpack.c.b16 %v1087, %v1085
  %v1384 = vpack.c.b16 %v1090, %v1088
  %v1385 = vpack.c.b16 %v1091, %v1089
  %v1386 = vpack.c.b16 %v1094, %v1092
  %v1387 = vpack.c.b16 %v1095, %v1093
  %v1388 = vpack.c.b16 %v1098, %v1096
  %v1389 = vpack.c.b16 %v1099, %v1097
  %v1390 = vpack.c.b16 %v1102, %v1100
  %v1391 = vpack.c.b16 %v1103, %v1101
  %v1392 = vpack.c.b16 %v1106, %v1104
  %v1393 = vpack.c.b16 %v1107, %v1105
  %v1394 = vpack.c.b16 %v1110, %v1108
  %v1395 = vpack.c.b16 %v1111, %v1109
  %v1396 = vpack.c.b16 %v1114, %v1112
  %v1397 = vpack.c.b16 %v1115, %v1113
  %v1398 = vpack.c.b16 %v1118, %v1116
  %v1399 = vpack.c.b16 %v1119, %v1117
  %v1400 = vpack.c.b16 %v1122, %v1120
  %v1401 = vpack.c.b16 %v1123, %v1121
  %v1402 = vpack.c.b16 %v1126, %v1124
  %v1403 = vpack.c.b16 %v1127, %v1125
  %v1404 = vpack.c.b16 %v1130, %v1128
  %v1405 = vpack.c.b16 %v1131, %v1129
  %v1406 = vpack.c.b16 %v1134, %v1132
  %v1407 = vpack.c.b16 %v1135, %v1133
  %v1408 = vpack.c.b16 %v1138, %v1136
  %v1409 = vpack.c.b16 %v1139, %v1137
  %v1410 = vpack.c.b16 %v1142, %v1140
  %v1411 = vpack.c.b16 %v1143, %v1141
  %v1412 = vpack.c.b16 %v1146, %v1144
  %v1413 = vpack.c.b16 %v1147, %v1145
  %v1414 = vpack.c.b16 %v1150, %v1148
  %v1415 = vpack.c.b16 %v1151, %v1149
  %v1416 = vpack.c.b16 %v1154, %v1152
  %v1417 = vpack.c.b16 %v1155, %v1153
  %v1418 = vpack.c.b16 %v1158, %v1156
  %v1419 = vpack.c.b16 %v1159, %v1157
  %v1420 = vpack.c.b16 %v1162, %v1160
  %v1421 = vpack.c.b16 %v1163, %v1161
  %v1422 = vpack.c.b16 %v1166, %v1164
  %v1423 = vpack.c.b16 %v1167, %v1165
  %1680 = vmatprep.subr.bf16.mxu0 %v1169
  %1681 = vmatpush1.bf16.msra.mxu0 %v1168
  %1682 = vmatprep.subr.bf16.mxu0 %v1171
  %1683 = vmatpush1.bf16.msra.mxu0 %v1170
  %1684 = vmatprep.subr.bf16.mxu0 %v1173
  %1685 = vmatpush1.bf16.msra.mxu0 %v1172
  %1686 = vmatprep.subr.bf16.mxu0 %v1175
  %1687 = vmatpush1.bf16.msra.mxu0 %v1174
  %1688 = vmatprep.subr.bf16.mxu0 %v1177
  %1689 = vmatpush1.bf16.msra.mxu0 %v1176
  %1690 = vmatprep.subr.bf16.mxu0 %v1179
  %1691 = vmatpush1.bf16.msra.mxu0 %v1178
  %1692 = vmatprep.subr.bf16.mxu0 %v1181
  %1693 = vmatpush1.bf16.msra.mxu0 %v1180
  %1694 = vmatprep.subr.bf16.mxu0 %v1183
  %1695 = vmatpush1.bf16.msra.mxu0 %v1182
  %1696 = vmatprep.subr.bf16.mxu0 %v1185
  %1697 = vmatpush1.bf16.msra.mxu0 %v1184
  %1698 = vmatprep.subr.bf16.mxu0 %v1187
  %1699 = vmatpush1.bf16.msra.mxu0 %v1186
  %1700 = vmatprep.subr.bf16.mxu0 %v1189
  %1701 = vmatpush1.bf16.msra.mxu0 %v1188
  %1702 = vmatprep.subr.bf16.mxu0 %v1191
  %1703 = vmatpush1.bf16.msra.mxu0 %v1190
  %1704 = vmatprep.subr.bf16.mxu0 %v1193
  %1705 = vmatpush1.bf16.msra.mxu0 %v1192
  %1706 = vmatprep.subr.bf16.mxu0 %v1195
  %1707 = vmatpush1.bf16.msra.mxu0 %v1194
  %1708 = vmatprep.subr.bf16.mxu0 %v1197
  %1709 = vmatpush1.bf16.msra.mxu0 %v1196
  %1710 = vmatprep.subr.bf16.mxu0 %v1199
  %1711 = vmatpush1.bf16.msra.mxu0 %v1198
  %1712 = vmatprep.mubr.bf16.mxu0 %v323
  %1713 = vmatmul.mubr.bf16.gmra.mrb[0].mxu0 %v309
  %v1714 = vpop.f32.mrb[0].mxu0
  %v1715 = vadd.f32 %v277, %v1714
  %v1716 = vpop.f32.mrb[0].mxu0
  %v1717 = vadd.f32 %v281, %v1716
  %v1718 = vpop.f32.mrb[0].mxu0
  %v1719 = vpop.f32.mrb[0].mxu0
  %1720 = vdwg.mxu0
  %1721 = vmatprep.subr.bf16.mxu0 %v1201
  %1722 = vmatpush1.bf16.msra.mxu0 %v1200
  %1723 = vmatprep.subr.bf16.mxu0 %v1203
  %1724 = vmatpush1.bf16.msra.mxu0 %v1202
  %1725 = vmatprep.subr.bf16.mxu0 %v1205
  %1726 = vmatpush1.bf16.msra.mxu0 %v1204
  %1727 = vmatprep.subr.bf16.mxu0 %v1207
  %1728 = vmatpush1.bf16.msra.mxu0 %v1206
  %1729 = vmatprep.subr.bf16.mxu0 %v1209
  %1730 = vmatpush1.bf16.msra.mxu0 %v1208
  %1731 = vmatprep.subr.bf16.mxu0 %v1211
  %1732 = vmatpush1.bf16.msra.mxu0 %v1210
  %1733 = vmatprep.subr.bf16.mxu0 %v1213
  %1734 = vmatpush1.bf16.msra.mxu0 %v1212
  %1735 = vmatprep.subr.bf16.mxu0 %v1215
  %1736 = vmatpush1.bf16.msra.mxu0 %v1214
  %1737 = vmatprep.subr.bf16.mxu0 %v1217
  %1738 = vmatpush1.bf16.msra.mxu0 %v1216
  %1739 = vmatprep.subr.bf16.mxu0 %v1219
  %1740 = vmatpush1.bf16.msra.mxu0 %v1218
  %1741 = vmatprep.subr.bf16.mxu0 %v1221
  %1742 = vmatpush1.bf16.msra.mxu0 %v1220
  %1743 = vmatprep.subr.bf16.mxu0 %v1223
  %1744 = vmatpush1.bf16.msra.mxu0 %v1222
  %1745 = vmatprep.subr.bf16.mxu0 %v1225
  %1746 = vmatpush1.bf16.msra.mxu0 %v1224
  %1747 = vmatprep.subr.bf16.mxu0 %v1227
  %1748 = vmatpush1.bf16.msra.mxu0 %v1226
  %1749 = vmatprep.subr.bf16.mxu0 %v1229
  %1750 = vmatpush1.bf16.msra.mxu0 %v1228
  %1751 = vmatprep.subr.bf16.mxu0 %v1231
  %1752 = vmatpush1.bf16.msra.mxu0 %v1230
  %1753 = vmatprep.mubr.bf16.mxu0 %v333
  %1754 = vmatmul.mubr.bf16.gmra.mrb[0].mxu0 %v331
  %v1755 = vpop.f32.mrb[0].mxu0
  %v1756 = vadd.f32 %v1715, %v1755
  %v1757 = vpop.f32.mrb[0].mxu0
  %v1758 = vadd.f32 %v1717, %v1757
  %v1759 = vpop.f32.mrb[0].mxu0
  %v1760 = vpop.f32.mrb[0].mxu0
  %1761 = vdwg.mxu0
  %1762 = vmatprep.subr.bf16.mxu0 %v1233
  %1763 = vmatpush1.bf16.msra.mxu0 %v1232
  %1764 = vmatprep.subr.bf16.mxu0 %v1235
  %1765 = vmatpush1.bf16.msra.mxu0 %v1234
  %1766 = vmatprep.subr.bf16.mxu0 %v1237
  %1767 = vmatpush1.bf16.msra.mxu0 %v1236
  %1768 = vmatprep.subr.bf16.mxu0 %v1239
  %1769 = vmatpush1.bf16.msra.mxu0 %v1238
  %1770 = vmatprep.subr.bf16.mxu0 %v1241
  %1771 = vmatpush1.bf16.msra.mxu0 %v1240
  %1772 = vmatprep.subr.bf16.mxu0 %v1243
  %1773 = vmatpush1.bf16.msra.mxu0 %v1242
  %1774 = vmatprep.subr.bf16.mxu0 %v1245
  %1775 = vmatpush1.bf16.msra.mxu0 %v1244
  %1776 = vmatprep.subr.bf16.mxu0 %v1247
  %1777 = vmatpush1.bf16.msra.mxu0 %v1246
  %1778 = vmatprep.subr.bf16.mxu0 %v1249
  %1779 = vmatpush1.bf16.msra.mxu0 %v1248
  %1780 = vmatprep.subr.bf16.mxu0 %v1251
  %1781 = vmatpush1.bf16.msra.mxu0 %v1250
  %1782 = vmatprep.subr.bf16.mxu0 %v1253
  %1783 = vmatpush1.bf16.msra.mxu0 %v1252
  %1784 = vmatprep.subr.bf16.mxu0 %v1255
  %1785 = vmatpush1.bf16.msra.mxu0 %v1254
  %1786 = vmatprep.subr.bf16.mxu0 %v1257
  %1787 = vmatpush1.bf16.msra.mxu0 %v1256
  %1788 = vmatprep.subr.bf16.mxu0 %v1259
  %1789 = vmatpush1.bf16.msra.mxu0 %v1258
  %1790 = vmatprep.subr.bf16.mxu0 %v1261
  %1791 = vmatpush1.bf16.msra.mxu0 %v1260
  %1792 = vmatprep.subr.bf16.mxu0 %v1263
  %1793 = vmatpush1.bf16.msra.mxu0 %v1262
  %1794 = vmatprep.mubr.bf16.mxu0 %v330
  %1795 = vmatmul.mubr.bf16.gmra.mrb[0].mxu0 %v316
  %v1796 = vpop.f32.mrb[0].mxu0
  %v1797 = vadd.f32 %v1756, %v1796
  %v1798 = vpop.f32.mrb[0].mxu0
  %v1799 = vadd.f32 %v1758, %v1798
  %v1800 = vpop.f32.mrb[0].mxu0
  %v1801 = vpop.f32.mrb[0].mxu0
  %1802 = vdwg.mxu0
  %1803 = vmatprep.subr.bf16.mxu0 %v1265
  %1804 = vmatpush1.bf16.msra.mxu0 %v1264
  %1805 = vmatprep.subr.bf16.mxu0 %v1267
  %1806 = vmatpush1.bf16.msra.mxu0 %v1266
  %1807 = vmatprep.subr.bf16.mxu0 %v1269
  %1808 = vmatpush1.bf16.msra.mxu0 %v1268
  %1809 = vmatprep.subr.bf16.mxu0 %v1271
  %1810 = vmatpush1.bf16.msra.mxu0 %v1270
  %1811 = vmatprep.subr.bf16.mxu0 %v1273
  %1812 = vmatpush1.bf16.msra.mxu0 %v1272
  %1813 = vmatprep.subr.bf16.mxu0 %v1275
  %1814 = vmatpush1.bf16.msra.mxu0 %v1274
  %1815 = vmatprep.subr.bf16.mxu0 %v1277
  %1816 = vmatpush1.bf16.msra.mxu0 %v1276
  %1817 = vmatprep.subr.bf16.mxu0 %v1279
  %1818 = vmatpush1.bf16.msra.mxu0 %v1278
  %1819 = vmatprep.subr.bf16.mxu0 %v1281
  %1820 = vmatpush1.bf16.msra.mxu0 %v1280
  %1821 = vmatprep.subr.bf16.mxu0 %v1283
  %1822 = vmatpush1.bf16.msra.mxu0 %v1282
  %1823 = vmatprep.subr.bf16.mxu0 %v1285
  %1824 = vmatpush1.bf16.msra.mxu0 %v1284
  %1825 = vmatprep.subr.bf16.mxu0 %v1287
  %1826 = vmatpush1.bf16.msra.mxu0 %v1286
  %1827 = vmatprep.subr.bf16.mxu0 %v1289
  %1828 = vmatpush1.bf16.msra.mxu0 %v1288
  %1829 = vmatprep.subr.bf16.mxu0 %v1291
  %1830 = vmatpush1.bf16.msra.mxu0 %v1290
  %1831 = vmatprep.subr.bf16.mxu0 %v1293
  %1832 = vmatpush1.bf16.msra.mxu0 %v1292
  %1833 = vmatprep.subr.bf16.mxu0 %v1295
  %1834 = vmatpush1.bf16.msra.mxu0 %v1294
  %1835 = vmatprep.mubr.bf16.mxu0 %v334
  %1836 = vmatmul.mubr.bf16.gmra.mrb[0].mxu0 %v332
  %v1837 = vpop.f32.mrb[0].mxu0
  %v1838 = vadd.f32 %v1797, %v1837
  %v1839 = vpop.f32.mrb[0].mxu0
  %v1840 = vadd.f32 %v1799, %v1839
  %v1841 = vpop.f32.mrb[0].mxu0
  %v1842 = vpop.f32.mrb[0].mxu0
  %1843 = vdwg.mxu0
  %1844 = vmatprep.subr.bf16.mxu0 %v1297
  %1845 = vmatpush1.bf16.msra.mxu0 %v1296
  %1846 = vmatprep.subr.bf16.mxu0 %v1299
  %1847 = vmatpush1.bf16.msra.mxu0 %v1298
  %1848 = vmatprep.subr.bf16.mxu0 %v1301
  %1849 = vmatpush1.bf16.msra.mxu0 %v1300
  %1850 = vmatprep.subr.bf16.mxu0 %v1303
  %1851 = vmatpush1.bf16.msra.mxu0 %v1302
  %1852 = vmatprep.subr.bf16.mxu0 %v1305
  %1853 = vmatpush1.bf16.msra.mxu0 %v1304
  %1854 = vmatprep.subr.bf16.mxu0 %v1307
  %1855 = vmatpush1.bf16.msra.mxu0 %v1306
  %1856 = vmatprep.subr.bf16.mxu0 %v1309
  %1857 = vmatpush1.bf16.msra.mxu0 %v1308
  %1858 = vmatprep.subr.bf16.mxu0 %v1311
  %1859 = vmatpush1.bf16.msra.mxu0 %v1310
  %1860 = vmatprep.subr.bf16.mxu0 %v1313
  %1861 = vmatpush1.bf16.msra.mxu0 %v1312
  %1862 = vmatprep.subr.bf16.mxu0 %v1315
  %1863 = vmatpush1.bf16.msra.mxu0 %v1314
  %1864 = vmatprep.subr.bf16.mxu0 %v1317
  %1865 = vmatpush1.bf16.msra.mxu0 %v1316
  %1866 = vmatprep.subr.bf16.mxu0 %v1319
  %1867 = vmatpush1.bf16.msra.mxu0 %v1318
  %1868 = vmatprep.subr.bf16.mxu0 %v1321
  %1869 = vmatpush1.bf16.msra.mxu0 %v1320
  %1870 = vmatprep.subr.bf16.mxu0 %v1323
  %1871 = vmatpush1.bf16.msra.mxu0 %v1322
  %1872 = vmatprep.subr.bf16.mxu0 %v1325
  %1873 = vmatpush1.bf16.msra.mxu0 %v1324
  %1874 = vmatprep.subr.bf16.mxu0 %v1327
  %1875 = vmatpush1.bf16.msra.mxu0 %v1326
  %1876 = vmatprep.mubr.bf16.mxu0 %v372
  %1877 = vmatmul.mubr.bf16.gmra.mrb[0].mxu0 %v358
  %v1878 = vpop.f32.mrb[0].mxu0
  %v1879 = vadd.f32 %v1838, %v1878
  %v1880 = vpop.f32.mrb[0].mxu0
  %v1881 = vadd.f32 %v1840, %v1880
  %v1882 = vpop.f32.mrb[0].mxu0
  %v1883 = vpop.f32.mrb[0].mxu0
  %1884 = vdwg.mxu0
  %1885 = vmatprep.subr.bf16.mxu0 %v1329
  %1886 = vmatpush1.bf16.msra.mxu0 %v1328
  %1887 = vmatprep.subr.bf16.mxu0 %v1331
  %1888 = vmatpush1.bf16.msra.mxu0 %v1330
  %1889 = vmatprep.subr.bf16.mxu0 %v1333
  %1890 = vmatpush1.bf16.msra.mxu0 %v1332
  %1891 = vmatprep.subr.bf16.mxu0 %v1335
  %1892 = vmatpush1.bf16.msra.mxu0 %v1334
  %1893 = vmatprep.subr.bf16.mxu0 %v1337
  %1894 = vmatpush1.bf16.msra.mxu0 %v1336
  %1895 = vmatprep.subr.bf16.mxu0 %v1339
  %1896 = vmatpush1.bf16.msra.mxu0 %v1338
  %1897 = vmatprep.subr.bf16.mxu0 %v1341
  %1898 = vmatpush1.bf16.msra.mxu0 %v1340
  %1899 = vmatprep.subr.bf16.mxu0 %v1343
  %1900 = vmatpush1.bf16.msra.mxu0 %v1342
  %1901 = vmatprep.subr.bf16.mxu0 %v1345
  %1902 = vmatpush1.bf16.msra.mxu0 %v1344
  %1903 = vmatprep.subr.bf16.mxu0 %v1347
  %1904 = vmatpush1.bf16.msra.mxu0 %v1346
  %1905 = vmatprep.subr.bf16.mxu0 %v1349
  %1906 = vmatpush1.bf16.msra.mxu0 %v1348
  %1907 = vmatprep.subr.bf16.mxu0 %v1351
  %1908 = vmatpush1.bf16.msra.mxu0 %v1350
  %1909 = vmatprep.subr.bf16.mxu0 %v1353
  %1910 = vmatpush1.bf16.msra.mxu0 %v1352
  %1911 = vmatprep.subr.bf16.mxu0 %v1355
  %1912 = vmatpush1.bf16.msra.mxu0 %v1354
  %1913 = vmatprep.subr.bf16.mxu0 %v1357
  %1914 = vmatpush1.bf16.msra.mxu0 %v1356
  %1915 = vmatprep.subr.bf16.mxu0 %v1359
  %1916 = vmatpush1.bf16.msra.mxu0 %v1358
  %1917 = vmatprep.mubr.bf16.mxu0 %v382
  %1918 = vmatmul.mubr.bf16.gmra.mrb[0].mxu0 %v380
  %v1919 = vpop.f32.mrb[0].mxu0
  %v1920 = vadd.f32 %v1879, %v1919
  %v1921 = vpop.f32.mrb[0].mxu0
  %v1922 = vadd.f32 %v1881, %v1921
  %v1923 = vpop.f32.mrb[0].mxu0
  %v1924 = vpop.f32.mrb[0].mxu0
  %1925 = vdwg.mxu0
  %1926 = vmatprep.subr.bf16.mxu0 %v1361
  %1927 = vmatpush1.bf16.msra.mxu0 %v1360
  %1928 = vmatprep.subr.bf16.mxu0 %v1363
  %1929 = vmatpush1.bf16.msra.mxu0 %v1362
  %1930 = vmatprep.subr.bf16.mxu0 %v1365
  %1931 = vmatpush1.bf16.msra.mxu0 %v1364
  %1932 = vmatprep.subr.bf16.mxu0 %v1367
  %1933 = vmatpush1.bf16.msra.mxu0 %v1366
  %1934 = vmatprep.subr.bf16.mxu0 %v1369
  %1935 = vmatpush1.bf16.msra.mxu0 %v1368
  %1936 = vmatprep.subr.bf16.mxu0 %v1371
  %1937 = vmatpush1.bf16.msra.mxu0 %v1370
  %1938 = vmatprep.subr.bf16.mxu0 %v1373
  %1939 = vmatpush1.bf16.msra.mxu0 %v1372
  %1940 = vmatprep.subr.bf16.mxu0 %v1375
  %1941 = vmatpush1.bf16.msra.mxu0 %v1374
  %1942 = vmatprep.subr.bf16.mxu0 %v1377
  %1943 = vmatpush1.bf16.msra.mxu0 %v1376
  %1944 = vmatprep.subr.bf16.mxu0 %v1379
  %1945 = vmatpush1.bf16.msra.mxu0 %v1378
  %1946 = vmatprep.subr.bf16.mxu0 %v1381
  %1947 = vmatpush1.bf16.msra.mxu0 %v1380
  %1948 = vmatprep.subr.bf16.mxu0 %v1383
  %1949 = vmatpush1.bf16.msra.mxu0 %v1382
  %1950 = vmatprep.subr.bf16.mxu0 %v1385
  %1951 = vmatpush1.bf16.msra.mxu0 %v1384
  %1952 = vmatprep.subr.bf16.mxu0 %v1387
  %1953 = vmatpush1.bf16.msra.mxu0 %v1386
  %1954 = vmatprep.subr.bf16.mxu0 %v1389
  %1955 = vmatpush1.bf16.msra.mxu0 %v1388
  %1956 = vmatprep.subr.bf16.mxu0 %v1391
  %1957 = vmatpush1.bf16.msra.mxu0 %v1390
  %1958 = vmatprep.mubr.bf16.mxu0 %v379
  %1959 = vmatmul.mubr.bf16.gmra.mrb[0].mxu0 %v365
  %v1960 = vpop.f32.mrb[0].mxu0
  %v1961 = vadd.f32 %v1920, %v1960
  %v1962 = vpop.f32.mrb[0].mxu0
  %v1963 = vadd.f32 %v1922, %v1962
  %v1964 = vpop.f32.mrb[0].mxu0
  %v1965 = vpop.f32.mrb[0].mxu0
  %1966 = vdwg.mxu0
  %1967 = vmatprep.subr.bf16.mxu0 %v1393
  %1968 = vmatpush1.bf16.msra.mxu0 %v1392
  %1969 = vmatprep.subr.bf16.mxu0 %v1395
  %1970 = vmatpush1.bf16.msra.mxu0 %v1394
  %1971 = vmatprep.subr.bf16.mxu0 %v1397
  %1972 = vmatpush1.bf16.msra.mxu0 %v1396
  %1973 = vmatprep.subr.bf16.mxu0 %v1399
  %1974 = vmatpush1.bf16.msra.mxu0 %v1398
  %1975 = vmatprep.subr.bf16.mxu0 %v1401
  %1976 = vmatpush1.bf16.msra.mxu0 %v1400
  %1977 = vmatprep.subr.bf16.mxu0 %v1403
  %1978 = vmatpush1.bf16.msra.mxu0 %v1402
  %1979 = vmatprep.subr.bf16.mxu0 %v1405
  %1980 = vmatpush1.bf16.msra.mxu0 %v1404
  %1981 = vmatprep.subr.bf16.mxu0 %v1407
  %1982 = vmatpush1.bf16.msra.mxu0 %v1406
  %1983 = vmatprep.subr.bf16.mxu0 %v1409
  %1984 = vmatpush1.bf16.msra.mxu0 %v1408
  %1985 = vmatprep.subr.bf16.mxu0 %v1411
  %1986 = vmatpush1.bf16.msra.mxu0 %v1410
  %1987 = vmatprep.subr.bf16.mxu0 %v1413
  %1988 = vmatpush1.bf16.msra.mxu0 %v1412
  %1989 = vmatprep.subr.bf16.mxu0 %v1415
  %1990 = vmatpush1.bf16.msra.mxu0 %v1414
  %1991 = vmatprep.subr.bf16.mxu0 %v1417
  %1992 = vmatpush1.bf16.msra.mxu0 %v1416
  %1993 = vmatprep.subr.bf16.mxu0 %v1419
  %1994 = vmatpush1.bf16.msra.mxu0 %v1418
  %1995 = vmatprep.subr.bf16.mxu0 %v1421
  %1996 = vmatpush1.bf16.msra.mxu0 %v1420
  %1997 = vmatprep.subr.bf16.mxu0 %v1423
  %1998 = vmatpush1.bf16.msra.mxu0 %v1422
  %1999 = vmatprep.mubr.bf16.mxu0 %v383
  %2000 = vmatmul.mubr.bf16.gmra.mrb[0].mxu0 %v381
  %v2001 = vpop.f32.mrb[0].mxu0
  %v2002 = vadd.f32 %v1961, %v2001
  %v2003 = vpop.f32.mrb[0].mxu0
  %v2004 = vadd.f32 %v1963, %v2003
  %v2005 = vpop.f32.mrb[0].mxu0
  %v2006 = vpop.f32.mrb[0].mxu0
  %2007 = vdwg.mxu0
  %vm2008 = vcmp.ge.f32.partialorder %v2002, 0.0
  %vm2009 = vcmp.ge.f32.partialorder %v2004, 0.0
  %v2010 = vmul.f32 %v2002, 0.2
  %v2011 = vmul.f32 %v2004, 0.2
  %v2012 = vsel %vm2008, %v2002, %v2010
  %v2013 = vsel %vm2009, %v2004, %v2011
  %v2014 = vpack.c.bf16 %v2012, %v2012
  %v2015 = vpack.c.bf16 %v2013, %v2013
  %v2018 = vcombine.low %v2014, %v2015
  %v2020 = vunpack.c.l.s4 1966171168
  %v2021 = vunpack.c.0.s8 %v2020
  %v2022 = vlaneseq
  %v2023 = vshrl.u32 %v2022, 7
  %v2024 = vsub.s32 %v2021, %v2023
  %v2025 = vrot.slane %v2018, %v2024
  %v2027 = vunpack.c.l.s4 1966171168
  %v2028 = vunpack.c.0.s8 %v2027
  %v2029 = vlaneseq
  %v2030 = vshrl.u32 %v2029, 7
  %v2031 = vsub.s32 %v2028, %v2030
  %v2032 = vrot.slane %v2025, %v2031
  %2034 = vst [vmem:[%s3] sm:$0x3] %v2032
  // Predicated region
  $region14: #{xz_discriminator_forward.8} parent=0 // pred_check
    _
  $region15: #{xz_discriminator_forward.8} parent=0 // pred_check_branch
    %2036 = sbr.rel (0) target = $region17
  $region16: #{xz_discriminator_forward.8} parent=0 // pred_region
    _
  $region17: #{xz_discriminator_forward.8} parent=0 // pred_fallthru
    _
  // Predicated region
  $region18: #{xz_discriminator_forward.8} parent=0 // pred_check
    _
  $region19: #{xz_discriminator_forward.8} parent=0 // pred_check_branch
    %2038 = sbr.rel (0) target = $region21
  $region20: #{xz_discriminator_forward.8} parent=0 // pred_region
    _
  $region21: #{xz_discriminator_forward.8} parent=0 // pred_fallthru
    _

// kernel: xz_discriminator_forward.9
$region0: #{xz_discriminator_forward.9}
  #allocation0 [shape = 'u32[]', space=smem, size = 0x4, offset = 0x4, fixed_abs, tag = 'smem constant byte address 0x4 - core index']
  #allocation1 [shape = 'u32[144,128]{1,0:T(1,128)}', space=vmem, size = 0x12000, scoped, tag = 'internal scratch']
  #allocation2 [shape = 'f32[1,1]{1,0:T(1,128)S(1)}', space=vmem, size = 0x200, scoped, tag = 'scoped memory for xz_discriminator_forward.9']
  %s0 = inlined_call_operand.vmem [shape: bf16[2,256], index: 0, kind: input, shape index: {}]
  %s1 = inlined_call_operand.vmem [shape: bf16[2,16], index: 1, kind: input, shape index: {}]
  %s2 = inlined_call_operand.vmem [shape: bf16[16,256], index: 2, kind: input, shape index: {}]
  %s3 = inlined_call_operand.vmem [shape: f32[1,256], index: 3, kind: input, shape index: {}]
  %s4 = inlined_call_operand.vmem [shape: bf16[256,256], index: 4, kind: input, shape index: {}]
  %s5 = inlined_call_operand.vmem [shape: f32[1,256], index: 5, kind: input, shape index: {}]
  %s6 = inlined_call_operand.vmem [shape: bf16[256,1024], index: 6, kind: input, shape index: {}]
  %s7 = inlined_call_operand.vmem [shape: bf16[256,1024], index: 7, kind: input, shape index: {}]
  %s8 = inlined_call_operand.vmem [shape: f32[1,1024], index: 8, kind: input, shape index: {}]
  %s9 = inlined_call_operand.vmem [shape: bf16[1024,1024], index: 9, kind: input, shape index: {}]
  %s10 = inlined_call_operand.vmem [shape: f32[1,1024], index: 10, kind: input, shape index: {}]
  %s11 = inlined_call_operand.vmem [shape: bf16[1024,1], index: 11, kind: input, shape index: {}]
  %s12 = inlined_call_operand.<no memory space> [shape: f32[1,1], index: 12, kind: input, shape index: {}]
  %s13 = inlined_call_operand.vmem [shape: f32[2,1], index: 13, kind: output, shape index: {}]
  %s14 = sld [smem:[#allocation0]]
  $region62: #{xz_discriminator_forward.9} parent=0
    _
  %s16 = ssub.s32 1, %s14
  %s17 = scalar_select 0, %s16, %s14
  %v18 = vstv %s12
  %19 = vst [vmem:[#allocation2] sm:$0x1] %v18
  // Predicated region
  $region2: #{xz_discriminator_forward.9} parent=0 // pred_check
    _
  $region3: #{xz_discriminator_forward.9} parent=0 // pred_check_branch
    %21 = sbr.rel (0) target = $region5
  $region4: #{xz_discriminator_forward.9} parent=0 // pred_region
    _
  $region5: #{xz_discriminator_forward.9} parent=0 // pred_fallthru
    _
  // Predicated region
  $region6: #{xz_discriminator_forward.9} parent=0 // pred_check
    _
  $region7: #{xz_discriminator_forward.9} parent=0 // pred_check_branch
    %23 = sbr.rel (0) target = $region9
  $region8: #{xz_discriminator_forward.9} parent=0 // pred_region
    _
  $region9: #{xz_discriminator_forward.9} parent=0 // pred_fallthru
    _
  // Predicated region
  $region10: #{xz_discriminator_forward.9} parent=0 // pred_check
    _
  $region11: #{xz_discriminator_forward.9} parent=0 // pred_check_branch
    %25 = sbr.rel (0) target = $region13
  $region12: #{xz_discriminator_forward.9} parent=0 // pred_region
    _
  $region13: #{xz_discriminator_forward.9} parent=0 // pred_fallthru
    _
  // Predicated region
  $region14: #{xz_discriminator_forward.9} parent=0 // pred_check
    _
  $region15: #{xz_discriminator_forward.9} parent=0 // pred_check_branch
    %27 = sbr.rel (0) target = $region17
  $region16: #{xz_discriminator_forward.9} parent=0 // pred_region
    _
  $region17: #{xz_discriminator_forward.9} parent=0 // pred_fallthru
    _
  // Predicated region
  $region18: #{xz_discriminator_forward.9} parent=0 // pred_check
    _
  $region19: #{xz_discriminator_forward.9} parent=0 // pred_check_branch
    %29 = sbr.rel (0) target = $region21
  $region20: #{xz_discriminator_forward.9} parent=0 // pred_region
    _
  $region21: #{xz_discriminator_forward.9} parent=0 // pred_fallthru
    _
  // Predicated region
  $region22: #{xz_discriminator_forward.9} parent=0 // pred_check
    _
  $region23: #{xz_discriminator_forward.9} parent=0 // pred_check_branch
    %31 = sbr.rel (0) target = $region25
  $region24: #{xz_discriminator_forward.9} parent=0 // pred_region
    _
  $region25: #{xz_discriminator_forward.9} parent=0 // pred_fallthru
    _
  // Predicated region
  $region26: #{xz_discriminator_forward.9} parent=0 // pred_check
    _
  $region27: #{xz_discriminator_forward.9} parent=0 // pred_check_branch
    %33 = sbr.rel (0) target = $region29
  $region28: #{xz_discriminator_forward.9} parent=0 // pred_region
    _
  $region29: #{xz_discriminator_forward.9} parent=0 // pred_fallthru
    _
  // Predicated region
  $region30: #{xz_discriminator_forward.9} parent=0 // pred_check
    _
  $region31: #{xz_discriminator_forward.9} parent=0 // pred_check_branch
    %35 = sbr.rel (0) target = $region33
  $region32: #{xz_discriminator_forward.9} parent=0 // pred_region
    _
  $region33: #{xz_discriminator_forward.9} parent=0 // pred_fallthru
    _
  // Predicated region
  $region34: #{xz_discriminator_forward.9} parent=0 // pred_check
    _
  $region35: #{xz_discriminator_forward.9} parent=0 // pred_check_branch
    %37 = sbr.rel (0) target = $region37
  $region36: #{xz_discriminator_forward.9} parent=0 // pred_region
    _
  $region37: #{xz_discriminator_forward.9} parent=0 // pred_fallthru
    _
  // Predicated region
  $region38: #{xz_discriminator_forward.9} parent=0 // pred_check
    _
  $region39: #{xz_discriminator_forward.9} parent=0 // pred_check_branch
    %39 = sbr.rel (0) target = $region41
  $region40: #{xz_discriminator_forward.9} parent=0 // pred_region
    _
  $region41: #{xz_discriminator_forward.9} parent=0 // pred_fallthru
    _
  // Predicated region
  $region42: #{xz_discriminator_forward.9} parent=0 // pred_check
    _
  $region43: #{xz_discriminator_forward.9} parent=0 // pred_check_branch
    %41 = sbr.rel (0) target = $region45
  $region44: #{xz_discriminator_forward.9} parent=0 // pred_region
    _
  $region45: #{xz_discriminator_forward.9} parent=0 // pred_fallthru
    _
  // Predicated region
  $region46: #{xz_discriminator_forward.9} parent=0 // pred_check
    _
  $region47: #{xz_discriminator_forward.9} parent=0 // pred_check_branch
    %43 = sbr.rel (0) target = $region49
  $region48: #{xz_discriminator_forward.9} parent=0 // pred_region
    _
  $region49: #{xz_discriminator_forward.9} parent=0 // pred_fallthru
    _
  // Predicated region
  $region50: #{xz_discriminator_forward.9} parent=0 // pred_check
    _
  $region51: #{xz_discriminator_forward.9} parent=0 // pred_check_branch
    %45 = sbr.rel (0) target = $region53
  $region52: #{xz_discriminator_forward.9} parent=0 // pred_region
    _
  $region53: #{xz_discriminator_forward.9} parent=0 // pred_fallthru
    _
  %v47 = vld [vmem:[%s1] sm:$0x1]
  %v48 = vld [vmem:[%s2] sm:$0xff]
  %v49 = vld [vmem:[%s2 + $0x8] sm:$0xff]
  %v50 = vld [vmem:[%s3] sm:$0x3]
  %v52 = vlaneseq
  %v53 = vshrl.u32 %v52, 7
  %v54 = vsub.s32 0, %v53
  %v55 = vrot.slane %v50, %v54
  %v56 = vlaneseq
  %v57 = vshrl.u32 %v56, 7
  %v58 = vsub.s32 1, %v57
  %v59 = vrot.slane %v50, %v58
  %v64 = vunpack.c.l.b16 %v48
  %v65 = vunpack.c.h.b16 %v48
  %v66 = vunpack.c.l.b16 %v49
  %v67 = vunpack.c.h.b16 %v49
  %v68 = vpack.c.b16 %v66, %v64
  %v69 = vpack.c.b16 %v67, %v65
  %vm72 = vcmask 130048
  %v74 = vsel %vm72, %v47, 0
  %76 = vmatprep.subr.bf16.mxu0 %v69
  %77 = vmatpush1.bf16.msra.mxu0 %v68
  %78 = vmatprep.subr.bf16.mxu0 0
  %79 = vmatpush1.bf16.msra.mxu0 0
  %80 = vmatprep.subr.bf16.mxu0 0
  %81 = vmatpush1.bf16.msra.mxu0 0
  %82 = vmatprep.subr.bf16.mxu0 0
  %83 = vmatpush1.bf16.msra.mxu0 0
  %84 = vmatprep.subr.bf16.mxu0 0
  %85 = vmatpush1.bf16.msra.mxu0 0
  %86 = vmatprep.subr.bf16.mxu0 0
  %87 = vmatpush1.bf16.msra.mxu0 0
  %88 = vmatprep.subr.bf16.mxu0 0
  %89 = vmatpush1.bf16.msra.mxu0 0
  %90 = vmatprep.subr.bf16.mxu0 0
  %91 = vmatpush1.bf16.msra.mxu0 0
  %92 = vmatprep.subr.bf16.mxu0 0
  %93 = vmatpush1.bf16.msra.mxu0 0
  %94 = vmatprep.subr.bf16.mxu0 0
  %95 = vmatpush1.bf16.msra.mxu0 0
  %96 = vmatprep.subr.bf16.mxu0 0
  %97 = vmatpush1.bf16.msra.mxu0 0
  %98 = vmatprep.subr.bf16.mxu0 0
  %99 = vmatpush1.bf16.msra.mxu0 0
  %100 = vmatprep.subr.bf16.mxu0 0
  %101 = vmatpush1.bf16.msra.mxu0 0
  %102 = vmatprep.subr.bf16.mxu0 0
  %103 = vmatpush1.bf16.msra.mxu0 0
  %104 = vmatprep.subr.bf16.mxu0 0
  %105 = vmatpush1.bf16.msra.mxu0 0
  %106 = vmatprep.subr.bf16.mxu0 0
  %107 = vmatpush1.bf16.msra.mxu0 0
  %108 = vmatprep.mubr.bf16.mxu0 0
  %109 = vmatmul.mubr.bf16.gmra.mrb[0].mxu0 %v74
  %v110 = vpop.f32.mrb[0].mxu0
  %v111 = vadd.f32 %v55, %v110
  %v112 = vpop.f32.mrb[0].mxu0
  %v113 = vadd.f32 %v59, %v112
  %v114 = vpop.f32.mrb[0].mxu0
  %v115 = vpop.f32.mrb[0].mxu0
  %116 = vdwg.mxu0
  %vm117 = vcmp.ge.f32.partialorder %v111, 0.0
  %vm118 = vcmp.ge.f32.partialorder %v113, 0.0
  %v119 = vmul.f32 %v111, 0.2
  %v120 = vmul.f32 %v113, 0.2
  %v121 = vsel %vm117, %v111, %v119
  %v122 = vsel %vm118, %v113, %v120
  %v123 = vpack.c.bf16 %v121, %v121
  %v124 = vpack.c.bf16 %v122, %v122
  %v125 = vld [vmem:[%s4] sm:$0xff]
  %v126 = vld [vmem:[%s4 + $0x8] sm:$0xff]
  %v127 = vld [vmem:[%s4 + $0x10] sm:$0xff]
  %v128 = vld [vmem:[%s4 + $0x18] sm:$0xff]
  %v129 = vld [vmem:[%s4 + $0x20] sm:$0xff]
  %v130 = vld [vmem:[%s4 + $0x28] sm:$0xff]
  %v131 = vld [vmem:[%s4 + $0x30] sm:$0xff]
  %v132 = vld [vmem:[%s4 + $0x38] sm:$0xff]
  %v133 = vld [vmem:[%s4 + $0x40] sm:$0xff]
  %v134 = vld [vmem:[%s4 + $0x48] sm:$0xff]
  %v135 = vld [vmem:[%s4 + $0x50] sm:$0xff]
  %v136 = vld [vmem:[%s4 + $0x58] sm:$0xff]
  %v137 = vld [vmem:[%s4 + $0x60] sm:$0xff]
  %v138 = vld [vmem:[%s4 + $0x68] sm:$0xff]
  %v139 = vld [vmem:[%s4 + $0x70] sm:$0xff]
  %v140 = vld [vmem:[%s4 + $0x78] sm:$0xff]
  %v141 = vld [vmem:[%s4 + $0x80] sm:$0xff]
  %v142 = vld [vmem:[%s4 + $0x88] sm:$0xff]
  %v143 = vld [vmem:[%s4 + $0x90] sm:$0xff]
  %v144 = vld [vmem:[%s4 + $0x98] sm:$0xff]
  %v145 = vld [vmem:[%s4 + $0xa0] sm:$0xff]
  %v146 = vld [vmem:[%s4 + $0xa8] sm:$0xff]
  %v147 = vld [vmem:[%s4 + $0xb0] sm:$0xff]
  %v148 = vld [vmem:[%s4 + $0xb8] sm:$0xff]
  %v149 = vld [vmem:[%s4 + $0xc0] sm:$0xff]
  %v150 = vld [vmem:[%s4 + $0xc8] sm:$0xff]
  %v151 = vld [vmem:[%s4 + $0xd0] sm:$0xff]
  %v152 = vld [vmem:[%s4 + $0xd8] sm:$0xff]
  %v153 = vld [vmem:[%s4 + $0xe0] sm:$0xff]
  %v154 = vld [vmem:[%s4 + $0xe8] sm:$0xff]
  %v155 = vld [vmem:[%s4 + $0xf0] sm:$0xff]
  %v156 = vld [vmem:[%s4 + $0xf8] sm:$0xff]
  %v157 = vld [vmem:[%s5] sm:$0x3]
  %v159 = vlaneseq
  %v160 = vshrl.u32 %v159, 7
  %v161 = vsub.s32 0, %v160
  %v162 = vrot.slane %v157, %v161
  %v163 = vlaneseq
  %v164 = vshrl.u32 %v163, 7
  %v165 = vsub.s32 1, %v164
  %v166 = vrot.slane %v157, %v165
  %v201 = vunpack.c.l.b16 %v125
  %v202 = vunpack.c.h.b16 %v125
  %v203 = vunpack.c.l.b16 %v126
  %v204 = vunpack.c.h.b16 %v126
  %v205 = vunpack.c.l.b16 %v127
  %v206 = vunpack.c.h.b16 %v127
  %v207 = vunpack.c.l.b16 %v128
  %v208 = vunpack.c.h.b16 %v128
  %v209 = vunpack.c.l.b16 %v129
  %v210 = vunpack.c.h.b16 %v129
  %v211 = vunpack.c.l.b16 %v130
  %v212 = vunpack.c.h.b16 %v130
  %v213 = vunpack.c.l.b16 %v131
  %v214 = vunpack.c.h.b16 %v131
  %v215 = vunpack.c.l.b16 %v132
  %v216 = vunpack.c.h.b16 %v132
  %v217 = vunpack.c.l.b16 %v133
  %v218 = vunpack.c.h.b16 %v133
  %v219 = vunpack.c.l.b16 %v134
  %v220 = vunpack.c.h.b16 %v134
  %v221 = vunpack.c.l.b16 %v135
  %v222 = vunpack.c.h.b16 %v135
  %v223 = vunpack.c.l.b16 %v136
  %v224 = vunpack.c.h.b16 %v136
  %v225 = vunpack.c.l.b16 %v137
  %v226 = vunpack.c.h.b16 %v137
  %v227 = vunpack.c.l.b16 %v138
  %v228 = vunpack.c.h.b16 %v138
  %v229 = vunpack.c.l.b16 %v139
  %v230 = vunpack.c.h.b16 %v139
  %v231 = vunpack.c.l.b16 %v140
  %v232 = vunpack.c.h.b16 %v140
  %v233 = vunpack.c.l.b16 %v141
  %v234 = vunpack.c.h.b16 %v141
  %v235 = vunpack.c.l.b16 %v142
  %v236 = vunpack.c.h.b16 %v142
  %v237 = vunpack.c.l.b16 %v143
  %v238 = vunpack.c.h.b16 %v143
  %v239 = vunpack.c.l.b16 %v144
  %v240 = vunpack.c.h.b16 %v144
  %v241 = vunpack.c.l.b16 %v145
  %v242 = vunpack.c.h.b16 %v145
  %v243 = vunpack.c.l.b16 %v146
  %v244 = vunpack.c.h.b16 %v146
  %v245 = vunpack.c.l.b16 %v147
  %v246 = vunpack.c.h.b16 %v147
  %v247 = vunpack.c.l.b16 %v148
  %v248 = vunpack.c.h.b16 %v148
  %v249 = vunpack.c.l.b16 %v149
  %v250 = vunpack.c.h.b16 %v149
  %v251 = vunpack.c.l.b16 %v150
  %v252 = vunpack.c.h.b16 %v150
  %v253 = vunpack.c.l.b16 %v151
  %v254 = vunpack.c.h.b16 %v151
  %v255 = vunpack.c.l.b16 %v152
  %v256 = vunpack.c.h.b16 %v152
  %v257 = vunpack.c.l.b16 %v153
  %v258 = vunpack.c.h.b16 %v153
  %v259 = vunpack.c.l.b16 %v154
  %v260 = vunpack.c.h.b16 %v154
  %v261 = vunpack.c.l.b16 %v155
  %v262 = vunpack.c.h.b16 %v155
  %v263 = vunpack.c.l.b16 %v156
  %v264 = vunpack.c.h.b16 %v156
  %v265 = vpack.c.b16 %v203, %v201
  %v266 = vpack.c.b16 %v204, %v202
  %v267 = vpack.c.b16 %v207, %v205
  %v268 = vpack.c.b16 %v208, %v206
  %v269 = vpack.c.b16 %v211, %v209
  %v270 = vpack.c.b16 %v212, %v210
  %v271 = vpack.c.b16 %v215, %v213
  %v272 = vpack.c.b16 %v216, %v214
  %v273 = vpack.c.b16 %v219, %v217
  %v274 = vpack.c.b16 %v220, %v218
  %v275 = vpack.c.b16 %v223, %v221
  %v276 = vpack.c.b16 %v224, %v222
  %v277 = vpack.c.b16 %v227, %v225
  %v278 = vpack.c.b16 %v228, %v226
  %v279 = vpack.c.b16 %v231, %v229
  %v280 = vpack.c.b16 %v232, %v230
  %v281 = vpack.c.b16 %v235, %v233
  %v282 = vpack.c.b16 %v236, %v234
  %v283 = vpack.c.b16 %v239, %v237
  %v284 = vpack.c.b16 %v240, %v238
  %v285 = vpack.c.b16 %v243, %v241
  %v286 = vpack.c.b16 %v244, %v242
  %v287 = vpack.c.b16 %v247, %v245
  %v288 = vpack.c.b16 %v248, %v246
  %v289 = vpack.c.b16 %v251, %v249
  %v290 = vpack.c.b16 %v252, %v250
  %v291 = vpack.c.b16 %v255, %v253
  %v292 = vpack.c.b16 %v256, %v254
  %v293 = vpack.c.b16 %v259, %v257
  %v294 = vpack.c.b16 %v260, %v258
  %v295 = vpack.c.b16 %v263, %v261
  %v296 = vpack.c.b16 %v264, %v262
  %329 = vmatprep.subr.bf16.mxu0 %v266
  %330 = vmatpush1.bf16.msra.mxu0 %v265
  %331 = vmatprep.subr.bf16.mxu0 %v268
  %332 = vmatpush1.bf16.msra.mxu0 %v267
  %333 = vmatprep.subr.bf16.mxu0 %v270
  %334 = vmatpush1.bf16.msra.mxu0 %v269
  %335 = vmatprep.subr.bf16.mxu0 %v272
  %336 = vmatpush1.bf16.msra.mxu0 %v271
  %337 = vmatprep.subr.bf16.mxu0 %v274
  %338 = vmatpush1.bf16.msra.mxu0 %v273
  %339 = vmatprep.subr.bf16.mxu0 %v276
  %340 = vmatpush1.bf16.msra.mxu0 %v275
  %341 = vmatprep.subr.bf16.mxu0 %v278
  %342 = vmatpush1.bf16.msra.mxu0 %v277
  %343 = vmatprep.subr.bf16.mxu0 %v280
  %344 = vmatpush1.bf16.msra.mxu0 %v279
  %345 = vmatprep.subr.bf16.mxu0 %v282
  %346 = vmatpush1.bf16.msra.mxu0 %v281
  %347 = vmatprep.subr.bf16.mxu0 %v284
  %348 = vmatpush1.bf16.msra.mxu0 %v283
  %349 = vmatprep.subr.bf16.mxu0 %v286
  %350 = vmatpush1.bf16.msra.mxu0 %v285
  %351 = vmatprep.subr.bf16.mxu0 %v288
  %352 = vmatpush1.bf16.msra.mxu0 %v287
  %353 = vmatprep.subr.bf16.mxu0 %v290
  %354 = vmatpush1.bf16.msra.mxu0 %v289
  %355 = vmatprep.subr.bf16.mxu0 %v292
  %356 = vmatpush1.bf16.msra.mxu0 %v291
  %357 = vmatprep.subr.bf16.mxu0 %v294
  %358 = vmatpush1.bf16.msra.mxu0 %v293
  %359 = vmatprep.subr.bf16.mxu0 %v296
  %360 = vmatpush1.bf16.msra.mxu0 %v295
  %361 = vmatprep.mubr.bf16.mxu0 %v124
  %362 = vmatmul.mubr.bf16.gmra.mrb[0].mxu0 %v123
  %v363 = vpop.f32.mrb[0].mxu0
  %v364 = vadd.f32 %v162, %v363
  %v365 = vpop.f32.mrb[0].mxu0
  %v366 = vadd.f32 %v166, %v365
  %v367 = vpop.f32.mrb[0].mxu0
  %v368 = vpop.f32.mrb[0].mxu0
  %369 = vdwg.mxu0
  %vm370 = vcmp.ge.f32.partialorder %v364, 0.0
  %vm371 = vcmp.ge.f32.partialorder %v366, 0.0
  %v372 = vmul.f32 %v364, 0.2
  %v373 = vmul.f32 %v366, 0.2
  %v374 = vsel %vm370, %v364, %v372
  %v375 = vsel %vm371, %v366, %v373
  %v376 = vld [vmem:[%s0] sm:$0x3]
  %v377 = vld [vmem:[%s6] sm:$0xff]
  %v378 = vld [vmem:[%s6 + $0x8] sm:$0xff]
  %v379 = vld [vmem:[%s6 + $0x10] sm:$0xff]
  %v380 = vld [vmem:[%s6 + $0x18] sm:$0xff]
  %v381 = vld [vmem:[%s6 + $0x20] sm:$0xff]
  %v382 = vld [vmem:[%s6 + $0x28] sm:$0xff]
  %v383 = vld [vmem:[%s6 + $0x30] sm:$0xff]
  %v384 = vld [vmem:[%s6 + $0x38] sm:$0xff]
  %v385 = vld [vmem:[%s6 + $0x40] sm:$0xff]
  %v386 = vld [vmem:[%s6 + $0x48] sm:$0xff]
  %v387 = vld [vmem:[%s6 + $0x50] sm:$0xff]
  %v388 = vld [vmem:[%s6 + $0x58] sm:$0xff]
  %v389 = vld [vmem:[%s6 + $0x60] sm:$0xff]
  %v390 = vld [vmem:[%s6 + $0x68] sm:$0xff]
  %v391 = vld [vmem:[%s6 + $0x70] sm:$0xff]
  %v392 = vld [vmem:[%s6 + $0x78] sm:$0xff]
  %v393 = vld [vmem:[%s6 + $0x80] sm:$0xff]
  %v394 = vld [vmem:[%s6 + $0x88] sm:$0xff]
  %v395 = vld [vmem:[%s6 + $0x90] sm:$0xff]
  %v396 = vld [vmem:[%s6 + $0x98] sm:$0xff]
  %v397 = vld [vmem:[%s6 + $0xa0] sm:$0xff]
  %v398 = vld [vmem:[%s6 + $0xa8] sm:$0xff]
  %v399 = vld [vmem:[%s6 + $0xb0] sm:$0xff]
  %v400 = vld [vmem:[%s6 + $0xb8] sm:$0xff]
  %v401 = vld [vmem:[%s6 + $0xc0] sm:$0xff]
  %v402 = vld [vmem:[%s6 + $0xc8] sm:$0xff]
  %v403 = vld [vmem:[%s6 + $0xd0] sm:$0xff]
  %v404 = vld [vmem:[%s6 + $0xd8] sm:$0xff]
  %v405 = vld [vmem:[%s6 + $0xe0] sm:$0xff]
  %v406 = vld [vmem:[%s6 + $0xe8] sm:$0xff]
  %v407 = vld [vmem:[%s6 + $0xf0] sm:$0xff]
  %v408 = vld [vmem:[%s6 + $0xf8] sm:$0xff]
  %v409 = vld [vmem:[%s6 + $0x100] sm:$0xff]
  %v410 = vld [vmem:[%s6 + $0x108] sm:$0xff]
  %v411 = vld [vmem:[%s6 + $0x110] sm:$0xff]
  %v412 = vld [vmem:[%s6 + $0x118] sm:$0xff]
  %v413 = vld [vmem:[%s6 + $0x120] sm:$0xff]
  %v414 = vld [vmem:[%s6 + $0x128] sm:$0xff]
  %v415 = vld [vmem:[%s6 + $0x130] sm:$0xff]
  %v416 = vld [vmem:[%s6 + $0x138] sm:$0xff]
  %v417 = vld [vmem:[%s6 + $0x140] sm:$0xff]
  %v418 = vld [vmem:[%s6 + $0x148] sm:$0xff]
  %v419 = vld [vmem:[%s6 + $0x150] sm:$0xff]
  %v420 = vld [vmem:[%s6 + $0x158] sm:$0xff]
  %v421 = vld [vmem:[%s6 + $0x160] sm:$0xff]
  %v422 = vld [vmem:[%s6 + $0x168] sm:$0xff]
  %v423 = vld [vmem:[%s6 + $0x170] sm:$0xff]
  %v424 = vld [vmem:[%s6 + $0x178] sm:$0xff]
  %v425 = vld [vmem:[%s6 + $0x180] sm:$0xff]
  %v426 = vld [vmem:[%s6 + $0x188] sm:$0xff]
  %v427 = vld [vmem:[%s6 + $0x190] sm:$0xff]
  %v428 = vld [vmem:[%s6 + $0x198] sm:$0xff]
  %v429 = vld [vmem:[%s6 + $0x1a0] sm:$0xff]
  %v430 = vld [vmem:[%s6 + $0x1a8] sm:$0xff]
  %v431 = vld [vmem:[%s6 + $0x1b0] sm:$0xff]
  %v432 = vld [vmem:[%s6 + $0x1b8] sm:$0xff]
  %v433 = vld [vmem:[%s6 + $0x1c0] sm:$0xff]
  %v434 = vld [vmem:[%s6 + $0x1c8] sm:$0xff]
  %v435 = vld [vmem:[%s6 + $0x1d0] sm:$0xff]
  %v436 = vld [vmem:[%s6 + $0x1d8] sm:$0xff]
  %v437 = vld [vmem:[%s6 + $0x1e0] sm:$0xff]
  %v438 = vld [vmem:[%s6 + $0x1e8] sm:$0xff]
  %v439 = vld [vmem:[%s6 + $0x1f0] sm:$0xff]
  %v440 = vld [vmem:[%s6 + $0x1f8] sm:$0xff]
  %v441 = vld [vmem:[%s6 + $0x200] sm:$0xff]
  %v442 = vld [vmem:[%s6 + $0x208] sm:$0xff]
  %v443 = vld [vmem:[%s6 + $0x210] sm:$0xff]
  %v444 = vld [vmem:[%s6 + $0x218] sm:$0xff]
  %v445 = vld [vmem:[%s6 + $0x220] sm:$0xff]
  %v446 = vld [vmem:[%s6 + $0x228] sm:$0xff]
  %v447 = vld [vmem:[%s6 + $0x230] sm:$0xff]
  %v448 = vld [vmem:[%s6 + $0x238] sm:$0xff]
  %v449 = vld [vmem:[%s6 + $0x240] sm:$0xff]
  %v450 = vld [vmem:[%s6 + $0x248] sm:$0xff]
  %v451 = vld [vmem:[%s6 + $0x250] sm:$0xff]
  %v452 = vld [vmem:[%s6 + $0x258] sm:$0xff]
  %v453 = vld [vmem:[%s6 + $0x260] sm:$0xff]
  %v454 = vld [vmem:[%s6 + $0x268] sm:$0xff]
  %v455 = vld [vmem:[%s6 + $0x270] sm:$0xff]
  %v456 = vld [vmem:[%s6 + $0x278] sm:$0xff]
  %v457 = vld [vmem:[%s6 + $0x280] sm:$0xff]
  %v458 = vld [vmem:[%s6 + $0x288] sm:$0xff]
  %v459 = vld [vmem:[%s6 + $0x290] sm:$0xff]
  %v460 = vld [vmem:[%s6 + $0x298] sm:$0xff]
  %v461 = vld [vmem:[%s6 + $0x2a0] sm:$0xff]
  %v462 = vld [vmem:[%s6 + $0x2a8] sm:$0xff]
  %v463 = vld [vmem:[%s6 + $0x2b0] sm:$0xff]
  %v464 = vld [vmem:[%s6 + $0x2b8] sm:$0xff]
  %v465 = vld [vmem:[%s6 + $0x2c0] sm:$0xff]
  %v466 = vld [vmem:[%s6 + $0x2c8] sm:$0xff]
  %v467 = vld [vmem:[%s6 + $0x2d0] sm:$0xff]
  %v468 = vld [vmem:[%s6 + $0x2d8] sm:$0xff]
  %v469 = vld [vmem:[%s6 + $0x2e0] sm:$0xff]
  %v470 = vld [vmem:[%s6 + $0x2e8] sm:$0xff]
  %v471 = vld [vmem:[%s6 + $0x2f0] sm:$0xff]
  %v472 = vld [vmem:[%s6 + $0x2f8] sm:$0xff]
  %v473 = vld [vmem:[%s6 + $0x300] sm:$0xff]
  %v474 = vld [vmem:[%s6 + $0x308] sm:$0xff]
  %v475 = vld [vmem:[%s6 + $0x310] sm:$0xff]
  %v476 = vld [vmem:[%s6 + $0x318] sm:$0xff]
  %v477 = vld [vmem:[%s6 + $0x320] sm:$0xff]
  %v478 = vld [vmem:[%s6 + $0x328] sm:$0xff]
  %v479 = vld [vmem:[%s6 + $0x330] sm:$0xff]
  %v480 = vld [vmem:[%s6 + $0x338] sm:$0xff]
  %v481 = vld [vmem:[%s6 + $0x340] sm:$0xff]
  %v482 = vld [vmem:[%s6 + $0x348] sm:$0xff]
  %v483 = vld [vmem:[%s6 + $0x350] sm:$0xff]
  %v484 = vld [vmem:[%s6 + $0x358] sm:$0xff]
  %v485 = vld [vmem:[%s6 + $0x360] sm:$0xff]
  %v486 = vld [vmem:[%s6 + $0x368] sm:$0xff]
  %v487 = vld [vmem:[%s6 + $0x370] sm:$0xff]
  %v488 = vld [vmem:[%s6 + $0x378] sm:$0xff]
  %v489 = vld [vmem:[%s6 + $0x380] sm:$0xff]
  %v490 = vld [vmem:[%s6 + $0x388] sm:$0xff]
  %v491 = vld [vmem:[%s6 + $0x390] sm:$0xff]
  %v492 = vld [vmem:[%s6 + $0x398] sm:$0xff]
  %v493 = vld [vmem:[%s6 + $0x3a0] sm:$0xff]
  %v494 = vld [vmem:[%s6 + $0x3a8] sm:$0xff]
  %v495 = vld [vmem:[%s6 + $0x3b0] sm:$0xff]
  %v496 = vld [vmem:[%s6 + $0x3b8] sm:$0xff]
  %v497 = vld [vmem:[%s6 + $0x3c0] sm:$0xff]
  %v498 = vld [vmem:[%s6 + $0x3c8] sm:$0xff]
  %v499 = vld [vmem:[%s6 + $0x3d0] sm:$0xff]
  %v500 = vld [vmem:[%s6 + $0x3d8] sm:$0xff]
  %v501 = vld [vmem:[%s6 + $0x3e0] sm:$0xff]
  %v502 = vld [vmem:[%s6 + $0x3e8] sm:$0xff]
  %v503 = vld [vmem:[%s6 + $0x3f0] sm:$0xff]
  %v504 = vld [vmem:[%s6 + $0x3f8] sm:$0xff]
  %v505 = vpack.c.bf16 %v374, %v374
  %v506 = vpack.c.bf16 %v375, %v375
  %v507 = vld [vmem:[%s7] sm:$0xff]
  %v508 = vld [vmem:[%s7 + $0x8] sm:$0xff]
  %v509 = vld [vmem:[%s7 + $0x10] sm:$0xff]
  %v510 = vld [vmem:[%s7 + $0x18] sm:$0xff]
  %v511 = vld [vmem:[%s7 + $0x20] sm:$0xff]
  %v512 = vld [vmem:[%s7 + $0x28] sm:$0xff]
  %v513 = vld [vmem:[%s7 + $0x30] sm:$0xff]
  %v514 = vld [vmem:[%s7 + $0x38] sm:$0xff]
  %v515 = vld [vmem:[%s7 + $0x40] sm:$0xff]
  %v516 = vld [vmem:[%s7 + $0x48] sm:$0xff]
  %v517 = vld [vmem:[%s7 + $0x50] sm:$0xff]
  %v518 = vld [vmem:[%s7 + $0x58] sm:$0xff]
  %v519 = vld [vmem:[%s7 + $0x60] sm:$0xff]
  %v520 = vld [vmem:[%s7 + $0x68] sm:$0xff]
  %v521 = vld [vmem:[%s7 + $0x70] sm:$0xff]
  %v522 = vld [vmem:[%s7 + $0x78] sm:$0xff]
  %v523 = vld [vmem:[%s7 + $0x80] sm:$0xff]
  %v524 = vld [vmem:[%s7 + $0x88] sm:$0xff]
  %v525 = vld [vmem:[%s7 + $0x90] sm:$0xff]
  %v526 = vld [vmem:[%s7 + $0x98] sm:$0xff]
  %v527 = vld [vmem:[%s7 + $0xa0] sm:$0xff]
  %v528 = vld [vmem:[%s7 + $0xa8] sm:$0xff]
  %v529 = vld [vmem:[%s7 + $0xb0] sm:$0xff]
  %v530 = vld [vmem:[%s7 + $0xb8] sm:$0xff]
  %v531 = vld [vmem:[%s7 + $0xc0] sm:$0xff]
  %v532 = vld [vmem:[%s7 + $0xc8] sm:$0xff]
  %v533 = vld [vmem:[%s7 + $0xd0] sm:$0xff]
  %v534 = vld [vmem:[%s7 + $0xd8] sm:$0xff]
  %v535 = vld [vmem:[%s7 + $0xe0] sm:$0xff]
  %v536 = vld [vmem:[%s7 + $0xe8] sm:$0xff]
  %v537 = vld [vmem:[%s7 + $0xf0] sm:$0xff]
  %v538 = vld [vmem:[%s7 + $0xf8] sm:$0xff]
  %v539 = vld [vmem:[%s7 + $0x100] sm:$0xff]
  %v540 = vld [vmem:[%s7 + $0x108] sm:$0xff]
  %v541 = vld [vmem:[%s7 + $0x110] sm:$0xff]
  %v542 = vld [vmem:[%s7 + $0x118] sm:$0xff]
  %v543 = vld [vmem:[%s7 + $0x120] sm:$0xff]
  %v544 = vld [vmem:[%s7 + $0x128] sm:$0xff]
  %v545 = vld [vmem:[%s7 + $0x130] sm:$0xff]
  %v546 = vld [vmem:[%s7 + $0x138] sm:$0xff]
  %v547 = vld [vmem:[%s7 + $0x140] sm:$0xff]
  %v548 = vld [vmem:[%s7 + $0x148] sm:$0xff]
  %v549 = vld [vmem:[%s7 + $0x150] sm:$0xff]
  %v550 = vld [vmem:[%s7 + $0x158] sm:$0xff]
  %v551 = vld [vmem:[%s7 + $0x160] sm:$0xff]
  %v552 = vld [vmem:[%s7 + $0x168] sm:$0xff]
  %v553 = vld [vmem:[%s7 + $0x170] sm:$0xff]
  %v554 = vld [vmem:[%s7 + $0x178] sm:$0xff]
  %v555 = vld [vmem:[%s7 + $0x180] sm:$0xff]
  %v556 = vld [vmem:[%s7 + $0x188] sm:$0xff]
  %v557 = vld [vmem:[%s7 + $0x190] sm:$0xff]
  %v558 = vld [vmem:[%s7 + $0x198] sm:$0xff]
  %v559 = vld [vmem:[%s7 + $0x1a0] sm:$0xff]
  %v560 = vld [vmem:[%s7 + $0x1a8] sm:$0xff]
  %v561 = vld [vmem:[%s7 + $0x1b0] sm:$0xff]
  %v562 = vld [vmem:[%s7 + $0x1b8] sm:$0xff]
  %v563 = vld [vmem:[%s7 + $0x1c0] sm:$0xff]
  %v564 = vld [vmem:[%s7 + $0x1c8] sm:$0xff]
  %v565 = vld [vmem:[%s7 + $0x1d0] sm:$0xff]
  %v566 = vld [vmem:[%s7 + $0x1d8] sm:$0xff]
  %v567 = vld [vmem:[%s7 + $0x1e0] sm:$0xff]
  %v568 = vld [vmem:[%s7 + $0x1e8] sm:$0xff]
  %v569 = vld [vmem:[%s7 + $0x1f0] sm:$0xff]
  %v570 = vld [vmem:[%s7 + $0x1f8] sm:$0xff]
  %v571 = vld [vmem:[%s7 + $0x200] sm:$0xff]
  %v572 = vld [vmem:[%s7 + $0x208] sm:$0xff]
  %v573 = vld [vmem:[%s7 + $0x210] sm:$0xff]
  %v574 = vld [vmem:[%s7 + $0x218] sm:$0xff]
  %v575 = vld [vmem:[%s7 + $0x220] sm:$0xff]
  %v576 = vld [vmem:[%s7 + $0x228] sm:$0xff]
  %v577 = vld [vmem:[%s7 + $0x230] sm:$0xff]
  %v578 = vld [vmem:[%s7 + $0x238] sm:$0xff]
  %v579 = vld [vmem:[%s7 + $0x240] sm:$0xff]
  %v580 = vld [vmem:[%s7 + $0x248] sm:$0xff]
  %v581 = vld [vmem:[%s7 + $0x250] sm:$0xff]
  %v582 = vld [vmem:[%s7 + $0x258] sm:$0xff]
  %v583 = vld [vmem:[%s7 + $0x260] sm:$0xff]
  %v584 = vld [vmem:[%s7 + $0x268] sm:$0xff]
  %v585 = vld [vmem:[%s7 + $0x270] sm:$0xff]
  %v586 = vld [vmem:[%s7 + $0x278] sm:$0xff]
  %v587 = vld [vmem:[%s7 + $0x280] sm:$0xff]
  %v588 = vld [vmem:[%s7 + $0x288] sm:$0xff]
  %v589 = vld [vmem:[%s7 + $0x290] sm:$0xff]
  %v590 = vld [vmem:[%s7 + $0x298] sm:$0xff]
  %v591 = vld [vmem:[%s7 + $0x2a0] sm:$0xff]
  %v592 = vld [vmem:[%s7 + $0x2a8] sm:$0xff]
  %v593 = vld [vmem:[%s7 + $0x2b0] sm:$0xff]
  %v594 = vld [vmem:[%s7 + $0x2b8] sm:$0xff]
  %v595 = vld [vmem:[%s7 + $0x2c0] sm:$0xff]
  %v596 = vld [vmem:[%s7 + $0x2c8] sm:$0xff]
  %v597 = vld [vmem:[%s7 + $0x2d0] sm:$0xff]
  %v598 = vld [vmem:[%s7 + $0x2d8] sm:$0xff]
  %v599 = vld [vmem:[%s7 + $0x2e0] sm:$0xff]
  %v600 = vld [vmem:[%s7 + $0x2e8] sm:$0xff]
  %v601 = vld [vmem:[%s7 + $0x2f0] sm:$0xff]
  %v602 = vld [vmem:[%s7 + $0x2f8] sm:$0xff]
  %v603 = vld [vmem:[%s7 + $0x300] sm:$0xff]
  %v604 = vld [vmem:[%s7 + $0x308] sm:$0xff]
  %v605 = vld [vmem:[%s7 + $0x310] sm:$0xff]
  %v606 = vld [vmem:[%s7 + $0x318] sm:$0xff]
  %v607 = vld [vmem:[%s7 + $0x320] sm:$0xff]
  %v608 = vld [vmem:[%s7 + $0x328] sm:$0xff]
  %v609 = vld [vmem:[%s7 + $0x330] sm:$0xff]
  %v610 = vld [vmem:[%s7 + $0x338] sm:$0xff]
  %v611 = vld [vmem:[%s7 + $0x340] sm:$0xff]
  %v612 = vld [vmem:[%s7 + $0x348] sm:$0xff]
  %v613 = vld [vmem:[%s7 + $0x350] sm:$0xff]
  %v614 = vld [vmem:[%s7 + $0x358] sm:$0xff]
  %v615 = vld [vmem:[%s7 + $0x360] sm:$0xff]
  %v616 = vld [vmem:[%s7 + $0x368] sm:$0xff]
  %v617 = vld [vmem:[%s7 + $0x370] sm:$0xff]
  %v618 = vld [vmem:[%s7 + $0x378] sm:$0xff]
  %v619 = vld [vmem:[%s7 + $0x380] sm:$0xff]
  %v620 = vld [vmem:[%s7 + $0x388] sm:$0xff]
  %v621 = vld [vmem:[%s7 + $0x390] sm:$0xff]
  %v622 = vld [vmem:[%s7 + $0x398] sm:$0xff]
  %v623 = vld [vmem:[%s7 + $0x3a0] sm:$0xff]
  %v624 = vld [vmem:[%s7 + $0x3a8] sm:$0xff]
  %v625 = vld [vmem:[%s7 + $0x3b0] sm:$0xff]
  %v626 = vld [vmem:[%s7 + $0x3b8] sm:$0xff]
  %v627 = vld [vmem:[%s7 + $0x3c0] sm:$0xff]
  %v628 = vld [vmem:[%s7 + $0x3c8] sm:$0xff]
  %v629 = vld [vmem:[%s7 + $0x3d0] sm:$0xff]
  %v630 = vld [vmem:[%s7 + $0x3d8] sm:$0xff]
  %v631 = vld [vmem:[%s7 + $0x3e0] sm:$0xff]
  %v632 = vld [vmem:[%s7 + $0x3e8] sm:$0xff]
  %v633 = vld [vmem:[%s7 + $0x3f0] sm:$0xff]
  %v634 = vld [vmem:[%s7 + $0x3f8] sm:$0xff]
  %v763 = vunpack.c.l.b16 %v507
  %v764 = vunpack.c.h.b16 %v507
  %v765 = vunpack.c.l.b16 %v508
  %v766 = vunpack.c.h.b16 %v508
  %v767 = vunpack.c.l.b16 %v509
  %v768 = vunpack.c.h.b16 %v509
  %v769 = vunpack.c.l.b16 %v510
  %v770 = vunpack.c.h.b16 %v510
  %v771 = vunpack.c.l.b16 %v511
  %v772 = vunpack.c.h.b16 %v511
  %v773 = vunpack.c.l.b16 %v512
  %v774 = vunpack.c.h.b16 %v512
  %v775 = vunpack.c.l.b16 %v513
  %v776 = vunpack.c.h.b16 %v513
  %v777 = vunpack.c.l.b16 %v514
  %v778 = vunpack.c.h.b16 %v514
  %v779 = vunpack.c.l.b16 %v515
  %v780 = vunpack.c.h.b16 %v515
  %v781 = vunpack.c.l.b16 %v516
  %v782 = vunpack.c.h.b16 %v516
  %v783 = vunpack.c.l.b16 %v517
  %v784 = vunpack.c.h.b16 %v517
  %v785 = vunpack.c.l.b16 %v518
  %v786 = vunpack.c.h.b16 %v518
  %v787 = vunpack.c.l.b16 %v519
  %v788 = vunpack.c.h.b16 %v519
  %v789 = vunpack.c.l.b16 %v520
  %v790 = vunpack.c.h.b16 %v520
  %v791 = vunpack.c.l.b16 %v521
  %v792 = vunpack.c.h.b16 %v521
  %v793 = vunpack.c.l.b16 %v522
  %v794 = vunpack.c.h.b16 %v522
  %v795 = vunpack.c.l.b16 %v523
  %v796 = vunpack.c.h.b16 %v523
  %v797 = vunpack.c.l.b16 %v524
  %v798 = vunpack.c.h.b16 %v524
  %v799 = vunpack.c.l.b16 %v525
  %v800 = vunpack.c.h.b16 %v525
  %v801 = vunpack.c.l.b16 %v526
  %v802 = vunpack.c.h.b16 %v526
  %v803 = vunpack.c.l.b16 %v527
  %v804 = vunpack.c.h.b16 %v527
  %v805 = vunpack.c.l.b16 %v528
  %v806 = vunpack.c.h.b16 %v528
  %v807 = vunpack.c.l.b16 %v529
  %v808 = vunpack.c.h.b16 %v529
  %v809 = vunpack.c.l.b16 %v530
  %v810 = vunpack.c.h.b16 %v530
  %v811 = vunpack.c.l.b16 %v531
  %v812 = vunpack.c.h.b16 %v531
  %v813 = vunpack.c.l.b16 %v532
  %v814 = vunpack.c.h.b16 %v532
  %v815 = vunpack.c.l.b16 %v533
  %v816 = vunpack.c.h.b16 %v533
  %v817 = vunpack.c.l.b16 %v534
  %v818 = vunpack.c.h.b16 %v534
  %v819 = vunpack.c.l.b16 %v535
  %v820 = vunpack.c.h.b16 %v535
  %v821 = vunpack.c.l.b16 %v536
  %v822 = vunpack.c.h.b16 %v536
  %v823 = vunpack.c.l.b16 %v537
  %v824 = vunpack.c.h.b16 %v537
  %v825 = vunpack.c.l.b16 %v538
  %v826 = vunpack.c.h.b16 %v538
  %v827 = vunpack.c.l.b16 %v539
  %v828 = vunpack.c.h.b16 %v539
  %v829 = vunpack.c.l.b16 %v540
  %v830 = vunpack.c.h.b16 %v540
  %v831 = vunpack.c.l.b16 %v541
  %v832 = vunpack.c.h.b16 %v541
  %v833 = vunpack.c.l.b16 %v542
  %v834 = vunpack.c.h.b16 %v542
  %v835 = vunpack.c.l.b16 %v543
  %v836 = vunpack.c.h.b16 %v543
  %v837 = vunpack.c.l.b16 %v544
  %v838 = vunpack.c.h.b16 %v544
  %v839 = vunpack.c.l.b16 %v545
  %v840 = vunpack.c.h.b16 %v545
  %v841 = vunpack.c.l.b16 %v546
  %v842 = vunpack.c.h.b16 %v546
  %v843 = vunpack.c.l.b16 %v547
  %v844 = vunpack.c.h.b16 %v547
  %v845 = vunpack.c.l.b16 %v548
  %v846 = vunpack.c.h.b16 %v548
  %v847 = vunpack.c.l.b16 %v549
  %v848 = vunpack.c.h.b16 %v549
  %v849 = vunpack.c.l.b16 %v550
  %v850 = vunpack.c.h.b16 %v550
  %v851 = vunpack.c.l.b16 %v551
  %v852 = vunpack.c.h.b16 %v551
  %v853 = vunpack.c.l.b16 %v552
  %v854 = vunpack.c.h.b16 %v552
  %v855 = vunpack.c.l.b16 %v553
  %v856 = vunpack.c.h.b16 %v553
  %v857 = vunpack.c.l.b16 %v554
  %v858 = vunpack.c.h.b16 %v554
  %v859 = vunpack.c.l.b16 %v555
  %v860 = vunpack.c.h.b16 %v555
  %v861 = vunpack.c.l.b16 %v556
  %v862 = vunpack.c.h.b16 %v556
  %v863 = vunpack.c.l.b16 %v557
  %v864 = vunpack.c.h.b16 %v557
  %v865 = vunpack.c.l.b16 %v558
  %v866 = vunpack.c.h.b16 %v558
  %v867 = vunpack.c.l.b16 %v559
  %v868 = vunpack.c.h.b16 %v559
  %v869 = vunpack.c.l.b16 %v560
  %v870 = vunpack.c.h.b16 %v560
  %v871 = vunpack.c.l.b16 %v561
  %v872 = vunpack.c.h.b16 %v561
  %v873 = vunpack.c.l.b16 %v562
  %v874 = vunpack.c.h.b16 %v562
  %v875 = vunpack.c.l.b16 %v563
  %v876 = vunpack.c.h.b16 %v563
  %v877 = vunpack.c.l.b16 %v564
  %v878 = vunpack.c.h.b16 %v564
  %v879 = vunpack.c.l.b16 %v565
  %v880 = vunpack.c.h.b16 %v565
  %v881 = vunpack.c.l.b16 %v566
  %v882 = vunpack.c.h.b16 %v566
  %v883 = vunpack.c.l.b16 %v567
  %v884 = vunpack.c.h.b16 %v567
  %v885 = vunpack.c.l.b16 %v568
  %v886 = vunpack.c.h.b16 %v568
  %v887 = vunpack.c.l.b16 %v569
  %v888 = vunpack.c.h.b16 %v569
  %v889 = vunpack.c.l.b16 %v570
  %v890 = vunpack.c.h.b16 %v570
  %v891 = vunpack.c.l.b16 %v571
  %v892 = vunpack.c.h.b16 %v571
  %v893 = vunpack.c.l.b16 %v572
  %v894 = vunpack.c.h.b16 %v572
  %v895 = vunpack.c.l.b16 %v573
  %v896 = vunpack.c.h.b16 %v573
  %v897 = vunpack.c.l.b16 %v574
  %v898 = vunpack.c.h.b16 %v574
  %v899 = vunpack.c.l.b16 %v575
  %v900 = vunpack.c.h.b16 %v575
  %v901 = vunpack.c.l.b16 %v576
  %v902 = vunpack.c.h.b16 %v576
  %v903 = vunpack.c.l.b16 %v577
  %v904 = vunpack.c.h.b16 %v577
  %v905 = vunpack.c.l.b16 %v578
  %v906 = vunpack.c.h.b16 %v578
  %v907 = vunpack.c.l.b16 %v579
  %v908 = vunpack.c.h.b16 %v579
  %v909 = vunpack.c.l.b16 %v580
  %v910 = vunpack.c.h.b16 %v580
  %v911 = vunpack.c.l.b16 %v581
  %v912 = vunpack.c.h.b16 %v581
  %v913 = vunpack.c.l.b16 %v582
  %v914 = vunpack.c.h.b16 %v582
  %v915 = vunpack.c.l.b16 %v583
  %v916 = vunpack.c.h.b16 %v583
  %v917 = vunpack.c.l.b16 %v584
  %v918 = vunpack.c.h.b16 %v584
  %v919 = vunpack.c.l.b16 %v585
  %v920 = vunpack.c.h.b16 %v585
  %v921 = vunpack.c.l.b16 %v586
  %v922 = vunpack.c.h.b16 %v586
  %v923 = vunpack.c.l.b16 %v587
  %v924 = vunpack.c.h.b16 %v587
  %v925 = vunpack.c.l.b16 %v588
  %v926 = vunpack.c.h.b16 %v588
  %v927 = vunpack.c.l.b16 %v589
  %v928 = vunpack.c.h.b16 %v589
  %v929 = vunpack.c.l.b16 %v590
  %v930 = vunpack.c.h.b16 %v590
  %v931 = vunpack.c.l.b16 %v591
  %v932 = vunpack.c.h.b16 %v591
  %v933 = vunpack.c.l.b16 %v592
  %v934 = vunpack.c.h.b16 %v592
  %v935 = vunpack.c.l.b16 %v593
  %v936 = vunpack.c.h.b16 %v593
  %v937 = vunpack.c.l.b16 %v594
  %v938 = vunpack.c.h.b16 %v594
  %v939 = vunpack.c.l.b16 %v595
  %v940 = vunpack.c.h.b16 %v595
  %v941 = vunpack.c.l.b16 %v596
  %v942 = vunpack.c.h.b16 %v596
  %v943 = vunpack.c.l.b16 %v597
  %v944 = vunpack.c.h.b16 %v597
  %v945 = vunpack.c.l.b16 %v598
  %v946 = vunpack.c.h.b16 %v598
  %v947 = vunpack.c.l.b16 %v599
  %v948 = vunpack.c.h.b16 %v599
  %v949 = vunpack.c.l.b16 %v600
  %v950 = vunpack.c.h.b16 %v600
  %v951 = vunpack.c.l.b16 %v601
  %v952 = vunpack.c.h.b16 %v601
  %v953 = vunpack.c.l.b16 %v602
  %v954 = vunpack.c.h.b16 %v602
  %v955 = vunpack.c.l.b16 %v603
  %v956 = vunpack.c.h.b16 %v603
  %v957 = vunpack.c.l.b16 %v604
  %v958 = vunpack.c.h.b16 %v604
  %v959 = vunpack.c.l.b16 %v605
  %v960 = vunpack.c.h.b16 %v605
  %v961 = vunpack.c.l.b16 %v606
  %v962 = vunpack.c.h.b16 %v606
  %v963 = vunpack.c.l.b16 %v607
  %v964 = vunpack.c.h.b16 %v607
  %v965 = vunpack.c.l.b16 %v608
  %v966 = vunpack.c.h.b16 %v608
  %v967 = vunpack.c.l.b16 %v609
  %v968 = vunpack.c.h.b16 %v609
  %v969 = vunpack.c.l.b16 %v610
  %v970 = vunpack.c.h.b16 %v610
  %v971 = vunpack.c.l.b16 %v611
  %v972 = vunpack.c.h.b16 %v611
  %v973 = vunpack.c.l.b16 %v612
  %v974 = vunpack.c.h.b16 %v612
  %v975 = vunpack.c.l.b16 %v613
  %v976 = vunpack.c.h.b16 %v613
  %v977 = vunpack.c.l.b16 %v614
  %v978 = vunpack.c.h.b16 %v614
  %v979 = vunpack.c.l.b16 %v615
  %v980 = vunpack.c.h.b16 %v615
  %v981 = vunpack.c.l.b16 %v616
  %v982 = vunpack.c.h.b16 %v616
  %v983 = vunpack.c.l.b16 %v617
  %v984 = vunpack.c.h.b16 %v617
  %v985 = vunpack.c.l.b16 %v618
  %v986 = vunpack.c.h.b16 %v618
  %v987 = vunpack.c.l.b16 %v619
  %v988 = vunpack.c.h.b16 %v619
  %v989 = vunpack.c.l.b16 %v620
  %v990 = vunpack.c.h.b16 %v620
  %v991 = vunpack.c.l.b16 %v621
  %v992 = vunpack.c.h.b16 %v621
  %v993 = vunpack.c.l.b16 %v622
  %v994 = vunpack.c.h.b16 %v622
  %v995 = vunpack.c.l.b16 %v623
  %v996 = vunpack.c.h.b16 %v623
  %v997 = vunpack.c.l.b16 %v624
  %v998 = vunpack.c.h.b16 %v624
  %v999 = vunpack.c.l.b16 %v625
  %v1000 = vunpack.c.h.b16 %v625
  %v1001 = vunpack.c.l.b16 %v626
  %v1002 = vunpack.c.h.b16 %v626
  %v1003 = vunpack.c.l.b16 %v627
  %v1004 = vunpack.c.h.b16 %v627
  %v1005 = vunpack.c.l.b16 %v628
  %v1006 = vunpack.c.h.b16 %v628
  %v1007 = vunpack.c.l.b16 %v629
  %v1008 = vunpack.c.h.b16 %v629
  %v1009 = vunpack.c.l.b16 %v630
  %v1010 = vunpack.c.h.b16 %v630
  %v1011 = vunpack.c.l.b16 %v631
  %v1012 = vunpack.c.h.b16 %v631
  %v1013 = vunpack.c.l.b16 %v632
  %v1014 = vunpack.c.h.b16 %v632
  %v1015 = vunpack.c.l.b16 %v633
  %v1016 = vunpack.c.h.b16 %v633
  %v1017 = vunpack.c.l.b16 %v634
  %v1018 = vunpack.c.h.b16 %v634
  %v1019 = vpack.c.b16 %v771, %v763
  %v1020 = vpack.c.b16 %v772, %v764
  %v1021 = vpack.c.b16 %v773, %v765
  %v1022 = vpack.c.b16 %v774, %v766
  %v1023 = vpack.c.b16 %v775, %v767
  %v1024 = vpack.c.b16 %v776, %v768
  %v1025 = vpack.c.b16 %v777, %v769
  %v1026 = vpack.c.b16 %v778, %v770
  %v1027 = vpack.c.b16 %v787, %v779
  %v1028 = vpack.c.b16 %v788, %v780
  %v1029 = vpack.c.b16 %v789, %v781
  %v1030 = vpack.c.b16 %v790, %v782
  %v1031 = vpack.c.b16 %v791, %v783
  %v1032 = vpack.c.b16 %v792, %v784
  %v1033 = vpack.c.b16 %v793, %v785
  %v1034 = vpack.c.b16 %v794, %v786
  %v1035 = vpack.c.b16 %v803, %v795
  %v1036 = vpack.c.b16 %v804, %v796
  %v1037 = vpack.c.b16 %v805, %v797
  %v1038 = vpack.c.b16 %v806, %v798
  %v1039 = vpack.c.b16 %v807, %v799
  %v1040 = vpack.c.b16 %v808, %v800
  %v1041 = vpack.c.b16 %v809, %v801
  %v1042 = vpack.c.b16 %v810, %v802
  %v1043 = vpack.c.b16 %v819, %v811
  %v1044 = vpack.c.b16 %v820, %v812
  %v1045 = vpack.c.b16 %v821, %v813
  %v1046 = vpack.c.b16 %v822, %v814
  %v1047 = vpack.c.b16 %v823, %v815
  %v1048 = vpack.c.b16 %v824, %v816
  %v1049 = vpack.c.b16 %v825, %v817
  %v1050 = vpack.c.b16 %v826, %v818
  %v1051 = vpack.c.b16 %v835, %v827
  %v1052 = vpack.c.b16 %v836, %v828
  %v1053 = vpack.c.b16 %v837, %v829
  %v1054 = vpack.c.b16 %v838, %v830
  %v1055 = vpack.c.b16 %v839, %v831
  %v1056 = vpack.c.b16 %v840, %v832
  %v1057 = vpack.c.b16 %v841, %v833
  %v1058 = vpack.c.b16 %v842, %v834
  %v1059 = vpack.c.b16 %v851, %v843
  %v1060 = vpack.c.b16 %v852, %v844
  %v1061 = vpack.c.b16 %v853, %v845
  %v1062 = vpack.c.b16 %v854, %v846
  %v1063 = vpack.c.b16 %v855, %v847
  %v1064 = vpack.c.b16 %v856, %v848
  %v1065 = vpack.c.b16 %v857, %v849
  %v1066 = vpack.c.b16 %v858, %v850
  %v1067 = vpack.c.b16 %v867, %v859
  %v1068 = vpack.c.b16 %v868, %v860
  %v1069 = vpack.c.b16 %v869, %v861
  %v1070 = vpack.c.b16 %v870, %v862
  %v1071 = vpack.c.b16 %v871, %v863
  %v1072 = vpack.c.b16 %v872, %v864
  %v1073 = vpack.c.b16 %v873, %v865
  %v1074 = vpack.c.b16 %v874, %v866
  %v1075 = vpack.c.b16 %v883, %v875
  %v1076 = vpack.c.b16 %v884, %v876
  %v1077 = vpack.c.b16 %v885, %v877
  %v1078 = vpack.c.b16 %v886, %v878
  %v1079 = vpack.c.b16 %v887, %v879
  %v1080 = vpack.c.b16 %v888, %v880
  %v1081 = vpack.c.b16 %v889, %v881
  %v1082 = vpack.c.b16 %v890, %v882
  %v1083 = vpack.c.b16 %v899, %v891
  %v1084 = vpack.c.b16 %v900, %v892
  %v1085 = vpack.c.b16 %v901, %v893
  %v1086 = vpack.c.b16 %v902, %v894
  %v1087 = vpack.c.b16 %v903, %v895
  %v1088 = vpack.c.b16 %v904, %v896
  %v1089 = vpack.c.b16 %v905, %v897
  %v1090 = vpack.c.b16 %v906, %v898
  %v1091 = vpack.c.b16 %v915, %v907
  %v1092 = vpack.c.b16 %v916, %v908
  %v1093 = vpack.c.b16 %v917, %v909
  %v1094 = vpack.c.b16 %v918, %v910
  %v1095 = vpack.c.b16 %v919, %v911
  %v1096 = vpack.c.b16 %v920, %v912
  %v1097 = vpack.c.b16 %v921, %v913
  %v1098 = vpack.c.b16 %v922, %v914
  %v1099 = vpack.c.b16 %v931, %v923
  %v1100 = vpack.c.b16 %v932, %v924
  %v1101 = vpack.c.b16 %v933, %v925
  %v1102 = vpack.c.b16 %v934, %v926
  %v1103 = vpack.c.b16 %v935, %v927
  %v1104 = vpack.c.b16 %v936, %v928
  %v1105 = vpack.c.b16 %v937, %v929
  %v1106 = vpack.c.b16 %v938, %v930
  %v1107 = vpack.c.b16 %v947, %v939
  %v1108 = vpack.c.b16 %v948, %v940
  %v1109 = vpack.c.b16 %v949, %v941
  %v1110 = vpack.c.b16 %v950, %v942
  %v1111 = vpack.c.b16 %v951, %v943
  %v1112 = vpack.c.b16 %v952, %v944
  %v1113 = vpack.c.b16 %v953, %v945
  %v1114 = vpack.c.b16 %v954, %v946
  %v1115 = vpack.c.b16 %v963, %v955
  %v1116 = vpack.c.b16 %v964, %v956
  %v1117 = vpack.c.b16 %v965, %v957
  %v1118 = vpack.c.b16 %v966, %v958
  %v1119 = vpack.c.b16 %v967, %v959
  %v1120 = vpack.c.b16 %v968, %v960
  %v1121 = vpack.c.b16 %v969, %v961
  %v1122 = vpack.c.b16 %v970, %v962
  %v1123 = vpack.c.b16 %v979, %v971
  %v1124 = vpack.c.b16 %v980, %v972
  %v1125 = vpack.c.b16 %v981, %v973
  %v1126 = vpack.c.b16 %v982, %v974
  %v1127 = vpack.c.b16 %v983, %v975
  %v1128 = vpack.c.b16 %v984, %v976
  %v1129 = vpack.c.b16 %v985, %v977
  %v1130 = vpack.c.b16 %v986, %v978
  %v1131 = vpack.c.b16 %v995, %v987
  %v1132 = vpack.c.b16 %v996, %v988
  %v1133 = vpack.c.b16 %v997, %v989
  %v1134 = vpack.c.b16 %v998, %v990
  %v1135 = vpack.c.b16 %v999, %v991
  %v1136 = vpack.c.b16 %v1000, %v992
  %v1137 = vpack.c.b16 %v1001, %v993
  %v1138 = vpack.c.b16 %v1002, %v994
  %v1139 = vpack.c.b16 %v1011, %v1003
  %v1140 = vpack.c.b16 %v1012, %v1004
  %v1141 = vpack.c.b16 %v1013, %v1005
  %v1142 = vpack.c.b16 %v1014, %v1006
  %v1143 = vpack.c.b16 %v1015, %v1007
  %v1144 = vpack.c.b16 %v1016, %v1008
  %v1145 = vpack.c.b16 %v1017, %v1009
  %v1146 = vpack.c.b16 %v1018, %v1010
  %1275 = vmatprep.subr.bf16.mxu0 %v1020
  %1276 = vmatpush1.bf16.msra.mxu0 %v1019
  %1277 = vmatprep.subr.bf16.mxu0 %v1028
  %1278 = vmatpush1.bf16.msra.mxu0 %v1027
  %1279 = vmatprep.subr.bf16.mxu0 %v1036
  %1280 = vmatpush1.bf16.msra.mxu0 %v1035
  %1281 = vmatprep.subr.bf16.mxu0 %v1044
  %1282 = vmatpush1.bf16.msra.mxu0 %v1043
  %1283 = vmatprep.subr.bf16.mxu0 %v1052
  %1284 = vmatpush1.bf16.msra.mxu0 %v1051
  %1285 = vmatprep.subr.bf16.mxu0 %v1060
  %1286 = vmatpush1.bf16.msra.mxu0 %v1059
  %1287 = vmatprep.subr.bf16.mxu0 %v1068
  %1288 = vmatpush1.bf16.msra.mxu0 %v1067
  %1289 = vmatprep.subr.bf16.mxu0 %v1076
  %1290 = vmatpush1.bf16.msra.mxu0 %v1075
  %1291 = vmatprep.subr.bf16.mxu0 %v1084
  %1292 = vmatpush1.bf16.msra.mxu0 %v1083
  %1293 = vmatprep.subr.bf16.mxu0 %v1092
  %1294 = vmatpush1.bf16.msra.mxu0 %v1091
  %1295 = vmatprep.subr.bf16.mxu0 %v1100
  %1296 = vmatpush1.bf16.msra.mxu0 %v1099
  %1297 = vmatprep.subr.bf16.mxu0 %v1108
  %1298 = vmatpush1.bf16.msra.mxu0 %v1107
  %1299 = vmatprep.subr.bf16.mxu0 %v1116
  %1300 = vmatpush1.bf16.msra.mxu0 %v1115
  %1301 = vmatprep.subr.bf16.mxu0 %v1124
  %1302 = vmatpush1.bf16.msra.mxu0 %v1123
  %1303 = vmatprep.subr.bf16.mxu0 %v1132
  %1304 = vmatpush1.bf16.msra.mxu0 %v1131
  %1305 = vmatprep.subr.bf16.mxu0 %v1140
  %1306 = vmatpush1.bf16.msra.mxu0 %v1139
  %1307 = vmatprep.mubr.bf16.mxu0 %v506
  %1308 = vmatmul.mubr.bf16.gmra.mrb[0].mxu0 %v505
  %v1309 = vpop.f32.mrb[0].mxu0
  %v1310 = vadd.f32 0.0, %v1309
  %v1311 = vpop.f32.mrb[0].mxu0
  %v1312 = vadd.f32 0.0, %v1311
  %v1313 = vpop.f32.mrb[0].mxu0
  %v1314 = vpop.f32.mrb[0].mxu0
  %1315 = vdwg.mxu0
  %1316 = vmatprep.subr.bf16.mxu0 %v1022
  %1317 = vmatpush1.bf16.msra.mxu0 %v1021
  %1318 = vmatprep.subr.bf16.mxu0 %v1030
  %1319 = vmatpush1.bf16.msra.mxu0 %v1029
  %1320 = vmatprep.subr.bf16.mxu0 %v1038
  %1321 = vmatpush1.bf16.msra.mxu0 %v1037
  %1322 = vmatprep.subr.bf16.mxu0 %v1046
  %1323 = vmatpush1.bf16.msra.mxu0 %v1045
  %1324 = vmatprep.subr.bf16.mxu0 %v1054
  %1325 = vmatpush1.bf16.msra.mxu0 %v1053
  %1326 = vmatprep.subr.bf16.mxu0 %v1062
  %1327 = vmatpush1.bf16.msra.mxu0 %v1061
  %1328 = vmatprep.subr.bf16.mxu0 %v1070
  %1329 = vmatpush1.bf16.msra.mxu0 %v1069
  %1330 = vmatprep.subr.bf16.mxu0 %v1078
  %1331 = vmatpush1.bf16.msra.mxu0 %v1077
  %1332 = vmatprep.subr.bf16.mxu0 %v1086
  %1333 = vmatpush1.bf16.msra.mxu0 %v1085
  %1334 = vmatprep.subr.bf16.mxu0 %v1094
  %1335 = vmatpush1.bf16.msra.mxu0 %v1093
  %1336 = vmatprep.subr.bf16.mxu0 %v1102
  %1337 = vmatpush1.bf16.msra.mxu0 %v1101
  %1338 = vmatprep.subr.bf16.mxu0 %v1110
  %1339 = vmatpush1.bf16.msra.mxu0 %v1109
  %1340 = vmatprep.subr.bf16.mxu0 %v1118
  %1341 = vmatpush1.bf16.msra.mxu0 %v1117
  %1342 = vmatprep.subr.bf16.mxu0 %v1126
  %1343 = vmatpush1.bf16.msra.mxu0 %v1125
  %1344 = vmatprep.subr.bf16.mxu0 %v1134
  %1345 = vmatpush1.bf16.msra.mxu0 %v1133
  %1346 = vmatprep.subr.bf16.mxu0 %v1142
  %1347 = vmatpush1.bf16.msra.mxu0 %v1141
  %1348 = vmatprep.mubr.bf16.mxu0 %v506
  %1349 = vmatmul.mubr.bf16.gmra.mrb[0].mxu0 %v505
  %v1350 = vpop.f32.mrb[0].mxu0
  %v1351 = vadd.f32 0.0, %v1350
  %v1352 = vpop.f32.mrb[0].mxu0
  %v1353 = vadd.f32 0.0, %v1352
  %v1354 = vpop.f32.mrb[0].mxu0
  %v1355 = vpop.f32.mrb[0].mxu0
  %1356 = vdwg.mxu0
  %1357 = vmatprep.subr.bf16.mxu0 %v1024
  %1358 = vmatpush1.bf16.msra.mxu0 %v1023
  %1359 = vmatprep.subr.bf16.mxu0 %v1032
  %1360 = vmatpush1.bf16.msra.mxu0 %v1031
  %1361 = vmatprep.subr.bf16.mxu0 %v1040
  %1362 = vmatpush1.bf16.msra.mxu0 %v1039
  %1363 = vmatprep.subr.bf16.mxu0 %v1048
  %1364 = vmatpush1.bf16.msra.mxu0 %v1047
  %1365 = vmatprep.subr.bf16.mxu0 %v1056
  %1366 = vmatpush1.bf16.msra.mxu0 %v1055
  %1367 = vmatprep.subr.bf16.mxu0 %v1064
  %1368 = vmatpush1.bf16.msra.mxu0 %v1063
  %1369 = vmatprep.subr.bf16.mxu0 %v1072
  %1370 = vmatpush1.bf16.msra.mxu0 %v1071
  %1371 = vmatprep.subr.bf16.mxu0 %v1080
  %1372 = vmatpush1.bf16.msra.mxu0 %v1079
  %1373 = vmatprep.subr.bf16.mxu0 %v1088
  %1374 = vmatpush1.bf16.msra.mxu0 %v1087
  %1375 = vmatprep.subr.bf16.mxu0 %v1096
  %1376 = vmatpush1.bf16.msra.mxu0 %v1095
  %1377 = vmatprep.subr.bf16.mxu0 %v1104
  %1378 = vmatpush1.bf16.msra.mxu0 %v1103
  %1379 = vmatprep.subr.bf16.mxu0 %v1112
  %1380 = vmatpush1.bf16.msra.mxu0 %v1111
  %1381 = vmatprep.subr.bf16.mxu0 %v1120
  %1382 = vmatpush1.bf16.msra.mxu0 %v1119
  %1383 = vmatprep.subr.bf16.mxu0 %v1128
  %1384 = vmatpush1.bf16.msra.mxu0 %v1127
  %1385 = vmatprep.subr.bf16.mxu0 %v1136
  %1386 = vmatpush1.bf16.msra.mxu0 %v1135
  %1387 = vmatprep.subr.bf16.mxu0 %v1144
  %1388 = vmatpush1.bf16.msra.mxu0 %v1143
  %1389 = vmatprep.mubr.bf16.mxu0 %v506
  %1390 = vmatmul.mubr.bf16.gmra.mrb[0].mxu0 %v505
  %v1391 = vpop.f32.mrb[0].mxu0
  %v1392 = vadd.f32 0.0, %v1391
  %v1393 = vpop.f32.mrb[0].mxu0
  %v1394 = vadd.f32 0.0, %v1393
  %v1395 = vpop.f32.mrb[0].mxu0
  %v1396 = vpop.f32.mrb[0].mxu0
  %1397 = vdwg.mxu0
  %1398 = vmatprep.subr.bf16.mxu0 %v1026
  %1399 = vmatpush1.bf16.msra.mxu0 %v1025
  %1400 = vmatprep.subr.bf16.mxu0 %v1034
  %1401 = vmatpush1.bf16.msra.mxu0 %v1033
  %1402 = vmatprep.subr.bf16.mxu0 %v1042
  %1403 = vmatpush1.bf16.msra.mxu0 %v1041
  %1404 = vmatprep.subr.bf16.mxu0 %v1050
  %1405 = vmatpush1.bf16.msra.mxu0 %v1049
  %1406 = vmatprep.subr.bf16.mxu0 %v1058
  %1407 = vmatpush1.bf16.msra.mxu0 %v1057
  %1408 = vmatprep.subr.bf16.mxu0 %v1066
  %1409 = vmatpush1.bf16.msra.mxu0 %v1065
  %1410 = vmatprep.subr.bf16.mxu0 %v1074
  %1411 = vmatpush1.bf16.msra.mxu0 %v1073
  %1412 = vmatprep.subr.bf16.mxu0 %v1082
  %1413 = vmatpush1.bf16.msra.mxu0 %v1081
  %1414 = vmatprep.subr.bf16.mxu0 %v1090
  %1415 = vmatpush1.bf16.msra.mxu0 %v1089
  %1416 = vmatprep.subr.bf16.mxu0 %v1098
  %1417 = vmatpush1.bf16.msra.mxu0 %v1097
  %1418 = vmatprep.subr.bf16.mxu0 %v1106
  %1419 = vmatpush1.bf16.msra.mxu0 %v1105
  %1420 = vmatprep.subr.bf16.mxu0 %v1114
  %1421 = vmatpush1.bf16.msra.mxu0 %v1113
  %1422 = vmatprep.subr.bf16.mxu0 %v1122
  %1423 = vmatpush1.bf16.msra.mxu0 %v1121
  %1424 = vmatprep.subr.bf16.mxu0 %v1130
  %1425 = vmatpush1.bf16.msra.mxu0 %v1129
  %1426 = vmatprep.subr.bf16.mxu0 %v1138
  %1427 = vmatpush1.bf16.msra.mxu0 %v1137
  %1428 = vmatprep.subr.bf16.mxu0 %v1146
  %1429 = vmatpush1.bf16.msra.mxu0 %v1145
  %1430 = vmatprep.mubr.bf16.mxu0 %v506
  %1431 = vmatmul.mubr.bf16.gmra.mrb[0].mxu0 %v505
  %v1432 = vpop.f32.mrb[0].mxu0
  %v1433 = vadd.f32 0.0, %v1432
  %v1434 = vpop.f32.mrb[0].mxu0
  %v1435 = vadd.f32 0.0, %v1434
  %v1436 = vpop.f32.mrb[0].mxu0
  %v1437 = vpop.f32.mrb[0].mxu0
  %1438 = vdwg.mxu0
  %v1441 = vunpack.c.l.s4 1966171168
  %v1442 = vunpack.c.0.s8 %v1441
  %v1443 = vlaneseq
  %v1444 = vshrl.u32 %v1443, 7
  %v1445 = vsub.s32 %v1442, %v1444
  %v1446 = vrot.slane %v376, %v1445
  %v1447 = vcombine.high %v1446, %v1446
  %v1449 = vunpack.c.l.s4 1966171168
  %v1450 = vunpack.c.0.s8 %v1449
  %v1451 = vlaneseq
  %v1452 = vshrl.u32 %v1451, 7
  %v1453 = vsub.s32 %v1450, %v1452
  %v1454 = vrot.slane %v1446, %v1453
  %v1456 = vunpack.c.l.s4 1966171168
  %v1457 = vunpack.c.0.s8 %v1456
  %v1458 = vlaneseq
  %v1459 = vshrl.u32 %v1458, 7
  %v1460 = vsub.s32 %v1457, %v1459
  %v1461 = vrot.slane %v1447, %v1460
  %v1592 = vunpack.c.l.b16 %v377
  %v1593 = vunpack.c.h.b16 %v377
  %v1594 = vunpack.c.l.b16 %v378
  %v1595 = vunpack.c.h.b16 %v378
  %v1596 = vunpack.c.l.b16 %v379
  %v1597 = vunpack.c.h.b16 %v379
  %v1598 = vunpack.c.l.b16 %v380
  %v1599 = vunpack.c.h.b16 %v380
  %v1600 = vunpack.c.l.b16 %v381
  %v1601 = vunpack.c.h.b16 %v381
  %v1602 = vunpack.c.l.b16 %v382
  %v1603 = vunpack.c.h.b16 %v382
  %v1604 = vunpack.c.l.b16 %v383
  %v1605 = vunpack.c.h.b16 %v383
  %v1606 = vunpack.c.l.b16 %v384
  %v1607 = vunpack.c.h.b16 %v384
  %v1608 = vunpack.c.l.b16 %v385
  %v1609 = vunpack.c.h.b16 %v385
  %v1610 = vunpack.c.l.b16 %v386
  %v1611 = vunpack.c.h.b16 %v386
  %v1612 = vunpack.c.l.b16 %v387
  %v1613 = vunpack.c.h.b16 %v387
  %v1614 = vunpack.c.l.b16 %v388
  %v1615 = vunpack.c.h.b16 %v388
  %v1616 = vunpack.c.l.b16 %v389
  %v1617 = vunpack.c.h.b16 %v389
  %v1618 = vunpack.c.l.b16 %v390
  %v1619 = vunpack.c.h.b16 %v390
  %v1620 = vunpack.c.l.b16 %v391
  %v1621 = vunpack.c.h.b16 %v391
  %v1622 = vunpack.c.l.b16 %v392
  %v1623 = vunpack.c.h.b16 %v392
  %v1624 = vunpack.c.l.b16 %v393
  %v1625 = vunpack.c.h.b16 %v393
  %v1626 = vunpack.c.l.b16 %v394
  %v1627 = vunpack.c.h.b16 %v394
  %v1628 = vunpack.c.l.b16 %v395
  %v1629 = vunpack.c.h.b16 %v395
  %v1630 = vunpack.c.l.b16 %v396
  %v1631 = vunpack.c.h.b16 %v396
  %v1632 = vunpack.c.l.b16 %v397
  %v1633 = vunpack.c.h.b16 %v397
  %v1634 = vunpack.c.l.b16 %v398
  %v1635 = vunpack.c.h.b16 %v398
  %v1636 = vunpack.c.l.b16 %v399
  %v1637 = vunpack.c.h.b16 %v399
  %v1638 = vunpack.c.l.b16 %v400
  %v1639 = vunpack.c.h.b16 %v400
  %v1640 = vunpack.c.l.b16 %v401
  %v1641 = vunpack.c.h.b16 %v401
  %v1642 = vunpack.c.l.b16 %v402
  %v1643 = vunpack.c.h.b16 %v402
  %v1644 = vunpack.c.l.b16 %v403
  %v1645 = vunpack.c.h.b16 %v403
  %v1646 = vunpack.c.l.b16 %v404
  %v1647 = vunpack.c.h.b16 %v404
  %v1648 = vunpack.c.l.b16 %v405
  %v1649 = vunpack.c.h.b16 %v405
  %v1650 = vunpack.c.l.b16 %v406
  %v1651 = vunpack.c.h.b16 %v406
  %v1652 = vunpack.c.l.b16 %v407
  %v1653 = vunpack.c.h.b16 %v407
  %v1654 = vunpack.c.l.b16 %v408
  %v1655 = vunpack.c.h.b16 %v408
  %v1656 = vunpack.c.l.b16 %v409
  %v1657 = vunpack.c.h.b16 %v409
  %v1658 = vunpack.c.l.b16 %v410
  %v1659 = vunpack.c.h.b16 %v410
  %v1660 = vunpack.c.l.b16 %v411
  %v1661 = vunpack.c.h.b16 %v411
  %v1662 = vunpack.c.l.b16 %v412
  %v1663 = vunpack.c.h.b16 %v412
  %v1664 = vunpack.c.l.b16 %v413
  %v1665 = vunpack.c.h.b16 %v413
  %v1666 = vunpack.c.l.b16 %v414
  %v1667 = vunpack.c.h.b16 %v414
  %v1668 = vunpack.c.l.b16 %v415
  %v1669 = vunpack.c.h.b16 %v415
  %v1670 = vunpack.c.l.b16 %v416
  %v1671 = vunpack.c.h.b16 %v416
  %v1672 = vunpack.c.l.b16 %v417
  %v1673 = vunpack.c.h.b16 %v417
  %v1674 = vunpack.c.l.b16 %v418
  %v1675 = vunpack.c.h.b16 %v418
  %v1676 = vunpack.c.l.b16 %v419
  %v1677 = vunpack.c.h.b16 %v419
  %v1678 = vunpack.c.l.b16 %v420
  %v1679 = vunpack.c.h.b16 %v420
  %v1680 = vunpack.c.l.b16 %v421
  %v1681 = vunpack.c.h.b16 %v421
  %v1682 = vunpack.c.l.b16 %v422
  %v1683 = vunpack.c.h.b16 %v422
  %v1684 = vunpack.c.l.b16 %v423
  %v1685 = vunpack.c.h.b16 %v423
  %v1686 = vunpack.c.l.b16 %v424
  %v1687 = vunpack.c.h.b16 %v424
  %v1688 = vunpack.c.l.b16 %v425
  %v1689 = vunpack.c.h.b16 %v425
  %v1690 = vunpack.c.l.b16 %v426
  %v1691 = vunpack.c.h.b16 %v426
  %v1692 = vunpack.c.l.b16 %v427
  %v1693 = vunpack.c.h.b16 %v427
  %v1694 = vunpack.c.l.b16 %v428
  %v1695 = vunpack.c.h.b16 %v428
  %v1696 = vunpack.c.l.b16 %v429
  %v1697 = vunpack.c.h.b16 %v429
  %v1698 = vunpack.c.l.b16 %v430
  %v1699 = vunpack.c.h.b16 %v430
  %v1700 = vunpack.c.l.b16 %v431
  %v1701 = vunpack.c.h.b16 %v431
  %v1702 = vunpack.c.l.b16 %v432
  %v1703 = vunpack.c.h.b16 %v432
  %v1704 = vunpack.c.l.b16 %v433
  %v1705 = vunpack.c.h.b16 %v433
  %v1706 = vunpack.c.l.b16 %v434
  %v1707 = vunpack.c.h.b16 %v434
  %v1708 = vunpack.c.l.b16 %v435
  %v1709 = vunpack.c.h.b16 %v435
  %v1710 = vunpack.c.l.b16 %v436
  %v1711 = vunpack.c.h.b16 %v436
  %v1712 = vunpack.c.l.b16 %v437
  %v1713 = vunpack.c.h.b16 %v437
  %v1714 = vunpack.c.l.b16 %v438
  %v1715 = vunpack.c.h.b16 %v438
  %v1716 = vunpack.c.l.b16 %v439
  %v1717 = vunpack.c.h.b16 %v439
  %v1718 = vunpack.c.l.b16 %v440
  %v1719 = vunpack.c.h.b16 %v440
  %v1720 = vunpack.c.l.b16 %v441
  %v1721 = vunpack.c.h.b16 %v441
  %v1722 = vunpack.c.l.b16 %v442
  %v1723 = vunpack.c.h.b16 %v442
  %v1724 = vunpack.c.l.b16 %v443
  %v1725 = vunpack.c.h.b16 %v443
  %v1726 = vunpack.c.l.b16 %v444
  %v1727 = vunpack.c.h.b16 %v444
  %v1728 = vunpack.c.l.b16 %v445
  %v1729 = vunpack.c.h.b16 %v445
  %v1730 = vunpack.c.l.b16 %v446
  %v1731 = vunpack.c.h.b16 %v446
  %v1732 = vunpack.c.l.b16 %v447
  %v1733 = vunpack.c.h.b16 %v447
  %v1734 = vunpack.c.l.b16 %v448
  %v1735 = vunpack.c.h.b16 %v448
  %v1736 = vunpack.c.l.b16 %v449
  %v1737 = vunpack.c.h.b16 %v449
  %v1738 = vunpack.c.l.b16 %v450
  %v1739 = vunpack.c.h.b16 %v450
  %v1740 = vunpack.c.l.b16 %v451
  %v1741 = vunpack.c.h.b16 %v451
  %v1742 = vunpack.c.l.b16 %v452
  %v1743 = vunpack.c.h.b16 %v452
  %v1744 = vunpack.c.l.b16 %v453
  %v1745 = vunpack.c.h.b16 %v453
  %v1746 = vunpack.c.l.b16 %v454
  %v1747 = vunpack.c.h.b16 %v454
  %v1748 = vunpack.c.l.b16 %v455
  %v1749 = vunpack.c.h.b16 %v455
  %v1750 = vunpack.c.l.b16 %v456
  %v1751 = vunpack.c.h.b16 %v456
  %v1752 = vunpack.c.l.b16 %v457
  %v1753 = vunpack.c.h.b16 %v457
  %v1754 = vunpack.c.l.b16 %v458
  %v1755 = vunpack.c.h.b16 %v458
  %v1756 = vunpack.c.l.b16 %v459
  %v1757 = vunpack.c.h.b16 %v459
  %v1758 = vunpack.c.l.b16 %v460
  %v1759 = vunpack.c.h.b16 %v460
  %v1760 = vunpack.c.l.b16 %v461
  %v1761 = vunpack.c.h.b16 %v461
  %v1762 = vunpack.c.l.b16 %v462
  %v1763 = vunpack.c.h.b16 %v462
  %v1764 = vunpack.c.l.b16 %v463
  %v1765 = vunpack.c.h.b16 %v463
  %v1766 = vunpack.c.l.b16 %v464
  %v1767 = vunpack.c.h.b16 %v464
  %v1768 = vunpack.c.l.b16 %v465
  %v1769 = vunpack.c.h.b16 %v465
  %v1770 = vunpack.c.l.b16 %v466
  %v1771 = vunpack.c.h.b16 %v466
  %v1772 = vunpack.c.l.b16 %v467
  %v1773 = vunpack.c.h.b16 %v467
  %v1774 = vunpack.c.l.b16 %v468
  %v1775 = vunpack.c.h.b16 %v468
  %v1776 = vunpack.c.l.b16 %v469
  %v1777 = vunpack.c.h.b16 %v469
  %v1778 = vunpack.c.l.b16 %v470
  %v1779 = vunpack.c.h.b16 %v470
  %v1780 = vunpack.c.l.b16 %v471
  %v1781 = vunpack.c.h.b16 %v471
  %v1782 = vunpack.c.l.b16 %v472
  %v1783 = vunpack.c.h.b16 %v472
  %v1784 = vunpack.c.l.b16 %v473
  %v1785 = vunpack.c.h.b16 %v473
  %v1786 = vunpack.c.l.b16 %v474
  %v1787 = vunpack.c.h.b16 %v474
  %v1788 = vunpack.c.l.b16 %v475
  %v1789 = vunpack.c.h.b16 %v475
  %v1790 = vunpack.c.l.b16 %v476
  %v1791 = vunpack.c.h.b16 %v476
  %v1792 = vunpack.c.l.b16 %v477
  %v1793 = vunpack.c.h.b16 %v477
  %v1794 = vunpack.c.l.b16 %v478
  %v1795 = vunpack.c.h.b16 %v478
  %v1796 = vunpack.c.l.b16 %v479
  %v1797 = vunpack.c.h.b16 %v479
  %v1798 = vunpack.c.l.b16 %v480
  %v1799 = vunpack.c.h.b16 %v480
  %v1800 = vunpack.c.l.b16 %v481
  %v1801 = vunpack.c.h.b16 %v481
  %v1802 = vunpack.c.l.b16 %v482
  %v1803 = vunpack.c.h.b16 %v482
  %v1804 = vunpack.c.l.b16 %v483
  %v1805 = vunpack.c.h.b16 %v483
  %v1806 = vunpack.c.l.b16 %v484
  %v1807 = vunpack.c.h.b16 %v484
  %v1808 = vunpack.c.l.b16 %v485
  %v1809 = vunpack.c.h.b16 %v485
  %v1810 = vunpack.c.l.b16 %v486
  %v1811 = vunpack.c.h.b16 %v486
  %v1812 = vunpack.c.l.b16 %v487
  %v1813 = vunpack.c.h.b16 %v487
  %v1814 = vunpack.c.l.b16 %v488
  %v1815 = vunpack.c.h.b16 %v488
  %v1816 = vunpack.c.l.b16 %v489
  %v1817 = vunpack.c.h.b16 %v489
  %v1818 = vunpack.c.l.b16 %v490
  %v1819 = vunpack.c.h.b16 %v490
  %v1820 = vunpack.c.l.b16 %v491
  %v1821 = vunpack.c.h.b16 %v491
  %v1822 = vunpack.c.l.b16 %v492
  %v1823 = vunpack.c.h.b16 %v492
  %v1824 = vunpack.c.l.b16 %v493
  %v1825 = vunpack.c.h.b16 %v493
  %v1826 = vunpack.c.l.b16 %v494
  %v1827 = vunpack.c.h.b16 %v494
  %v1828 = vunpack.c.l.b16 %v495
  %v1829 = vunpack.c.h.b16 %v495
  %v1830 = vunpack.c.l.b16 %v496
  %v1831 = vunpack.c.h.b16 %v496
  %v1832 = vunpack.c.l.b16 %v497
  %v1833 = vunpack.c.h.b16 %v497
  %v1834 = vunpack.c.l.b16 %v498
  %v1835 = vunpack.c.h.b16 %v498
  %v1836 = vunpack.c.l.b16 %v499
  %v1837 = vunpack.c.h.b16 %v499
  %v1838 = vunpack.c.l.b16 %v500
  %v1839 = vunpack.c.h.b16 %v500
  %v1840 = vunpack.c.l.b16 %v501
  %v1841 = vunpack.c.h.b16 %v501
  %v1842 = vunpack.c.l.b16 %v502
  %v1843 = vunpack.c.h.b16 %v502
  %v1844 = vunpack.c.l.b16 %v503
  %v1845 = vunpack.c.h.b16 %v503
  %v1846 = vunpack.c.l.b16 %v504
  %v1847 = vunpack.c.h.b16 %v504
  %v1848 = vpack.c.b16 %v1600, %v1592
  %v1849 = vpack.c.b16 %v1601, %v1593
  %v1850 = vpack.c.b16 %v1602, %v1594
  %v1851 = vpack.c.b16 %v1603, %v1595
  %v1852 = vpack.c.b16 %v1604, %v1596
  %v1853 = vpack.c.b16 %v1605, %v1597
  %v1854 = vpack.c.b16 %v1606, %v1598
  %v1855 = vpack.c.b16 %v1607, %v1599
  %v1856 = vpack.c.b16 %v1616, %v1608
  %v1857 = vpack.c.b16 %v1617, %v1609
  %v1858 = vpack.c.b16 %v1618, %v1610
  %v1859 = vpack.c.b16 %v1619, %v1611
  %v1860 = vpack.c.b16 %v1620, %v1612
  %v1861 = vpack.c.b16 %v1621, %v1613
  %v1862 = vpack.c.b16 %v1622, %v1614
  %v1863 = vpack.c.b16 %v1623, %v1615
  %v1864 = vpack.c.b16 %v1632, %v1624
  %v1865 = vpack.c.b16 %v1633, %v1625
  %v1866 = vpack.c.b16 %v1634, %v1626
  %v1867 = vpack.c.b16 %v1635, %v1627
  %v1868 = vpack.c.b16 %v1636, %v1628
  %v1869 = vpack.c.b16 %v1637, %v1629
  %v1870 = vpack.c.b16 %v1638, %v1630
  %v1871 = vpack.c.b16 %v1639, %v1631
  %v1872 = vpack.c.b16 %v1648, %v1640
  %v1873 = vpack.c.b16 %v1649, %v1641
  %v1874 = vpack.c.b16 %v1650, %v1642
  %v1875 = vpack.c.b16 %v1651, %v1643
  %v1876 = vpack.c.b16 %v1652, %v1644
  %v1877 = vpack.c.b16 %v1653, %v1645
  %v1878 = vpack.c.b16 %v1654, %v1646
  %v1879 = vpack.c.b16 %v1655, %v1647
  %v1880 = vpack.c.b16 %v1664, %v1656
  %v1881 = vpack.c.b16 %v1665, %v1657
  %v1882 = vpack.c.b16 %v1666, %v1658
  %v1883 = vpack.c.b16 %v1667, %v1659
  %v1884 = vpack.c.b16 %v1668, %v1660
  %v1885 = vpack.c.b16 %v1669, %v1661
  %v1886 = vpack.c.b16 %v1670, %v1662
  %v1887 = vpack.c.b16 %v1671, %v1663
  %v1888 = vpack.c.b16 %v1680, %v1672
  %v1889 = vpack.c.b16 %v1681, %v1673
  %v1890 = vpack.c.b16 %v1682, %v1674
  %v1891 = vpack.c.b16 %v1683, %v1675
  %v1892 = vpack.c.b16 %v1684, %v1676
  %v1893 = vpack.c.b16 %v1685, %v1677
  %v1894 = vpack.c.b16 %v1686, %v1678
  %v1895 = vpack.c.b16 %v1687, %v1679
  %v1896 = vpack.c.b16 %v1696, %v1688
  %v1897 = vpack.c.b16 %v1697, %v1689
  %v1898 = vpack.c.b16 %v1698, %v1690
  %v1899 = vpack.c.b16 %v1699, %v1691
  %v1900 = vpack.c.b16 %v1700, %v1692
  %v1901 = vpack.c.b16 %v1701, %v1693
  %v1902 = vpack.c.b16 %v1702, %v1694
  %v1903 = vpack.c.b16 %v1703, %v1695
  %v1904 = vpack.c.b16 %v1712, %v1704
  %v1905 = vpack.c.b16 %v1713, %v1705
  %v1906 = vpack.c.b16 %v1714, %v1706
  %v1907 = vpack.c.b16 %v1715, %v1707
  %v1908 = vpack.c.b16 %v1716, %v1708
  %v1909 = vpack.c.b16 %v1717, %v1709
  %v1910 = vpack.c.b16 %v1718, %v1710
  %v1911 = vpack.c.b16 %v1719, %v1711
  %v1912 = vpack.c.b16 %v1728, %v1720
  %v1913 = vpack.c.b16 %v1729, %v1721
  %v1914 = vpack.c.b16 %v1730, %v1722
  %v1915 = vpack.c.b16 %v1731, %v1723
  %v1916 = vpack.c.b16 %v1732, %v1724
  %v1917 = vpack.c.b16 %v1733, %v1725
  %v1918 = vpack.c.b16 %v1734, %v1726
  %v1919 = vpack.c.b16 %v1735, %v1727
  %v1920 = vpack.c.b16 %v1744, %v1736
  %v1921 = vpack.c.b16 %v1745, %v1737
  %v1922 = vpack.c.b16 %v1746, %v1738
  %v1923 = vpack.c.b16 %v1747, %v1739
  %v1924 = vpack.c.b16 %v1748, %v1740
  %v1925 = vpack.c.b16 %v1749, %v1741
  %v1926 = vpack.c.b16 %v1750, %v1742
  %v1927 = vpack.c.b16 %v1751, %v1743
  %v1928 = vpack.c.b16 %v1760, %v1752
  %v1929 = vpack.c.b16 %v1761, %v1753
  %v1930 = vpack.c.b16 %v1762, %v1754
  %v1931 = vpack.c.b16 %v1763, %v1755
  %v1932 = vpack.c.b16 %v1764, %v1756
  %v1933 = vpack.c.b16 %v1765, %v1757
  %v1934 = vpack.c.b16 %v1766, %v1758
  %v1935 = vpack.c.b16 %v1767, %v1759
  %v1936 = vpack.c.b16 %v1776, %v1768
  %v1937 = vpack.c.b16 %v1777, %v1769
  %v1938 = vpack.c.b16 %v1778, %v1770
  %v1939 = vpack.c.b16 %v1779, %v1771
  %v1940 = vpack.c.b16 %v1780, %v1772
  %v1941 = vpack.c.b16 %v1781, %v1773
  %v1942 = vpack.c.b16 %v1782, %v1774
  %v1943 = vpack.c.b16 %v1783, %v1775
  %v1944 = vpack.c.b16 %v1792, %v1784
  %v1945 = vpack.c.b16 %v1793, %v1785
  %v1946 = vpack.c.b16 %v1794, %v1786
  %v1947 = vpack.c.b16 %v1795, %v1787
  %v1948 = vpack.c.b16 %v1796, %v1788
  %v1949 = vpack.c.b16 %v1797, %v1789
  %v1950 = vpack.c.b16 %v1798, %v1790
  %v1951 = vpack.c.b16 %v1799, %v1791
  %v1952 = vpack.c.b16 %v1808, %v1800
  %v1953 = vpack.c.b16 %v1809, %v1801
  %v1954 = vpack.c.b16 %v1810, %v1802
  %v1955 = vpack.c.b16 %v1811, %v1803
  %v1956 = vpack.c.b16 %v1812, %v1804
  %v1957 = vpack.c.b16 %v1813, %v1805
  %v1958 = vpack.c.b16 %v1814, %v1806
  %v1959 = vpack.c.b16 %v1815, %v1807
  %v1960 = vpack.c.b16 %v1824, %v1816
  %v1961 = vpack.c.b16 %v1825, %v1817
  %v1962 = vpack.c.b16 %v1826, %v1818
  %v1963 = vpack.c.b16 %v1827, %v1819
  %v1964 = vpack.c.b16 %v1828, %v1820
  %v1965 = vpack.c.b16 %v1829, %v1821
  %v1966 = vpack.c.b16 %v1830, %v1822
  %v1967 = vpack.c.b16 %v1831, %v1823
  %v1968 = vpack.c.b16 %v1840, %v1832
  %v1969 = vpack.c.b16 %v1841, %v1833
  %v1970 = vpack.c.b16 %v1842, %v1834
  %v1971 = vpack.c.b16 %v1843, %v1835
  %v1972 = vpack.c.b16 %v1844, %v1836
  %v1973 = vpack.c.b16 %v1845, %v1837
  %v1974 = vpack.c.b16 %v1846, %v1838
  %v1975 = vpack.c.b16 %v1847, %v1839
  %2104 = vmatprep.subr.bf16.mxu0 %v1849
  %2105 = vmatpush1.bf16.msra.mxu0 %v1848
  %2106 = vmatprep.subr.bf16.mxu0 %v1857
  %2107 = vmatpush1.bf16.msra.mxu0 %v1856
  %2108 = vmatprep.subr.bf16.mxu0 %v1865
  %2109 = vmatpush1.bf16.msra.mxu0 %v1864
  %2110 = vmatprep.subr.bf16.mxu0 %v1873
  %2111 = vmatpush1.bf16.msra.mxu0 %v1872
  %2112 = vmatprep.subr.bf16.mxu0 %v1881
  %2113 = vmatpush1.bf16.msra.mxu0 %v1880
  %2114 = vmatprep.subr.bf16.mxu0 %v1889
  %2115 = vmatpush1.bf16.msra.mxu0 %v1888
  %2116 = vmatprep.subr.bf16.mxu0 %v1897
  %2117 = vmatpush1.bf16.msra.mxu0 %v1896
  %2118 = vmatprep.subr.bf16.mxu0 %v1905
  %2119 = vmatpush1.bf16.msra.mxu0 %v1904
  %2120 = vmatprep.subr.bf16.mxu0 %v1913
  %2121 = vmatpush1.bf16.msra.mxu0 %v1912
  %2122 = vmatprep.subr.bf16.mxu0 %v1921
  %2123 = vmatpush1.bf16.msra.mxu0 %v1920
  %2124 = vmatprep.subr.bf16.mxu0 %v1929
  %2125 = vmatpush1.bf16.msra.mxu0 %v1928
  %2126 = vmatprep.subr.bf16.mxu0 %v1937
  %2127 = vmatpush1.bf16.msra.mxu0 %v1936
  %2128 = vmatprep.subr.bf16.mxu0 %v1945
  %2129 = vmatpush1.bf16.msra.mxu0 %v1944
  %2130 = vmatprep.subr.bf16.mxu0 %v1953
  %2131 = vmatpush1.bf16.msra.mxu0 %v1952
  %2132 = vmatprep.subr.bf16.mxu0 %v1961
  %2133 = vmatpush1.bf16.msra.mxu0 %v1960
  %2134 = vmatprep.subr.bf16.mxu0 %v1969
  %2135 = vmatpush1.bf16.msra.mxu0 %v1968
  %2136 = vmatprep.mubr.bf16.mxu0 %v1461
  %2137 = vmatmul.mubr.bf16.gmra.mrb[0].mxu0 %v1454
  %v2138 = vpop.f32.mrb[0].mxu0
  %v2139 = vadd.f32 %v1310, %v2138
  %v2140 = vpop.f32.mrb[0].mxu0
  %v2141 = vadd.f32 %v1312, %v2140
  %v2142 = vpop.f32.mrb[0].mxu0
  %v2143 = vpop.f32.mrb[0].mxu0
  %2144 = vdwg.mxu0
  %2145 = vmatprep.subr.bf16.mxu0 %v1851
  %2146 = vmatpush1.bf16.msra.mxu0 %v1850
  %2147 = vmatprep.subr.bf16.mxu0 %v1859
  %2148 = vmatpush1.bf16.msra.mxu0 %v1858
  %2149 = vmatprep.subr.bf16.mxu0 %v1867
  %2150 = vmatpush1.bf16.msra.mxu0 %v1866
  %2151 = vmatprep.subr.bf16.mxu0 %v1875
  %2152 = vmatpush1.bf16.msra.mxu0 %v1874
  %2153 = vmatprep.subr.bf16.mxu0 %v1883
  %2154 = vmatpush1.bf16.msra.mxu0 %v1882
  %2155 = vmatprep.subr.bf16.mxu0 %v1891
  %2156 = vmatpush1.bf16.msra.mxu0 %v1890
  %2157 = vmatprep.subr.bf16.mxu0 %v1899
  %2158 = vmatpush1.bf16.msra.mxu0 %v1898
  %2159 = vmatprep.subr.bf16.mxu0 %v1907
  %2160 = vmatpush1.bf16.msra.mxu0 %v1906
  %2161 = vmatprep.subr.bf16.mxu0 %v1915
  %2162 = vmatpush1.bf16.msra.mxu0 %v1914
  %2163 = vmatprep.subr.bf16.mxu0 %v1923
  %2164 = vmatpush1.bf16.msra.mxu0 %v1922
  %2165 = vmatprep.subr.bf16.mxu0 %v1931
  %2166 = vmatpush1.bf16.msra.mxu0 %v1930
  %2167 = vmatprep.subr.bf16.mxu0 %v1939
  %2168 = vmatpush1.bf16.msra.mxu0 %v1938
  %2169 = vmatprep.subr.bf16.mxu0 %v1947
  %2170 = vmatpush1.bf16.msra.mxu0 %v1946
  %2171 = vmatprep.subr.bf16.mxu0 %v1955
  %2172 = vmatpush1.bf16.msra.mxu0 %v1954
  %2173 = vmatprep.subr.bf16.mxu0 %v1963
  %2174 = vmatpush1.bf16.msra.mxu0 %v1962
  %2175 = vmatprep.subr.bf16.mxu0 %v1971
  %2176 = vmatpush1.bf16.msra.mxu0 %v1970
  %2177 = vmatprep.mubr.bf16.mxu0 %v1461
  %2178 = vmatmul.mubr.bf16.gmra.mrb[0].mxu0 %v1454
  %v2179 = vpop.f32.mrb[0].mxu0
  %v2180 = vadd.f32 %v1351, %v2179
  %v2181 = vpop.f32.mrb[0].mxu0
  %v2182 = vadd.f32 %v1353, %v2181
  %v2183 = vpop.f32.mrb[0].mxu0
  %v2184 = vpop.f32.mrb[0].mxu0
  %2185 = vdwg.mxu0
  %2186 = vmatprep.subr.bf16.mxu0 %v1853
  %2187 = vmatpush1.bf16.msra.mxu0 %v1852
  %2188 = vmatprep.subr.bf16.mxu0 %v1861
  %2189 = vmatpush1.bf16.msra.mxu0 %v1860
  %2190 = vmatprep.subr.bf16.mxu0 %v1869
  %2191 = vmatpush1.bf16.msra.mxu0 %v1868
  %2192 = vmatprep.subr.bf16.mxu0 %v1877
  %2193 = vmatpush1.bf16.msra.mxu0 %v1876
  %2194 = vmatprep.subr.bf16.mxu0 %v1885
  %2195 = vmatpush1.bf16.msra.mxu0 %v1884
  %2196 = vmatprep.subr.bf16.mxu0 %v1893
  %2197 = vmatpush1.bf16.msra.mxu0 %v1892
  %2198 = vmatprep.subr.bf16.mxu0 %v1901
  %2199 = vmatpush1.bf16.msra.mxu0 %v1900
  %2200 = vmatprep.subr.bf16.mxu0 %v1909
  %2201 = vmatpush1.bf16.msra.mxu0 %v1908
  %2202 = vmatprep.subr.bf16.mxu0 %v1917
  %2203 = vmatpush1.bf16.msra.mxu0 %v1916
  %2204 = vmatprep.subr.bf16.mxu0 %v1925
  %2205 = vmatpush1.bf16.msra.mxu0 %v1924
  %2206 = vmatprep.subr.bf16.mxu0 %v1933
  %2207 = vmatpush1.bf16.msra.mxu0 %v1932
  %2208 = vmatprep.subr.bf16.mxu0 %v1941
  %2209 = vmatpush1.bf16.msra.mxu0 %v1940
  %2210 = vmatprep.subr.bf16.mxu0 %v1949
  %2211 = vmatpush1.bf16.msra.mxu0 %v1948
  %2212 = vmatprep.subr.bf16.mxu0 %v1957
  %2213 = vmatpush1.bf16.msra.mxu0 %v1956
  %2214 = vmatprep.subr.bf16.mxu0 %v1965
  %2215 = vmatpush1.bf16.msra.mxu0 %v1964
  %2216 = vmatprep.subr.bf16.mxu0 %v1973
  %2217 = vmatpush1.bf16.msra.mxu0 %v1972
  %2218 = vmatprep.mubr.bf16.mxu0 %v1461
  %2219 = vmatmul.mubr.bf16.gmra.mrb[0].mxu0 %v1454
  %v2220 = vpop.f32.mrb[0].mxu0
  %v2221 = vadd.f32 %v1392, %v2220
  %v2222 = vpop.f32.mrb[0].mxu0
  %v2223 = vadd.f32 %v1394, %v2222
  %v2224 = vpop.f32.mrb[0].mxu0
  %v2225 = vpop.f32.mrb[0].mxu0
  %2226 = vdwg.mxu0
  %2227 = vmatprep.subr.bf16.mxu0 %v1855
  %2228 = vmatpush1.bf16.msra.mxu0 %v1854
  %2229 = vmatprep.subr.bf16.mxu0 %v1863
  %2230 = vmatpush1.bf16.msra.mxu0 %v1862
  %2231 = vmatprep.subr.bf16.mxu0 %v1871
  %2232 = vmatpush1.bf16.msra.mxu0 %v1870
  %2233 = vmatprep.subr.bf16.mxu0 %v1879
  %2234 = vmatpush1.bf16.msra.mxu0 %v1878
  %2235 = vmatprep.subr.bf16.mxu0 %v1887
  %2236 = vmatpush1.bf16.msra.mxu0 %v1886
  %2237 = vmatprep.subr.bf16.mxu0 %v1895
  %2238 = vmatpush1.bf16.msra.mxu0 %v1894
  %2239 = vmatprep.subr.bf16.mxu0 %v1903
  %2240 = vmatpush1.bf16.msra.mxu0 %v1902
  %2241 = vmatprep.subr.bf16.mxu0 %v1911
  %2242 = vmatpush1.bf16.msra.mxu0 %v1910
  %2243 = vmatprep.subr.bf16.mxu0 %v1919
  %2244 = vmatpush1.bf16.msra.mxu0 %v1918
  %2245 = vmatprep.subr.bf16.mxu0 %v1927
  %2246 = vmatpush1.bf16.msra.mxu0 %v1926
  %2247 = vmatprep.subr.bf16.mxu0 %v1935
  %2248 = vmatpush1.bf16.msra.mxu0 %v1934
  %2249 = vmatprep.subr.bf16.mxu0 %v1943
  %2250 = vmatpush1.bf16.msra.mxu0 %v1942
  %2251 = vmatprep.subr.bf16.mxu0 %v1951
  %2252 = vmatpush1.bf16.msra.mxu0 %v1950
  %2253 = vmatprep.subr.bf16.mxu0 %v1959
  %2254 = vmatpush1.bf16.msra.mxu0 %v1958
  %2255 = vmatprep.subr.bf16.mxu0 %v1967
  %2256 = vmatpush1.bf16.msra.mxu0 %v1966
  %2257 = vmatprep.subr.bf16.mxu0 %v1975
  %2258 = vmatpush1.bf16.msra.mxu0 %v1974
  %2259 = vmatprep.mubr.bf16.mxu0 %v1461
  %2260 = vmatmul.mubr.bf16.gmra.mrb[0].mxu0 %v1454
  %v2261 = vpop.f32.mrb[0].mxu0
  %v2262 = vadd.f32 %v1433, %v2261
  %v2263 = vpop.f32.mrb[0].mxu0
  %v2264 = vadd.f32 %v1435, %v2263
  %v2265 = vpop.f32.mrb[0].mxu0
  %v2266 = vpop.f32.mrb[0].mxu0
  %2267 = vdwg.mxu0
  %v2268 = vld [vmem:[%s8] sm:$0xff]
  %v2270 = vlaneseq
  %v2271 = vshrl.u32 %v2270, 7
  %v2272 = vsub.s32 0, %v2271
  %v2273 = vrot.slane %v2268, %v2272
  %v2274 = vlaneseq
  %v2275 = vshrl.u32 %v2274, 7
  %v2276 = vsub.s32 1, %v2275
  %v2277 = vrot.slane %v2268, %v2276
  %v2278 = vlaneseq
  %v2279 = vshrl.u32 %v2278, 7
  %v2280 = vsub.s32 2, %v2279
  %v2281 = vrot.slane %v2268, %v2280
  %v2282 = vlaneseq
  %v2283 = vshrl.u32 %v2282, 7
  %v2284 = vsub.s32 3, %v2283
  %v2285 = vrot.slane %v2268, %v2284
  %v2286 = vlaneseq
  %v2287 = vshrl.u32 %v2286, 7
  %v2288 = vsub.s32 4, %v2287
  %v2289 = vrot.slane %v2268, %v2288
  %v2290 = vlaneseq
  %v2291 = vshrl.u32 %v2290, 7
  %v2292 = vsub.s32 5, %v2291
  %v2293 = vrot.slane %v2268, %v2292
  %v2294 = vlaneseq
  %v2295 = vshrl.u32 %v2294, 7
  %v2296 = vsub.s32 6, %v2295
  %v2297 = vrot.slane %v2268, %v2296
  %v2298 = vlaneseq
  %v2299 = vshrl.u32 %v2298, 7
  %v2300 = vsub.s32 7, %v2299
  %v2301 = vrot.slane %v2268, %v2300
  %v2310 = vadd.f32 %v2139, %v2273
  %v2311 = vadd.f32 %v2141, %v2277
  %v2312 = vadd.f32 %v2180, %v2281
  %v2313 = vadd.f32 %v2182, %v2285
  %v2314 = vadd.f32 %v2221, %v2289
  %v2315 = vadd.f32 %v2223, %v2293
  %v2316 = vadd.f32 %v2262, %v2297
  %v2317 = vadd.f32 %v2264, %v2301
  %vm2318 = vcmp.ge.f32.partialorder %v2310, 0.0
  %vm2319 = vcmp.ge.f32.partialorder %v2311, 0.0
  %vm2320 = vcmp.ge.f32.partialorder %v2312, 0.0
  %vm2321 = vcmp.ge.f32.partialorder %v2313, 0.0
  %vm2322 = vcmp.ge.f32.partialorder %v2314, 0.0
  %vm2323 = vcmp.ge.f32.partialorder %v2315, 0.0
  %vm2324 = vcmp.ge.f32.partialorder %v2316, 0.0
  %vm2325 = vcmp.ge.f32.partialorder %v2317, 0.0
  %v2326 = vmul.f32 %v2310, 0.2
  %v2327 = vmul.f32 %v2311, 0.2
  %v2328 = vmul.f32 %v2312, 0.2
  %v2329 = vmul.f32 %v2313, 0.2
  %v2330 = vmul.f32 %v2314, 0.2
  %v2331 = vmul.f32 %v2315, 0.2
  %v2332 = vmul.f32 %v2316, 0.2
  %v2333 = vmul.f32 %v2317, 0.2
  %v2334 = vsel %vm2318, %v2310, %v2326
  %v2335 = vsel %vm2319, %v2311, %v2327
  %v2336 = vsel %vm2320, %v2312, %v2328
  %v2337 = vsel %vm2321, %v2313, %v2329
  %v2338 = vsel %vm2322, %v2314, %v2330
  %v2339 = vsel %vm2323, %v2315, %v2331
  %v2340 = vsel %vm2324, %v2316, %v2332
  %v2341 = vsel %vm2325, %v2317, %v2333
  %v2342 = vpack.c.bf16 %v2334, %v2334
  %v2343 = vpack.c.bf16 %v2335, %v2335
  %v2344 = vpack.c.bf16 %v2336, %v2336
  %v2345 = vpack.c.bf16 %v2337, %v2337
  %v2346 = vpack.c.bf16 %v2338, %v2338
  %v2347 = vpack.c.bf16 %v2339, %v2339
  %v2348 = vpack.c.bf16 %v2340, %v2340
  %v2349 = vpack.c.bf16 %v2341, %v2341
  %v2350 = vld [vmem:[%s9] sm:$0xff]
  %v2351 = vld [vmem:[%s9 + $0x8] sm:$0xff]
  %v2352 = vld [vmem:[%s9 + $0x10] sm:$0xff]
  %v2353 = vld [vmem:[%s9 + $0x18] sm:$0xff]
  %v2354 = vld [vmem:[%s9 + $0x20] sm:$0xff]
  %v2355 = vld [vmem:[%s9 + $0x28] sm:$0xff]
  %v2356 = vld [vmem:[%s9 + $0x30] sm:$0xff]
  %v2357 = vld [vmem:[%s9 + $0x38] sm:$0xff]
  %v2358 = vld [vmem:[%s9 + $0x40] sm:$0xff]
  %v2359 = vld [vmem:[%s9 + $0x48] sm:$0xff]
  %v2360 = vld [vmem:[%s9 + $0x50] sm:$0xff]
  %v2361 = vld [vmem:[%s9 + $0x58] sm:$0xff]
  %v2362 = vld [vmem:[%s9 + $0x60] sm:$0xff]
  %v2363 = vld [vmem:[%s9 + $0x68] sm:$0xff]
  %v2364 = vld [vmem:[%s9 + $0x70] sm:$0xff]
  %v2365 = vld [vmem:[%s9 + $0x78] sm:$0xff]
  %v2366 = vld [vmem:[%s9 + $0x80] sm:$0xff]
  %v2367 = vld [vmem:[%s9 + $0x88] sm:$0xff]
  %v2368 = vld [vmem:[%s9 + $0x90] sm:$0xff]
  %v2369 = vld [vmem:[%s9 + $0x98] sm:$0xff]
  %v2370 = vld [vmem:[%s9 + $0xa0] sm:$0xff]
  %v2371 = vld [vmem:[%s9 + $0xa8] sm:$0xff]
  %v2372 = vld [vmem:[%s9 + $0xb0] sm:$0xff]
  %v2373 = vld [vmem:[%s9 + $0xb8] sm:$0xff]
  %v2374 = vld [vmem:[%s9 + $0xc0] sm:$0xff]
  %v2375 = vld [vmem:[%s9 + $0xc8] sm:$0xff]
  %v2376 = vld [vmem:[%s9 + $0xd0] sm:$0xff]
  %v2377 = vld [vmem:[%s9 + $0xd8] sm:$0xff]
  %v2378 = vld [vmem:[%s9 + $0xe0] sm:$0xff]
  %v2379 = vld [vmem:[%s9 + $0xe8] sm:$0xff]
  %v2380 = vld [vmem:[%s9 + $0xf0] sm:$0xff]
  %v2381 = vld [vmem:[%s9 + $0xf8] sm:$0xff]
  %v2382 = vld [vmem:[%s9 + $0x100] sm:$0xff]
  %v2383 = vld [vmem:[%s9 + $0x108] sm:$0xff]
  %v2384 = vld [vmem:[%s9 + $0x110] sm:$0xff]
  %v2385 = vld [vmem:[%s9 + $0x118] sm:$0xff]
  %v2386 = vld [vmem:[%s9 + $0x120] sm:$0xff]
  %v2387 = vld [vmem:[%s9 + $0x128] sm:$0xff]
  %v2388 = vld [vmem:[%s9 + $0x130] sm:$0xff]
  %v2389 = vld [vmem:[%s9 + $0x138] sm:$0xff]
  %v2390 = vld [vmem:[%s9 + $0x140] sm:$0xff]
  %v2391 = vld [vmem:[%s9 + $0x148] sm:$0xff]
  %v2392 = vld [vmem:[%s9 + $0x150] sm:$0xff]
  %v2393 = vld [vmem:[%s9 + $0x158] sm:$0xff]
  %v2394 = vld [vmem:[%s9 + $0x160] sm:$0xff]
  %v2395 = vld [vmem:[%s9 + $0x168] sm:$0xff]
  %v2396 = vld [vmem:[%s9 + $0x170] sm:$0xff]
  %v2397 = vld [vmem:[%s9 + $0x178] sm:$0xff]
  %v2398 = vld [vmem:[%s9 + $0x180] sm:$0xff]
  %v2399 = vld [vmem:[%s9 + $0x188] sm:$0xff]
  %v2400 = vld [vmem:[%s9 + $0x190] sm:$0xff]
  %v2401 = vld [vmem:[%s9 + $0x198] sm:$0xff]
  %v2402 = vld [vmem:[%s9 + $0x1a0] sm:$0xff]
  %v2403 = vld [vmem:[%s9 + $0x1a8] sm:$0xff]
  %v2404 = vld [vmem:[%s9 + $0x1b0] sm:$0xff]
  %v2405 = vld [vmem:[%s9 + $0x1b8] sm:$0xff]
  %v2406 = vld [vmem:[%s9 + $0x1c0] sm:$0xff]
  %v2407 = vld [vmem:[%s9 + $0x1c8] sm:$0xff]
  %v2408 = vld [vmem:[%s9 + $0x1d0] sm:$0xff]
  %v2409 = vld [vmem:[%s9 + $0x1d8] sm:$0xff]
  %v2410 = vld [vmem:[%s9 + $0x1e0] sm:$0xff]
  %v2411 = vld [vmem:[%s9 + $0x1e8] sm:$0xff]
  %v2412 = vld [vmem:[%s9 + $0x1f0] sm:$0xff]
  %v2413 = vld [vmem:[%s9 + $0x1f8] sm:$0xff]
  %v2414 = vld [vmem:[%s9 + $0x200] sm:$0xff]
  %v2415 = vld [vmem:[%s9 + $0x208] sm:$0xff]
  %v2416 = vld [vmem:[%s9 + $0x210] sm:$0xff]
  %v2417 = vld [vmem:[%s9 + $0x218] sm:$0xff]
  %v2418 = vld [vmem:[%s9 + $0x220] sm:$0xff]
  %v2419 = vld [vmem:[%s9 + $0x228] sm:$0xff]
  %v2420 = vld [vmem:[%s9 + $0x230] sm:$0xff]
  %v2421 = vld [vmem:[%s9 + $0x238] sm:$0xff]
  %v2422 = vld [vmem:[%s9 + $0x240] sm:$0xff]
  %v2423 = vld [vmem:[%s9 + $0x248] sm:$0xff]
  %v2424 = vld [vmem:[%s9 + $0x250] sm:$0xff]
  %v2425 = vld [vmem:[%s9 + $0x258] sm:$0xff]
  %v2426 = vld [vmem:[%s9 + $0x260] sm:$0xff]
  %v2427 = vld [vmem:[%s9 + $0x268] sm:$0xff]
  %v2428 = vld [vmem:[%s9 + $0x270] sm:$0xff]
  %v2429 = vld [vmem:[%s9 + $0x278] sm:$0xff]
  %v2430 = vld [vmem:[%s9 + $0x280] sm:$0xff]
  %v2431 = vld [vmem:[%s9 + $0x288] sm:$0xff]
  %v2432 = vld [vmem:[%s9 + $0x290] sm:$0xff]
  %v2433 = vld [vmem:[%s9 + $0x298] sm:$0xff]
  %v2434 = vld [vmem:[%s9 + $0x2a0] sm:$0xff]
  %v2435 = vld [vmem:[%s9 + $0x2a8] sm:$0xff]
  %v2436 = vld [vmem:[%s9 + $0x2b0] sm:$0xff]
  %v2437 = vld [vmem:[%s9 + $0x2b8] sm:$0xff]
  %v2438 = vld [vmem:[%s9 + $0x2c0] sm:$0xff]
  %v2439 = vld [vmem:[%s9 + $0x2c8] sm:$0xff]
  %v2440 = vld [vmem:[%s9 + $0x2d0] sm:$0xff]
  %v2441 = vld [vmem:[%s9 + $0x2d8] sm:$0xff]
  %v2442 = vld [vmem:[%s9 + $0x2e0] sm:$0xff]
  %v2443 = vld [vmem:[%s9 + $0x2e8] sm:$0xff]
  %v2444 = vld [vmem:[%s9 + $0x2f0] sm:$0xff]
  %v2445 = vld [vmem:[%s9 + $0x2f8] sm:$0xff]
  %v2446 = vld [vmem:[%s9 + $0x300] sm:$0xff]
  %v2447 = vld [vmem:[%s9 + $0x308] sm:$0xff]
  %v2448 = vld [vmem:[%s9 + $0x310] sm:$0xff]
  %v2449 = vld [vmem:[%s9 + $0x318] sm:$0xff]
  %v2450 = vld [vmem:[%s9 + $0x320] sm:$0xff]
  %v2451 = vld [vmem:[%s9 + $0x328] sm:$0xff]
  %v2452 = vld [vmem:[%s9 + $0x330] sm:$0xff]
  %v2453 = vld [vmem:[%s9 + $0x338] sm:$0xff]
  %v2454 = vld [vmem:[%s9 + $0x340] sm:$0xff]
  %v2455 = vld [vmem:[%s9 + $0x348] sm:$0xff]
  %v2456 = vld [vmem:[%s9 + $0x350] sm:$0xff]
  %v2457 = vld [vmem:[%s9 + $0x358] sm:$0xff]
  %v2458 = vld [vmem:[%s9 + $0x360] sm:$0xff]
  %v2459 = vld [vmem:[%s9 + $0x368] sm:$0xff]
  %v2460 = vld [vmem:[%s9 + $0x370] sm:$0xff]
  %v2461 = vld [vmem:[%s9 + $0x378] sm:$0xff]
  %v2462 = vld [vmem:[%s9 + $0x380] sm:$0xff]
  %v2463 = vld [vmem:[%s9 + $0x388] sm:$0xff]
  %v2464 = vld [vmem:[%s9 + $0x390] sm:$0xff]
  %v2465 = vld [vmem:[%s9 + $0x398] sm:$0xff]
  %v2466 = vld [vmem:[%s9 + $0x3a0] sm:$0xff]
  %v2467 = vld [vmem:[%s9 + $0x3a8] sm:$0xff]
  %v2468 = vld [vmem:[%s9 + $0x3b0] sm:$0xff]
  %v2469 = vld [vmem:[%s9 + $0x3b8] sm:$0xff]
  %v2470 = vld [vmem:[%s9 + $0x3c0] sm:$0xff]
  %v2471 = vld [vmem:[%s9 + $0x3c8] sm:$0xff]
  %v2472 = vld [vmem:[%s9 + $0x3d0] sm:$0xff]
  %v2473 = vld [vmem:[%s9 + $0x3d8] sm:$0xff]
  %v2474 = vld [vmem:[%s9 + $0x3e0] sm:$0xff]
  %v2475 = vld [vmem:[%s9 + $0x3e8] sm:$0xff]
  %v2476 = vld [vmem:[%s9 + $0x3f0] sm:$0xff]
  %v2477 = vld [vmem:[%s9 + $0x3f8] sm:$0xff]
  %v2478 = vld [vmem:[%s9 + $0x400] sm:$0xff]
  %v2479 = vld [vmem:[%s9 + $0x408] sm:$0xff]
  %v2480 = vld [vmem:[%s9 + $0x410] sm:$0xff]
  %v2481 = vld [vmem:[%s9 + $0x418] sm:$0xff]
  %v2482 = vld [vmem:[%s9 + $0x420] sm:$0xff]
  %v2483 = vld [vmem:[%s9 + $0x428] sm:$0xff]
  %v2484 = vld [vmem:[%s9 + $0x430] sm:$0xff]
  %v2485 = vld [vmem:[%s9 + $0x438] sm:$0xff]
  %v2486 = vld [vmem:[%s9 + $0x440] sm:$0xff]
  %v2487 = vld [vmem:[%s9 + $0x448] sm:$0xff]
  %v2488 = vld [vmem:[%s9 + $0x450] sm:$0xff]
  %v2489 = vld [vmem:[%s9 + $0x458] sm:$0xff]
  %v2490 = vld [vmem:[%s9 + $0x460] sm:$0xff]
  %v2491 = vld [vmem:[%s9 + $0x468] sm:$0xff]
  %v2492 = vld [vmem:[%s9 + $0x470] sm:$0xff]
  %v2493 = vld [vmem:[%s9 + $0x478] sm:$0xff]
  %v2494 = vld [vmem:[%s9 + $0x480] sm:$0xff]
  %v2495 = vld [vmem:[%s9 + $0x488] sm:$0xff]
  %v2496 = vld [vmem:[%s9 + $0x490] sm:$0xff]
  %v2497 = vld [vmem:[%s9 + $0x498] sm:$0xff]
  %v2498 = vld [vmem:[%s9 + $0x4a0] sm:$0xff]
  %v2499 = vld [vmem:[%s9 + $0x4a8] sm:$0xff]
  %v2500 = vld [vmem:[%s9 + $0x4b0] sm:$0xff]
  %v2501 = vld [vmem:[%s9 + $0x4b8] sm:$0xff]
  %v2502 = vld [vmem:[%s9 + $0x4c0] sm:$0xff]
  %v2503 = vld [vmem:[%s9 + $0x4c8] sm:$0xff]
  %v2504 = vld [vmem:[%s9 + $0x4d0] sm:$0xff]
  %v2505 = vld [vmem:[%s9 + $0x4d8] sm:$0xff]
  %v2506 = vld [vmem:[%s9 + $0x4e0] sm:$0xff]
  %v2507 = vld [vmem:[%s9 + $0x4e8] sm:$0xff]
  %v2508 = vld [vmem:[%s9 + $0x4f0] sm:$0xff]
  %v2509 = vld [vmem:[%s9 + $0x4f8] sm:$0xff]
  %v2510 = vld [vmem:[%s9 + $0x500] sm:$0xff]
  %v2511 = vld [vmem:[%s9 + $0x508] sm:$0xff]
  %v2512 = vld [vmem:[%s9 + $0x510] sm:$0xff]
  %v2513 = vld [vmem:[%s9 + $0x518] sm:$0xff]
  %v2514 = vld [vmem:[%s9 + $0x520] sm:$0xff]
  %v2515 = vld [vmem:[%s9 + $0x528] sm:$0xff]
  %v2516 = vld [vmem:[%s9 + $0x530] sm:$0xff]
  %v2517 = vld [vmem:[%s9 + $0x538] sm:$0xff]
  %v2518 = vld [vmem:[%s9 + $0x540] sm:$0xff]
  %v2519 = vld [vmem:[%s9 + $0x548] sm:$0xff]
  %v2520 = vld [vmem:[%s9 + $0x550] sm:$0xff]
  %v2521 = vld [vmem:[%s9 + $0x558] sm:$0xff]
  %v2522 = vld [vmem:[%s9 + $0x560] sm:$0xff]
  %v2523 = vld [vmem:[%s9 + $0x568] sm:$0xff]
  %v2524 = vld [vmem:[%s9 + $0x570] sm:$0xff]
  %v2525 = vld [vmem:[%s9 + $0x578] sm:$0xff]
  %v2526 = vld [vmem:[%s9 + $0x580] sm:$0xff]
  %v2527 = vld [vmem:[%s9 + $0x588] sm:$0xff]
  %v2528 = vld [vmem:[%s9 + $0x590] sm:$0xff]
  %v2529 = vld [vmem:[%s9 + $0x598] sm:$0xff]
  %v2530 = vld [vmem:[%s9 + $0x5a0] sm:$0xff]
  %v2531 = vld [vmem:[%s9 + $0x5a8] sm:$0xff]
  %v2532 = vld [vmem:[%s9 + $0x5b0] sm:$0xff]
  %v2533 = vld [vmem:[%s9 + $0x5b8] sm:$0xff]
  %v2534 = vld [vmem:[%s9 + $0x5c0] sm:$0xff]
  %v2535 = vld [vmem:[%s9 + $0x5c8] sm:$0xff]
  %v2536 = vld [vmem:[%s9 + $0x5d0] sm:$0xff]
  %v2537 = vld [vmem:[%s9 + $0x5d8] sm:$0xff]
  %v2538 = vld [vmem:[%s9 + $0x5e0] sm:$0xff]
  %v2539 = vld [vmem:[%s9 + $0x5e8] sm:$0xff]
  %v2540 = vld [vmem:[%s9 + $0x5f0] sm:$0xff]
  %v2541 = vld [vmem:[%s9 + $0x5f8] sm:$0xff]
  %v2542 = vld [vmem:[%s9 + $0x600] sm:$0xff]
  %v2543 = vld [vmem:[%s9 + $0x608] sm:$0xff]
  %v2544 = vld [vmem:[%s9 + $0x610] sm:$0xff]
  %v2545 = vld [vmem:[%s9 + $0x618] sm:$0xff]
  %v2546 = vld [vmem:[%s9 + $0x620] sm:$0xff]
  %v2547 = vld [vmem:[%s9 + $0x628] sm:$0xff]
  %v2548 = vld [vmem:[%s9 + $0x630] sm:$0xff]
  %v2549 = vld [vmem:[%s9 + $0x638] sm:$0xff]
  %v2550 = vld [vmem:[%s9 + $0x640] sm:$0xff]
  %v2551 = vld [vmem:[%s9 + $0x648] sm:$0xff]
  %v2552 = vld [vmem:[%s9 + $0x650] sm:$0xff]
  %v2553 = vld [vmem:[%s9 + $0x658] sm:$0xff]
  %v2554 = vld [vmem:[%s9 + $0x660] sm:$0xff]
  %v2555 = vld [vmem:[%s9 + $0x668] sm:$0xff]
  %v2556 = vld [vmem:[%s9 + $0x670] sm:$0xff]
  %v2557 = vld [vmem:[%s9 + $0x678] sm:$0xff]
  %v2558 = vld [vmem:[%s9 + $0x680] sm:$0xff]
  %v2559 = vld [vmem:[%s9 + $0x688] sm:$0xff]
  %v2560 = vld [vmem:[%s9 + $0x690] sm:$0xff]
  %v2561 = vld [vmem:[%s9 + $0x698] sm:$0xff]
  %v2562 = vld [vmem:[%s9 + $0x6a0] sm:$0xff]
  %v2563 = vld [vmem:[%s9 + $0x6a8] sm:$0xff]
  %v2564 = vld [vmem:[%s9 + $0x6b0] sm:$0xff]
  %v2565 = vld [vmem:[%s9 + $0x6b8] sm:$0xff]
  %v2566 = vld [vmem:[%s9 + $0x6c0] sm:$0xff]
  %v2567 = vld [vmem:[%s9 + $0x6c8] sm:$0xff]
  %v2568 = vld [vmem:[%s9 + $0x6d0] sm:$0xff]
  %v2569 = vld [vmem:[%s9 + $0x6d8] sm:$0xff]
  %v2570 = vld [vmem:[%s9 + $0x6e0] sm:$0xff]
  %v2571 = vld [vmem:[%s9 + $0x6e8] sm:$0xff]
  %v2572 = vld [vmem:[%s9 + $0x6f0] sm:$0xff]
  %v2573 = vld [vmem:[%s9 + $0x6f8] sm:$0xff]
  %v2574 = vld [vmem:[%s9 + $0x700] sm:$0xff]
  %v2575 = vld [vmem:[%s9 + $0x708] sm:$0xff]
  %v2576 = vld [vmem:[%s9 + $0x710] sm:$0xff]
  %v2577 = vld [vmem:[%s9 + $0x718] sm:$0xff]
  %v2578 = vld [vmem:[%s9 + $0x720] sm:$0xff]
  %v2579 = vld [vmem:[%s9 + $0x728] sm:$0xff]
  %v2580 = vld [vmem:[%s9 + $0x730] sm:$0xff]
  %v2581 = vld [vmem:[%s9 + $0x738] sm:$0xff]
  %v2582 = vld [vmem:[%s9 + $0x740] sm:$0xff]
  %v2583 = vld [vmem:[%s9 + $0x748] sm:$0xff]
  %v2584 = vld [vmem:[%s9 + $0x750] sm:$0xff]
  %v2585 = vld [vmem:[%s9 + $0x758] sm:$0xff]
  %v2586 = vld [vmem:[%s9 + $0x760] sm:$0xff]
  %v2587 = vld [vmem:[%s9 + $0x768] sm:$0xff]
  %v2588 = vld [vmem:[%s9 + $0x770] sm:$0xff]
  %v2589 = vld [vmem:[%s9 + $0x778] sm:$0xff]
  %v2590 = vld [vmem:[%s9 + $0x780] sm:$0xff]
  %v2591 = vld [vmem:[%s9 + $0x788] sm:$0xff]
  %v2592 = vld [vmem:[%s9 + $0x790] sm:$0xff]
  %v2593 = vld [vmem:[%s9 + $0x798] sm:$0xff]
  %v2594 = vld [vmem:[%s9 + $0x7a0] sm:$0xff]
  %v2595 = vld [vmem:[%s9 + $0x7a8] sm:$0xff]
  %v2596 = vld [vmem:[%s9 + $0x7b0] sm:$0xff]
  %v2597 = vld [vmem:[%s9 + $0x7b8] sm:$0xff]
  %v2598 = vld [vmem:[%s9 + $0x7c0] sm:$0xff]
  %v2599 = vld [vmem:[%s9 + $0x7c8] sm:$0xff]
  %v2600 = vld [vmem:[%s9 + $0x7d0] sm:$0xff]
  %v2601 = vld [vmem:[%s9 + $0x7d8] sm:$0xff]
  %v2602 = vld [vmem:[%s9 + $0x7e0] sm:$0xff]
  %v2603 = vld [vmem:[%s9 + $0x7e8] sm:$0xff]
  %v2604 = vld [vmem:[%s9 + $0x7f0] sm:$0xff]
  %v2605 = vld [vmem:[%s9 + $0x7f8] sm:$0xff]
  %v2606 = vld [vmem:[%s9 + $0x800] sm:$0xff]
  %v2607 = vld [vmem:[%s9 + $0x808] sm:$0xff]
  %v2608 = vld [vmem:[%s9 + $0x810] sm:$0xff]
  %v2609 = vld [vmem:[%s9 + $0x818] sm:$0xff]
  %v2610 = vld [vmem:[%s9 + $0x820] sm:$0xff]
  %v2611 = vld [vmem:[%s9 + $0x828] sm:$0xff]
  %v2612 = vld [vmem:[%s9 + $0x830] sm:$0xff]
  %v2613 = vld [vmem:[%s9 + $0x838] sm:$0xff]
  %v2614 = vld [vmem:[%s9 + $0x840] sm:$0xff]
  %v2615 = vld [vmem:[%s9 + $0x848] sm:$0xff]
  %v2616 = vld [vmem:[%s9 + $0x850] sm:$0xff]
  %v2617 = vld [vmem:[%s9 + $0x858] sm:$0xff]
  %v2618 = vld [vmem:[%s9 + $0x860] sm:$0xff]
  %v2619 = vld [vmem:[%s9 + $0x868] sm:$0xff]
  %v2620 = vld [vmem:[%s9 + $0x870] sm:$0xff]
  %v2621 = vld [vmem:[%s9 + $0x878] sm:$0xff]
  %v2622 = vld [vmem:[%s9 + $0x880] sm:$0xff]
  %v2623 = vld [vmem:[%s9 + $0x888] sm:$0xff]
  %v2624 = vld [vmem:[%s9 + $0x890] sm:$0xff]
  %v2625 = vld [vmem:[%s9 + $0x898] sm:$0xff]
  %v2626 = vld [vmem:[%s9 + $0x8a0] sm:$0xff]
  %v2627 = vld [vmem:[%s9 + $0x8a8] sm:$0xff]
  %v2628 = vld [vmem:[%s9 + $0x8b0] sm:$0xff]
  %v2629 = vld [vmem:[%s9 + $0x8b8] sm:$0xff]
  %v2630 = vld [vmem:[%s9 + $0x8c0] sm:$0xff]
  %v2631 = vld [vmem:[%s9 + $0x8c8] sm:$0xff]
  %v2632 = vld [vmem:[%s9 + $0x8d0] sm:$0xff]
  %v2633 = vld [vmem:[%s9 + $0x8d8] sm:$0xff]
  %v2634 = vld [vmem:[%s9 + $0x8e0] sm:$0xff]
  %v2635 = vld [vmem:[%s9 + $0x8e8] sm:$0xff]
  %v2636 = vld [vmem:[%s9 + $0x8f0] sm:$0xff]
  %v2637 = vld [vmem:[%s9 + $0x8f8] sm:$0xff]
  %v2638 = vld [vmem:[%s9 + $0x900] sm:$0xff]
  %v2639 = vld [vmem:[%s9 + $0x908] sm:$0xff]
  %v2640 = vld [vmem:[%s9 + $0x910] sm:$0xff]
  %v2641 = vld [vmem:[%s9 + $0x918] sm:$0xff]
  %v2642 = vld [vmem:[%s9 + $0x920] sm:$0xff]
  %v2643 = vld [vmem:[%s9 + $0x928] sm:$0xff]
  %v2644 = vld [vmem:[%s9 + $0x930] sm:$0xff]
  %v2645 = vld [vmem:[%s9 + $0x938] sm:$0xff]
  %v2646 = vld [vmem:[%s9 + $0x940] sm:$0xff]
  %v2647 = vld [vmem:[%s9 + $0x948] sm:$0xff]
  %v2648 = vld [vmem:[%s9 + $0x950] sm:$0xff]
  %v2649 = vld [vmem:[%s9 + $0x958] sm:$0xff]
  %v2650 = vld [vmem:[%s9 + $0x960] sm:$0xff]
  %v2651 = vld [vmem:[%s9 + $0x968] sm:$0xff]
  %v2652 = vld [vmem:[%s9 + $0x970] sm:$0xff]
  %v2653 = vld [vmem:[%s9 + $0x978] sm:$0xff]
  %v2654 = vld [vmem:[%s9 + $0x980] sm:$0xff]
  %v2655 = vld [vmem:[%s9 + $0x988] sm:$0xff]
  %v2656 = vld [vmem:[%s9 + $0x990] sm:$0xff]
  %v2657 = vld [vmem:[%s9 + $0x998] sm:$0xff]
  %v2658 = vld [vmem:[%s9 + $0x9a0] sm:$0xff]
  %v2659 = vld [vmem:[%s9 + $0x9a8] sm:$0xff]
  %v2660 = vld [vmem:[%s9 + $0x9b0] sm:$0xff]
  %v2661 = vld [vmem:[%s9 + $0x9b8] sm:$0xff]
  %v2662 = vld [vmem:[%s9 + $0x9c0] sm:$0xff]
  %v2663 = vld [vmem:[%s9 + $0x9c8] sm:$0xff]
  %v2664 = vld [vmem:[%s9 + $0x9d0] sm:$0xff]
  %v2665 = vld [vmem:[%s9 + $0x9d8] sm:$0xff]
  %v2666 = vld [vmem:[%s9 + $0x9e0] sm:$0xff]
  %v2667 = vld [vmem:[%s9 + $0x9e8] sm:$0xff]
  %v2668 = vld [vmem:[%s9 + $0x9f0] sm:$0xff]
  %v2669 = vld [vmem:[%s9 + $0x9f8] sm:$0xff]
  %v2670 = vld [vmem:[%s9 + $0xa00] sm:$0xff]
  %v2671 = vld [vmem:[%s9 + $0xa08] sm:$0xff]
  %v2672 = vld [vmem:[%s9 + $0xa10] sm:$0xff]
  %v2673 = vld [vmem:[%s9 + $0xa18] sm:$0xff]
  %v2674 = vld [vmem:[%s9 + $0xa20] sm:$0xff]
  %v2675 = vld [vmem:[%s9 + $0xa28] sm:$0xff]
  %v2676 = vld [vmem:[%s9 + $0xa30] sm:$0xff]
  %v2677 = vld [vmem:[%s9 + $0xa38] sm:$0xff]
  %v2678 = vld [vmem:[%s9 + $0xa40] sm:$0xff]
  %v2679 = vld [vmem:[%s9 + $0xa48] sm:$0xff]
  %v2680 = vld [vmem:[%s9 + $0xa50] sm:$0xff]
  %v2681 = vld [vmem:[%s9 + $0xa58] sm:$0xff]
  %v2682 = vld [vmem:[%s9 + $0xa60] sm:$0xff]
  %v2683 = vld [vmem:[%s9 + $0xa68] sm:$0xff]
  %v2684 = vld [vmem:[%s9 + $0xa70] sm:$0xff]
  %v2685 = vld [vmem:[%s9 + $0xa78] sm:$0xff]
  %v2686 = vld [vmem:[%s9 + $0xa80] sm:$0xff]
  %v2687 = vld [vmem:[%s9 + $0xa88] sm:$0xff]
  %v2688 = vld [vmem:[%s9 + $0xa90] sm:$0xff]
  %v2689 = vld [vmem:[%s9 + $0xa98] sm:$0xff]
  %v2690 = vld [vmem:[%s9 + $0xaa0] sm:$0xff]
  %v2691 = vld [vmem:[%s9 + $0xaa8] sm:$0xff]
  %v2692 = vld [vmem:[%s9 + $0xab0] sm:$0xff]
  %v2693 = vld [vmem:[%s9 + $0xab8] sm:$0xff]
  %v2694 = vld [vmem:[%s9 + $0xac0] sm:$0xff]
  %v2695 = vld [vmem:[%s9 + $0xac8] sm:$0xff]
  %v2696 = vld [vmem:[%s9 + $0xad0] sm:$0xff]
  %v2697 = vld [vmem:[%s9 + $0xad8] sm:$0xff]
  %v2698 = vld [vmem:[%s9 + $0xae0] sm:$0xff]
  %v2699 = vld [vmem:[%s9 + $0xae8] sm:$0xff]
  %v2700 = vld [vmem:[%s9 + $0xaf0] sm:$0xff]
  %v2701 = vld [vmem:[%s9 + $0xaf8] sm:$0xff]
  %v2702 = vld [vmem:[%s9 + $0xb00] sm:$0xff]
  %v2703 = vld [vmem:[%s9 + $0xb08] sm:$0xff]
  %v2704 = vld [vmem:[%s9 + $0xb10] sm:$0xff]
  %v2705 = vld [vmem:[%s9 + $0xb18] sm:$0xff]
  %v2706 = vld [vmem:[%s9 + $0xb20] sm:$0xff]
  %v2707 = vld [vmem:[%s9 + $0xb28] sm:$0xff]
  %v2708 = vld [vmem:[%s9 + $0xb30] sm:$0xff]
  %v2709 = vld [vmem:[%s9 + $0xb38] sm:$0xff]
  %v2710 = vld [vmem:[%s9 + $0xb40] sm:$0xff]
  %v2711 = vld [vmem:[%s9 + $0xb48] sm:$0xff]
  %v2712 = vld [vmem:[%s9 + $0xb50] sm:$0xff]
  %v2713 = vld [vmem:[%s9 + $0xb58] sm:$0xff]
  %v2714 = vld [vmem:[%s9 + $0xb60] sm:$0xff]
  %v2715 = vld [vmem:[%s9 + $0xb68] sm:$0xff]
  %v2716 = vld [vmem:[%s9 + $0xb70] sm:$0xff]
  %v2717 = vld [vmem:[%s9 + $0xb78] sm:$0xff]
  %v2718 = vld [vmem:[%s9 + $0xb80] sm:$0xff]
  %v2719 = vld [vmem:[%s9 + $0xb88] sm:$0xff]
  %v2720 = vld [vmem:[%s9 + $0xb90] sm:$0xff]
  %v2721 = vld [vmem:[%s9 + $0xb98] sm:$0xff]
  %v2722 = vld [vmem:[%s9 + $0xba0] sm:$0xff]
  %v2723 = vld [vmem:[%s9 + $0xba8] sm:$0xff]
  %v2724 = vld [vmem:[%s9 + $0xbb0] sm:$0xff]
  %v2725 = vld [vmem:[%s9 + $0xbb8] sm:$0xff]
  %v2726 = vld [vmem:[%s9 + $0xbc0] sm:$0xff]
  %v2727 = vld [vmem:[%s9 + $0xbc8] sm:$0xff]
  %v2728 = vld [vmem:[%s9 + $0xbd0] sm:$0xff]
  %v2729 = vld [vmem:[%s9 + $0xbd8] sm:$0xff]
  %v2730 = vld [vmem:[%s9 + $0xbe0] sm:$0xff]
  %v2731 = vld [vmem:[%s9 + $0xbe8] sm:$0xff]
  %v2732 = vld [vmem:[%s9 + $0xbf0] sm:$0xff]
  %v2733 = vld [vmem:[%s9 + $0xbf8] sm:$0xff]
  %v2734 = vld [vmem:[%s9 + $0xc00] sm:$0xff]
  %v2735 = vld [vmem:[%s9 + $0xc08] sm:$0xff]
  %v2736 = vld [vmem:[%s9 + $0xc10] sm:$0xff]
  %v2737 = vld [vmem:[%s9 + $0xc18] sm:$0xff]
  %v2738 = vld [vmem:[%s9 + $0xc20] sm:$0xff]
  %v2739 = vld [vmem:[%s9 + $0xc28] sm:$0xff]
  %v2740 = vld [vmem:[%s9 + $0xc30] sm:$0xff]
  %v2741 = vld [vmem:[%s9 + $0xc38] sm:$0xff]
  %v2742 = vld [vmem:[%s9 + $0xc40] sm:$0xff]
  %v2743 = vld [vmem:[%s9 + $0xc48] sm:$0xff]
  %v2744 = vld [vmem:[%s9 + $0xc50] sm:$0xff]
  %v2745 = vld [vmem:[%s9 + $0xc58] sm:$0xff]
  %v2746 = vld [vmem:[%s9 + $0xc60] sm:$0xff]
  %v2747 = vld [vmem:[%s9 + $0xc68] sm:$0xff]
  %v2748 = vld [vmem:[%s9 + $0xc70] sm:$0xff]
  %v2749 = vld [vmem:[%s9 + $0xc78] sm:$0xff]
  %v2750 = vld [vmem:[%s9 + $0xc80] sm:$0xff]
  %v2751 = vld [vmem:[%s9 + $0xc88] sm:$0xff]
  %v2752 = vld [vmem:[%s9 + $0xc90] sm:$0xff]
  %v2753 = vld [vmem:[%s9 + $0xc98] sm:$0xff]
  %v2754 = vld [vmem:[%s9 + $0xca0] sm:$0xff]
  %v2755 = vld [vmem:[%s9 + $0xca8] sm:$0xff]
  %v2756 = vld [vmem:[%s9 + $0xcb0] sm:$0xff]
  %v2757 = vld [vmem:[%s9 + $0xcb8] sm:$0xff]
  %v2758 = vld [vmem:[%s9 + $0xcc0] sm:$0xff]
  %v2759 = vld [vmem:[%s9 + $0xcc8] sm:$0xff]
  %v2760 = vld [vmem:[%s9 + $0xcd0] sm:$0xff]
  %v2761 = vld [vmem:[%s9 + $0xcd8] sm:$0xff]
  %v2762 = vld [vmem:[%s9 + $0xce0] sm:$0xff]
  %v2763 = vld [vmem:[%s9 + $0xce8] sm:$0xff]
  %v2764 = vld [vmem:[%s9 + $0xcf0] sm:$0xff]
  %v2765 = vld [vmem:[%s9 + $0xcf8] sm:$0xff]
  %v2766 = vld [vmem:[%s9 + $0xd00] sm:$0xff]
  %v2767 = vld [vmem:[%s9 + $0xd08] sm:$0xff]
  %v2768 = vld [vmem:[%s9 + $0xd10] sm:$0xff]
  %v2769 = vld [vmem:[%s9 + $0xd18] sm:$0xff]
  %v2770 = vld [vmem:[%s9 + $0xd20] sm:$0xff]
  %v2771 = vld [vmem:[%s9 + $0xd28] sm:$0xff]
  %v2772 = vld [vmem:[%s9 + $0xd30] sm:$0xff]
  %v2773 = vld [vmem:[%s9 + $0xd38] sm:$0xff]
  %v2774 = vld [vmem:[%s9 + $0xd40] sm:$0xff]
  %v2775 = vld [vmem:[%s9 + $0xd48] sm:$0xff]
  %v2776 = vld [vmem:[%s9 + $0xd50] sm:$0xff]
  %v2777 = vld [vmem:[%s9 + $0xd58] sm:$0xff]
  %v2778 = vld [vmem:[%s9 + $0xd60] sm:$0xff]
  %v2779 = vld [vmem:[%s9 + $0xd68] sm:$0xff]
  %v2780 = vld [vmem:[%s9 + $0xd70] sm:$0xff]
  %v2781 = vld [vmem:[%s9 + $0xd78] sm:$0xff]
  %v2782 = vld [vmem:[%s9 + $0xd80] sm:$0xff]
  %v2783 = vld [vmem:[%s9 + $0xd88] sm:$0xff]
  %v2784 = vld [vmem:[%s9 + $0xd90] sm:$0xff]
  %v2785 = vld [vmem:[%s9 + $0xd98] sm:$0xff]
  %v2786 = vld [vmem:[%s9 + $0xda0] sm:$0xff]
  %v2787 = vld [vmem:[%s9 + $0xda8] sm:$0xff]
  %v2788 = vld [vmem:[%s9 + $0xdb0] sm:$0xff]
  %v2789 = vld [vmem:[%s9 + $0xdb8] sm:$0xff]
  %v2790 = vld [vmem:[%s9 + $0xdc0] sm:$0xff]
  %v2791 = vld [vmem:[%s9 + $0xdc8] sm:$0xff]
  %v2792 = vld [vmem:[%s9 + $0xdd0] sm:$0xff]
  %v2793 = vld [vmem:[%s9 + $0xdd8] sm:$0xff]
  %v2794 = vld [vmem:[%s9 + $0xde0] sm:$0xff]
  %v2795 = vld [vmem:[%s9 + $0xde8] sm:$0xff]
  %v2796 = vld [vmem:[%s9 + $0xdf0] sm:$0xff]
  %v2797 = vld [vmem:[%s9 + $0xdf8] sm:$0xff]
  %v2798 = vld [vmem:[%s9 + $0xe00] sm:$0xff]
  %v2799 = vld [vmem:[%s9 + $0xe08] sm:$0xff]
  %v2800 = vld [vmem:[%s9 + $0xe10] sm:$0xff]
  %v2801 = vld [vmem:[%s9 + $0xe18] sm:$0xff]
  %v2802 = vld [vmem:[%s9 + $0xe20] sm:$0xff]
  %v2803 = vld [vmem:[%s9 + $0xe28] sm:$0xff]
  %v2804 = vld [vmem:[%s9 + $0xe30] sm:$0xff]
  %v2805 = vld [vmem:[%s9 + $0xe38] sm:$0xff]
  %v2806 = vld [vmem:[%s9 + $0xe40] sm:$0xff]
  %v2807 = vld [vmem:[%s9 + $0xe48] sm:$0xff]
  %v2808 = vld [vmem:[%s9 + $0xe50] sm:$0xff]
  %v2809 = vld [vmem:[%s9 + $0xe58] sm:$0xff]
  %v2810 = vld [vmem:[%s9 + $0xe60] sm:$0xff]
  %v2811 = vld [vmem:[%s9 + $0xe68] sm:$0xff]
  %v2812 = vld [vmem:[%s9 + $0xe70] sm:$0xff]
  %v2813 = vld [vmem:[%s9 + $0xe78] sm:$0xff]
  %v2814 = vld [vmem:[%s9 + $0xe80] sm:$0xff]
  %v2815 = vld [vmem:[%s9 + $0xe88] sm:$0xff]
  %v2816 = vld [vmem:[%s9 + $0xe90] sm:$0xff]
  %v2817 = vld [vmem:[%s9 + $0xe98] sm:$0xff]
  %v2818 = vld [vmem:[%s9 + $0xea0] sm:$0xff]
  %v2819 = vld [vmem:[%s9 + $0xea8] sm:$0xff]
  %v2820 = vld [vmem:[%s9 + $0xeb0] sm:$0xff]
  %v2821 = vld [vmem:[%s9 + $0xeb8] sm:$0xff]
  %v2822 = vld [vmem:[%s9 + $0xec0] sm:$0xff]
  %v2823 = vld [vmem:[%s9 + $0xec8] sm:$0xff]
  %v2824 = vld [vmem:[%s9 + $0xed0] sm:$0xff]
  %v2825 = vld [vmem:[%s9 + $0xed8] sm:$0xff]
  %v2826 = vld [vmem:[%s9 + $0xee0] sm:$0xff]
  %v2827 = vld [vmem:[%s9 + $0xee8] sm:$0xff]
  %v2828 = vld [vmem:[%s9 + $0xef0] sm:$0xff]
  %v2829 = vld [vmem:[%s9 + $0xef8] sm:$0xff]
  %v2830 = vld [vmem:[%s9 + $0xf00] sm:$0xff]
  %v2831 = vld [vmem:[%s9 + $0xf08] sm:$0xff]
  %v2832 = vld [vmem:[%s9 + $0xf10] sm:$0xff]
  %v2833 = vld [vmem:[%s9 + $0xf18] sm:$0xff]
  %v2834 = vld [vmem:[%s9 + $0xf20] sm:$0xff]
  %v2835 = vld [vmem:[%s9 + $0xf28] sm:$0xff]
  %v2836 = vld [vmem:[%s9 + $0xf30] sm:$0xff]
  %v2837 = vld [vmem:[%s9 + $0xf38] sm:$0xff]
  %v2838 = vld [vmem:[%s9 + $0xf40] sm:$0xff]
  %v2839 = vld [vmem:[%s9 + $0xf48] sm:$0xff]
  %v2840 = vld [vmem:[%s9 + $0xf50] sm:$0xff]
  %v2841 = vld [vmem:[%s9 + $0xf58] sm:$0xff]
  %v2842 = vld [vmem:[%s9 + $0xf60] sm:$0xff]
  %v2843 = vld [vmem:[%s9 + $0xf68] sm:$0xff]
  %v2844 = vld [vmem:[%s9 + $0xf70] sm:$0xff]
  %v2845 = vld [vmem:[%s9 + $0xf78] sm:$0xff]
  %v2846 = vld [vmem:[%s9 + $0xf80] sm:$0xff]
  %v2847 = vld [vmem:[%s9 + $0xf88] sm:$0xff]
  %v2848 = vld [vmem:[%s9 + $0xf90] sm:$0xff]
  %v2849 = vld [vmem:[%s9 + $0xf98] sm:$0xff]
  %v2850 = vld [vmem:[%s9 + $0xfa0] sm:$0xff]
  %v2851 = vld [vmem:[%s9 + $0xfa8] sm:$0xff]
  %v2852 = vld [vmem:[%s9 + $0xfb0] sm:$0xff]
  %v2853 = vld [vmem:[%s9 + $0xfb8] sm:$0xff]
  %v2854 = vld [vmem:[%s9 + $0xfc0] sm:$0xff]
  %v2855 = vld [vmem:[%s9 + $0xfc8] sm:$0xff]
  %v2856 = vld [vmem:[%s9 + $0xfd0] sm:$0xff]
  %v2857 = vld [vmem:[%s9 + $0xfd8] sm:$0xff]
  %v2858 = vld [vmem:[%s9 + $0xfe0] sm:$0xff]
  %v2859 = vld [vmem:[%s9 + $0xfe8] sm:$0xff]
  %v2860 = vld [vmem:[%s9 + $0xff0] sm:$0xff]
  %v2861 = vld [vmem:[%s9 + $0xff8] sm:$0xff]
  %v2862 = vld [vmem:[%s10] sm:$0xff]
  %v2864 = vlaneseq
  %v2865 = vshrl.u32 %v2864, 7
  %v2866 = vsub.s32 0, %v2865
  %v2867 = vrot.slane %v2862, %v2866
  %v2868 = vlaneseq
  %v2869 = vshrl.u32 %v2868, 7
  %v2870 = vsub.s32 1, %v2869
  %v2871 = vrot.slane %v2862, %v2870
  %v2872 = vlaneseq
  %v2873 = vshrl.u32 %v2872, 7
  %v2874 = vsub.s32 2, %v2873
  %v2875 = vrot.slane %v2862, %v2874
  %v2876 = vlaneseq
  %v2877 = vshrl.u32 %v2876, 7
  %v2878 = vsub.s32 3, %v2877
  %v2879 = vrot.slane %v2862, %v2878
  %v2880 = vlaneseq
  %v2881 = vshrl.u32 %v2880, 7
  %v2882 = vsub.s32 4, %v2881
  %v2883 = vrot.slane %v2862, %v2882
  %v2884 = vlaneseq
  %v2885 = vshrl.u32 %v2884, 7
  %v2886 = vsub.s32 5, %v2885
  %v2887 = vrot.slane %v2862, %v2886
  %v2888 = vlaneseq
  %v2889 = vshrl.u32 %v2888, 7
  %v2890 = vsub.s32 6, %v2889
  %v2891 = vrot.slane %v2862, %v2890
  %v2892 = vlaneseq
  %v2893 = vshrl.u32 %v2892, 7
  %v2894 = vsub.s32 7, %v2893
  %v2895 = vrot.slane %v2862, %v2894
  %v3416 = vunpack.c.l.b16 %v2350
  %v3417 = vunpack.c.h.b16 %v2350
  %v3418 = vunpack.c.l.b16 %v2351
  %v3419 = vunpack.c.h.b16 %v2351
  %v3420 = vunpack.c.l.b16 %v2352
  %v3421 = vunpack.c.h.b16 %v2352
  %v3422 = vunpack.c.l.b16 %v2353
  %v3423 = vunpack.c.h.b16 %v2353
  %v3424 = vunpack.c.l.b16 %v2354
  %v3425 = vunpack.c.h.b16 %v2354
  %v3426 = vunpack.c.l.b16 %v2355
  %v3427 = vunpack.c.h.b16 %v2355
  %v3428 = vunpack.c.l.b16 %v2356
  %v3429 = vunpack.c.h.b16 %v2356
  %v3430 = vunpack.c.l.b16 %v2357
  %v3431 = vunpack.c.h.b16 %v2357
  %v3432 = vunpack.c.l.b16 %v2358
  %v3433 = vunpack.c.h.b16 %v2358
  %v3434 = vunpack.c.l.b16 %v2359
  %v3435 = vunpack.c.h.b16 %v2359
  %v3436 = vunpack.c.l.b16 %v2360
  %v3437 = vunpack.c.h.b16 %v2360
  %v3438 = vunpack.c.l.b16 %v2361
  %v3439 = vunpack.c.h.b16 %v2361
  %v3440 = vunpack.c.l.b16 %v2362
  %v3441 = vunpack.c.h.b16 %v2362
  %v3442 = vunpack.c.l.b16 %v2363
  %v3443 = vunpack.c.h.b16 %v2363
  %v3444 = vunpack.c.l.b16 %v2364
  %v3445 = vunpack.c.h.b16 %v2364
  %v3446 = vunpack.c.l.b16 %v2365
  %v3447 = vunpack.c.h.b16 %v2365
  %v3448 = vunpack.c.l.b16 %v2366
  %v3449 = vunpack.c.h.b16 %v2366
  %v3450 = vunpack.c.l.b16 %v2367
  %v3451 = vunpack.c.h.b16 %v2367
  %v3452 = vunpack.c.l.b16 %v2368
  %v3453 = vunpack.c.h.b16 %v2368
  %v3454 = vunpack.c.l.b16 %v2369
  %v3455 = vunpack.c.h.b16 %v2369
  %v3456 = vunpack.c.l.b16 %v2370
  %v3457 = vunpack.c.h.b16 %v2370
  %v3458 = vunpack.c.l.b16 %v2371
  %v3459 = vunpack.c.h.b16 %v2371
  %v3460 = vunpack.c.l.b16 %v2372
  %v3461 = vunpack.c.h.b16 %v2372
  %v3462 = vunpack.c.l.b16 %v2373
  %v3463 = vunpack.c.h.b16 %v2373
  %v3464 = vunpack.c.l.b16 %v2374
  %v3465 = vunpack.c.h.b16 %v2374
  %v3466 = vunpack.c.l.b16 %v2375
  %v3467 = vunpack.c.h.b16 %v2375
  %v3468 = vunpack.c.l.b16 %v2376
  %v3469 = vunpack.c.h.b16 %v2376
  %v3470 = vunpack.c.l.b16 %v2377
  %v3471 = vunpack.c.h.b16 %v2377
  %v3472 = vunpack.c.l.b16 %v2378
  %v3473 = vunpack.c.h.b16 %v2378
  %v3474 = vunpack.c.l.b16 %v2379
  %v3475 = vunpack.c.h.b16 %v2379
  %v3476 = vunpack.c.l.b16 %v2380
  %v3477 = vunpack.c.h.b16 %v2380
  %v3478 = vunpack.c.l.b16 %v2381
  %v3479 = vunpack.c.h.b16 %v2381
  %v3480 = vunpack.c.l.b16 %v2382
  %v3481 = vunpack.c.h.b16 %v2382
  %v3482 = vunpack.c.l.b16 %v2383
  %v3483 = vunpack.c.h.b16 %v2383
  %v3484 = vunpack.c.l.b16 %v2384
  %v3485 = vunpack.c.h.b16 %v2384
  %v3486 = vunpack.c.l.b16 %v2385
  %v3487 = vunpack.c.h.b16 %v2385
  %v3488 = vunpack.c.l.b16 %v2386
  %v3489 = vunpack.c.h.b16 %v2386
  %v3490 = vunpack.c.l.b16 %v2387
  %v3491 = vunpack.c.h.b16 %v2387
  %v3492 = vunpack.c.l.b16 %v2388
  %v3493 = vunpack.c.h.b16 %v2388
  %v3494 = vunpack.c.l.b16 %v2389
  %v3495 = vunpack.c.h.b16 %v2389
  %v3496 = vunpack.c.l.b16 %v2390
  %v3497 = vunpack.c.h.b16 %v2390
  %v3498 = vunpack.c.l.b16 %v2391
  %v3499 = vunpack.c.h.b16 %v2391
  %v3500 = vunpack.c.l.b16 %v2392
  %v3501 = vunpack.c.h.b16 %v2392
  %v3502 = vunpack.c.l.b16 %v2393
  %v3503 = vunpack.c.h.b16 %v2393
  %v3504 = vunpack.c.l.b16 %v2394
  %v3505 = vunpack.c.h.b16 %v2394
  %v3506 = vunpack.c.l.b16 %v2395
  %v3507 = vunpack.c.h.b16 %v2395
  %v3508 = vunpack.c.l.b16 %v2396
  %v3509 = vunpack.c.h.b16 %v2396
  %v3510 = vunpack.c.l.b16 %v2397
  %v3511 = vunpack.c.h.b16 %v2397
  %v3512 = vunpack.c.l.b16 %v2398
  %v3513 = vunpack.c.h.b16 %v2398
  %v3514 = vunpack.c.l.b16 %v2399
  %v3515 = vunpack.c.h.b16 %v2399
  %v3516 = vunpack.c.l.b16 %v2400
  %v3517 = vunpack.c.h.b16 %v2400
  %v3518 = vunpack.c.l.b16 %v2401
  %v3519 = vunpack.c.h.b16 %v2401
  %v3520 = vunpack.c.l.b16 %v2402
  %v3521 = vunpack.c.h.b16 %v2402
  %v3522 = vunpack.c.l.b16 %v2403
  %v3523 = vunpack.c.h.b16 %v2403
  %v3524 = vunpack.c.l.b16 %v2404
  %v3525 = vunpack.c.h.b16 %v2404
  %v3526 = vunpack.c.l.b16 %v2405
  %v3527 = vunpack.c.h.b16 %v2405
  %v3528 = vunpack.c.l.b16 %v2406
  %v3529 = vunpack.c.h.b16 %v2406
  %v3530 = vunpack.c.l.b16 %v2407
  %v3531 = vunpack.c.h.b16 %v2407
  %v3532 = vunpack.c.l.b16 %v2408
  %v3533 = vunpack.c.h.b16 %v2408
  %v3534 = vunpack.c.l.b16 %v2409
  %v3535 = vunpack.c.h.b16 %v2409
  %v3536 = vunpack.c.l.b16 %v2410
  %v3537 = vunpack.c.h.b16 %v2410
  %v3538 = vunpack.c.l.b16 %v2411
  %v3539 = vunpack.c.h.b16 %v2411
  %v3540 = vunpack.c.l.b16 %v2412
  %v3541 = vunpack.c.h.b16 %v2412
  %v3542 = vunpack.c.l.b16 %v2413
  %v3543 = vunpack.c.h.b16 %v2413
  %v3544 = vunpack.c.l.b16 %v2414
  %v3545 = vunpack.c.h.b16 %v2414
  %v3546 = vunpack.c.l.b16 %v2415
  %v3547 = vunpack.c.h.b16 %v2415
  %v3548 = vunpack.c.l.b16 %v2416
  %v3549 = vunpack.c.h.b16 %v2416
  %v3550 = vunpack.c.l.b16 %v2417
  %v3551 = vunpack.c.h.b16 %v2417
  %v3552 = vunpack.c.l.b16 %v2418
  %v3553 = vunpack.c.h.b16 %v2418
  %v3554 = vunpack.c.l.b16 %v2419
  %v3555 = vunpack.c.h.b16 %v2419
  %v3556 = vunpack.c.l.b16 %v2420
  %v3557 = vunpack.c.h.b16 %v2420
  %v3558 = vunpack.c.l.b16 %v2421
  %v3559 = vunpack.c.h.b16 %v2421
  %v3560 = vunpack.c.l.b16 %v2422
  %v3561 = vunpack.c.h.b16 %v2422
  %v3562 = vunpack.c.l.b16 %v2423
  %v3563 = vunpack.c.h.b16 %v2423
  %v3564 = vunpack.c.l.b16 %v2424
  %v3565 = vunpack.c.h.b16 %v2424
  %v3566 = vunpack.c.l.b16 %v2425
  %v3567 = vunpack.c.h.b16 %v2425
  %v3568 = vunpack.c.l.b16 %v2426
  %v3569 = vunpack.c.h.b16 %v2426
  %v3570 = vunpack.c.l.b16 %v2427
  %v3571 = vunpack.c.h.b16 %v2427
  %v3572 = vunpack.c.l.b16 %v2428
  %v3573 = vunpack.c.h.b16 %v2428
  %v3574 = vunpack.c.l.b16 %v2429
  %v3575 = vunpack.c.h.b16 %v2429
  %v3576 = vunpack.c.l.b16 %v2430
  %v3577 = vunpack.c.h.b16 %v2430
  %v3578 = vunpack.c.l.b16 %v2431
  %v3579 = vunpack.c.h.b16 %v2431
  %v3580 = vunpack.c.l.b16 %v2432
  %v3581 = vunpack.c.h.b16 %v2432
  %v3582 = vunpack.c.l.b16 %v2433
  %v3583 = vunpack.c.h.b16 %v2433
  %v3584 = vunpack.c.l.b16 %v2434
  %v3585 = vunpack.c.h.b16 %v2434
  %v3586 = vunpack.c.l.b16 %v2435
  %v3587 = vunpack.c.h.b16 %v2435
  %v3588 = vunpack.c.l.b16 %v2436
  %v3589 = vunpack.c.h.b16 %v2436
  %v3590 = vunpack.c.l.b16 %v2437
  %v3591 = vunpack.c.h.b16 %v2437
  %v3592 = vunpack.c.l.b16 %v2438
  %v3593 = vunpack.c.h.b16 %v2438
  %v3594 = vunpack.c.l.b16 %v2439
  %v3595 = vunpack.c.h.b16 %v2439
  %v3596 = vunpack.c.l.b16 %v2440
  %v3597 = vunpack.c.h.b16 %v2440
  %v3598 = vunpack.c.l.b16 %v2441
  %v3599 = vunpack.c.h.b16 %v2441
  %v3600 = vunpack.c.l.b16 %v2442
  %v3601 = vunpack.c.h.b16 %v2442
  %v3602 = vunpack.c.l.b16 %v2443
  %v3603 = vunpack.c.h.b16 %v2443
  %v3604 = vunpack.c.l.b16 %v2444
  %v3605 = vunpack.c.h.b16 %v2444
  %v3606 = vunpack.c.l.b16 %v2445
  %v3607 = vunpack.c.h.b16 %v2445
  %v3608 = vunpack.c.l.b16 %v2446
  %v3609 = vunpack.c.h.b16 %v2446
  %v3610 = vunpack.c.l.b16 %v2447
  %v3611 = vunpack.c.h.b16 %v2447
  %v3612 = vunpack.c.l.b16 %v2448
  %v3613 = vunpack.c.h.b16 %v2448
  %v3614 = vunpack.c.l.b16 %v2449
  %v3615 = vunpack.c.h.b16 %v2449
  %v3616 = vunpack.c.l.b16 %v2450
  %v3617 = vunpack.c.h.b16 %v2450
  %v3618 = vunpack.c.l.b16 %v2451
  %v3619 = vunpack.c.h.b16 %v2451
  %v3620 = vunpack.c.l.b16 %v2452
  %v3621 = vunpack.c.h.b16 %v2452
  %v3622 = vunpack.c.l.b16 %v2453
  %v3623 = vunpack.c.h.b16 %v2453
  %v3624 = vunpack.c.l.b16 %v2454
  %v3625 = vunpack.c.h.b16 %v2454
  %v3626 = vunpack.c.l.b16 %v2455
  %v3627 = vunpack.c.h.b16 %v2455
  %v3628 = vunpack.c.l.b16 %v2456
  %v3629 = vunpack.c.h.b16 %v2456
  %v3630 = vunpack.c.l.b16 %v2457
  %v3631 = vunpack.c.h.b16 %v2457
  %v3632 = vunpack.c.l.b16 %v2458
  %v3633 = vunpack.c.h.b16 %v2458
  %v3634 = vunpack.c.l.b16 %v2459
  %v3635 = vunpack.c.h.b16 %v2459
  %v3636 = vunpack.c.l.b16 %v2460
  %v3637 = vunpack.c.h.b16 %v2460
  %v3638 = vunpack.c.l.b16 %v2461
  %v3639 = vunpack.c.h.b16 %v2461
  %v3640 = vunpack.c.l.b16 %v2462
  %v3641 = vunpack.c.h.b16 %v2462
  %v3642 = vunpack.c.l.b16 %v2463
  %v3643 = vunpack.c.h.b16 %v2463
  %v3644 = vunpack.c.l.b16 %v2464
  %v3645 = vunpack.c.h.b16 %v2464
  %v3646 = vunpack.c.l.b16 %v2465
  %v3647 = vunpack.c.h.b16 %v2465
  %v3648 = vunpack.c.l.b16 %v2466
  %v3649 = vunpack.c.h.b16 %v2466
  %v3650 = vunpack.c.l.b16 %v2467
  %v3651 = vunpack.c.h.b16 %v2467
  %v3652 = vunpack.c.l.b16 %v2468
  %v3653 = vunpack.c.h.b16 %v2468
  %v3654 = vunpack.c.l.b16 %v2469
  %v3655 = vunpack.c.h.b16 %v2469
  %v3656 = vunpack.c.l.b16 %v2470
  %v3657 = vunpack.c.h.b16 %v2470
  %v3658 = vunpack.c.l.b16 %v2471
  %v3659 = vunpack.c.h.b16 %v2471
  %v3660 = vunpack.c.l.b16 %v2472
  %v3661 = vunpack.c.h.b16 %v2472
  %v3662 = vunpack.c.l.b16 %v2473
  %v3663 = vunpack.c.h.b16 %v2473
  %v3664 = vunpack.c.l.b16 %v2474
  %v3665 = vunpack.c.h.b16 %v2474
  %v3666 = vunpack.c.l.b16 %v2475
  %v3667 = vunpack.c.h.b16 %v2475
  %v3668 = vunpack.c.l.b16 %v2476
  %v3669 = vunpack.c.h.b16 %v2476
  %v3670 = vunpack.c.l.b16 %v2477
  %v3671 = vunpack.c.h.b16 %v2477
  %v3672 = vunpack.c.l.b16 %v2478
  %v3673 = vunpack.c.h.b16 %v2478
  %v3674 = vunpack.c.l.b16 %v2479
  %v3675 = vunpack.c.h.b16 %v2479
  %v3676 = vunpack.c.l.b16 %v2480
  %v3677 = vunpack.c.h.b16 %v2480
  %v3678 = vunpack.c.l.b16 %v2481
  %v3679 = vunpack.c.h.b16 %v2481
  %v3680 = vunpack.c.l.b16 %v2482
  %v3681 = vunpack.c.h.b16 %v2482
  %v3682 = vunpack.c.l.b16 %v2483
  %v3683 = vunpack.c.h.b16 %v2483
  %v3684 = vunpack.c.l.b16 %v2484
  %v3685 = vunpack.c.h.b16 %v2484
  %v3686 = vunpack.c.l.b16 %v2485
  %v3687 = vunpack.c.h.b16 %v2485
  %v3688 = vunpack.c.l.b16 %v2486
  %v3689 = vunpack.c.h.b16 %v2486
  %v3690 = vunpack.c.l.b16 %v2487
  %v3691 = vunpack.c.h.b16 %v2487
  %v3692 = vunpack.c.l.b16 %v2488
  %v3693 = vunpack.c.h.b16 %v2488
  %v3694 = vunpack.c.l.b16 %v2489
  %v3695 = vunpack.c.h.b16 %v2489
  %v3696 = vunpack.c.l.b16 %v2490
  %v3697 = vunpack.c.h.b16 %v2490
  %v3698 = vunpack.c.l.b16 %v2491
  %v3699 = vunpack.c.h.b16 %v2491
  %v3700 = vunpack.c.l.b16 %v2492
  %v3701 = vunpack.c.h.b16 %v2492
  %v3702 = vunpack.c.l.b16 %v2493
  %v3703 = vunpack.c.h.b16 %v2493
  %v3704 = vunpack.c.l.b16 %v2494
  %v3705 = vunpack.c.h.b16 %v2494
  %v3706 = vunpack.c.l.b16 %v2495
  %v3707 = vunpack.c.h.b16 %v2495
  %v3708 = vunpack.c.l.b16 %v2496
  %v3709 = vunpack.c.h.b16 %v2496
  %v3710 = vunpack.c.l.b16 %v2497
  %v3711 = vunpack.c.h.b16 %v2497
  %v3712 = vunpack.c.l.b16 %v2498
  %v3713 = vunpack.c.h.b16 %v2498
  %v3714 = vunpack.c.l.b16 %v2499
  %v3715 = vunpack.c.h.b16 %v2499
  %v3716 = vunpack.c.l.b16 %v2500
  %v3717 = vunpack.c.h.b16 %v2500
  %v3718 = vunpack.c.l.b16 %v2501
  %v3719 = vunpack.c.h.b16 %v2501
  %v3720 = vunpack.c.l.b16 %v2502
  %v3721 = vunpack.c.h.b16 %v2502
  %v3722 = vunpack.c.l.b16 %v2503
  %v3723 = vunpack.c.h.b16 %v2503
  %v3724 = vunpack.c.l.b16 %v2504
  %v3725 = vunpack.c.h.b16 %v2504
  %v3726 = vunpack.c.l.b16 %v2505
  %v3727 = vunpack.c.h.b16 %v2505
  %v3728 = vunpack.c.l.b16 %v2506
  %v3729 = vunpack.c.h.b16 %v2506
  %v3730 = vunpack.c.l.b16 %v2507
  %v3731 = vunpack.c.h.b16 %v2507
  %v3732 = vunpack.c.l.b16 %v2508
  %v3733 = vunpack.c.h.b16 %v2508
  %v3734 = vunpack.c.l.b16 %v2509
  %v3735 = vunpack.c.h.b16 %v2509
  %v3736 = vunpack.c.l.b16 %v2510
  %v3737 = vunpack.c.h.b16 %v2510
  %v3738 = vunpack.c.l.b16 %v2511
  %v3739 = vunpack.c.h.b16 %v2511
  %v3740 = vunpack.c.l.b16 %v2512
  %v3741 = vunpack.c.h.b16 %v2512
  %v3742 = vunpack.c.l.b16 %v2513
  %v3743 = vunpack.c.h.b16 %v2513
  %v3744 = vunpack.c.l.b16 %v2514
  %v3745 = vunpack.c.h.b16 %v2514
  %v3746 = vunpack.c.l.b16 %v2515
  %v3747 = vunpack.c.h.b16 %v2515
  %v3748 = vunpack.c.l.b16 %v2516
  %v3749 = vunpack.c.h.b16 %v2516
  %v3750 = vunpack.c.l.b16 %v2517
  %v3751 = vunpack.c.h.b16 %v2517
  %v3752 = vunpack.c.l.b16 %v2518
  %v3753 = vunpack.c.h.b16 %v2518
  %v3754 = vunpack.c.l.b16 %v2519
  %v3755 = vunpack.c.h.b16 %v2519
  %v3756 = vunpack.c.l.b16 %v2520
  %v3757 = vunpack.c.h.b16 %v2520
  %v3758 = vunpack.c.l.b16 %v2521
  %v3759 = vunpack.c.h.b16 %v2521
  %v3760 = vunpack.c.l.b16 %v2522
  %v3761 = vunpack.c.h.b16 %v2522
  %v3762 = vunpack.c.l.b16 %v2523
  %v3763 = vunpack.c.h.b16 %v2523
  %v3764 = vunpack.c.l.b16 %v2524
  %v3765 = vunpack.c.h.b16 %v2524
  %v3766 = vunpack.c.l.b16 %v2525
  %v3767 = vunpack.c.h.b16 %v2525
  %v3768 = vunpack.c.l.b16 %v2526
  %v3769 = vunpack.c.h.b16 %v2526
  %v3770 = vunpack.c.l.b16 %v2527
  %v3771 = vunpack.c.h.b16 %v2527
  %v3772 = vunpack.c.l.b16 %v2528
  %v3773 = vunpack.c.h.b16 %v2528
  %v3774 = vunpack.c.l.b16 %v2529
  %v3775 = vunpack.c.h.b16 %v2529
  %v3776 = vunpack.c.l.b16 %v2530
  %v3777 = vunpack.c.h.b16 %v2530
  %v3778 = vunpack.c.l.b16 %v2531
  %v3779 = vunpack.c.h.b16 %v2531
  %v3780 = vunpack.c.l.b16 %v2532
  %v3781 = vunpack.c.h.b16 %v2532
  %v3782 = vunpack.c.l.b16 %v2533
  %v3783 = vunpack.c.h.b16 %v2533
  %v3784 = vunpack.c.l.b16 %v2534
  %v3785 = vunpack.c.h.b16 %v2534
  %v3786 = vunpack.c.l.b16 %v2535
  %v3787 = vunpack.c.h.b16 %v2535
  %v3788 = vunpack.c.l.b16 %v2536
  %v3789 = vunpack.c.h.b16 %v2536
  %v3790 = vunpack.c.l.b16 %v2537
  %v3791 = vunpack.c.h.b16 %v2537
  %v3792 = vunpack.c.l.b16 %v2538
  %v3793 = vunpack.c.h.b16 %v2538
  %v3794 = vunpack.c.l.b16 %v2539
  %v3795 = vunpack.c.h.b16 %v2539
  %v3796 = vunpack.c.l.b16 %v2540
  %v3797 = vunpack.c.h.b16 %v2540
  %v3798 = vunpack.c.l.b16 %v2541
  %v3799 = vunpack.c.h.b16 %v2541
  %v3800 = vunpack.c.l.b16 %v2542
  %v3801 = vunpack.c.h.b16 %v2542
  %v3802 = vunpack.c.l.b16 %v2543
  %v3803 = vunpack.c.h.b16 %v2543
  %v3804 = vunpack.c.l.b16 %v2544
  %v3805 = vunpack.c.h.b16 %v2544
  %v3806 = vunpack.c.l.b16 %v2545
  %v3807 = vunpack.c.h.b16 %v2545
  %v3808 = vunpack.c.l.b16 %v2546
  %v3809 = vunpack.c.h.b16 %v2546
  %v3810 = vunpack.c.l.b16 %v2547
  %v3811 = vunpack.c.h.b16 %v2547
  %v3812 = vunpack.c.l.b16 %v2548
  %v3813 = vunpack.c.h.b16 %v2548
  %v3814 = vunpack.c.l.b16 %v2549
  %v3815 = vunpack.c.h.b16 %v2549
  %v3816 = vunpack.c.l.b16 %v2550
  %v3817 = vunpack.c.h.b16 %v2550
  %v3818 = vunpack.c.l.b16 %v2551
  %v3819 = vunpack.c.h.b16 %v2551
  %v3820 = vunpack.c.l.b16 %v2552
  %v3821 = vunpack.c.h.b16 %v2552
  %v3822 = vunpack.c.l.b16 %v2553
  %v3823 = vunpack.c.h.b16 %v2553
  %v3824 = vunpack.c.l.b16 %v2554
  %v3825 = vunpack.c.h.b16 %v2554
  %v3826 = vunpack.c.l.b16 %v2555
  %v3827 = vunpack.c.h.b16 %v2555
  %v3828 = vunpack.c.l.b16 %v2556
  %v3829 = vunpack.c.h.b16 %v2556
  %v3830 = vunpack.c.l.b16 %v2557
  %v3831 = vunpack.c.h.b16 %v2557
  %v3832 = vunpack.c.l.b16 %v2558
  %v3833 = vunpack.c.h.b16 %v2558
  %v3834 = vunpack.c.l.b16 %v2559
  %v3835 = vunpack.c.h.b16 %v2559
  %v3836 = vunpack.c.l.b16 %v2560
  %v3837 = vunpack.c.h.b16 %v2560
  %v3838 = vunpack.c.l.b16 %v2561
  %v3839 = vunpack.c.h.b16 %v2561
  %v3840 = vunpack.c.l.b16 %v2562
  %v3841 = vunpack.c.h.b16 %v2562
  %v3842 = vunpack.c.l.b16 %v2563
  %v3843 = vunpack.c.h.b16 %v2563
  %v3844 = vunpack.c.l.b16 %v2564
  %v3845 = vunpack.c.h.b16 %v2564
  %v3846 = vunpack.c.l.b16 %v2565
  %v3847 = vunpack.c.h.b16 %v2565
  %v3848 = vunpack.c.l.b16 %v2566
  %v3849 = vunpack.c.h.b16 %v2566
  %v3850 = vunpack.c.l.b16 %v2567
  %v3851 = vunpack.c.h.b16 %v2567
  %v3852 = vunpack.c.l.b16 %v2568
  %v3853 = vunpack.c.h.b16 %v2568
  %v3854 = vunpack.c.l.b16 %v2569
  %v3855 = vunpack.c.h.b16 %v2569
  %v3856 = vunpack.c.l.b16 %v2570
  %v3857 = vunpack.c.h.b16 %v2570
  %v3858 = vunpack.c.l.b16 %v2571
  %v3859 = vunpack.c.h.b16 %v2571
  %v3860 = vunpack.c.l.b16 %v2572
  %v3861 = vunpack.c.h.b16 %v2572
  %v3862 = vunpack.c.l.b16 %v2573
  %v3863 = vunpack.c.h.b16 %v2573
  %v3864 = vunpack.c.l.b16 %v2574
  %v3865 = vunpack.c.h.b16 %v2574
  %v3866 = vunpack.c.l.b16 %v2575
  %v3867 = vunpack.c.h.b16 %v2575
  %v3868 = vunpack.c.l.b16 %v2576
  %v3869 = vunpack.c.h.b16 %v2576
  %v3870 = vunpack.c.l.b16 %v2577
  %v3871 = vunpack.c.h.b16 %v2577
  %v3872 = vunpack.c.l.b16 %v2578
  %v3873 = vunpack.c.h.b16 %v2578
  %v3874 = vunpack.c.l.b16 %v2579
  %v3875 = vunpack.c.h.b16 %v2579
  %v3876 = vunpack.c.l.b16 %v2580
  %v3877 = vunpack.c.h.b16 %v2580
  %v3878 = vunpack.c.l.b16 %v2581
  %v3879 = vunpack.c.h.b16 %v2581
  %v3880 = vunpack.c.l.b16 %v2582
  %v3881 = vunpack.c.h.b16 %v2582
  %v3882 = vunpack.c.l.b16 %v2583
  %v3883 = vunpack.c.h.b16 %v2583
  %v3884 = vunpack.c.l.b16 %v2584
  %v3885 = vunpack.c.h.b16 %v2584
  %v3886 = vunpack.c.l.b16 %v2585
  %v3887 = vunpack.c.h.b16 %v2585
  %v3888 = vunpack.c.l.b16 %v2586
  %v3889 = vunpack.c.h.b16 %v2586
  %v3890 = vunpack.c.l.b16 %v2587
  %v3891 = vunpack.c.h.b16 %v2587
  %v3892 = vunpack.c.l.b16 %v2588
  %v3893 = vunpack.c.h.b16 %v2588
  %v3894 = vunpack.c.l.b16 %v2589
  %v3895 = vunpack.c.h.b16 %v2589
  %v3896 = vunpack.c.l.b16 %v2590
  %v3897 = vunpack.c.h.b16 %v2590
  %v3898 = vunpack.c.l.b16 %v2591
  %v3899 = vunpack.c.h.b16 %v2591
  %v3900 = vunpack.c.l.b16 %v2592
  %v3901 = vunpack.c.h.b16 %v2592
  %v3902 = vunpack.c.l.b16 %v2593
  %v3903 = vunpack.c.h.b16 %v2593
  %v3904 = vunpack.c.l.b16 %v2594
  %v3905 = vunpack.c.h.b16 %v2594
  %v3906 = vunpack.c.l.b16 %v2595
  %v3907 = vunpack.c.h.b16 %v2595
  %v3908 = vunpack.c.l.b16 %v2596
  %v3909 = vunpack.c.h.b16 %v2596
  %v3910 = vunpack.c.l.b16 %v2597
  %v3911 = vunpack.c.h.b16 %v2597
  %v3912 = vunpack.c.l.b16 %v2598
  %v3913 = vunpack.c.h.b16 %v2598
  %v3914 = vunpack.c.l.b16 %v2599
  %v3915 = vunpack.c.h.b16 %v2599
  %v3916 = vunpack.c.l.b16 %v2600
  %v3917 = vunpack.c.h.b16 %v2600
  %v3918 = vunpack.c.l.b16 %v2601
  %v3919 = vunpack.c.h.b16 %v2601
  %v3920 = vunpack.c.l.b16 %v2602
  %v3921 = vunpack.c.h.b16 %v2602
  %v3922 = vunpack.c.l.b16 %v2603
  %v3923 = vunpack.c.h.b16 %v2603
  %v3924 = vunpack.c.l.b16 %v2604
  %v3925 = vunpack.c.h.b16 %v2604
  %v3926 = vunpack.c.l.b16 %v2605
  %v3927 = vunpack.c.h.b16 %v2605
  %v3928 = vunpack.c.l.b16 %v2606
  %v3929 = vunpack.c.h.b16 %v2606
  %v3930 = vunpack.c.l.b16 %v2607
  %v3931 = vunpack.c.h.b16 %v2607
  %v3932 = vunpack.c.l.b16 %v2608
  %v3933 = vunpack.c.h.b16 %v2608
  %v3934 = vunpack.c.l.b16 %v2609
  %v3935 = vunpack.c.h.b16 %v2609
  %v3936 = vunpack.c.l.b16 %v2610
  %v3937 = vunpack.c.h.b16 %v2610
  %v3938 = vunpack.c.l.b16 %v2611
  %v3939 = vunpack.c.h.b16 %v2611
  %v3940 = vunpack.c.l.b16 %v2612
  %v3941 = vunpack.c.h.b16 %v2612
  %v3942 = vunpack.c.l.b16 %v2613
  %v3943 = vunpack.c.h.b16 %v2613
  %v3944 = vunpack.c.l.b16 %v2614
  %v3945 = vunpack.c.h.b16 %v2614
  %v3946 = vunpack.c.l.b16 %v2615
  %v3947 = vunpack.c.h.b16 %v2615
  %v3948 = vunpack.c.l.b16 %v2616
  %v3949 = vunpack.c.h.b16 %v2616
  %v3950 = vunpack.c.l.b16 %v2617
  %v3951 = vunpack.c.h.b16 %v2617
  %v3952 = vunpack.c.l.b16 %v2618
  %v3953 = vunpack.c.h.b16 %v2618
  %v3954 = vunpack.c.l.b16 %v2619
  %v3955 = vunpack.c.h.b16 %v2619
  %v3956 = vunpack.c.l.b16 %v2620
  %v3957 = vunpack.c.h.b16 %v2620
  %v3958 = vunpack.c.l.b16 %v2621
  %v3959 = vunpack.c.h.b16 %v2621
  %v3960 = vunpack.c.l.b16 %v2622
  %v3961 = vunpack.c.h.b16 %v2622
  %v3962 = vunpack.c.l.b16 %v2623
  %v3963 = vunpack.c.h.b16 %v2623
  %v3964 = vunpack.c.l.b16 %v2624
  %v3965 = vunpack.c.h.b16 %v2624
  %v3966 = vunpack.c.l.b16 %v2625
  %v3967 = vunpack.c.h.b16 %v2625
  %v3968 = vunpack.c.l.b16 %v2626
  %v3969 = vunpack.c.h.b16 %v2626
  %v3970 = vunpack.c.l.b16 %v2627
  %v3971 = vunpack.c.h.b16 %v2627
  %v3972 = vunpack.c.l.b16 %v2628
  %v3973 = vunpack.c.h.b16 %v2628
  %v3974 = vunpack.c.l.b16 %v2629
  %v3975 = vunpack.c.h.b16 %v2629
  %v3976 = vunpack.c.l.b16 %v2630
  %v3977 = vunpack.c.h.b16 %v2630
  %v3978 = vunpack.c.l.b16 %v2631
  %v3979 = vunpack.c.h.b16 %v2631
  %v3980 = vunpack.c.l.b16 %v2632
  %v3981 = vunpack.c.h.b16 %v2632
  %v3982 = vunpack.c.l.b16 %v2633
  %v3983 = vunpack.c.h.b16 %v2633
  %v3984 = vunpack.c.l.b16 %v2634
  %v3985 = vunpack.c.h.b16 %v2634
  %v3986 = vunpack.c.l.b16 %v2635
  %v3987 = vunpack.c.h.b16 %v2635
  %v3988 = vunpack.c.l.b16 %v2636
  %v3989 = vunpack.c.h.b16 %v2636
  %v3990 = vunpack.c.l.b16 %v2637
  %v3991 = vunpack.c.h.b16 %v2637
  %v3992 = vunpack.c.l.b16 %v2638
  %v3993 = vunpack.c.h.b16 %v2638
  %v3994 = vunpack.c.l.b16 %v2639
  %v3995 = vunpack.c.h.b16 %v2639
  %v3996 = vunpack.c.l.b16 %v2640
  %v3997 = vunpack.c.h.b16 %v2640
  %v3998 = vunpack.c.l.b16 %v2641
  %v3999 = vunpack.c.h.b16 %v2641
  %v4000 = vunpack.c.l.b16 %v2642
  %v4001 = vunpack.c.h.b16 %v2642
  %v4002 = vunpack.c.l.b16 %v2643
  %v4003 = vunpack.c.h.b16 %v2643
  %v4004 = vunpack.c.l.b16 %v2644
  %v4005 = vunpack.c.h.b16 %v2644
  %v4006 = vunpack.c.l.b16 %v2645
  %v4007 = vunpack.c.h.b16 %v2645
  %v4008 = vunpack.c.l.b16 %v2646
  %v4009 = vunpack.c.h.b16 %v2646
  %v4010 = vunpack.c.l.b16 %v2647
  %v4011 = vunpack.c.h.b16 %v2647
  %v4012 = vunpack.c.l.b16 %v2648
  %v4013 = vunpack.c.h.b16 %v2648
  %v4014 = vunpack.c.l.b16 %v2649
  %v4015 = vunpack.c.h.b16 %v2649
  %v4016 = vunpack.c.l.b16 %v2650
  %v4017 = vunpack.c.h.b16 %v2650
  %v4018 = vunpack.c.l.b16 %v2651
  %v4019 = vunpack.c.h.b16 %v2651
  %v4020 = vunpack.c.l.b16 %v2652
  %v4021 = vunpack.c.h.b16 %v2652
  %v4022 = vunpack.c.l.b16 %v2653
  %v4023 = vunpack.c.h.b16 %v2653
  %v4024 = vunpack.c.l.b16 %v2654
  %v4025 = vunpack.c.h.b16 %v2654
  %v4026 = vunpack.c.l.b16 %v2655
  %v4027 = vunpack.c.h.b16 %v2655
  %v4028 = vunpack.c.l.b16 %v2656
  %v4029 = vunpack.c.h.b16 %v2656
  %v4030 = vunpack.c.l.b16 %v2657
  %v4031 = vunpack.c.h.b16 %v2657
  %v4032 = vunpack.c.l.b16 %v2658
  %v4033 = vunpack.c.h.b16 %v2658
  %v4034 = vunpack.c.l.b16 %v2659
  %v4035 = vunpack.c.h.b16 %v2659
  %v4036 = vunpack.c.l.b16 %v2660
  %v4037 = vunpack.c.h.b16 %v2660
  %v4038 = vunpack.c.l.b16 %v2661
  %v4039 = vunpack.c.h.b16 %v2661
  %v4040 = vunpack.c.l.b16 %v2662
  %v4041 = vunpack.c.h.b16 %v2662
  %v4042 = vunpack.c.l.b16 %v2663
  %v4043 = vunpack.c.h.b16 %v2663
  %v4044 = vunpack.c.l.b16 %v2664
  %v4045 = vunpack.c.h.b16 %v2664
  %v4046 = vunpack.c.l.b16 %v2665
  %v4047 = vunpack.c.h.b16 %v2665
  %v4048 = vunpack.c.l.b16 %v2666
  %v4049 = vunpack.c.h.b16 %v2666
  %v4050 = vunpack.c.l.b16 %v2667
  %v4051 = vunpack.c.h.b16 %v2667
  %v4052 = vunpack.c.l.b16 %v2668
  %v4053 = vunpack.c.h.b16 %v2668
  %v4054 = vunpack.c.l.b16 %v2669
  %v4055 = vunpack.c.h.b16 %v2669
  %v4056 = vunpack.c.l.b16 %v2670
  %v4057 = vunpack.c.h.b16 %v2670
  %v4058 = vunpack.c.l.b16 %v2671
  %v4059 = vunpack.c.h.b16 %v2671
  %v4060 = vunpack.c.l.b16 %v2672
  %v4061 = vunpack.c.h.b16 %v2672
  %v4062 = vunpack.c.l.b16 %v2673
  %v4063 = vunpack.c.h.b16 %v2673
  %v4064 = vunpack.c.l.b16 %v2674
  %v4065 = vunpack.c.h.b16 %v2674
  %v4066 = vunpack.c.l.b16 %v2675
  %v4067 = vunpack.c.h.b16 %v2675
  %v4068 = vunpack.c.l.b16 %v2676
  %v4069 = vunpack.c.h.b16 %v2676
  %v4070 = vunpack.c.l.b16 %v2677
  %v4071 = vunpack.c.h.b16 %v2677
  %v4072 = vunpack.c.l.b16 %v2678
  %v4073 = vunpack.c.h.b16 %v2678
  %v4074 = vunpack.c.l.b16 %v2679
  %v4075 = vunpack.c.h.b16 %v2679
  %v4076 = vunpack.c.l.b16 %v2680
  %v4077 = vunpack.c.h.b16 %v2680
  %v4078 = vunpack.c.l.b16 %v2681
  %v4079 = vunpack.c.h.b16 %v2681
  %v4080 = vunpack.c.l.b16 %v2682
  %v4081 = vunpack.c.h.b16 %v2682
  %v4082 = vunpack.c.l.b16 %v2683
  %v4083 = vunpack.c.h.b16 %v2683
  %v4084 = vunpack.c.l.b16 %v2684
  %v4085 = vunpack.c.h.b16 %v2684
  %v4086 = vunpack.c.l.b16 %v2685
  %v4087 = vunpack.c.h.b16 %v2685
  %v4088 = vunpack.c.l.b16 %v2686
  %v4089 = vunpack.c.h.b16 %v2686
  %v4090 = vunpack.c.l.b16 %v2687
  %v4091 = vunpack.c.h.b16 %v2687
  %v4092 = vunpack.c.l.b16 %v2688
  %v4093 = vunpack.c.h.b16 %v2688
  %v4094 = vunpack.c.l.b16 %v2689
  %v4095 = vunpack.c.h.b16 %v2689
  %v4096 = vunpack.c.l.b16 %v2690
  %v4097 = vunpack.c.h.b16 %v2690
  %v4098 = vunpack.c.l.b16 %v2691
  %v4099 = vunpack.c.h.b16 %v2691
  %v4100 = vunpack.c.l.b16 %v2692
  %v4101 = vunpack.c.h.b16 %v2692
  %v4102 = vunpack.c.l.b16 %v2693
  %v4103 = vunpack.c.h.b16 %v2693
  %v4104 = vunpack.c.l.b16 %v2694
  %v4105 = vunpack.c.h.b16 %v2694
  %v4106 = vunpack.c.l.b16 %v2695
  %v4107 = vunpack.c.h.b16 %v2695
  %v4108 = vunpack.c.l.b16 %v2696
  %v4109 = vunpack.c.h.b16 %v2696
  %v4110 = vunpack.c.l.b16 %v2697
  %v4111 = vunpack.c.h.b16 %v2697
  %v4112 = vunpack.c.l.b16 %v2698
  %v4113 = vunpack.c.h.b16 %v2698
  %v4114 = vunpack.c.l.b16 %v2699
  %v4115 = vunpack.c.h.b16 %v2699
  %v4116 = vunpack.c.l.b16 %v2700
  %v4117 = vunpack.c.h.b16 %v2700
  %v4118 = vunpack.c.l.b16 %v2701
  %v4119 = vunpack.c.h.b16 %v2701
  %v4120 = vunpack.c.l.b16 %v2702
  %v4121 = vunpack.c.h.b16 %v2702
  %v4122 = vunpack.c.l.b16 %v2703
  %v4123 = vunpack.c.h.b16 %v2703
  %v4124 = vunpack.c.l.b16 %v2704
  %v4125 = vunpack.c.h.b16 %v2704
  %v4126 = vunpack.c.l.b16 %v2705
  %v4127 = vunpack.c.h.b16 %v2705
  %v4128 = vunpack.c.l.b16 %v2706
  %v4129 = vunpack.c.h.b16 %v2706
  %v4130 = vunpack.c.l.b16 %v2707
  %v4131 = vunpack.c.h.b16 %v2707
  %v4132 = vunpack.c.l.b16 %v2708
  %v4133 = vunpack.c.h.b16 %v2708
  %v4134 = vunpack.c.l.b16 %v2709
  %v4135 = vunpack.c.h.b16 %v2709
  %v4136 = vunpack.c.l.b16 %v2710
  %v4137 = vunpack.c.h.b16 %v2710
  %v4138 = vunpack.c.l.b16 %v2711
  %v4139 = vunpack.c.h.b16 %v2711
  %v4140 = vunpack.c.l.b16 %v2712
  %v4141 = vunpack.c.h.b16 %v2712
  %v4142 = vunpack.c.l.b16 %v2713
  %v4143 = vunpack.c.h.b16 %v2713
  %v4144 = vunpack.c.l.b16 %v2714
  %v4145 = vunpack.c.h.b16 %v2714
  %v4146 = vunpack.c.l.b16 %v2715
  %v4147 = vunpack.c.h.b16 %v2715
  %v4148 = vunpack.c.l.b16 %v2716
  %v4149 = vunpack.c.h.b16 %v2716
  %v4150 = vunpack.c.l.b16 %v2717
  %v4151 = vunpack.c.h.b16 %v2717
  %v4152 = vunpack.c.l.b16 %v2718
  %v4153 = vunpack.c.h.b16 %v2718
  %v4154 = vunpack.c.l.b16 %v2719
  %v4155 = vunpack.c.h.b16 %v2719
  %v4156 = vunpack.c.l.b16 %v2720
  %v4157 = vunpack.c.h.b16 %v2720
  %v4158 = vunpack.c.l.b16 %v2721
  %v4159 = vunpack.c.h.b16 %v2721
  %v4160 = vunpack.c.l.b16 %v2722
  %v4161 = vunpack.c.h.b16 %v2722
  %v4162 = vunpack.c.l.b16 %v2723
  %v4163 = vunpack.c.h.b16 %v2723
  %v4164 = vunpack.c.l.b16 %v2724
  %v4165 = vunpack.c.h.b16 %v2724
  %v4166 = vunpack.c.l.b16 %v2725
  %v4167 = vunpack.c.h.b16 %v2725
  %v4168 = vunpack.c.l.b16 %v2726
  %v4169 = vunpack.c.h.b16 %v2726
  %v4170 = vunpack.c.l.b16 %v2727
  %v4171 = vunpack.c.h.b16 %v2727
  %v4172 = vunpack.c.l.b16 %v2728
  %v4173 = vunpack.c.h.b16 %v2728
  %v4174 = vunpack.c.l.b16 %v2729
  %v4175 = vunpack.c.h.b16 %v2729
  %v4176 = vunpack.c.l.b16 %v2730
  %v4177 = vunpack.c.h.b16 %v2730
  %v4178 = vunpack.c.l.b16 %v2731
  %v4179 = vunpack.c.h.b16 %v2731
  %v4180 = vunpack.c.l.b16 %v2732
  %v4181 = vunpack.c.h.b16 %v2732
  %v4182 = vunpack.c.l.b16 %v2733
  %v4183 = vunpack.c.h.b16 %v2733
  %v4184 = vunpack.c.l.b16 %v2734
  %v4185 = vunpack.c.h.b16 %v2734
  %v4186 = vunpack.c.l.b16 %v2735
  %v4187 = vunpack.c.h.b16 %v2735
  %v4188 = vunpack.c.l.b16 %v2736
  %v4189 = vunpack.c.h.b16 %v2736
  %v4190 = vunpack.c.l.b16 %v2737
  %v4191 = vunpack.c.h.b16 %v2737
  %v4192 = vunpack.c.l.b16 %v2738
  %v4193 = vunpack.c.h.b16 %v2738
  %v4194 = vunpack.c.l.b16 %v2739
  %v4195 = vunpack.c.h.b16 %v2739
  %v4196 = vunpack.c.l.b16 %v2740
  %v4197 = vunpack.c.h.b16 %v2740
  %v4198 = vunpack.c.l.b16 %v2741
  %v4199 = vunpack.c.h.b16 %v2741
  %v4200 = vunpack.c.l.b16 %v2742
  %v4201 = vunpack.c.h.b16 %v2742
  %v4202 = vunpack.c.l.b16 %v2743
  %v4203 = vunpack.c.h.b16 %v2743
  %v4204 = vunpack.c.l.b16 %v2744
  %v4205 = vunpack.c.h.b16 %v2744
  %v4206 = vunpack.c.l.b16 %v2745
  %v4207 = vunpack.c.h.b16 %v2745
  %v4208 = vunpack.c.l.b16 %v2746
  %v4209 = vunpack.c.h.b16 %v2746
  %v4210 = vunpack.c.l.b16 %v2747
  %v4211 = vunpack.c.h.b16 %v2747
  %v4212 = vunpack.c.l.b16 %v2748
  %v4213 = vunpack.c.h.b16 %v2748
  %v4214 = vunpack.c.l.b16 %v2749
  %v4215 = vunpack.c.h.b16 %v2749
  %v4216 = vunpack.c.l.b16 %v2750
  %v4217 = vunpack.c.h.b16 %v2750
  %v4218 = vunpack.c.l.b16 %v2751
  %v4219 = vunpack.c.h.b16 %v2751
  %v4220 = vunpack.c.l.b16 %v2752
  %v4221 = vunpack.c.h.b16 %v2752
  %v4222 = vunpack.c.l.b16 %v2753
  %v4223 = vunpack.c.h.b16 %v2753
  %v4224 = vunpack.c.l.b16 %v2754
  %v4225 = vunpack.c.h.b16 %v2754
  %v4226 = vunpack.c.l.b16 %v2755
  %v4227 = vunpack.c.h.b16 %v2755
  %v4228 = vunpack.c.l.b16 %v2756
  %v4229 = vunpack.c.h.b16 %v2756
  %v4230 = vunpack.c.l.b16 %v2757
  %v4231 = vunpack.c.h.b16 %v2757
  %v4232 = vunpack.c.l.b16 %v2758
  %v4233 = vunpack.c.h.b16 %v2758
  %v4234 = vunpack.c.l.b16 %v2759
  %v4235 = vunpack.c.h.b16 %v2759
  %v4236 = vunpack.c.l.b16 %v2760
  %v4237 = vunpack.c.h.b16 %v2760
  %v4238 = vunpack.c.l.b16 %v2761
  %v4239 = vunpack.c.h.b16 %v2761
  %v4240 = vunpack.c.l.b16 %v2762
  %v4241 = vunpack.c.h.b16 %v2762
  %v4242 = vunpack.c.l.b16 %v2763
  %v4243 = vunpack.c.h.b16 %v2763
  %v4244 = vunpack.c.l.b16 %v2764
  %v4245 = vunpack.c.h.b16 %v2764
  %v4246 = vunpack.c.l.b16 %v2765
  %v4247 = vunpack.c.h.b16 %v2765
  %v4248 = vunpack.c.l.b16 %v2766
  %v4249 = vunpack.c.h.b16 %v2766
  %v4250 = vunpack.c.l.b16 %v2767
  %v4251 = vunpack.c.h.b16 %v2767
  %v4252 = vunpack.c.l.b16 %v2768
  %v4253 = vunpack.c.h.b16 %v2768
  %v4254 = vunpack.c.l.b16 %v2769
  %v4255 = vunpack.c.h.b16 %v2769
  %v4256 = vunpack.c.l.b16 %v2770
  %v4257 = vunpack.c.h.b16 %v2770
  %v4258 = vunpack.c.l.b16 %v2771
  %v4259 = vunpack.c.h.b16 %v2771
  %v4260 = vunpack.c.l.b16 %v2772
  %v4261 = vunpack.c.h.b16 %v2772
  %v4262 = vunpack.c.l.b16 %v2773
  %v4263 = vunpack.c.h.b16 %v2773
  %v4264 = vunpack.c.l.b16 %v2774
  %v4265 = vunpack.c.h.b16 %v2774
  %v4266 = vunpack.c.l.b16 %v2775
  %v4267 = vunpack.c.h.b16 %v2775
  %v4268 = vunpack.c.l.b16 %v2776
  %v4269 = vunpack.c.h.b16 %v2776
  %v4270 = vunpack.c.l.b16 %v2777
  %v4271 = vunpack.c.h.b16 %v2777
  %v4272 = vunpack.c.l.b16 %v2778
  %v4273 = vunpack.c.h.b16 %v2778
  %v4274 = vunpack.c.l.b16 %v2779
  %v4275 = vunpack.c.h.b16 %v2779
  %v4276 = vunpack.c.l.b16 %v2780
  %v4277 = vunpack.c.h.b16 %v2780
  %v4278 = vunpack.c.l.b16 %v2781
  %v4279 = vunpack.c.h.b16 %v2781
  %v4280 = vunpack.c.l.b16 %v2782
  %v4281 = vunpack.c.h.b16 %v2782
  %v4282 = vunpack.c.l.b16 %v2783
  %v4283 = vunpack.c.h.b16 %v2783
  %v4284 = vunpack.c.l.b16 %v2784
  %v4285 = vunpack.c.h.b16 %v2784
  %v4286 = vunpack.c.l.b16 %v2785
  %v4287 = vunpack.c.h.b16 %v2785
  %v4288 = vunpack.c.l.b16 %v2786
  %v4289 = vunpack.c.h.b16 %v2786
  %v4290 = vunpack.c.l.b16 %v2787
  %v4291 = vunpack.c.h.b16 %v2787
  %v4292 = vunpack.c.l.b16 %v2788
  %v4293 = vunpack.c.h.b16 %v2788
  %v4294 = vunpack.c.l.b16 %v2789
  %v4295 = vunpack.c.h.b16 %v2789
  %v4296 = vunpack.c.l.b16 %v2790
  %v4297 = vunpack.c.h.b16 %v2790
  %v4298 = vunpack.c.l.b16 %v2791
  %v4299 = vunpack.c.h.b16 %v2791
  %v4300 = vunpack.c.l.b16 %v2792
  %v4301 = vunpack.c.h.b16 %v2792
  %v4302 = vunpack.c.l.b16 %v2793
  %v4303 = vunpack.c.h.b16 %v2793
  %v4304 = vunpack.c.l.b16 %v2794
  %v4305 = vunpack.c.h.b16 %v2794
  %v4306 = vunpack.c.l.b16 %v2795
  %v4307 = vunpack.c.h.b16 %v2795
  %v4308 = vunpack.c.l.b16 %v2796
  %v4309 = vunpack.c.h.b16 %v2796
  %v4310 = vunpack.c.l.b16 %v2797
  %v4311 = vunpack.c.h.b16 %v2797
  %v4312 = vunpack.c.l.b16 %v2798
  %v4313 = vunpack.c.h.b16 %v2798
  %v4314 = vunpack.c.l.b16 %v2799
  %v4315 = vunpack.c.h.b16 %v2799
  %v4316 = vunpack.c.l.b16 %v2800
  %v4317 = vunpack.c.h.b16 %v2800
  %v4318 = vunpack.c.l.b16 %v2801
  %v4319 = vunpack.c.h.b16 %v2801
  %v4320 = vunpack.c.l.b16 %v2802
  %v4321 = vunpack.c.h.b16 %v2802
  %v4322 = vunpack.c.l.b16 %v2803
  %v4323 = vunpack.c.h.b16 %v2803
  %v4324 = vunpack.c.l.b16 %v2804
  %v4325 = vunpack.c.h.b16 %v2804
  %v4326 = vunpack.c.l.b16 %v2805
  %v4327 = vunpack.c.h.b16 %v2805
  %v4328 = vunpack.c.l.b16 %v2806
  %v4329 = vunpack.c.h.b16 %v2806
  %v4330 = vunpack.c.l.b16 %v2807
  %v4331 = vunpack.c.h.b16 %v2807
  %v4332 = vunpack.c.l.b16 %v2808
  %v4333 = vunpack.c.h.b16 %v2808
  %v4334 = vunpack.c.l.b16 %v2809
  %v4335 = vunpack.c.h.b16 %v2809
  %v4336 = vunpack.c.l.b16 %v2810
  %v4337 = vunpack.c.h.b16 %v2810
  %v4338 = vunpack.c.l.b16 %v2811
  %v4339 = vunpack.c.h.b16 %v2811
  %v4340 = vunpack.c.l.b16 %v2812
  %v4341 = vunpack.c.h.b16 %v2812
  %v4342 = vunpack.c.l.b16 %v2813
  %v4343 = vunpack.c.h.b16 %v2813
  %v4344 = vunpack.c.l.b16 %v2814
  %v4345 = vunpack.c.h.b16 %v2814
  %v4346 = vunpack.c.l.b16 %v2815
  %v4347 = vunpack.c.h.b16 %v2815
  %v4348 = vunpack.c.l.b16 %v2816
  %v4349 = vunpack.c.h.b16 %v2816
  %v4350 = vunpack.c.l.b16 %v2817
  %v4351 = vunpack.c.h.b16 %v2817
  %v4352 = vunpack.c.l.b16 %v2818
  %v4353 = vunpack.c.h.b16 %v2818
  %v4354 = vunpack.c.l.b16 %v2819
  %v4355 = vunpack.c.h.b16 %v2819
  %v4356 = vunpack.c.l.b16 %v2820
  %v4357 = vunpack.c.h.b16 %v2820
  %v4358 = vunpack.c.l.b16 %v2821
  %v4359 = vunpack.c.h.b16 %v2821
  %v4360 = vunpack.c.l.b16 %v2822
  %v4361 = vunpack.c.h.b16 %v2822
  %v4362 = vunpack.c.l.b16 %v2823
  %v4363 = vunpack.c.h.b16 %v2823
  %v4364 = vunpack.c.l.b16 %v2824
  %v4365 = vunpack.c.h.b16 %v2824
  %v4366 = vunpack.c.l.b16 %v2825
  %v4367 = vunpack.c.h.b16 %v2825
  %v4368 = vunpack.c.l.b16 %v2826
  %v4369 = vunpack.c.h.b16 %v2826
  %v4370 = vunpack.c.l.b16 %v2827
  %v4371 = vunpack.c.h.b16 %v2827
  %v4372 = vunpack.c.l.b16 %v2828
  %v4373 = vunpack.c.h.b16 %v2828
  %v4374 = vunpack.c.l.b16 %v2829
  %v4375 = vunpack.c.h.b16 %v2829
  %v4376 = vunpack.c.l.b16 %v2830
  %v4377 = vunpack.c.h.b16 %v2830
  %v4378 = vunpack.c.l.b16 %v2831
  %v4379 = vunpack.c.h.b16 %v2831
  %v4380 = vunpack.c.l.b16 %v2832
  %v4381 = vunpack.c.h.b16 %v2832
  %v4382 = vunpack.c.l.b16 %v2833
  %v4383 = vunpack.c.h.b16 %v2833
  %v4384 = vunpack.c.l.b16 %v2834
  %v4385 = vunpack.c.h.b16 %v2834
  %v4386 = vunpack.c.l.b16 %v2835
  %v4387 = vunpack.c.h.b16 %v2835
  %v4388 = vunpack.c.l.b16 %v2836
  %v4389 = vunpack.c.h.b16 %v2836
  %v4390 = vunpack.c.l.b16 %v2837
  %v4391 = vunpack.c.h.b16 %v2837
  %v4392 = vunpack.c.l.b16 %v2838
  %v4393 = vunpack.c.h.b16 %v2838
  %v4394 = vunpack.c.l.b16 %v2839
  %v4395 = vunpack.c.h.b16 %v2839
  %v4396 = vunpack.c.l.b16 %v2840
  %v4397 = vunpack.c.h.b16 %v2840
  %v4398 = vunpack.c.l.b16 %v2841
  %v4399 = vunpack.c.h.b16 %v2841
  %v4400 = vunpack.c.l.b16 %v2842
  %v4401 = vunpack.c.h.b16 %v2842
  %v4402 = vunpack.c.l.b16 %v2843
  %v4403 = vunpack.c.h.b16 %v2843
  %v4404 = vunpack.c.l.b16 %v2844
  %v4405 = vunpack.c.h.b16 %v2844
  %v4406 = vunpack.c.l.b16 %v2845
  %v4407 = vunpack.c.h.b16 %v2845
  %v4408 = vunpack.c.l.b16 %v2846
  %v4409 = vunpack.c.h.b16 %v2846
  %v4410 = vunpack.c.l.b16 %v2847
  %v4411 = vunpack.c.h.b16 %v2847
  %v4412 = vunpack.c.l.b16 %v2848
  %v4413 = vunpack.c.h.b16 %v2848
  %v4414 = vunpack.c.l.b16 %v2849
  %v4415 = vunpack.c.h.b16 %v2849
  %v4416 = vunpack.c.l.b16 %v2850
  %v4417 = vunpack.c.h.b16 %v2850
  %v4418 = vunpack.c.l.b16 %v2851
  %v4419 = vunpack.c.h.b16 %v2851
  %v4420 = vunpack.c.l.b16 %v2852
  %v4421 = vunpack.c.h.b16 %v2852
  %v4422 = vunpack.c.l.b16 %v2853
  %v4423 = vunpack.c.h.b16 %v2853
  %v4424 = vunpack.c.l.b16 %v2854
  %v4425 = vunpack.c.h.b16 %v2854
  %v4426 = vunpack.c.l.b16 %v2855
  %v4427 = vunpack.c.h.b16 %v2855
  %v4428 = vunpack.c.l.b16 %v2856
  %v4429 = vunpack.c.h.b16 %v2856
  %v4430 = vunpack.c.l.b16 %v2857
  %v4431 = vunpack.c.h.b16 %v2857
  %v4432 = vunpack.c.l.b16 %v2858
  %v4433 = vunpack.c.h.b16 %v2858
  %v4434 = vunpack.c.l.b16 %v2859
  %v4435 = vunpack.c.h.b16 %v2859
  %v4436 = vunpack.c.l.b16 %v2860
  %v4437 = vunpack.c.h.b16 %v2860
  %v4438 = vunpack.c.l.b16 %v2861
  %v4439 = vunpack.c.h.b16 %v2861
  %v4440 = vpack.c.b16 %v3424, %v3416
  %v4441 = vpack.c.b16 %v3425, %v3417
  %v4442 = vpack.c.b16 %v3426, %v3418
  %v4443 = vpack.c.b16 %v3427, %v3419
  %v4444 = vpack.c.b16 %v3428, %v3420
  %v4445 = vpack.c.b16 %v3429, %v3421
  %v4446 = vpack.c.b16 %v3430, %v3422
  %v4447 = vpack.c.b16 %v3431, %v3423
  %v4448 = vpack.c.b16 %v3440, %v3432
  %v4449 = vpack.c.b16 %v3441, %v3433
  %v4450 = vpack.c.b16 %v3442, %v3434
  %v4451 = vpack.c.b16 %v3443, %v3435
  %v4452 = vpack.c.b16 %v3444, %v3436
  %v4453 = vpack.c.b16 %v3445, %v3437
  %v4454 = vpack.c.b16 %v3446, %v3438
  %v4455 = vpack.c.b16 %v3447, %v3439
  %v4456 = vpack.c.b16 %v3456, %v3448
  %v4457 = vpack.c.b16 %v3457, %v3449
  %v4458 = vpack.c.b16 %v3458, %v3450
  %v4459 = vpack.c.b16 %v3459, %v3451
  %v4460 = vpack.c.b16 %v3460, %v3452
  %v4461 = vpack.c.b16 %v3461, %v3453
  %v4462 = vpack.c.b16 %v3462, %v3454
  %v4463 = vpack.c.b16 %v3463, %v3455
  %v4464 = vpack.c.b16 %v3472, %v3464
  %v4465 = vpack.c.b16 %v3473, %v3465
  %v4466 = vpack.c.b16 %v3474, %v3466
  %v4467 = vpack.c.b16 %v3475, %v3467
  %v4468 = vpack.c.b16 %v3476, %v3468
  %v4469 = vpack.c.b16 %v3477, %v3469
  %v4470 = vpack.c.b16 %v3478, %v3470
  %v4471 = vpack.c.b16 %v3479, %v3471
  %v4472 = vpack.c.b16 %v3488, %v3480
  %v4473 = vpack.c.b16 %v3489, %v3481
  %v4474 = vpack.c.b16 %v3490, %v3482
  %v4475 = vpack.c.b16 %v3491, %v3483
  %v4476 = vpack.c.b16 %v3492, %v3484
  %v4477 = vpack.c.b16 %v3493, %v3485
  %v4478 = vpack.c.b16 %v3494, %v3486
  %v4479 = vpack.c.b16 %v3495, %v3487
  %v4480 = vpack.c.b16 %v3504, %v3496
  %v4481 = vpack.c.b16 %v3505, %v3497
  %v4482 = vpack.c.b16 %v3506, %v3498
  %v4483 = vpack.c.b16 %v3507, %v3499
  %v4484 = vpack.c.b16 %v3508, %v3500
  %v4485 = vpack.c.b16 %v3509, %v3501
  %v4486 = vpack.c.b16 %v3510, %v3502
  %v4487 = vpack.c.b16 %v3511, %v3503
  %v4488 = vpack.c.b16 %v3520, %v3512
  %v4489 = vpack.c.b16 %v3521, %v3513
  %v4490 = vpack.c.b16 %v3522, %v3514
  %v4491 = vpack.c.b16 %v3523, %v3515
  %v4492 = vpack.c.b16 %v3524, %v3516
  %v4493 = vpack.c.b16 %v3525, %v3517
  %v4494 = vpack.c.b16 %v3526, %v3518
  %v4495 = vpack.c.b16 %v3527, %v3519
  %v4496 = vpack.c.b16 %v3536, %v3528
  %v4497 = vpack.c.b16 %v3537, %v3529
  %v4498 = vpack.c.b16 %v3538, %v3530
  %v4499 = vpack.c.b16 %v3539, %v3531
  %v4500 = vpack.c.b16 %v3540, %v3532
  %v4501 = vpack.c.b16 %v3541, %v3533
  %v4502 = vpack.c.b16 %v3542, %v3534
  %v4503 = vpack.c.b16 %v3543, %v3535
  %v4504 = vpack.c.b16 %v3552, %v3544
  %v4505 = vpack.c.b16 %v3553, %v3545
  %v4506 = vpack.c.b16 %v3554, %v3546
  %v4507 = vpack.c.b16 %v3555, %v3547
  %v4508 = vpack.c.b16 %v3556, %v3548
  %v4509 = vpack.c.b16 %v3557, %v3549
  %v4510 = vpack.c.b16 %v3558, %v3550
  %v4511 = vpack.c.b16 %v3559, %v3551
  %v4512 = vpack.c.b16 %v3568, %v3560
  %v4513 = vpack.c.b16 %v3569, %v3561
  %v4514 = vpack.c.b16 %v3570, %v3562
  %v4515 = vpack.c.b16 %v3571, %v3563
  %v4516 = vpack.c.b16 %v3572, %v3564
  %v4517 = vpack.c.b16 %v3573, %v3565
  %v4518 = vpack.c.b16 %v3574, %v3566
  %v4519 = vpack.c.b16 %v3575, %v3567
  %v4520 = vpack.c.b16 %v3584, %v3576
  %v4521 = vpack.c.b16 %v3585, %v3577
  %v4522 = vpack.c.b16 %v3586, %v3578
  %v4523 = vpack.c.b16 %v3587, %v3579
  %v4524 = vpack.c.b16 %v3588, %v3580
  %v4525 = vpack.c.b16 %v3589, %v3581
  %v4526 = vpack.c.b16 %v3590, %v3582
  %v4527 = vpack.c.b16 %v3591, %v3583
  %v4528 = vpack.c.b16 %v3600, %v3592
  %v4529 = vpack.c.b16 %v3601, %v3593
  %v4530 = vpack.c.b16 %v3602, %v3594
  %v4531 = vpack.c.b16 %v3603, %v3595
  %v4532 = vpack.c.b16 %v3604, %v3596
  %v4533 = vpack.c.b16 %v3605, %v3597
  %v4534 = vpack.c.b16 %v3606, %v3598
  %v4535 = vpack.c.b16 %v3607, %v3599
  %v4536 = vpack.c.b16 %v3616, %v3608
  %v4537 = vpack.c.b16 %v3617, %v3609
  %v4538 = vpack.c.b16 %v3618, %v3610
  %v4539 = vpack.c.b16 %v3619, %v3611
  %v4540 = vpack.c.b16 %v3620, %v3612
  %v4541 = vpack.c.b16 %v3621, %v3613
  %v4542 = vpack.c.b16 %v3622, %v3614
  %v4543 = vpack.c.b16 %v3623, %v3615
  %v4544 = vpack.c.b16 %v3632, %v3624
  %v4545 = vpack.c.b16 %v3633, %v3625
  %v4546 = vpack.c.b16 %v3634, %v3626
  %v4547 = vpack.c.b16 %v3635, %v3627
  %v4548 = vpack.c.b16 %v3636, %v3628
  %v4549 = vpack.c.b16 %v3637, %v3629
  %v4550 = vpack.c.b16 %v3638, %v3630
  %v4551 = vpack.c.b16 %v3639, %v3631
  %v4552 = vpack.c.b16 %v3648, %v3640
  %v4553 = vpack.c.b16 %v3649, %v3641
  %v4554 = vpack.c.b16 %v3650, %v3642
  %v4555 = vpack.c.b16 %v3651, %v3643
  %v4556 = vpack.c.b16 %v3652, %v3644
  %v4557 = vpack.c.b16 %v3653, %v3645
  %v4558 = vpack.c.b16 %v3654, %v3646
  %v4559 = vpack.c.b16 %v3655, %v3647
  %v4560 = vpack.c.b16 %v3664, %v3656
  %v4561 = vpack.c.b16 %v3665, %v3657
  %v4562 = vpack.c.b16 %v3666, %v3658
  %v4563 = vpack.c.b16 %v3667, %v3659
  %v4564 = vpack.c.b16 %v3668, %v3660
  %v4565 = vpack.c.b16 %v3669, %v3661
  %v4566 = vpack.c.b16 %v3670, %v3662
  %v4567 = vpack.c.b16 %v3671, %v3663
  %v4568 = vpack.c.b16 %v3680, %v3672
  %v4569 = vpack.c.b16 %v3681, %v3673
  %v4570 = vpack.c.b16 %v3682, %v3674
  %v4571 = vpack.c.b16 %v3683, %v3675
  %v4572 = vpack.c.b16 %v3684, %v3676
  %v4573 = vpack.c.b16 %v3685, %v3677
  %v4574 = vpack.c.b16 %v3686, %v3678
  %v4575 = vpack.c.b16 %v3687, %v3679
  %v4576 = vpack.c.b16 %v3696, %v3688
  %v4577 = vpack.c.b16 %v3697, %v3689
  %v4578 = vpack.c.b16 %v3698, %v3690
  %v4579 = vpack.c.b16 %v3699, %v3691
  %v4580 = vpack.c.b16 %v3700, %v3692
  %v4581 = vpack.c.b16 %v3701, %v3693
  %v4582 = vpack.c.b16 %v3702, %v3694
  %v4583 = vpack.c.b16 %v3703, %v3695
  %v4584 = vpack.c.b16 %v3712, %v3704
  %v4585 = vpack.c.b16 %v3713, %v3705
  %v4586 = vpack.c.b16 %v3714, %v3706
  %v4587 = vpack.c.b16 %v3715, %v3707
  %v4588 = vpack.c.b16 %v3716, %v3708
  %v4589 = vpack.c.b16 %v3717, %v3709
  %v4590 = vpack.c.b16 %v3718, %v3710
  %v4591 = vpack.c.b16 %v3719, %v3711
  %v4592 = vpack.c.b16 %v3728, %v3720
  %v4593 = vpack.c.b16 %v3729, %v3721
  %v4594 = vpack.c.b16 %v3730, %v3722
  %v4595 = vpack.c.b16 %v3731, %v3723
  %v4596 = vpack.c.b16 %v3732, %v3724
  %v4597 = vpack.c.b16 %v3733, %v3725
  %v4598 = vpack.c.b16 %v3734, %v3726
  %v4599 = vpack.c.b16 %v3735, %v3727
  %v4600 = vpack.c.b16 %v3744, %v3736
  %v4601 = vpack.c.b16 %v3745, %v3737
  %v4602 = vpack.c.b16 %v3746, %v3738
  %v4603 = vpack.c.b16 %v3747, %v3739
  %v4604 = vpack.c.b16 %v3748, %v3740
  %v4605 = vpack.c.b16 %v3749, %v3741
  %v4606 = vpack.c.b16 %v3750, %v3742
  %v4607 = vpack.c.b16 %v3751, %v3743
  %v4608 = vpack.c.b16 %v3760, %v3752
  %v4609 = vpack.c.b16 %v3761, %v3753
  %v4610 = vpack.c.b16 %v3762, %v3754
  %v4611 = vpack.c.b16 %v3763, %v3755
  %v4612 = vpack.c.b16 %v3764, %v3756
  %v4613 = vpack.c.b16 %v3765, %v3757
  %v4614 = vpack.c.b16 %v3766, %v3758
  %v4615 = vpack.c.b16 %v3767, %v3759
  %v4616 = vpack.c.b16 %v3776, %v3768
  %v4617 = vpack.c.b16 %v3777, %v3769
  %v4618 = vpack.c.b16 %v3778, %v3770
  %v4619 = vpack.c.b16 %v3779, %v3771
  %v4620 = vpack.c.b16 %v3780, %v3772
  %v4621 = vpack.c.b16 %v3781, %v3773
  %v4622 = vpack.c.b16 %v3782, %v3774
  %v4623 = vpack.c.b16 %v3783, %v3775
  %v4624 = vpack.c.b16 %v3792, %v3784
  %v4625 = vpack.c.b16 %v3793, %v3785
  %v4626 = vpack.c.b16 %v3794, %v3786
  %v4627 = vpack.c.b16 %v3795, %v3787
  %v4628 = vpack.c.b16 %v3796, %v3788
  %v4629 = vpack.c.b16 %v3797, %v3789
  %v4630 = vpack.c.b16 %v3798, %v3790
  %v4631 = vpack.c.b16 %v3799, %v3791
  %v4632 = vpack.c.b16 %v3808, %v3800
  %v4633 = vpack.c.b16 %v3809, %v3801
  %v4634 = vpack.c.b16 %v3810, %v3802
  %v4635 = vpack.c.b16 %v3811, %v3803
  %v4636 = vpack.c.b16 %v3812, %v3804
  %v4637 = vpack.c.b16 %v3813, %v3805
  %v4638 = vpack.c.b16 %v3814, %v3806
  %v4639 = vpack.c.b16 %v3815, %v3807
  %v4640 = vpack.c.b16 %v3824, %v3816
  %v4641 = vpack.c.b16 %v3825, %v3817
  %v4642 = vpack.c.b16 %v3826, %v3818
  %v4643 = vpack.c.b16 %v3827, %v3819
  %v4644 = vpack.c.b16 %v3828, %v3820
  %v4645 = vpack.c.b16 %v3829, %v3821
  %v4646 = vpack.c.b16 %v3830, %v3822
  %v4647 = vpack.c.b16 %v3831, %v3823
  %v4648 = vpack.c.b16 %v3840, %v3832
  %v4649 = vpack.c.b16 %v3841, %v3833
  %v4650 = vpack.c.b16 %v3842, %v3834
  %v4651 = vpack.c.b16 %v3843, %v3835
  %v4652 = vpack.c.b16 %v3844, %v3836
  %v4653 = vpack.c.b16 %v3845, %v3837
  %v4654 = vpack.c.b16 %v3846, %v3838
  %v4655 = vpack.c.b16 %v3847, %v3839
  %v4656 = vpack.c.b16 %v3856, %v3848
  %v4657 = vpack.c.b16 %v3857, %v3849
  %v4658 = vpack.c.b16 %v3858, %v3850
  %v4659 = vpack.c.b16 %v3859, %v3851
  %v4660 = vpack.c.b16 %v3860, %v3852
  %v4661 = vpack.c.b16 %v3861, %v3853
  %v4662 = vpack.c.b16 %v3862, %v3854
  %v4663 = vpack.c.b16 %v3863, %v3855
  %v4664 = vpack.c.b16 %v3872, %v3864
  %v4665 = vpack.c.b16 %v3873, %v3865
  %v4666 = vpack.c.b16 %v3874, %v3866
  %v4667 = vpack.c.b16 %v3875, %v3867
  %v4668 = vpack.c.b16 %v3876, %v3868
  %v4669 = vpack.c.b16 %v3877, %v3869
  %v4670 = vpack.c.b16 %v3878, %v3870
  %v4671 = vpack.c.b16 %v3879, %v3871
  %v4672 = vpack.c.b16 %v3888, %v3880
  %v4673 = vpack.c.b16 %v3889, %v3881
  %v4674 = vpack.c.b16 %v3890, %v3882
  %v4675 = vpack.c.b16 %v3891, %v3883
  %v4676 = vpack.c.b16 %v3892, %v3884
  %v4677 = vpack.c.b16 %v3893, %v3885
  %v4678 = vpack.c.b16 %v3894, %v3886
  %v4679 = vpack.c.b16 %v3895, %v3887
  %v4680 = vpack.c.b16 %v3904, %v3896
  %v4681 = vpack.c.b16 %v3905, %v3897
  %v4682 = vpack.c.b16 %v3906, %v3898
  %v4683 = vpack.c.b16 %v3907, %v3899
  %v4684 = vpack.c.b16 %v3908, %v3900
  %v4685 = vpack.c.b16 %v3909, %v3901
  %v4686 = vpack.c.b16 %v3910, %v3902
  %v4687 = vpack.c.b16 %v3911, %v3903
  %v4688 = vpack.c.b16 %v3920, %v3912
  %v4689 = vpack.c.b16 %v3921, %v3913
  %v4690 = vpack.c.b16 %v3922, %v3914
  %v4691 = vpack.c.b16 %v3923, %v3915
  %v4692 = vpack.c.b16 %v3924, %v3916
  %v4693 = vpack.c.b16 %v3925, %v3917
  %v4694 = vpack.c.b16 %v3926, %v3918
  %v4695 = vpack.c.b16 %v3927, %v3919
  %v4696 = vpack.c.b16 %v3936, %v3928
  %v4697 = vpack.c.b16 %v3937, %v3929
  %v4698 = vpack.c.b16 %v3938, %v3930
  %v4699 = vpack.c.b16 %v3939, %v3931
  %v4700 = vpack.c.b16 %v3940, %v3932
  %v4701 = vpack.c.b16 %v3941, %v3933
  %v4702 = vpack.c.b16 %v3942, %v3934
  %v4703 = vpack.c.b16 %v3943, %v3935
  %v4704 = vpack.c.b16 %v3952, %v3944
  %v4705 = vpack.c.b16 %v3953, %v3945
  %v4706 = vpack.c.b16 %v3954, %v3946
  %v4707 = vpack.c.b16 %v3955, %v3947
  %v4708 = vpack.c.b16 %v3956, %v3948
  %v4709 = vpack.c.b16 %v3957, %v3949
  %v4710 = vpack.c.b16 %v3958, %v3950
  %v4711 = vpack.c.b16 %v3959, %v3951
  %v4712 = vpack.c.b16 %v3968, %v3960
  %v4713 = vpack.c.b16 %v3969, %v3961
  %v4714 = vpack.c.b16 %v3970, %v3962
  %v4715 = vpack.c.b16 %v3971, %v3963
  %v4716 = vpack.c.b16 %v3972, %v3964
  %v4717 = vpack.c.b16 %v3973, %v3965
  %v4718 = vpack.c.b16 %v3974, %v3966
  %v4719 = vpack.c.b16 %v3975, %v3967
  %v4720 = vpack.c.b16 %v3984, %v3976
  %v4721 = vpack.c.b16 %v3985, %v3977
  %v4722 = vpack.c.b16 %v3986, %v3978
  %v4723 = vpack.c.b16 %v3987, %v3979
  %v4724 = vpack.c.b16 %v3988, %v3980
  %v4725 = vpack.c.b16 %v3989, %v3981
  %v4726 = vpack.c.b16 %v3990, %v3982
  %v4727 = vpack.c.b16 %v3991, %v3983
  %v4728 = vpack.c.b16 %v4000, %v3992
  %v4729 = vpack.c.b16 %v4001, %v3993
  %v4730 = vpack.c.b16 %v4002, %v3994
  %v4731 = vpack.c.b16 %v4003, %v3995
  %v4732 = vpack.c.b16 %v4004, %v3996
  %v4733 = vpack.c.b16 %v4005, %v3997
  %v4734 = vpack.c.b16 %v4006, %v3998
  %v4735 = vpack.c.b16 %v4007, %v3999
  %v4736 = vpack.c.b16 %v4016, %v4008
  %v4737 = vpack.c.b16 %v4017, %v4009
  %v4738 = vpack.c.b16 %v4018, %v4010
  %v4739 = vpack.c.b16 %v4019, %v4011
  %v4740 = vpack.c.b16 %v4020, %v4012
  %v4741 = vpack.c.b16 %v4021, %v4013
  %v4742 = vpack.c.b16 %v4022, %v4014
  %v4743 = vpack.c.b16 %v4023, %v4015
  %v4744 = vpack.c.b16 %v4032, %v4024
  %v4745 = vpack.c.b16 %v4033, %v4025
  %v4746 = vpack.c.b16 %v4034, %v4026
  %v4747 = vpack.c.b16 %v4035, %v4027
  %v4748 = vpack.c.b16 %v4036, %v4028
  %v4749 = vpack.c.b16 %v4037, %v4029
  %v4750 = vpack.c.b16 %v4038, %v4030
  %v4751 = vpack.c.b16 %v4039, %v4031
  %v4752 = vpack.c.b16 %v4048, %v4040
  %v4753 = vpack.c.b16 %v4049, %v4041
  %v4754 = vpack.c.b16 %v4050, %v4042
  %v4755 = vpack.c.b16 %v4051, %v4043
  %v4756 = vpack.c.b16 %v4052, %v4044
  %v4757 = vpack.c.b16 %v4053, %v4045
  %v4758 = vpack.c.b16 %v4054, %v4046
  %v4759 = vpack.c.b16 %v4055, %v4047
  %v4760 = vpack.c.b16 %v4064, %v4056
  %v4761 = vpack.c.b16 %v4065, %v4057
  %v4762 = vpack.c.b16 %v4066, %v4058
  %v4763 = vpack.c.b16 %v4067, %v4059
  %v4764 = vpack.c.b16 %v4068, %v4060
  %v4765 = vpack.c.b16 %v4069, %v4061
  %v4766 = vpack.c.b16 %v4070, %v4062
  %v4767 = vpack.c.b16 %v4071, %v4063
  %v4768 = vpack.c.b16 %v4080, %v4072
  %v4769 = vpack.c.b16 %v4081, %v4073
  %v4770 = vpack.c.b16 %v4082, %v4074
  %v4771 = vpack.c.b16 %v4083, %v4075
  %v4772 = vpack.c.b16 %v4084, %v4076
  %v4773 = vpack.c.b16 %v4085, %v4077
  %v4774 = vpack.c.b16 %v4086, %v4078
  %v4775 = vpack.c.b16 %v4087, %v4079
  %v4776 = vpack.c.b16 %v4096, %v4088
  %v4777 = vpack.c.b16 %v4097, %v4089
  %v4778 = vpack.c.b16 %v4098, %v4090
  %v4779 = vpack.c.b16 %v4099, %v4091
  %v4780 = vpack.c.b16 %v4100, %v4092
  %v4781 = vpack.c.b16 %v4101, %v4093
  %v4782 = vpack.c.b16 %v4102, %v4094
  %v4783 = vpack.c.b16 %v4103, %v4095
  %v4784 = vpack.c.b16 %v4112, %v4104
  %v4785 = vpack.c.b16 %v4113, %v4105
  %v4786 = vpack.c.b16 %v4114, %v4106
  %v4787 = vpack.c.b16 %v4115, %v4107
  %v4788 = vpack.c.b16 %v4116, %v4108
  %v4789 = vpack.c.b16 %v4117, %v4109
  %v4790 = vpack.c.b16 %v4118, %v4110
  %v4791 = vpack.c.b16 %v4119, %v4111
  %v4792 = vpack.c.b16 %v4128, %v4120
  %v4793 = vpack.c.b16 %v4129, %v4121
  %v4794 = vpack.c.b16 %v4130, %v4122
  %v4795 = vpack.c.b16 %v4131, %v4123
  %v4796 = vpack.c.b16 %v4132, %v4124
  %v4797 = vpack.c.b16 %v4133, %v4125
  %v4798 = vpack.c.b16 %v4134, %v4126
  %v4799 = vpack.c.b16 %v4135, %v4127
  %v4800 = vpack.c.b16 %v4144, %v4136
  %v4801 = vpack.c.b16 %v4145, %v4137
  %v4802 = vpack.c.b16 %v4146, %v4138
  %v4803 = vpack.c.b16 %v4147, %v4139
  %v4804 = vpack.c.b16 %v4148, %v4140
  %v4805 = vpack.c.b16 %v4149, %v4141
  %v4806 = vpack.c.b16 %v4150, %v4142
  %v4807 = vpack.c.b16 %v4151, %v4143
  %v4808 = vpack.c.b16 %v4160, %v4152
  %v4809 = vpack.c.b16 %v4161, %v4153
  %v4810 = vpack.c.b16 %v4162, %v4154
  %v4811 = vpack.c.b16 %v4163, %v4155
  %v4812 = vpack.c.b16 %v4164, %v4156
  %v4813 = vpack.c.b16 %v4165, %v4157
  %v4814 = vpack.c.b16 %v4166, %v4158
  %v4815 = vpack.c.b16 %v4167, %v4159
  %v4816 = vpack.c.b16 %v4176, %v4168
  %v4817 = vpack.c.b16 %v4177, %v4169
  %v4818 = vpack.c.b16 %v4178, %v4170
  %v4819 = vpack.c.b16 %v4179, %v4171
  %v4820 = vpack.c.b16 %v4180, %v4172
  %v4821 = vpack.c.b16 %v4181, %v4173
  %v4822 = vpack.c.b16 %v4182, %v4174
  %v4823 = vpack.c.b16 %v4183, %v4175
  %v4824 = vpack.c.b16 %v4192, %v4184
  %v4825 = vpack.c.b16 %v4193, %v4185
  %v4826 = vpack.c.b16 %v4194, %v4186
  %v4827 = vpack.c.b16 %v4195, %v4187
  %v4828 = vpack.c.b16 %v4196, %v4188
  %v4829 = vpack.c.b16 %v4197, %v4189
  %v4830 = vpack.c.b16 %v4198, %v4190
  %v4831 = vpack.c.b16 %v4199, %v4191
  %v4832 = vpack.c.b16 %v4208, %v4200
  %v4833 = vpack.c.b16 %v4209, %v4201
  %v4834 = vpack.c.b16 %v4210, %v4202
  %v4835 = vpack.c.b16 %v4211, %v4203
  %v4836 = vpack.c.b16 %v4212, %v4204
  %v4837 = vpack.c.b16 %v4213, %v4205
  %v4838 = vpack.c.b16 %v4214, %v4206
  %v4839 = vpack.c.b16 %v4215, %v4207
  %v4840 = vpack.c.b16 %v4224, %v4216
  %v4841 = vpack.c.b16 %v4225, %v4217
  %v4842 = vpack.c.b16 %v4226, %v4218
  %v4843 = vpack.c.b16 %v4227, %v4219
  %v4844 = vpack.c.b16 %v4228, %v4220
  %v4845 = vpack.c.b16 %v4229, %v4221
  %v4846 = vpack.c.b16 %v4230, %v4222
  %v4847 = vpack.c.b16 %v4231, %v4223
  %v4848 = vpack.c.b16 %v4240, %v4232
  %v4849 = vpack.c.b16 %v4241, %v4233
  %v4850 = vpack.c.b16 %v4242, %v4234
  %v4851 = vpack.c.b16 %v4243, %v4235
  %v4852 = vpack.c.b16 %v4244, %v4236
  %v4853 = vpack.c.b16 %v4245, %v4237
  %v4854 = vpack.c.b16 %v4246, %v4238
  %v4855 = vpack.c.b16 %v4247, %v4239
  %v4856 = vpack.c.b16 %v4256, %v4248
  %v4857 = vpack.c.b16 %v4257, %v4249
  %v4858 = vpack.c.b16 %v4258, %v4250
  %v4859 = vpack.c.b16 %v4259, %v4251
  %v4860 = vpack.c.b16 %v4260, %v4252
  %v4861 = vpack.c.b16 %v4261, %v4253
  %v4862 = vpack.c.b16 %v4262, %v4254
  %v4863 = vpack.c.b16 %v4263, %v4255
  %v4864 = vpack.c.b16 %v4272, %v4264
  %v4865 = vpack.c.b16 %v4273, %v4265
  %v4866 = vpack.c.b16 %v4274, %v4266
  %v4867 = vpack.c.b16 %v4275, %v4267
  %v4868 = vpack.c.b16 %v4276, %v4268
  %v4869 = vpack.c.b16 %v4277, %v4269
  %v4870 = vpack.c.b16 %v4278, %v4270
  %v4871 = vpack.c.b16 %v4279, %v4271
  %v4872 = vpack.c.b16 %v4288, %v4280
  %v4873 = vpack.c.b16 %v4289, %v4281
  %v4874 = vpack.c.b16 %v4290, %v4282
  %v4875 = vpack.c.b16 %v4291, %v4283
  %v4876 = vpack.c.b16 %v4292, %v4284
  %v4877 = vpack.c.b16 %v4293, %v4285
  %v4878 = vpack.c.b16 %v4294, %v4286
  %v4879 = vpack.c.b16 %v4295, %v4287
  %v4880 = vpack.c.b16 %v4304, %v4296
  %v4881 = vpack.c.b16 %v4305, %v4297
  %v4882 = vpack.c.b16 %v4306, %v4298
  %v4883 = vpack.c.b16 %v4307, %v4299
  %v4884 = vpack.c.b16 %v4308, %v4300
  %v4885 = vpack.c.b16 %v4309, %v4301
  %v4886 = vpack.c.b16 %v4310, %v4302
  %v4887 = vpack.c.b16 %v4311, %v4303
  %v4888 = vpack.c.b16 %v4320, %v4312
  %v4889 = vpack.c.b16 %v4321, %v4313
  %v4890 = vpack.c.b16 %v4322, %v4314
  %v4891 = vpack.c.b16 %v4323, %v4315
  %v4892 = vpack.c.b16 %v4324, %v4316
  %v4893 = vpack.c.b16 %v4325, %v4317
  %v4894 = vpack.c.b16 %v4326, %v4318
  %v4895 = vpack.c.b16 %v4327, %v4319
  %v4896 = vpack.c.b16 %v4336, %v4328
  %v4897 = vpack.c.b16 %v4337, %v4329
  %v4898 = vpack.c.b16 %v4338, %v4330
  %v4899 = vpack.c.b16 %v4339, %v4331
  %v4900 = vpack.c.b16 %v4340, %v4332
  %v4901 = vpack.c.b16 %v4341, %v4333
  %v4902 = vpack.c.b16 %v4342, %v4334
  %v4903 = vpack.c.b16 %v4343, %v4335
  %v4904 = vpack.c.b16 %v4352, %v4344
  %v4905 = vpack.c.b16 %v4353, %v4345
  %v4906 = vpack.c.b16 %v4354, %v4346
  %v4907 = vpack.c.b16 %v4355, %v4347
  %v4908 = vpack.c.b16 %v4356, %v4348
  %v4909 = vpack.c.b16 %v4357, %v4349
  %v4910 = vpack.c.b16 %v4358, %v4350
  %v4911 = vpack.c.b16 %v4359, %v4351
  %v4912 = vpack.c.b16 %v4368, %v4360
  %v4913 = vpack.c.b16 %v4369, %v4361
  %v4914 = vpack.c.b16 %v4370, %v4362
  %v4915 = vpack.c.b16 %v4371, %v4363
  %v4916 = vpack.c.b16 %v4372, %v4364
  %v4917 = vpack.c.b16 %v4373, %v4365
  %v4918 = vpack.c.b16 %v4374, %v4366
  %v4919 = vpack.c.b16 %v4375, %v4367
  %v4920 = vpack.c.b16 %v4384, %v4376
  %v4921 = vpack.c.b16 %v4385, %v4377
  %v4922 = vpack.c.b16 %v4386, %v4378
  %v4923 = vpack.c.b16 %v4387, %v4379
  %v4924 = vpack.c.b16 %v4388, %v4380
  %v4925 = vpack.c.b16 %v4389, %v4381
  %v4926 = vpack.c.b16 %v4390, %v4382
  %v4927 = vpack.c.b16 %v4391, %v4383
  %v4928 = vpack.c.b16 %v4400, %v4392
  %v4929 = vpack.c.b16 %v4401, %v4393
  %v4930 = vpack.c.b16 %v4402, %v4394
  %v4931 = vpack.c.b16 %v4403, %v4395
  %v4932 = vpack.c.b16 %v4404, %v4396
  %v4933 = vpack.c.b16 %v4405, %v4397
  %v4934 = vpack.c.b16 %v4406, %v4398
  %v4935 = vpack.c.b16 %v4407, %v4399
  %v4936 = vpack.c.b16 %v4416, %v4408
  %v4937 = vpack.c.b16 %v4417, %v4409
  %v4938 = vpack.c.b16 %v4418, %v4410
  %v4939 = vpack.c.b16 %v4419, %v4411
  %v4940 = vpack.c.b16 %v4420, %v4412
  %v4941 = vpack.c.b16 %v4421, %v4413
  %v4942 = vpack.c.b16 %v4422, %v4414
  %v4943 = vpack.c.b16 %v4423, %v4415
  %v4944 = vpack.c.b16 %v4432, %v4424
  %v4945 = vpack.c.b16 %v4433, %v4425
  %v4946 = vpack.c.b16 %v4434, %v4426
  %v4947 = vpack.c.b16 %v4435, %v4427
  %v4948 = vpack.c.b16 %v4436, %v4428
  %v4949 = vpack.c.b16 %v4437, %v4429
  %v4950 = vpack.c.b16 %v4438, %v4430
  %v4951 = vpack.c.b16 %v4439, %v4431
  %5464 = vmatprep.subr.bf16.mxu0 %v4441
  %5465 = vmatpush1.bf16.msra.mxu0 %v4440
  %5466 = vmatprep.subr.bf16.mxu0 %v4449
  %5467 = vmatpush1.bf16.msra.mxu0 %v4448
  %5468 = vmatprep.subr.bf16.mxu0 %v4457
  %5469 = vmatpush1.bf16.msra.mxu0 %v4456
  %5470 = vmatprep.subr.bf16.mxu0 %v4465
  %5471 = vmatpush1.bf16.msra.mxu0 %v4464
  %5472 = vmatprep.subr.bf16.mxu0 %v4473
  %5473 = vmatpush1.bf16.msra.mxu0 %v4472
  %5474 = vmatprep.subr.bf16.mxu0 %v4481
  %5475 = vmatpush1.bf16.msra.mxu0 %v4480
  %5476 = vmatprep.subr.bf16.mxu0 %v4489
  %5477 = vmatpush1.bf16.msra.mxu0 %v4488
  %5478 = vmatprep.subr.bf16.mxu0 %v4497
  %5479 = vmatpush1.bf16.msra.mxu0 %v4496
  %5480 = vmatprep.subr.bf16.mxu0 %v4505
  %5481 = vmatpush1.bf16.msra.mxu0 %v4504
  %5482 = vmatprep.subr.bf16.mxu0 %v4513
  %5483 = vmatpush1.bf16.msra.mxu0 %v4512
  %5484 = vmatprep.subr.bf16.mxu0 %v4521
  %5485 = vmatpush1.bf16.msra.mxu0 %v4520
  %5486 = vmatprep.subr.bf16.mxu0 %v4529
  %5487 = vmatpush1.bf16.msra.mxu0 %v4528
  %5488 = vmatprep.subr.bf16.mxu0 %v4537
  %5489 = vmatpush1.bf16.msra.mxu0 %v4536
  %5490 = vmatprep.subr.bf16.mxu0 %v4545
  %5491 = vmatpush1.bf16.msra.mxu0 %v4544
  %5492 = vmatprep.subr.bf16.mxu0 %v4553
  %5493 = vmatpush1.bf16.msra.mxu0 %v4552
  %5494 = vmatprep.subr.bf16.mxu0 %v4561
  %5495 = vmatpush1.bf16.msra.mxu0 %v4560
  %5496 = vmatprep.mubr.bf16.mxu0 %v2343
  %5497 = vmatmul.mubr.bf16.gmra.mrb[0].mxu0 %v2342
  %v5498 = vpop.f32.mrb[0].mxu0
  %v5499 = vadd.f32 %v2867, %v5498
  %v5500 = vpop.f32.mrb[0].mxu0
  %v5501 = vadd.f32 %v2871, %v5500
  %v5502 = vpop.f32.mrb[0].mxu0
  %v5503 = vpop.f32.mrb[0].mxu0
  %5504 = vdwg.mxu0
  %5505 = vmatprep.subr.bf16.mxu0 %v4569
  %5506 = vmatpush1.bf16.msra.mxu0 %v4568
  %5507 = vmatprep.subr.bf16.mxu0 %v4577
  %5508 = vmatpush1.bf16.msra.mxu0 %v4576
  %5509 = vmatprep.subr.bf16.mxu0 %v4585
  %5510 = vmatpush1.bf16.msra.mxu0 %v4584
  %5511 = vmatprep.subr.bf16.mxu0 %v4593
  %5512 = vmatpush1.bf16.msra.mxu0 %v4592
  %5513 = vmatprep.subr.bf16.mxu0 %v4601
  %5514 = vmatpush1.bf16.msra.mxu0 %v4600
  %5515 = vmatprep.subr.bf16.mxu0 %v4609
  %5516 = vmatpush1.bf16.msra.mxu0 %v4608
  %5517 = vmatprep.subr.bf16.mxu0 %v4617
  %5518 = vmatpush1.bf16.msra.mxu0 %v4616
  %5519 = vmatprep.subr.bf16.mxu0 %v4625
  %5520 = vmatpush1.bf16.msra.mxu0 %v4624
  %5521 = vmatprep.subr.bf16.mxu0 %v4633
  %5522 = vmatpush1.bf16.msra.mxu0 %v4632
  %5523 = vmatprep.subr.bf16.mxu0 %v4641
  %5524 = vmatpush1.bf16.msra.mxu0 %v4640
  %5525 = vmatprep.subr.bf16.mxu0 %v4649
  %5526 = vmatpush1.bf16.msra.mxu0 %v4648
  %5527 = vmatprep.subr.bf16.mxu0 %v4657
  %5528 = vmatpush1.bf16.msra.mxu0 %v4656
  %5529 = vmatprep.subr.bf16.mxu0 %v4665
  %5530 = vmatpush1.bf16.msra.mxu0 %v4664
  %5531 = vmatprep.subr.bf16.mxu0 %v4673
  %5532 = vmatpush1.bf16.msra.mxu0 %v4672
  %5533 = vmatprep.subr.bf16.mxu0 %v4681
  %5534 = vmatpush1.bf16.msra.mxu0 %v4680
  %5535 = vmatprep.subr.bf16.mxu0 %v4689
  %5536 = vmatpush1.bf16.msra.mxu0 %v4688
  %5537 = vmatprep.mubr.bf16.mxu0 %v2345
  %5538 = vmatmul.mubr.bf16.gmra.mrb[0].mxu0 %v2344
  %v5539 = vpop.f32.mrb[0].mxu0
  %v5540 = vadd.f32 %v5499, %v5539
  %v5541 = vpop.f32.mrb[0].mxu0
  %v5542 = vadd.f32 %v5501, %v5541
  %v5543 = vpop.f32.mrb[0].mxu0
  %v5544 = vpop.f32.mrb[0].mxu0
  %5545 = vdwg.mxu0
  %5546 = vmatprep.subr.bf16.mxu0 %v4697
  %5547 = vmatpush1.bf16.msra.mxu0 %v4696
  %5548 = vmatprep.subr.bf16.mxu0 %v4705
  %5549 = vmatpush1.bf16.msra.mxu0 %v4704
  %5550 = vmatprep.subr.bf16.mxu0 %v4713
  %5551 = vmatpush1.bf16.msra.mxu0 %v4712
  %5552 = vmatprep.subr.bf16.mxu0 %v4721
  %5553 = vmatpush1.bf16.msra.mxu0 %v4720
  %5554 = vmatprep.subr.bf16.mxu0 %v4729
  %5555 = vmatpush1.bf16.msra.mxu0 %v4728
  %5556 = vmatprep.subr.bf16.mxu0 %v4737
  %5557 = vmatpush1.bf16.msra.mxu0 %v4736
  %5558 = vmatprep.subr.bf16.mxu0 %v4745
  %5559 = vmatpush1.bf16.msra.mxu0 %v4744
  %5560 = vmatprep.subr.bf16.mxu0 %v4753
  %5561 = vmatpush1.bf16.msra.mxu0 %v4752
  %5562 = vmatprep.subr.bf16.mxu0 %v4761
  %5563 = vmatpush1.bf16.msra.mxu0 %v4760
  %5564 = vmatprep.subr.bf16.mxu0 %v4769
  %5565 = vmatpush1.bf16.msra.mxu0 %v4768
  %5566 = vmatprep.subr.bf16.mxu0 %v4777
  %5567 = vmatpush1.bf16.msra.mxu0 %v4776
  %5568 = vmatprep.subr.bf16.mxu0 %v4785
  %5569 = vmatpush1.bf16.msra.mxu0 %v4784
  %5570 = vmatprep.subr.bf16.mxu0 %v4793
  %5571 = vmatpush1.bf16.msra.mxu0 %v4792
  %5572 = vmatprep.subr.bf16.mxu0 %v4801
  %5573 = vmatpush1.bf16.msra.mxu0 %v4800
  %5574 = vmatprep.subr.bf16.mxu0 %v4809
  %5575 = vmatpush1.bf16.msra.mxu0 %v4808
  %5576 = vmatprep.subr.bf16.mxu0 %v4817
  %5577 = vmatpush1.bf16.msra.mxu0 %v4816
  %5578 = vmatprep.mubr.bf16.mxu0 %v2347
  %5579 = vmatmul.mubr.bf16.gmra.mrb[0].mxu0 %v2346
  %v5580 = vpop.f32.mrb[0].mxu0
  %v5581 = vadd.f32 %v5540, %v5580
  %v5582 = vpop.f32.mrb[0].mxu0
  %v5583 = vadd.f32 %v5542, %v5582
  %v5584 = vpop.f32.mrb[0].mxu0
  %v5585 = vpop.f32.mrb[0].mxu0
  %5586 = vdwg.mxu0
  %5587 = vmatprep.subr.bf16.mxu0 %v4825
  %5588 = vmatpush1.bf16.msra.mxu0 %v4824
  %5589 = vmatprep.subr.bf16.mxu0 %v4833
  %5590 = vmatpush1.bf16.msra.mxu0 %v4832
  %5591 = vmatprep.subr.bf16.mxu0 %v4841
  %5592 = vmatpush1.bf16.msra.mxu0 %v4840
  %5593 = vmatprep.subr.bf16.mxu0 %v4849
  %5594 = vmatpush1.bf16.msra.mxu0 %v4848
  %5595 = vmatprep.subr.bf16.mxu0 %v4857
  %5596 = vmatpush1.bf16.msra.mxu0 %v4856
  %5597 = vmatprep.subr.bf16.mxu0 %v4865
  %5598 = vmatpush1.bf16.msra.mxu0 %v4864
  %5599 = vmatprep.subr.bf16.mxu0 %v4873
  %5600 = vmatpush1.bf16.msra.mxu0 %v4872
  %5601 = vmatprep.subr.bf16.mxu0 %v4881
  %5602 = vmatpush1.bf16.msra.mxu0 %v4880
  %5603 = vmatprep.subr.bf16.mxu0 %v4889
  %5604 = vmatpush1.bf16.msra.mxu0 %v4888
  %5605 = vmatprep.subr.bf16.mxu0 %v4897
  %5606 = vmatpush1.bf16.msra.mxu0 %v4896
  %5607 = vmatprep.subr.bf16.mxu0 %v4905
  %5608 = vmatpush1.bf16.msra.mxu0 %v4904
  %5609 = vmatprep.subr.bf16.mxu0 %v4913
  %5610 = vmatpush1.bf16.msra.mxu0 %v4912
  %5611 = vmatprep.subr.bf16.mxu0 %v4921
  %5612 = vmatpush1.bf16.msra.mxu0 %v4920
  %5613 = vmatprep.subr.bf16.mxu0 %v4929
  %5614 = vmatpush1.bf16.msra.mxu0 %v4928
  %5615 = vmatprep.subr.bf16.mxu0 %v4937
  %5616 = vmatpush1.bf16.msra.mxu0 %v4936
  %5617 = vmatprep.subr.bf16.mxu0 %v4945
  %5618 = vmatpush1.bf16.msra.mxu0 %v4944
  %5619 = vmatprep.mubr.bf16.mxu0 %v2349
  %5620 = vmatmul.mubr.bf16.gmra.mrb[0].mxu0 %v2348
  %v5621 = vpop.f32.mrb[0].mxu0
  %v5622 = vadd.f32 %v5581, %v5621
  %v5623 = vpop.f32.mrb[0].mxu0
  %v5624 = vadd.f32 %v5583, %v5623
  %v5625 = vpop.f32.mrb[0].mxu0
  %v5626 = vpop.f32.mrb[0].mxu0
  %5627 = vdwg.mxu0
  %5628 = vmatprep.subr.bf16.mxu0 %v4443
  %5629 = vmatpush1.bf16.msra.mxu0 %v4442
  %5630 = vmatprep.subr.bf16.mxu0 %v4451
  %5631 = vmatpush1.bf16.msra.mxu0 %v4450
  %5632 = vmatprep.subr.bf16.mxu0 %v4459
  %5633 = vmatpush1.bf16.msra.mxu0 %v4458
  %5634 = vmatprep.subr.bf16.mxu0 %v4467
  %5635 = vmatpush1.bf16.msra.mxu0 %v4466
  %5636 = vmatprep.subr.bf16.mxu0 %v4475
  %5637 = vmatpush1.bf16.msra.mxu0 %v4474
  %5638 = vmatprep.subr.bf16.mxu0 %v4483
  %5639 = vmatpush1.bf16.msra.mxu0 %v4482
  %5640 = vmatprep.subr.bf16.mxu0 %v4491
  %5641 = vmatpush1.bf16.msra.mxu0 %v4490
  %5642 = vmatprep.subr.bf16.mxu0 %v4499
  %5643 = vmatpush1.bf16.msra.mxu0 %v4498
  %5644 = vmatprep.subr.bf16.mxu0 %v4507
  %5645 = vmatpush1.bf16.msra.mxu0 %v4506
  %5646 = vmatprep.subr.bf16.mxu0 %v4515
  %5647 = vmatpush1.bf16.msra.mxu0 %v4514
  %5648 = vmatprep.subr.bf16.mxu0 %v4523
  %5649 = vmatpush1.bf16.msra.mxu0 %v4522
  %5650 = vmatprep.subr.bf16.mxu0 %v4531
  %5651 = vmatpush1.bf16.msra.mxu0 %v4530
  %5652 = vmatprep.subr.bf16.mxu0 %v4539
  %5653 = vmatpush1.bf16.msra.mxu0 %v4538
  %5654 = vmatprep.subr.bf16.mxu0 %v4547
  %5655 = vmatpush1.bf16.msra.mxu0 %v4546
  %5656 = vmatprep.subr.bf16.mxu0 %v4555
  %5657 = vmatpush1.bf16.msra.mxu0 %v4554
  %5658 = vmatprep.subr.bf16.mxu0 %v4563
  %5659 = vmatpush1.bf16.msra.mxu0 %v4562
  %5660 = vmatprep.mubr.bf16.mxu0 %v2343
  %5661 = vmatmul.mubr.bf16.gmra.mrb[0].mxu0 %v2342
  %v5662 = vpop.f32.mrb[0].mxu0
  %v5663 = vadd.f32 %v2875, %v5662
  %v5664 = vpop.f32.mrb[0].mxu0
  %v5665 = vadd.f32 %v2879, %v5664
  %v5666 = vpop.f32.mrb[0].mxu0
  %v5667 = vpop.f32.mrb[0].mxu0
  %5668 = vdwg.mxu0
  %5669 = vmatprep.subr.bf16.mxu0 %v4571
  %5670 = vmatpush1.bf16.msra.mxu0 %v4570
  %5671 = vmatprep.subr.bf16.mxu0 %v4579
  %5672 = vmatpush1.bf16.msra.mxu0 %v4578
  %5673 = vmatprep.subr.bf16.mxu0 %v4587
  %5674 = vmatpush1.bf16.msra.mxu0 %v4586
  %5675 = vmatprep.subr.bf16.mxu0 %v4595
  %5676 = vmatpush1.bf16.msra.mxu0 %v4594
  %5677 = vmatprep.subr.bf16.mxu0 %v4603
  %5678 = vmatpush1.bf16.msra.mxu0 %v4602
  %5679 = vmatprep.subr.bf16.mxu0 %v4611
  %5680 = vmatpush1.bf16.msra.mxu0 %v4610
  %5681 = vmatprep.subr.bf16.mxu0 %v4619
  %5682 = vmatpush1.bf16.msra.mxu0 %v4618
  %5683 = vmatprep.subr.bf16.mxu0 %v4627
  %5684 = vmatpush1.bf16.msra.mxu0 %v4626
  %5685 = vmatprep.subr.bf16.mxu0 %v4635
  %5686 = vmatpush1.bf16.msra.mxu0 %v4634
  %5687 = vmatprep.subr.bf16.mxu0 %v4643
  %5688 = vmatpush1.bf16.msra.mxu0 %v4642
  %5689 = vmatprep.subr.bf16.mxu0 %v4651
  %5690 = vmatpush1.bf16.msra.mxu0 %v4650
  %5691 = vmatprep.subr.bf16.mxu0 %v4659
  %5692 = vmatpush1.bf16.msra.mxu0 %v4658
  %5693 = vmatprep.subr.bf16.mxu0 %v4667
  %5694 = vmatpush1.bf16.msra.mxu0 %v4666
  %5695 = vmatprep.subr.bf16.mxu0 %v4675
  %5696 = vmatpush1.bf16.msra.mxu0 %v4674
  %5697 = vmatprep.subr.bf16.mxu0 %v4683
  %5698 = vmatpush1.bf16.msra.mxu0 %v4682
  %5699 = vmatprep.subr.bf16.mxu0 %v4691
  %5700 = vmatpush1.bf16.msra.mxu0 %v4690
  %5701 = vmatprep.mubr.bf16.mxu0 %v2345
  %5702 = vmatmul.mubr.bf16.gmra.mrb[0].mxu0 %v2344
  %v5703 = vpop.f32.mrb[0].mxu0
  %v5704 = vadd.f32 %v5663, %v5703
  %v5705 = vpop.f32.mrb[0].mxu0
  %v5706 = vadd.f32 %v5665, %v5705
  %v5707 = vpop.f32.mrb[0].mxu0
  %v5708 = vpop.f32.mrb[0].mxu0
  %5709 = vdwg.mxu0
  %5710 = vmatprep.subr.bf16.mxu0 %v4699
  %5711 = vmatpush1.bf16.msra.mxu0 %v4698
  %5712 = vmatprep.subr.bf16.mxu0 %v4707
  %5713 = vmatpush1.bf16.msra.mxu0 %v4706
  %5714 = vmatprep.subr.bf16.mxu0 %v4715
  %5715 = vmatpush1.bf16.msra.mxu0 %v4714
  %5716 = vmatprep.subr.bf16.mxu0 %v4723
  %5717 = vmatpush1.bf16.msra.mxu0 %v4722
  %5718 = vmatprep.subr.bf16.mxu0 %v4731
  %5719 = vmatpush1.bf16.msra.mxu0 %v4730
  %5720 = vmatprep.subr.bf16.mxu0 %v4739
  %5721 = vmatpush1.bf16.msra.mxu0 %v4738
  %5722 = vmatprep.subr.bf16.mxu0 %v4747
  %5723 = vmatpush1.bf16.msra.mxu0 %v4746
  %5724 = vmatprep.subr.bf16.mxu0 %v4755
  %5725 = vmatpush1.bf16.msra.mxu0 %v4754
  %5726 = vmatprep.subr.bf16.mxu0 %v4763
  %5727 = vmatpush1.bf16.msra.mxu0 %v4762
  %5728 = vmatprep.subr.bf16.mxu0 %v4771
  %5729 = vmatpush1.bf16.msra.mxu0 %v4770
  %5730 = vmatprep.subr.bf16.mxu0 %v4779
  %5731 = vmatpush1.bf16.msra.mxu0 %v4778
  %5732 = vmatprep.subr.bf16.mxu0 %v4787
  %5733 = vmatpush1.bf16.msra.mxu0 %v4786
  %5734 = vmatprep.subr.bf16.mxu0 %v4795
  %5735 = vmatpush1.bf16.msra.mxu0 %v4794
  %5736 = vmatprep.subr.bf16.mxu0 %v4803
  %5737 = vmatpush1.bf16.msra.mxu0 %v4802
  %5738 = vmatprep.subr.bf16.mxu0 %v4811
  %5739 = vmatpush1.bf16.msra.mxu0 %v4810
  %5740 = vmatprep.subr.bf16.mxu0 %v4819
  %5741 = vmatpush1.bf16.msra.mxu0 %v4818
  %5742 = vmatprep.mubr.bf16.mxu0 %v2347
  %5743 = vmatmul.mubr.bf16.gmra.mrb[0].mxu0 %v2346
  %v5744 = vpop.f32.mrb[0].mxu0
  %v5745 = vadd.f32 %v5704, %v5744
  %v5746 = vpop.f32.mrb[0].mxu0
  %v5747 = vadd.f32 %v5706, %v5746
  %v5748 = vpop.f32.mrb[0].mxu0
  %v5749 = vpop.f32.mrb[0].mxu0
  %5750 = vdwg.mxu0
  %5751 = vmatprep.subr.bf16.mxu0 %v4827
  %5752 = vmatpush1.bf16.msra.mxu0 %v4826
  %5753 = vmatprep.subr.bf16.mxu0 %v4835
  %5754 = vmatpush1.bf16.msra.mxu0 %v4834
  %5755 = vmatprep.subr.bf16.mxu0 %v4843
  %5756 = vmatpush1.bf16.msra.mxu0 %v4842
  %5757 = vmatprep.subr.bf16.mxu0 %v4851
  %5758 = vmatpush1.bf16.msra.mxu0 %v4850
  %5759 = vmatprep.subr.bf16.mxu0 %v4859
  %5760 = vmatpush1.bf16.msra.mxu0 %v4858
  %5761 = vmatprep.subr.bf16.mxu0 %v4867
  %5762 = vmatpush1.bf16.msra.mxu0 %v4866
  %5763 = vmatprep.subr.bf16.mxu0 %v4875
  %5764 = vmatpush1.bf16.msra.mxu0 %v4874
  %5765 = vmatprep.subr.bf16.mxu0 %v4883
  %5766 = vmatpush1.bf16.msra.mxu0 %v4882
  %5767 = vmatprep.subr.bf16.mxu0 %v4891
  %5768 = vmatpush1.bf16.msra.mxu0 %v4890
  %5769 = vmatprep.subr.bf16.mxu0 %v4899
  %5770 = vmatpush1.bf16.msra.mxu0 %v4898
  %5771 = vmatprep.subr.bf16.mxu0 %v4907
  %5772 = vmatpush1.bf16.msra.mxu0 %v4906
  %5773 = vmatprep.subr.bf16.mxu0 %v4915
  %5774 = vmatpush1.bf16.msra.mxu0 %v4914
  %5775 = vmatprep.subr.bf16.mxu0 %v4923
  %5776 = vmatpush1.bf16.msra.mxu0 %v4922
  %5777 = vmatprep.subr.bf16.mxu0 %v4931
  %5778 = vmatpush1.bf16.msra.mxu0 %v4930
  %5779 = vmatprep.subr.bf16.mxu0 %v4939
  %5780 = vmatpush1.bf16.msra.mxu0 %v4938
  %5781 = vmatprep.subr.bf16.mxu0 %v4947
  %5782 = vmatpush1.bf16.msra.mxu0 %v4946
  %5783 = vmatprep.mubr.bf16.mxu0 %v2349
  %5784 = vmatmul.mubr.bf16.gmra.mrb[0].mxu0 %v2348
  %v5785 = vpop.f32.mrb[0].mxu0
  %v5786 = vadd.f32 %v5745, %v5785
  %v5787 = vpop.f32.mrb[0].mxu0
  %v5788 = vadd.f32 %v5747, %v5787
  %v5789 = vpop.f32.mrb[0].mxu0
  %v5790 = vpop.f32.mrb[0].mxu0
  %5791 = vdwg.mxu0
  %5792 = vmatprep.subr.bf16.mxu0 %v4445
  %5793 = vmatpush1.bf16.msra.mxu0 %v4444
  %5794 = vmatprep.subr.bf16.mxu0 %v4453
  %5795 = vmatpush1.bf16.msra.mxu0 %v4452
  %5796 = vmatprep.subr.bf16.mxu0 %v4461
  %5797 = vmatpush1.bf16.msra.mxu0 %v4460
  %5798 = vmatprep.subr.bf16.mxu0 %v4469
  %5799 = vmatpush1.bf16.msra.mxu0 %v4468
  %5800 = vmatprep.subr.bf16.mxu0 %v4477
  %5801 = vmatpush1.bf16.msra.mxu0 %v4476
  %5802 = vmatprep.subr.bf16.mxu0 %v4485
  %5803 = vmatpush1.bf16.msra.mxu0 %v4484
  %5804 = vmatprep.subr.bf16.mxu0 %v4493
  %5805 = vmatpush1.bf16.msra.mxu0 %v4492
  %5806 = vmatprep.subr.bf16.mxu0 %v4501
  %5807 = vmatpush1.bf16.msra.mxu0 %v4500
  %5808 = vmatprep.subr.bf16.mxu0 %v4509
  %5809 = vmatpush1.bf16.msra.mxu0 %v4508
  %5810 = vmatprep.subr.bf16.mxu0 %v4517
  %5811 = vmatpush1.bf16.msra.mxu0 %v4516
  %5812 = vmatprep.subr.bf16.mxu0 %v4525
  %5813 = vmatpush1.bf16.msra.mxu0 %v4524
  %5814 = vmatprep.subr.bf16.mxu0 %v4533
  %5815 = vmatpush1.bf16.msra.mxu0 %v4532
  %5816 = vmatprep.subr.bf16.mxu0 %v4541
  %5817 = vmatpush1.bf16.msra.mxu0 %v4540
  %5818 = vmatprep.subr.bf16.mxu0 %v4549
  %5819 = vmatpush1.bf16.msra.mxu0 %v4548
  %5820 = vmatprep.subr.bf16.mxu0 %v4557
  %5821 = vmatpush1.bf16.msra.mxu0 %v4556
  %5822 = vmatprep.subr.bf16.mxu0 %v4565
  %5823 = vmatpush1.bf16.msra.mxu0 %v4564
  %5824 = vmatprep.mubr.bf16.mxu0 %v2343
  %5825 = vmatmul.mubr.bf16.gmra.mrb[0].mxu0 %v2342
  %v5826 = vpop.f32.mrb[0].mxu0
  %v5827 = vadd.f32 %v2883, %v5826
  %v5828 = vpop.f32.mrb[0].mxu0
  %v5829 = vadd.f32 %v2887, %v5828
  %v5830 = vpop.f32.mrb[0].mxu0
  %v5831 = vpop.f32.mrb[0].mxu0
  %5832 = vdwg.mxu0
  %5833 = vmatprep.subr.bf16.mxu0 %v4573
  %5834 = vmatpush1.bf16.msra.mxu0 %v4572
  %5835 = vmatprep.subr.bf16.mxu0 %v4581
  %5836 = vmatpush1.bf16.msra.mxu0 %v4580
  %5837 = vmatprep.subr.bf16.mxu0 %v4589
  %5838 = vmatpush1.bf16.msra.mxu0 %v4588
  %5839 = vmatprep.subr.bf16.mxu0 %v4597
  %5840 = vmatpush1.bf16.msra.mxu0 %v4596
  %5841 = vmatprep.subr.bf16.mxu0 %v4605
  %5842 = vmatpush1.bf16.msra.mxu0 %v4604
  %5843 = vmatprep.subr.bf16.mxu0 %v4613
  %5844 = vmatpush1.bf16.msra.mxu0 %v4612
  %5845 = vmatprep.subr.bf16.mxu0 %v4621
  %5846 = vmatpush1.bf16.msra.mxu0 %v4620
  %5847 = vmatprep.subr.bf16.mxu0 %v4629
  %5848 = vmatpush1.bf16.msra.mxu0 %v4628
  %5849 = vmatprep.subr.bf16.mxu0 %v4637
  %5850 = vmatpush1.bf16.msra.mxu0 %v4636
  %5851 = vmatprep.subr.bf16.mxu0 %v4645
  %5852 = vmatpush1.bf16.msra.mxu0 %v4644
  %5853 = vmatprep.subr.bf16.mxu0 %v4653
  %5854 = vmatpush1.bf16.msra.mxu0 %v4652
  %5855 = vmatprep.subr.bf16.mxu0 %v4661
  %5856 = vmatpush1.bf16.msra.mxu0 %v4660
  %5857 = vmatprep.subr.bf16.mxu0 %v4669
  %5858 = vmatpush1.bf16.msra.mxu0 %v4668
  %5859 = vmatprep.subr.bf16.mxu0 %v4677
  %5860 = vmatpush1.bf16.msra.mxu0 %v4676
  %5861 = vmatprep.subr.bf16.mxu0 %v4685
  %5862 = vmatpush1.bf16.msra.mxu0 %v4684
  %5863 = vmatprep.subr.bf16.mxu0 %v4693
  %5864 = vmatpush1.bf16.msra.mxu0 %v4692
  %5865 = vmatprep.mubr.bf16.mxu0 %v2345
  %5866 = vmatmul.mubr.bf16.gmra.mrb[0].mxu0 %v2344
  %v5867 = vpop.f32.mrb[0].mxu0
  %v5868 = vadd.f32 %v5827, %v5867
  %v5869 = vpop.f32.mrb[0].mxu0
  %v5870 = vadd.f32 %v5829, %v5869
  %v5871 = vpop.f32.mrb[0].mxu0
  %v5872 = vpop.f32.mrb[0].mxu0
  %5873 = vdwg.mxu0
  %5874 = vmatprep.subr.bf16.mxu0 %v4701
  %5875 = vmatpush1.bf16.msra.mxu0 %v4700
  %5876 = vmatprep.subr.bf16.mxu0 %v4709
  %5877 = vmatpush1.bf16.msra.mxu0 %v4708
  %5878 = vmatprep.subr.bf16.mxu0 %v4717
  %5879 = vmatpush1.bf16.msra.mxu0 %v4716
  %5880 = vmatprep.subr.bf16.mxu0 %v4725
  %5881 = vmatpush1.bf16.msra.mxu0 %v4724
  %5882 = vmatprep.subr.bf16.mxu0 %v4733
  %5883 = vmatpush1.bf16.msra.mxu0 %v4732
  %5884 = vmatprep.subr.bf16.mxu0 %v4741
  %5885 = vmatpush1.bf16.msra.mxu0 %v4740
  %5886 = vmatprep.subr.bf16.mxu0 %v4749
  %5887 = vmatpush1.bf16.msra.mxu0 %v4748
  %5888 = vmatprep.subr.bf16.mxu0 %v4757
  %5889 = vmatpush1.bf16.msra.mxu0 %v4756
  %5890 = vmatprep.subr.bf16.mxu0 %v4765
  %5891 = vmatpush1.bf16.msra.mxu0 %v4764
  %5892 = vmatprep.subr.bf16.mxu0 %v4773
  %5893 = vmatpush1.bf16.msra.mxu0 %v4772
  %5894 = vmatprep.subr.bf16.mxu0 %v4781
  %5895 = vmatpush1.bf16.msra.mxu0 %v4780
  %5896 = vmatprep.subr.bf16.mxu0 %v4789
  %5897 = vmatpush1.bf16.msra.mxu0 %v4788
  %5898 = vmatprep.subr.bf16.mxu0 %v4797
  %5899 = vmatpush1.bf16.msra.mxu0 %v4796
  %5900 = vmatprep.subr.bf16.mxu0 %v4805
  %5901 = vmatpush1.bf16.msra.mxu0 %v4804
  %5902 = vmatprep.subr.bf16.mxu0 %v4813
  %5903 = vmatpush1.bf16.msra.mxu0 %v4812
  %5904 = vmatprep.subr.bf16.mxu0 %v4821
  %5905 = vmatpush1.bf16.msra.mxu0 %v4820
  %5906 = vmatprep.mubr.bf16.mxu0 %v2347
  %5907 = vmatmul.mubr.bf16.gmra.mrb[0].mxu0 %v2346
  %v5908 = vpop.f32.mrb[0].mxu0
  %v5909 = vadd.f32 %v5868, %v5908
  %v5910 = vpop.f32.mrb[0].mxu0
  %v5911 = vadd.f32 %v5870, %v5910
  %v5912 = vpop.f32.mrb[0].mxu0
  %v5913 = vpop.f32.mrb[0].mxu0
  %5914 = vdwg.mxu0
  %5915 = vmatprep.subr.bf16.mxu0 %v4829
  %5916 = vmatpush1.bf16.msra.mxu0 %v4828
  %5917 = vmatprep.subr.bf16.mxu0 %v4837
  %5918 = vmatpush1.bf16.msra.mxu0 %v4836
  %5919 = vmatprep.subr.bf16.mxu0 %v4845
  %5920 = vmatpush1.bf16.msra.mxu0 %v4844
  %5921 = vmatprep.subr.bf16.mxu0 %v4853
  %5922 = vmatpush1.bf16.msra.mxu0 %v4852
  %5923 = vmatprep.subr.bf16.mxu0 %v4861
  %5924 = vmatpush1.bf16.msra.mxu0 %v4860
  %5925 = vmatprep.subr.bf16.mxu0 %v4869
  %5926 = vmatpush1.bf16.msra.mxu0 %v4868
  %5927 = vmatprep.subr.bf16.mxu0 %v4877
  %5928 = vmatpush1.bf16.msra.mxu0 %v4876
  %5929 = vmatprep.subr.bf16.mxu0 %v4885
  %5930 = vmatpush1.bf16.msra.mxu0 %v4884
  %5931 = vmatprep.subr.bf16.mxu0 %v4893
  %5932 = vmatpush1.bf16.msra.mxu0 %v4892
  %5933 = vmatprep.subr.bf16.mxu0 %v4901
  %5934 = vmatpush1.bf16.msra.mxu0 %v4900
  %5935 = vmatprep.subr.bf16.mxu0 %v4909
  %5936 = vmatpush1.bf16.msra.mxu0 %v4908
  %5937 = vmatprep.subr.bf16.mxu0 %v4917
  %5938 = vmatpush1.bf16.msra.mxu0 %v4916
  %5939 = vmatprep.subr.bf16.mxu0 %v4925
  %5940 = vmatpush1.bf16.msra.mxu0 %v4924
  %5941 = vmatprep.subr.bf16.mxu0 %v4933
  %5942 = vmatpush1.bf16.msra.mxu0 %v4932
  %5943 = vmatprep.subr.bf16.mxu0 %v4941
  %5944 = vmatpush1.bf16.msra.mxu0 %v4940
  %5945 = vmatprep.subr.bf16.mxu0 %v4949
  %5946 = vmatpush1.bf16.msra.mxu0 %v4948
  %5947 = vmatprep.mubr.bf16.mxu0 %v2349
  %5948 = vmatmul.mubr.bf16.gmra.mrb[0].mxu0 %v2348
  %v5949 = vpop.f32.mrb[0].mxu0
  %v5950 = vadd.f32 %v5909, %v5949
  %v5951 = vpop.f32.mrb[0].mxu0
  %v5952 = vadd.f32 %v5911, %v5951
  %v5953 = vpop.f32.mrb[0].mxu0
  %v5954 = vpop.f32.mrb[0].mxu0
  %5955 = vdwg.mxu0
  %5956 = vmatprep.subr.bf16.mxu0 %v4447
  %5957 = vmatpush1.bf16.msra.mxu0 %v4446
  %5958 = vmatprep.subr.bf16.mxu0 %v4455
  %5959 = vmatpush1.bf16.msra.mxu0 %v4454
  %5960 = vmatprep.subr.bf16.mxu0 %v4463
  %5961 = vmatpush1.bf16.msra.mxu0 %v4462
  %5962 = vmatprep.subr.bf16.mxu0 %v4471
  %5963 = vmatpush1.bf16.msra.mxu0 %v4470
  %5964 = vmatprep.subr.bf16.mxu0 %v4479
  %5965 = vmatpush1.bf16.msra.mxu0 %v4478
  %5966 = vmatprep.subr.bf16.mxu0 %v4487
  %5967 = vmatpush1.bf16.msra.mxu0 %v4486
  %5968 = vmatprep.subr.bf16.mxu0 %v4495
  %5969 = vmatpush1.bf16.msra.mxu0 %v4494
  %5970 = vmatprep.subr.bf16.mxu0 %v4503
  %5971 = vmatpush1.bf16.msra.mxu0 %v4502
  %5972 = vmatprep.subr.bf16.mxu0 %v4511
  %5973 = vmatpush1.bf16.msra.mxu0 %v4510
  %5974 = vmatprep.subr.bf16.mxu0 %v4519
  %5975 = vmatpush1.bf16.msra.mxu0 %v4518
  %5976 = vmatprep.subr.bf16.mxu0 %v4527
  %5977 = vmatpush1.bf16.msra.mxu0 %v4526
  %5978 = vmatprep.subr.bf16.mxu0 %v4535
  %5979 = vmatpush1.bf16.msra.mxu0 %v4534
  %5980 = vmatprep.subr.bf16.mxu0 %v4543
  %5981 = vmatpush1.bf16.msra.mxu0 %v4542
  %5982 = vmatprep.subr.bf16.mxu0 %v4551
  %5983 = vmatpush1.bf16.msra.mxu0 %v4550
  %5984 = vmatprep.subr.bf16.mxu0 %v4559
  %5985 = vmatpush1.bf16.msra.mxu0 %v4558
  %5986 = vmatprep.subr.bf16.mxu0 %v4567
  %5987 = vmatpush1.bf16.msra.mxu0 %v4566
  %5988 = vmatprep.mubr.bf16.mxu0 %v2343
  %5989 = vmatmul.mubr.bf16.gmra.mrb[0].mxu0 %v2342
  %v5990 = vpop.f32.mrb[0].mxu0
  %v5991 = vadd.f32 %v2891, %v5990
  %v5992 = vpop.f32.mrb[0].mxu0
  %v5993 = vadd.f32 %v2895, %v5992
  %v5994 = vpop.f32.mrb[0].mxu0
  %v5995 = vpop.f32.mrb[0].mxu0
  %5996 = vdwg.mxu0
  %5997 = vmatprep.subr.bf16.mxu0 %v4575
  %5998 = vmatpush1.bf16.msra.mxu0 %v4574
  %5999 = vmatprep.subr.bf16.mxu0 %v4583
  %6000 = vmatpush1.bf16.msra.mxu0 %v4582
  %6001 = vmatprep.subr.bf16.mxu0 %v4591
  %6002 = vmatpush1.bf16.msra.mxu0 %v4590
  %6003 = vmatprep.subr.bf16.mxu0 %v4599
  %6004 = vmatpush1.bf16.msra.mxu0 %v4598
  %6005 = vmatprep.subr.bf16.mxu0 %v4607
  %6006 = vmatpush1.bf16.msra.mxu0 %v4606
  %6007 = vmatprep.subr.bf16.mxu0 %v4615
  %6008 = vmatpush1.bf16.msra.mxu0 %v4614
  %6009 = vmatprep.subr.bf16.mxu0 %v4623
  %6010 = vmatpush1.bf16.msra.mxu0 %v4622
  %6011 = vmatprep.subr.bf16.mxu0 %v4631
  %6012 = vmatpush1.bf16.msra.mxu0 %v4630
  %6013 = vmatprep.subr.bf16.mxu0 %v4639
  %6014 = vmatpush1.bf16.msra.mxu0 %v4638
  %6015 = vmatprep.subr.bf16.mxu0 %v4647
  %6016 = vmatpush1.bf16.msra.mxu0 %v4646
  %6017 = vmatprep.subr.bf16.mxu0 %v4655
  %6018 = vmatpush1.bf16.msra.mxu0 %v4654
  %6019 = vmatprep.subr.bf16.mxu0 %v4663
  %6020 = vmatpush1.bf16.msra.mxu0 %v4662
  %6021 = vmatprep.subr.bf16.mxu0 %v4671
  %6022 = vmatpush1.bf16.msra.mxu0 %v4670
  %6023 = vmatprep.subr.bf16.mxu0 %v4679
  %6024 = vmatpush1.bf16.msra.mxu0 %v4678
  %6025 = vmatprep.subr.bf16.mxu0 %v4687
  %6026 = vmatpush1.bf16.msra.mxu0 %v4686
  %6027 = vmatprep.subr.bf16.mxu0 %v4695
  %6028 = vmatpush1.bf16.msra.mxu0 %v4694
  %6029 = vmatprep.mubr.bf16.mxu0 %v2345
  %6030 = vmatmul.mubr.bf16.gmra.mrb[0].mxu0 %v2344
  %v6031 = vpop.f32.mrb[0].mxu0
  %v6032 = vadd.f32 %v5991, %v6031
  %v6033 = vpop.f32.mrb[0].mxu0
  %v6034 = vadd.f32 %v5993, %v6033
  %v6035 = vpop.f32.mrb[0].mxu0
  %v6036 = vpop.f32.mrb[0].mxu0
  %6037 = vdwg.mxu0
  %6038 = vmatprep.subr.bf16.mxu0 %v4703
  %6039 = vmatpush1.bf16.msra.mxu0 %v4702
  %6040 = vmatprep.subr.bf16.mxu0 %v4711
  %6041 = vmatpush1.bf16.msra.mxu0 %v4710
  %6042 = vmatprep.subr.bf16.mxu0 %v4719
  %6043 = vmatpush1.bf16.msra.mxu0 %v4718
  %6044 = vmatprep.subr.bf16.mxu0 %v4727
  %6045 = vmatpush1.bf16.msra.mxu0 %v4726
  %6046 = vmatprep.subr.bf16.mxu0 %v4735
  %6047 = vmatpush1.bf16.msra.mxu0 %v4734
  %6048 = vmatprep.subr.bf16.mxu0 %v4743
  %6049 = vmatpush1.bf16.msra.mxu0 %v4742
  %6050 = vmatprep.subr.bf16.mxu0 %v4751
  %6051 = vmatpush1.bf16.msra.mxu0 %v4750
  %6052 = vmatprep.subr.bf16.mxu0 %v4759
  %6053 = vmatpush1.bf16.msra.mxu0 %v4758
  %6054 = vmatprep.subr.bf16.mxu0 %v4767
  %6055 = vmatpush1.bf16.msra.mxu0 %v4766
  %6056 = vmatprep.subr.bf16.mxu0 %v4775
  %6057 = vmatpush1.bf16.msra.mxu0 %v4774
  %6058 = vmatprep.subr.bf16.mxu0 %v4783
  %6059 = vmatpush1.bf16.msra.mxu0 %v4782
  %6060 = vmatprep.subr.bf16.mxu0 %v4791
  %6061 = vmatpush1.bf16.msra.mxu0 %v4790
  %6062 = vmatprep.subr.bf16.mxu0 %v4799
  %6063 = vmatpush1.bf16.msra.mxu0 %v4798
  %6064 = vmatprep.subr.bf16.mxu0 %v4807
  %6065 = vmatpush1.bf16.msra.mxu0 %v4806
  %6066 = vmatprep.subr.bf16.mxu0 %v4815
  %6067 = vmatpush1.bf16.msra.mxu0 %v4814
  %6068 = vmatprep.subr.bf16.mxu0 %v4823
  %6069 = vmatpush1.bf16.msra.mxu0 %v4822
  %6070 = vmatprep.mubr.bf16.mxu0 %v2347
  %6071 = vmatmul.mubr.bf16.gmra.mrb[0].mxu0 %v2346
  %v6072 = vpop.f32.mrb[0].mxu0
  %v6073 = vadd.f32 %v6032, %v6072
  %v6074 = vpop.f32.mrb[0].mxu0
  %v6075 = vadd.f32 %v6034, %v6074
  %v6076 = vpop.f32.mrb[0].mxu0
  %v6077 = vpop.f32.mrb[0].mxu0
  %6078 = vdwg.mxu0
  %6079 = vmatprep.subr.bf16.mxu0 %v4831
  %6080 = vmatpush1.bf16.msra.mxu0 %v4830
  %6081 = vmatprep.subr.bf16.mxu0 %v4839
  %6082 = vmatpush1.bf16.msra.mxu0 %v4838
  %6083 = vmatprep.subr.bf16.mxu0 %v4847
  %6084 = vmatpush1.bf16.msra.mxu0 %v4846
  %6085 = vmatprep.subr.bf16.mxu0 %v4855
  %6086 = vmatpush1.bf16.msra.mxu0 %v4854
  %6087 = vmatprep.subr.bf16.mxu0 %v4863
  %6088 = vmatpush1.bf16.msra.mxu0 %v4862
  %6089 = vmatprep.subr.bf16.mxu0 %v4871
  %6090 = vmatpush1.bf16.msra.mxu0 %v4870
  %6091 = vmatprep.subr.bf16.mxu0 %v4879
  %6092 = vmatpush1.bf16.msra.mxu0 %v4878
  %6093 = vmatprep.subr.bf16.mxu0 %v4887
  %6094 = vmatpush1.bf16.msra.mxu0 %v4886
  %6095 = vmatprep.subr.bf16.mxu0 %v4895
  %6096 = vmatpush1.bf16.msra.mxu0 %v4894
  %6097 = vmatprep.subr.bf16.mxu0 %v4903
  %6098 = vmatpush1.bf16.msra.mxu0 %v4902
  %6099 = vmatprep.subr.bf16.mxu0 %v4911
  %6100 = vmatpush1.bf16.msra.mxu0 %v4910
  %6101 = vmatprep.subr.bf16.mxu0 %v4919
  %6102 = vmatpush1.bf16.msra.mxu0 %v4918
  %6103 = vmatprep.subr.bf16.mxu0 %v4927
  %6104 = vmatpush1.bf16.msra.mxu0 %v4926
  %6105 = vmatprep.subr.bf16.mxu0 %v4935
  %6106 = vmatpush1.bf16.msra.mxu0 %v4934
  %6107 = vmatprep.subr.bf16.mxu0 %v4943
  %6108 = vmatpush1.bf16.msra.mxu0 %v4942
  %6109 = vmatprep.subr.bf16.mxu0 %v4951
  %6110 = vmatpush1.bf16.msra.mxu0 %v4950
  %6111 = vmatprep.mubr.bf16.mxu0 %v2349
  %6112 = vmatmul.mubr.bf16.gmra.mrb[0].mxu0 %v2348
  %v6113 = vpop.f32.mrb[0].mxu0
  %v6114 = vadd.f32 %v6073, %v6113
  %v6115 = vpop.f32.mrb[0].mxu0
  %v6116 = vadd.f32 %v6075, %v6115
  %v6117 = vpop.f32.mrb[0].mxu0
  %v6118 = vpop.f32.mrb[0].mxu0
  %6119 = vdwg.mxu0
  %vm6120 = vcmp.ge.f32.partialorder %v5622, 0.0
  %vm6121 = vcmp.ge.f32.partialorder %v5624, 0.0
  %vm6122 = vcmp.ge.f32.partialorder %v5786, 0.0
  %vm6123 = vcmp.ge.f32.partialorder %v5788, 0.0
  %vm6124 = vcmp.ge.f32.partialorder %v5950, 0.0
  %vm6125 = vcmp.ge.f32.partialorder %v5952, 0.0
  %vm6126 = vcmp.ge.f32.partialorder %v6114, 0.0
  %vm6127 = vcmp.ge.f32.partialorder %v6116, 0.0
  %v6128 = vmul.f32 %v5622, 0.2
  %v6129 = vmul.f32 %v5624, 0.2
  %v6130 = vmul.f32 %v5786, 0.2
  %v6131 = vmul.f32 %v5788, 0.2
  %v6132 = vmul.f32 %v5950, 0.2
  %v6133 = vmul.f32 %v5952, 0.2
  %v6134 = vmul.f32 %v6114, 0.2
  %v6135 = vmul.f32 %v6116, 0.2
  %v6136 = vsel %vm6120, %v5622, %v6128
  %v6137 = vsel %vm6121, %v5624, %v6129
  %v6138 = vsel %vm6122, %v5786, %v6130
  %v6139 = vsel %vm6123, %v5788, %v6131
  %v6140 = vsel %vm6124, %v5950, %v6132
  %v6141 = vsel %vm6125, %v5952, %v6133
  %v6142 = vsel %vm6126, %v6114, %v6134
  %v6143 = vsel %vm6127, %v6116, %v6135
  %v6144 = vpack.c.bf16 %v6136, %v6136
  %v6145 = vpack.c.bf16 %v6137, %v6137
  %v6146 = vpack.c.bf16 %v6138, %v6138
  %v6147 = vpack.c.bf16 %v6139, %v6139
  %v6148 = vpack.c.bf16 %v6140, %v6140
  %v6149 = vpack.c.bf16 %v6141, %v6141
  %v6150 = vpack.c.bf16 %v6142, %v6142
  %v6151 = vpack.c.bf16 %v6143, %v6143
  %v6152 = vld [vmem:[%s11] sm:$0xf]
  %v6153 = vld [vmem:[%s11 + $0x4] sm:$0xf]
  %v6154 = vld [vmem:[%s11 + $0x8] sm:$0xf]
  %v6155 = vld [vmem:[%s11 + $0xc] sm:$0xf]
  %v6156 = vld [vmem:[%s11 + $0x10] sm:$0xf]
  %v6157 = vld [vmem:[%s11 + $0x14] sm:$0xf]
  %v6158 = vld [vmem:[%s11 + $0x18] sm:$0xf]
  %v6159 = vld [vmem:[%s11 + $0x1c] sm:$0xf]
  %v6160 = vld [vmem:[%s11 + $0x20] sm:$0xf]
  %v6161 = vld [vmem:[%s11 + $0x24] sm:$0xf]
  %v6162 = vld [vmem:[%s11 + $0x28] sm:$0xf]
  %v6163 = vld [vmem:[%s11 + $0x2c] sm:$0xf]
  %v6164 = vld [vmem:[%s11 + $0x30] sm:$0xf]
  %v6165 = vld [vmem:[%s11 + $0x34] sm:$0xf]
  %v6166 = vld [vmem:[%s11 + $0x38] sm:$0xf]
  %v6167 = vld [vmem:[%s11 + $0x3c] sm:$0xf]
  %v6168 = vld [vmem:[%s11 + $0x40] sm:$0xf]
  %v6169 = vld [vmem:[%s11 + $0x44] sm:$0xf]
  %v6170 = vld [vmem:[%s11 + $0x48] sm:$0xf]
  %v6171 = vld [vmem:[%s11 + $0x4c] sm:$0xf]
  %v6172 = vld [vmem:[%s11 + $0x50] sm:$0xf]
  %v6173 = vld [vmem:[%s11 + $0x54] sm:$0xf]
  %v6174 = vld [vmem:[%s11 + $0x58] sm:$0xf]
  %v6175 = vld [vmem:[%s11 + $0x5c] sm:$0xf]
  %v6176 = vld [vmem:[%s11 + $0x60] sm:$0xf]
  %v6177 = vld [vmem:[%s11 + $0x64] sm:$0xf]
  %v6178 = vld [vmem:[%s11 + $0x68] sm:$0xf]
  %v6179 = vld [vmem:[%s11 + $0x6c] sm:$0xf]
  %v6180 = vld [vmem:[%s11 + $0x70] sm:$0xf]
  %v6181 = vld [vmem:[%s11 + $0x74] sm:$0xf]
  %v6182 = vld [vmem:[%s11 + $0x78] sm:$0xf]
  %v6183 = vld [vmem:[%s11 + $0x7c] sm:$0xf]
  %v6184 = vld [vmem:[%s11 + $0x80] sm:$0xf]
  %v6185 = vld [vmem:[%s11 + $0x84] sm:$0xf]
  %v6186 = vld [vmem:[%s11 + $0x88] sm:$0xf]
  %v6187 = vld [vmem:[%s11 + $0x8c] sm:$0xf]
  %v6188 = vld [vmem:[%s11 + $0x90] sm:$0xf]
  %v6189 = vld [vmem:[%s11 + $0x94] sm:$0xf]
  %v6190 = vld [vmem:[%s11 + $0x98] sm:$0xf]
  %v6191 = vld [vmem:[%s11 + $0x9c] sm:$0xf]
  %v6192 = vld [vmem:[%s11 + $0xa0] sm:$0xf]
  %v6193 = vld [vmem:[%s11 + $0xa4] sm:$0xf]
  %v6194 = vld [vmem:[%s11 + $0xa8] sm:$0xf]
  %v6195 = vld [vmem:[%s11 + $0xac] sm:$0xf]
  %v6196 = vld [vmem:[%s11 + $0xb0] sm:$0xf]
  %v6197 = vld [vmem:[%s11 + $0xb4] sm:$0xf]
  %v6198 = vld [vmem:[%s11 + $0xb8] sm:$0xf]
  %v6199 = vld [vmem:[%s11 + $0xbc] sm:$0xf]
  %v6200 = vld [vmem:[%s11 + $0xc0] sm:$0xf]
  %v6201 = vld [vmem:[%s11 + $0xc4] sm:$0xf]
  %v6202 = vld [vmem:[%s11 + $0xc8] sm:$0xf]
  %v6203 = vld [vmem:[%s11 + $0xcc] sm:$0xf]
  %v6204 = vld [vmem:[%s11 + $0xd0] sm:$0xf]
  %v6205 = vld [vmem:[%s11 + $0xd4] sm:$0xf]
  %v6206 = vld [vmem:[%s11 + $0xd8] sm:$0xf]
  %v6207 = vld [vmem:[%s11 + $0xdc] sm:$0xf]
  %v6208 = vld [vmem:[%s11 + $0xe0] sm:$0xf]
  %v6209 = vld [vmem:[%s11 + $0xe4] sm:$0xf]
  %v6210 = vld [vmem:[%s11 + $0xe8] sm:$0xf]
  %v6211 = vld [vmem:[%s11 + $0xec] sm:$0xf]
  %v6212 = vld [vmem:[%s11 + $0xf0] sm:$0xf]
  %v6213 = vld [vmem:[%s11 + $0xf4] sm:$0xf]
  %v6214 = vld [vmem:[%s11 + $0xf8] sm:$0xf]
  %v6215 = vld [vmem:[%s11 + $0xfc] sm:$0xf]
  %v6216 = vld [vmem:[%s11 + $0x100] sm:$0xf]
  %v6217 = vld [vmem:[%s11 + $0x104] sm:$0xf]
  %v6218 = vld [vmem:[%s11 + $0x108] sm:$0xf]
  %v6219 = vld [vmem:[%s11 + $0x10c] sm:$0xf]
  %v6220 = vld [vmem:[%s11 + $0x110] sm:$0xf]
  %v6221 = vld [vmem:[%s11 + $0x114] sm:$0xf]
  %v6222 = vld [vmem:[%s11 + $0x118] sm:$0xf]
  %v6223 = vld [vmem:[%s11 + $0x11c] sm:$0xf]
  %v6224 = vld [vmem:[%s11 + $0x120] sm:$0xf]
  %v6225 = vld [vmem:[%s11 + $0x124] sm:$0xf]
  %v6226 = vld [vmem:[%s11 + $0x128] sm:$0xf]
  %v6227 = vld [vmem:[%s11 + $0x12c] sm:$0xf]
  %v6228 = vld [vmem:[%s11 + $0x130] sm:$0xf]
  %v6229 = vld [vmem:[%s11 + $0x134] sm:$0xf]
  %v6230 = vld [vmem:[%s11 + $0x138] sm:$0xf]
  %v6231 = vld [vmem:[%s11 + $0x13c] sm:$0xf]
  %v6232 = vld [vmem:[%s11 + $0x140] sm:$0xf]
  %v6233 = vld [vmem:[%s11 + $0x144] sm:$0xf]
  %v6234 = vld [vmem:[%s11 + $0x148] sm:$0xf]
  %v6235 = vld [vmem:[%s11 + $0x14c] sm:$0xf]
  %v6236 = vld [vmem:[%s11 + $0x150] sm:$0xf]
  %v6237 = vld [vmem:[%s11 + $0x154] sm:$0xf]
  %v6238 = vld [vmem:[%s11 + $0x158] sm:$0xf]
  %v6239 = vld [vmem:[%s11 + $0x15c] sm:$0xf]
  %v6240 = vld [vmem:[%s11 + $0x160] sm:$0xf]
  %v6241 = vld [vmem:[%s11 + $0x164] sm:$0xf]
  %v6242 = vld [vmem:[%s11 + $0x168] sm:$0xf]
  %v6243 = vld [vmem:[%s11 + $0x16c] sm:$0xf]
  %v6244 = vld [vmem:[%s11 + $0x170] sm:$0xf]
  %v6245 = vld [vmem:[%s11 + $0x174] sm:$0xf]
  %v6246 = vld [vmem:[%s11 + $0x178] sm:$0xf]
  %v6247 = vld [vmem:[%s11 + $0x17c] sm:$0xf]
  %v6248 = vld [vmem:[%s11 + $0x180] sm:$0xf]
  %v6249 = vld [vmem:[%s11 + $0x184] sm:$0xf]
  %v6250 = vld [vmem:[%s11 + $0x188] sm:$0xf]
  %v6251 = vld [vmem:[%s11 + $0x18c] sm:$0xf]
  %v6252 = vld [vmem:[%s11 + $0x190] sm:$0xf]
  %v6253 = vld [vmem:[%s11 + $0x194] sm:$0xf]
  %v6254 = vld [vmem:[%s11 + $0x198] sm:$0xf]
  %v6255 = vld [vmem:[%s11 + $0x19c] sm:$0xf]
  %v6256 = vld [vmem:[%s11 + $0x1a0] sm:$0xf]
  %v6257 = vld [vmem:[%s11 + $0x1a4] sm:$0xf]
  %v6258 = vld [vmem:[%s11 + $0x1a8] sm:$0xf]
  %v6259 = vld [vmem:[%s11 + $0x1ac] sm:$0xf]
  %v6260 = vld [vmem:[%s11 + $0x1b0] sm:$0xf]
  %v6261 = vld [vmem:[%s11 + $0x1b4] sm:$0xf]
  %v6262 = vld [vmem:[%s11 + $0x1b8] sm:$0xf]
  %v6263 = vld [vmem:[%s11 + $0x1bc] sm:$0xf]
  %v6264 = vld [vmem:[%s11 + $0x1c0] sm:$0xf]
  %v6265 = vld [vmem:[%s11 + $0x1c4] sm:$0xf]
  %v6266 = vld [vmem:[%s11 + $0x1c8] sm:$0xf]
  %v6267 = vld [vmem:[%s11 + $0x1cc] sm:$0xf]
  %v6268 = vld [vmem:[%s11 + $0x1d0] sm:$0xf]
  %v6269 = vld [vmem:[%s11 + $0x1d4] sm:$0xf]
  %v6270 = vld [vmem:[%s11 + $0x1d8] sm:$0xf]
  %v6271 = vld [vmem:[%s11 + $0x1dc] sm:$0xf]
  %v6272 = vld [vmem:[%s11 + $0x1e0] sm:$0xf]
  %v6273 = vld [vmem:[%s11 + $0x1e4] sm:$0xf]
  %v6274 = vld [vmem:[%s11 + $0x1e8] sm:$0xf]
  %v6275 = vld [vmem:[%s11 + $0x1ec] sm:$0xf]
  %v6276 = vld [vmem:[%s11 + $0x1f0] sm:$0xf]
  %v6277 = vld [vmem:[%s11 + $0x1f4] sm:$0xf]
  %v6278 = vld [vmem:[%s11 + $0x1f8] sm:$0xf]
  %v6279 = vld [vmem:[%s11 + $0x1fc] sm:$0xf]
  %v6280 = vld [vmem:[#allocation2] sm:$0x1]
  %v6282 = vlaneseq
  %v6283 = vshrl.u32 %v6282, 7
  %v6284 = vsub.s32 0, %v6283
  %v6285 = vrot.slane %v6280, %v6284
  %v6415 = vunpack.c.l.b16 %v6152
  %v6416 = vunpack.c.l.b16 %v6153
  %v6417 = vunpack.c.l.b16 %v6154
  %v6418 = vunpack.c.l.b16 %v6155
  %v6419 = vunpack.c.l.b16 %v6156
  %v6420 = vunpack.c.l.b16 %v6157
  %v6421 = vunpack.c.l.b16 %v6158
  %v6422 = vunpack.c.l.b16 %v6159
  %v6423 = vunpack.c.l.b16 %v6160
  %v6424 = vunpack.c.l.b16 %v6161
  %v6425 = vunpack.c.l.b16 %v6162
  %v6426 = vunpack.c.l.b16 %v6163
  %v6427 = vunpack.c.l.b16 %v6164
  %v6428 = vunpack.c.l.b16 %v6165
  %v6429 = vunpack.c.l.b16 %v6166
  %v6430 = vunpack.c.l.b16 %v6167
  %v6431 = vunpack.c.l.b16 %v6168
  %v6432 = vunpack.c.l.b16 %v6169
  %v6433 = vunpack.c.l.b16 %v6170
  %v6434 = vunpack.c.l.b16 %v6171
  %v6435 = vunpack.c.l.b16 %v6172
  %v6436 = vunpack.c.l.b16 %v6173
  %v6437 = vunpack.c.l.b16 %v6174
  %v6438 = vunpack.c.l.b16 %v6175
  %v6439 = vunpack.c.l.b16 %v6176
  %v6440 = vunpack.c.l.b16 %v6177
  %v6441 = vunpack.c.l.b16 %v6178
  %v6442 = vunpack.c.l.b16 %v6179
  %v6443 = vunpack.c.l.b16 %v6180
  %v6444 = vunpack.c.l.b16 %v6181
  %v6445 = vunpack.c.l.b16 %v6182
  %v6446 = vunpack.c.l.b16 %v6183
  %v6447 = vunpack.c.l.b16 %v6184
  %v6448 = vunpack.c.l.b16 %v6185
  %v6449 = vunpack.c.l.b16 %v6186
  %v6450 = vunpack.c.l.b16 %v6187
  %v6451 = vunpack.c.l.b16 %v6188
  %v6452 = vunpack.c.l.b16 %v6189
  %v6453 = vunpack.c.l.b16 %v6190
  %v6454 = vunpack.c.l.b16 %v6191
  %v6455 = vunpack.c.l.b16 %v6192
  %v6456 = vunpack.c.l.b16 %v6193
  %v6457 = vunpack.c.l.b16 %v6194
  %v6458 = vunpack.c.l.b16 %v6195
  %v6459 = vunpack.c.l.b16 %v6196
  %v6460 = vunpack.c.l.b16 %v6197
  %v6461 = vunpack.c.l.b16 %v6198
  %v6462 = vunpack.c.l.b16 %v6199
  %v6463 = vunpack.c.l.b16 %v6200
  %v6464 = vunpack.c.l.b16 %v6201
  %v6465 = vunpack.c.l.b16 %v6202
  %v6466 = vunpack.c.l.b16 %v6203
  %v6467 = vunpack.c.l.b16 %v6204
  %v6468 = vunpack.c.l.b16 %v6205
  %v6469 = vunpack.c.l.b16 %v6206
  %v6470 = vunpack.c.l.b16 %v6207
  %v6471 = vunpack.c.l.b16 %v6208
  %v6472 = vunpack.c.l.b16 %v6209
  %v6473 = vunpack.c.l.b16 %v6210
  %v6474 = vunpack.c.l.b16 %v6211
  %v6475 = vunpack.c.l.b16 %v6212
  %v6476 = vunpack.c.l.b16 %v6213
  %v6477 = vunpack.c.l.b16 %v6214
  %v6478 = vunpack.c.l.b16 %v6215
  %v6479 = vunpack.c.l.b16 %v6216
  %v6480 = vunpack.c.l.b16 %v6217
  %v6481 = vunpack.c.l.b16 %v6218
  %v6482 = vunpack.c.l.b16 %v6219
  %v6483 = vunpack.c.l.b16 %v6220
  %v6484 = vunpack.c.l.b16 %v6221
  %v6485 = vunpack.c.l.b16 %v6222
  %v6486 = vunpack.c.l.b16 %v6223
  %v6487 = vunpack.c.l.b16 %v6224
  %v6488 = vunpack.c.l.b16 %v6225
  %v6489 = vunpack.c.l.b16 %v6226
  %v6490 = vunpack.c.l.b16 %v6227
  %v6491 = vunpack.c.l.b16 %v6228
  %v6492 = vunpack.c.l.b16 %v6229
  %v6493 = vunpack.c.l.b16 %v6230
  %v6494 = vunpack.c.l.b16 %v6231
  %v6495 = vunpack.c.l.b16 %v6232
  %v6496 = vunpack.c.l.b16 %v6233
  %v6497 = vunpack.c.l.b16 %v6234
  %v6498 = vunpack.c.l.b16 %v6235
  %v6499 = vunpack.c.l.b16 %v6236
  %v6500 = vunpack.c.l.b16 %v6237
  %v6501 = vunpack.c.l.b16 %v6238
  %v6502 = vunpack.c.l.b16 %v6239
  %v6503 = vunpack.c.l.b16 %v6240
  %v6504 = vunpack.c.l.b16 %v6241
  %v6505 = vunpack.c.l.b16 %v6242
  %v6506 = vunpack.c.l.b16 %v6243
  %v6507 = vunpack.c.l.b16 %v6244
  %v6508 = vunpack.c.l.b16 %v6245
  %v6509 = vunpack.c.l.b16 %v6246
  %v6510 = vunpack.c.l.b16 %v6247
  %v6511 = vunpack.c.l.b16 %v6248
  %v6512 = vunpack.c.l.b16 %v6249
  %v6513 = vunpack.c.l.b16 %v6250
  %v6514 = vunpack.c.l.b16 %v6251
  %v6515 = vunpack.c.l.b16 %v6252
  %v6516 = vunpack.c.l.b16 %v6253
  %v6517 = vunpack.c.l.b16 %v6254
  %v6518 = vunpack.c.l.b16 %v6255
  %v6519 = vunpack.c.l.b16 %v6256
  %v6520 = vunpack.c.l.b16 %v6257
  %v6521 = vunpack.c.l.b16 %v6258
  %v6522 = vunpack.c.l.b16 %v6259
  %v6523 = vunpack.c.l.b16 %v6260
  %v6524 = vunpack.c.l.b16 %v6261
  %v6525 = vunpack.c.l.b16 %v6262
  %v6526 = vunpack.c.l.b16 %v6263
  %v6527 = vunpack.c.l.b16 %v6264
  %v6528 = vunpack.c.l.b16 %v6265
  %v6529 = vunpack.c.l.b16 %v6266
  %v6530 = vunpack.c.l.b16 %v6267
  %v6531 = vunpack.c.l.b16 %v6268
  %v6532 = vunpack.c.l.b16 %v6269
  %v6533 = vunpack.c.l.b16 %v6270
  %v6534 = vunpack.c.l.b16 %v6271
  %v6535 = vunpack.c.l.b16 %v6272
  %v6536 = vunpack.c.l.b16 %v6273
  %v6537 = vunpack.c.l.b16 %v6274
  %v6538 = vunpack.c.l.b16 %v6275
  %v6539 = vunpack.c.l.b16 %v6276
  %v6540 = vunpack.c.l.b16 %v6277
  %v6541 = vunpack.c.l.b16 %v6278
  %v6542 = vunpack.c.l.b16 %v6279
  %v6543 = vpack.c.b16 %v6416, %v6415
  %v6544 = vpack.c.b16 %v6418, %v6417
  %v6545 = vpack.c.b16 %v6420, %v6419
  %v6546 = vpack.c.b16 %v6422, %v6421
  %v6547 = vpack.c.b16 %v6424, %v6423
  %v6548 = vpack.c.b16 %v6426, %v6425
  %v6549 = vpack.c.b16 %v6428, %v6427
  %v6550 = vpack.c.b16 %v6430, %v6429
  %v6551 = vpack.c.b16 %v6432, %v6431
  %v6552 = vpack.c.b16 %v6434, %v6433
  %v6553 = vpack.c.b16 %v6436, %v6435
  %v6554 = vpack.c.b16 %v6438, %v6437
  %v6555 = vpack.c.b16 %v6440, %v6439
  %v6556 = vpack.c.b16 %v6442, %v6441
  %v6557 = vpack.c.b16 %v6444, %v6443
  %v6558 = vpack.c.b16 %v6446, %v6445
  %v6559 = vpack.c.b16 %v6448, %v6447
  %v6560 = vpack.c.b16 %v6450, %v6449
  %v6561 = vpack.c.b16 %v6452, %v6451
  %v6562 = vpack.c.b16 %v6454, %v6453
  %v6563 = vpack.c.b16 %v6456, %v6455
  %v6564 = vpack.c.b16 %v6458, %v6457
  %v6565 = vpack.c.b16 %v6460, %v6459
  %v6566 = vpack.c.b16 %v6462, %v6461
  %v6567 = vpack.c.b16 %v6464, %v6463
  %v6568 = vpack.c.b16 %v6466, %v6465
  %v6569 = vpack.c.b16 %v6468, %v6467
  %v6570 = vpack.c.b16 %v6470, %v6469
  %v6571 = vpack.c.b16 %v6472, %v6471
  %v6572 = vpack.c.b16 %v6474, %v6473
  %v6573 = vpack.c.b16 %v6476, %v6475
  %v6574 = vpack.c.b16 %v6478, %v6477
  %v6575 = vpack.c.b16 %v6480, %v6479
  %v6576 = vpack.c.b16 %v6482, %v6481
  %v6577 = vpack.c.b16 %v6484, %v6483
  %v6578 = vpack.c.b16 %v6486, %v6485
  %v6579 = vpack.c.b16 %v6488, %v6487
  %v6580 = vpack.c.b16 %v6490, %v6489
  %v6581 = vpack.c.b16 %v6492, %v6491
  %v6582 = vpack.c.b16 %v6494, %v6493
  %v6583 = vpack.c.b16 %v6496, %v6495
  %v6584 = vpack.c.b16 %v6498, %v6497
  %v6585 = vpack.c.b16 %v6500, %v6499
  %v6586 = vpack.c.b16 %v6502, %v6501
  %v6587 = vpack.c.b16 %v6504, %v6503
  %v6588 = vpack.c.b16 %v6506, %v6505
  %v6589 = vpack.c.b16 %v6508, %v6507
  %v6590 = vpack.c.b16 %v6510, %v6509
  %v6591 = vpack.c.b16 %v6512, %v6511
  %v6592 = vpack.c.b16 %v6514, %v6513
  %v6593 = vpack.c.b16 %v6516, %v6515
  %v6594 = vpack.c.b16 %v6518, %v6517
  %v6595 = vpack.c.b16 %v6520, %v6519
  %v6596 = vpack.c.b16 %v6522, %v6521
  %v6597 = vpack.c.b16 %v6524, %v6523
  %v6598 = vpack.c.b16 %v6526, %v6525
  %v6599 = vpack.c.b16 %v6528, %v6527
  %v6600 = vpack.c.b16 %v6530, %v6529
  %v6601 = vpack.c.b16 %v6532, %v6531
  %v6602 = vpack.c.b16 %v6534, %v6533
  %v6603 = vpack.c.b16 %v6536, %v6535
  %v6604 = vpack.c.b16 %v6538, %v6537
  %v6605 = vpack.c.b16 %v6540, %v6539
  %v6606 = vpack.c.b16 %v6542, %v6541
  %6671 = vmatprep.subr.bf16.mxu0 0
  %6672 = vmatpush1.bf16.msra.mxu0 %v6543
  %6673 = vmatprep.subr.bf16.mxu0 0
  %6674 = vmatpush1.bf16.msra.mxu0 %v6544
  %6675 = vmatprep.subr.bf16.mxu0 0
  %6676 = vmatpush1.bf16.msra.mxu0 %v6545
  %6677 = vmatprep.subr.bf16.mxu0 0
  %6678 = vmatpush1.bf16.msra.mxu0 %v6546
  %6679 = vmatprep.subr.bf16.mxu0 0
  %6680 = vmatpush1.bf16.msra.mxu0 %v6547
  %6681 = vmatprep.subr.bf16.mxu0 0
  %6682 = vmatpush1.bf16.msra.mxu0 %v6548
  %6683 = vmatprep.subr.bf16.mxu0 0
  %6684 = vmatpush1.bf16.msra.mxu0 %v6549
  %6685 = vmatprep.subr.bf16.mxu0 0
  %6686 = vmatpush1.bf16.msra.mxu0 %v6550
  %6687 = vmatprep.subr.bf16.mxu0 0
  %6688 = vmatpush1.bf16.msra.mxu0 %v6551
  %6689 = vmatprep.subr.bf16.mxu0 0
  %6690 = vmatpush1.bf16.msra.mxu0 %v6552
  %6691 = vmatprep.subr.bf16.mxu0 0
  %6692 = vmatpush1.bf16.msra.mxu0 %v6553
  %6693 = vmatprep.subr.bf16.mxu0 0
  %6694 = vmatpush1.bf16.msra.mxu0 %v6554
  %6695 = vmatprep.subr.bf16.mxu0 0
  %6696 = vmatpush1.bf16.msra.mxu0 %v6555
  %6697 = vmatprep.subr.bf16.mxu0 0
  %6698 = vmatpush1.bf16.msra.mxu0 %v6556
  %6699 = vmatprep.subr.bf16.mxu0 0
  %6700 = vmatpush1.bf16.msra.mxu0 %v6557
  %6701 = vmatprep.subr.bf16.mxu0 0
  %6702 = vmatpush1.bf16.msra.mxu0 %v6558
  %6703 = vmatprep.mubr.bf16.mxu0 %v6145
  %6704 = vmatmul.mubr.bf16.gmra.mrb[0].mxu0 %v6144
  %v6705 = vpop.f32.mrb[0].mxu0
  %v6706 = vadd.f32 %v6285, %v6705
  %v6707 = vpop.f32.mrb[0].mxu0
  %v6708 = vpop.f32.mrb[0].mxu0
  %v6709 = vpop.f32.mrb[0].mxu0
  %6710 = vdwg.mxu0
  %6711 = vmatprep.subr.bf16.mxu0 0
  %6712 = vmatpush1.bf16.msra.mxu0 %v6559
  %6713 = vmatprep.subr.bf16.mxu0 0
  %6714 = vmatpush1.bf16.msra.mxu0 %v6560
  %6715 = vmatprep.subr.bf16.mxu0 0
  %6716 = vmatpush1.bf16.msra.mxu0 %v6561
  %6717 = vmatprep.subr.bf16.mxu0 0
  %6718 = vmatpush1.bf16.msra.mxu0 %v6562
  %6719 = vmatprep.subr.bf16.mxu0 0
  %6720 = vmatpush1.bf16.msra.mxu0 %v6563
  %6721 = vmatprep.subr.bf16.mxu0 0
  %6722 = vmatpush1.bf16.msra.mxu0 %v6564
  %6723 = vmatprep.subr.bf16.mxu0 0
  %6724 = vmatpush1.bf16.msra.mxu0 %v6565
  %6725 = vmatprep.subr.bf16.mxu0 0
  %6726 = vmatpush1.bf16.msra.mxu0 %v6566
  %6727 = vmatprep.subr.bf16.mxu0 0
  %6728 = vmatpush1.bf16.msra.mxu0 %v6567
  %6729 = vmatprep.subr.bf16.mxu0 0
  %6730 = vmatpush1.bf16.msra.mxu0 %v6568
  %6731 = vmatprep.subr.bf16.mxu0 0
  %6732 = vmatpush1.bf16.msra.mxu0 %v6569
  %6733 = vmatprep.subr.bf16.mxu0 0
  %6734 = vmatpush1.bf16.msra.mxu0 %v6570
  %6735 = vmatprep.subr.bf16.mxu0 0
  %6736 = vmatpush1.bf16.msra.mxu0 %v6571
  %6737 = vmatprep.subr.bf16.mxu0 0
  %6738 = vmatpush1.bf16.msra.mxu0 %v6572
  %6739 = vmatprep.subr.bf16.mxu0 0
  %6740 = vmatpush1.bf16.msra.mxu0 %v6573
  %6741 = vmatprep.subr.bf16.mxu0 0
  %6742 = vmatpush1.bf16.msra.mxu0 %v6574
  %6743 = vmatprep.mubr.bf16.mxu0 %v6147
  %6744 = vmatmul.mubr.bf16.gmra.mrb[0].mxu0 %v6146
  %v6745 = vpop.f32.mrb[0].mxu0
  %v6746 = vadd.f32 %v6706, %v6745
  %v6747 = vpop.f32.mrb[0].mxu0
  %v6748 = vpop.f32.mrb[0].mxu0
  %v6749 = vpop.f32.mrb[0].mxu0
  %6750 = vdwg.mxu0
  %6751 = vmatprep.subr.bf16.mxu0 0
  %6752 = vmatpush1.bf16.msra.mxu0 %v6575
  %6753 = vmatprep.subr.bf16.mxu0 0
  %6754 = vmatpush1.bf16.msra.mxu0 %v6576
  %6755 = vmatprep.subr.bf16.mxu0 0
  %6756 = vmatpush1.bf16.msra.mxu0 %v6577
  %6757 = vmatprep.subr.bf16.mxu0 0
  %6758 = vmatpush1.bf16.msra.mxu0 %v6578
  %6759 = vmatprep.subr.bf16.mxu0 0
  %6760 = vmatpush1.bf16.msra.mxu0 %v6579
  %6761 = vmatprep.subr.bf16.mxu0 0
  %6762 = vmatpush1.bf16.msra.mxu0 %v6580
  %6763 = vmatprep.subr.bf16.mxu0 0
  %6764 = vmatpush1.bf16.msra.mxu0 %v6581
  %6765 = vmatprep.subr.bf16.mxu0 0
  %6766 = vmatpush1.bf16.msra.mxu0 %v6582
  %6767 = vmatprep.subr.bf16.mxu0 0
  %6768 = vmatpush1.bf16.msra.mxu0 %v6583
  %6769 = vmatprep.subr.bf16.mxu0 0
  %6770 = vmatpush1.bf16.msra.mxu0 %v6584
  %6771 = vmatprep.subr.bf16.mxu0 0
  %6772 = vmatpush1.bf16.msra.mxu0 %v6585
  %6773 = vmatprep.subr.bf16.mxu0 0
  %6774 = vmatpush1.bf16.msra.mxu0 %v6586
  %6775 = vmatprep.subr.bf16.mxu0 0
  %6776 = vmatpush1.bf16.msra.mxu0 %v6587
  %6777 = vmatprep.subr.bf16.mxu0 0
  %6778 = vmatpush1.bf16.msra.mxu0 %v6588
  %6779 = vmatprep.subr.bf16.mxu0 0
  %6780 = vmatpush1.bf16.msra.mxu0 %v6589
  %6781 = vmatprep.subr.bf16.mxu0 0
  %6782 = vmatpush1.bf16.msra.mxu0 %v6590
  %6783 = vmatprep.mubr.bf16.mxu0 %v6149
  %6784 = vmatmul.mubr.bf16.gmra.mrb[0].mxu0 %v6148
  %v6785 = vpop.f32.mrb[0].mxu0
  %v6786 = vadd.f32 %v6746, %v6785
  %v6787 = vpop.f32.mrb[0].mxu0
  %v6788 = vpop.f32.mrb[0].mxu0
  %v6789 = vpop.f32.mrb[0].mxu0
  %6790 = vdwg.mxu0
  %6791 = vmatprep.subr.bf16.mxu0 0
  %6792 = vmatpush1.bf16.msra.mxu0 %v6591
  %6793 = vmatprep.subr.bf16.mxu0 0
  %6794 = vmatpush1.bf16.msra.mxu0 %v6592
  %6795 = vmatprep.subr.bf16.mxu0 0
  %6796 = vmatpush1.bf16.msra.mxu0 %v6593
  %6797 = vmatprep.subr.bf16.mxu0 0
  %6798 = vmatpush1.bf16.msra.mxu0 %v6594
  %6799 = vmatprep.subr.bf16.mxu0 0
  %6800 = vmatpush1.bf16.msra.mxu0 %v6595
  %6801 = vmatprep.subr.bf16.mxu0 0
  %6802 = vmatpush1.bf16.msra.mxu0 %v6596
  %6803 = vmatprep.subr.bf16.mxu0 0
  %6804 = vmatpush1.bf16.msra.mxu0 %v6597
  %6805 = vmatprep.subr.bf16.mxu0 0
  %6806 = vmatpush1.bf16.msra.mxu0 %v6598
  %6807 = vmatprep.subr.bf16.mxu0 0
  %6808 = vmatpush1.bf16.msra.mxu0 %v6599
  %6809 = vmatprep.subr.bf16.mxu0 0
  %6810 = vmatpush1.bf16.msra.mxu0 %v6600
  %6811 = vmatprep.subr.bf16.mxu0 0
  %6812 = vmatpush1.bf16.msra.mxu0 %v6601
  %6813 = vmatprep.subr.bf16.mxu0 0
  %6814 = vmatpush1.bf16.msra.mxu0 %v6602
  %6815 = vmatprep.subr.bf16.mxu0 0
  %6816 = vmatpush1.bf16.msra.mxu0 %v6603
  %6817 = vmatprep.subr.bf16.mxu0 0
  %6818 = vmatpush1.bf16.msra.mxu0 %v6604
  %6819 = vmatprep.subr.bf16.mxu0 0
  %6820 = vmatpush1.bf16.msra.mxu0 %v6605
  %6821 = vmatprep.subr.bf16.mxu0 0
  %6822 = vmatpush1.bf16.msra.mxu0 %v6606
  %6823 = vmatprep.mubr.bf16.mxu0 %v6151
  %6824 = vmatmul.mubr.bf16.gmra.mrb[0].mxu0 %v6150
  %v6825 = vpop.f32.mrb[0].mxu0
  %v6826 = vadd.f32 %v6786, %v6825
  %v6827 = vpop.f32.mrb[0].mxu0
  %v6828 = vpop.f32.mrb[0].mxu0
  %v6829 = vpop.f32.mrb[0].mxu0
  %6830 = vdwg.mxu0
  %vm6831 = vcmask 1024
  %6832 = vst.msk [vmem:[%s13] sm:$0x3] %vm6831, %v6826
  // Predicated region
  $region54: #{xz_discriminator_forward.9} parent=0 // pred_check
    _
  $region55: #{xz_discriminator_forward.9} parent=0 // pred_check_branch
    %6834 = sbr.rel (0) target = $region57
  $region56: #{xz_discriminator_forward.9} parent=0 // pred_region
    _
  $region57: #{xz_discriminator_forward.9} parent=0 // pred_fallthru
    _
  // Predicated region
  $region58: #{xz_discriminator_forward.9} parent=0 // pred_check
    _
  $region59: #{xz_discriminator_forward.9} parent=0 // pred_check_branch
    %6836 = sbr.rel (0) target = $region61
  $region60: #{xz_discriminator_forward.9} parent=0 // pred_region
    _
  $region61: #{xz_discriminator_forward.9} parent=0 // pred_fallthru
    _

</llo_original>
